<compile_context>
chip_gen: v6e
topology: v6e:2x2x1
jax: 0.10.0
libtpu: 0.0.40
codegen_flags: <defaults>
</compile_context>

<pallas_src>
import jax
import jax.numpy as jnp
from jax.experimental import pallas as pl
from jax.experimental.pallas import tpu as pltpu

N_CH1 = 40      # n_ch1 in the PyTorch module
K_TIME = 25     # temporal conv kernel width  (Conv2d kernel (1,25))
POOL_W = 75     # avg-pool window over time
POOL_S = 15     # avg-pool stride over time
BN_EPS = 1e-5


def _round_up(x, m):
    return (x + m - 1) // m * m


def _shallow_convnet_kernel(x_ref, w_ref, pool_ref, wclf_ref, bclf_ref, o_ref):
    """Whole forward for a tile of Bt samples; everything is lane-aligned 2D."""
    # conv1 + conv2 + BatchNorm(eval) (+ fused bias via the constant-1 lane):
    # one bf16 MXU matmul with f32 accumulation.  out2[b, t*40 + c].
    out2 = jnp.dot(x_ref[...], w_ref[...], preferred_element_type=jnp.float32)

    # square -> overlapping avg_pool2d((1,75),15): per-sample pooling matrix over
    # the lane axis (batch independent), bf16 operands / f32 accumulation.
    sq = (out2 * out2).astype(jnp.bfloat16)
    pooled = jnp.dot(sq, pool_ref[...], preferred_element_type=jnp.float32)

    logged = jnp.log(pooled)    # padding feature lanes replicate lane 0 -> finite

    # TODO(synk): torch.nn.functional.dropout(x) (training-mode, stochastic) has no
    #             deterministic equivalent here -> identity (eval semantics).

    # Linear classifier: single lane-dense matmul + bias.  Padding feature rows of
    # wclf are zero; padding class columns get bias 0 and are sliced off outside.
    o_ref[...] = (jnp.dot(logged, wclf_ref[...], preferred_element_type=jnp.float32)
                  + bclf_ref[...])


def shallow_convnet_forward(x, params, *, batch_tile=None):
    B, E, T = x.shape
    T_out = T - (K_TIME - 1)
    T_pool = (T_out - POOL_W) // POOL_S + 1
    assert T_pool >= 1
    # pooling windows never reach past the valid conv output (holds by construction)
    assert POOL_S * (T_pool - 1) + POOL_W <= T_out
    classes = params["b_clf"].shape[-1]

    KE_flat = E * T + 1                     # raw signal + one constant-1 bias lane
    KEf = _round_up(KE_flat, 128)
    N2 = T_out * N_CH1
    N2p = _round_up(N2, 128)
    FEAT = N_CH1 * T_pool                   # classifier input features (torch order)
    FEATp = _round_up(FEAT, 128)
    CLSp = _round_up(classes, 128)          # lane-dense output block

    # ---- batch tiling: multiple of 8; prefer >=2 grid steps so v7x uses both TCs ----
    if batch_tile is None:
        Bt = min(128, _round_up(B, 8))
        if B >= 16 and _round_up(B, Bt) // Bt < 2:
            Bt = _round_up((B + 1) // 2, 8)
    else:
        Bt = batch_tile
    assert Bt % 8 == 0, "batch_tile must be a multiple of 8 for sublane alignment"
    B_pad = _round_up(B, Bt)

    # ---- fuse conv1 + conv2 + BatchNorm(eval) into one affine map (exact algebra) ----
    w2_t = params["w2"][:, :, :, 0]                               # (c, o, e)
    w_fused = jnp.einsum("ok,coe->ekc", params["w1"], w2_t)       # (E, K, 40)
    b_fused = jnp.einsum("o,coe->c", params["b1"], w2_t)          # (40,)
    scale = params["bn_gamma"] * jax.lax.rsqrt(params["bn_var"] + BN_EPS)
    shift = params["bn_beta"] - params["bn_mean"] * scale
    w_bn = w_fused * scale[None, None, :]                         # (E, K, 40)
    b_bn = b_fused * scale + shift                                # (40,)

    # ---- "conv as dense matmul": BigW[e*T + t', t*40 + c] = w_bn[e, t'-t, c] ----
    to = jnp.arange(T_out)
    ts = jnp.arange(T)
    k_mat = ts[None, :] - to[:, None]                             # (T_out, T) = t' - t
    onehot = (k_mat[:, :, None] == jnp.arange(K_TIME)[None, None, :]).astype(jnp.float32)
    w_sel = jnp.einsum("tsk,ekc->estc", onehot, w_bn)             # (E, T, T_out, 40)
    big = w_sel.reshape(E * T, N2)
    bias_row = jnp.tile(b_bn, T_out)[None, :]                     # bias for every (t, c)
    big = jnp.concatenate([big, bias_row], axis=0)                # (E*T + 1, N2)
    big = jnp.pad(big, ((0, KEf - KE_flat), (0, N2p - N2))).astype(jnp.bfloat16)

    # ---- per-sample pooling matrix (batch independent) ----
    p_idx = jnp.arange(T_pool)
    win = ((to[None, :] >= p_idx[:, None] * POOL_S) &
           (to[None, :] < p_idx[:, None] * POOL_S + POOL_W)).astype(jnp.float32) / POOL_W
    pool_core = jnp.einsum("pt,cd->tcdp", win, jnp.eye(N_CH1, dtype=jnp.float32))
    pool_core = pool_core.reshape(N2, FEAT)        # column index c*T_pool + p (torch order)
    pool_mat = jnp.zeros((N2p, FEATp), jnp.float32).at[:N2, :FEAT].set(pool_core)
    # padding feature lanes copy lane 0 so log() stays finite; their wclf rows are 0
    pool_mat = pool_mat.at[:, FEAT:].set(pool_mat[:, :1])
    pool_mat = pool_mat.astype(jnp.bfloat16)

    # ---- classifier weights (features already in torch flatten order c*T_pool + p) ----
    wclf = jnp.zeros((FEATp, CLSp), jnp.float32).at[:FEAT, :classes].set(params["w_clf"].T)
    bclf = jnp.zeros((1, CLSp), jnp.float32).at[0, :classes].set(params["b_clf"])

    # ---- raw-x input: no im2col in HBM, just flatten + constant-1 lane + padding ----
    x_flat = jnp.concatenate([x.reshape(B, E * T), jnp.ones((B, 1), x.dtype)], axis=1)
    x_flat = jnp.pad(x_flat, ((0, 0), (0, KEf - KE_flat)))
    # pad batch by replicating the last sample -> padded rows stay finite (no log(0))
    x_flat = jnp.pad(x_flat, ((0, B_pad - B), (0, 0)), mode="edge").astype(jnp.bfloat16)

    out = pl.pallas_call(
        _shallow_convnet_kernel,
        out_shape=jax.ShapeDtypeStruct((B_pad, CLSp), jnp.float32),
        grid_spec=pltpu.PrefetchScalarGridSpec(
            num_scalar_prefetch=0,
            grid=(B_pad // Bt,),
            in_specs=[
                pl.BlockSpec((Bt, KEf), lambda i: (i, 0)),      # raw x tile (~1 KB/sample)
                pl.BlockSpec((KEf, N2p), lambda i: (0, 0)),     # fused conv+BN Toeplitz W (resident)
                pl.BlockSpec((N2p, FEATp), lambda i: (0, 0)),   # pooling matrix (resident)
                pl.BlockSpec((FEATp, CLSp), lambda i: (0, 0)),  # classifier W (resident)
                pl.BlockSpec((1, CLSp), lambda i: (0, 0)),      # classifier bias
            ],
            out_specs=pl.BlockSpec((Bt, CLSp), lambda i: (i, 0)),
        ),
        compiler_params=pltpu.CompilerParams(
            dimension_semantics=("parallel",),
            # resident weights ~4.8 MB + O(Bt) activations; explicit limit w/ headroom
            vmem_limit_bytes=32 * 1024 * 1024,
        ),
    )(x_flat, big, pool_mat, wclf, bclf)
    return out[:B, :classes]


def reference_forward(x, params):
    """Pure-JAX reference matching the PyTorch (eval) forward."""
    B, E, T = x.shape
    T_out = T - (K_TIME - 1)
    T_pool = (T_out - POOL_W) // POOL_S + 1
    y = x[:, None, :, :]                                       # (B,1,E,T)
    w1_4d = params["w1"].reshape(N_CH1, 1, 1, K_TIME)
    y = jax.lax.conv_general_dilated(y, w1_4d, (1, 1), "VALID",
                                     dimension_numbers=("NCHW", "OIHW", "NCHW"))
    y = y + params["b1"].reshape(1, N_CH1, 1, 1)
    y = jax.lax.conv_general_dilated(y, params["w2"], (1, 1), "VALID",
                                     dimension_numbers=("NCHW", "OIHW", "NCHW"))
    scale = params["bn_gamma"] / jnp.sqrt(params["bn_var"] + BN_EPS)
    shift = params["bn_beta"] - params["bn_mean"] * scale
    y = y * scale.reshape(1, N_CH1, 1, 1) + shift.reshape(1, N_CH1, 1, 1)
    y = y * y
    y = jnp.concatenate(
        [y[..., p * POOL_S: p * POOL_S + POOL_W].mean(-1, keepdims=True)
         for p in range(T_pool)], axis=-1)
    y = jnp.log(y)
    y = y.reshape(B, -1)
    return y @ params["w_clf"].T + params["b_clf"]


def init_params(key, classes, E, T):
    T_out = T - (K_TIME - 1)
    T_pool = (T_out - POOL_W) // POOL_S + 1
    n_outputs = N_CH1 * 1 * T_pool
    ks = jax.random.split(key, 9)
    return {
        "w1": 0.2 * jax.random.normal(ks[0], (N_CH1, K_TIME), jnp.float32),
        "b1": 0.1 * jax.random.normal(ks[1], (N_CH1,), jnp.float32),
        "w2": 0.2 * jax.random.normal(ks[2], (N_CH1, N_CH1, E, 1), jnp.float32),
        "bn_gamma": 1.0 + 0.1 * jax.random.normal(ks[3], (N_CH1,), jnp.float32),
        "bn_beta": 0.1 * jax.random.normal(ks[4], (N_CH1,), jnp.float32),
        "bn_mean": 0.1 * jax.random.normal(ks[5], (N_CH1,), jnp.float32),
        "bn_var": 1.0 + 0.5 * jax.random.uniform(ks[6], (N_CH1,), jnp.float32),
        "w_clf": 0.1 * jax.random.normal(ks[7], (classes, n_outputs), jnp.float32),
        "b_clf": 0.1 * jax.random.normal(ks[8], (classes,), jnp.float32),
    }


if __name__ == "__main__":
    B, E, T, classes = 2, 4, 114, 3   # batch, in_channels (electrodes), time_step, classes
    key = jax.random.PRNGKey(0)
    kx, kp = jax.random.split(key)
    x = jax.random.normal(kx, (B, E, T), jnp.float32)
    params = init_params(kp, classes, E, T)

    out = jax.block_until_ready(shallow_convnet_forward(x, params))
    ref = jax.block_until_ready(reference_forward(x, params))

    assert out.shape == (B, classes)
    assert bool(jnp.all(jnp.isfinite(out)))
    assert bool(jnp.allclose(out, ref, rtol=2e-2, atol=2e-2)), (out, ref)
    print("KERNEL_OK")
</pallas_src>

<mosaic_0001>
module attributes {stable_mosaic.version = 11 : i64} {
  func.func @_shallow_convnet_kernel(%arg0: i32, %arg1: memref<8x512xbf16, #tpu.memory_space<vmem>>, %arg2: memref<512x3712xbf16, #tpu.memory_space<vmem>>, %arg3: memref<3712x128xbf16, #tpu.memory_space<vmem>>, %arg4: memref<128x128xf32, #tpu.memory_space<vmem>>, %arg5: memref<1x128xf32, #tpu.memory_space<vmem>>, %arg6: memref<8x128xf32, #tpu.memory_space<vmem>>) attributes {dimension_semantics = [#tpu.dimension_semantics<parallel>], iteration_bounds = array<i64: 1>, scalar_prefetch = 0 : i64, scratch_operands = 0 : i64, tpu.core_type = #tpu.core_type<tc>, window_params = [{transform_indices = @transform_0, window_bounds = array<i64: 8, 512>}, {pipeline_mode = #tpu.pipeline_mode<synchronous>, transform_indices = @transform_1, window_bounds = array<i64: 512, 3712>}, {pipeline_mode = #tpu.pipeline_mode<synchronous>, transform_indices = @transform_2, window_bounds = array<i64: 3712, 128>}, {pipeline_mode = #tpu.pipeline_mode<synchronous>, transform_indices = @transform_3, window_bounds = array<i64: 128, 128>}, {pipeline_mode = #tpu.pipeline_mode<synchronous>, transform_indices = @transform_4, window_bounds = array<i64: 1, 128>}, {transform_indices = @transform_5, window_bounds = array<i64: 8, 128>}]} {
    %c0 = arith.constant 0 : index
    %c0_0 = arith.constant 0 : index
    %0 = vector.load %arg1[%c0, %c0_0] : memref<8x512xbf16, #tpu.memory_space<vmem>>, vector<8x512xbf16>
    %c0_1 = arith.constant 0 : index
    %c0_2 = arith.constant 0 : index
    %1 = vector.load %arg2[%c0_1, %c0_2] : memref<512x3712xbf16, #tpu.memory_space<vmem>>, vector<512x3712xbf16>
    %cst = arith.constant dense<0.000000e+00> : vector<8x3712xf32>
    %2 = tpu.matmul %0, %1, %cst {dimension_numbers = #tpu.dot_dimension_numbers<[1], [0], [0], [1], [0, 0, 1, 1], [], []>} : vector<8x512xbf16>, vector<512x3712xbf16>, vector<8x3712xf32> -> vector<8x3712xf32>
    %3 = arith.mulf %2, %2 : vector<8x3712xf32>
    %4 = arith.truncf %3 : vector<8x3712xf32> to vector<8x3712xbf16>
    %c0_3 = arith.constant 0 : index
    %c0_4 = arith.constant 0 : index
    %5 = vector.load %arg3[%c0_3, %c0_4] : memref<3712x128xbf16, #tpu.memory_space<vmem>>, vector<3712x128xbf16>
    %cst_5 = arith.constant dense<0.000000e+00> : vector<8x128xf32>
    %6 = tpu.matmul %4, %5, %cst_5 {dimension_numbers = #tpu.dot_dimension_numbers<[1], [0], [0], [1], [0, 0, 1, 1], [], []>} : vector<8x3712xbf16>, vector<3712x128xbf16>, vector<8x128xf32> -> vector<8x128xf32>
    %7 = math.log %6 : vector<8x128xf32>
    %c0_6 = arith.constant 0 : index
    %c0_7 = arith.constant 0 : index
    %8 = vector.load %arg4[%c0_6, %c0_7] : memref<128x128xf32, #tpu.memory_space<vmem>>, vector<128x128xf32>
    %cst_8 = arith.constant dense<0.000000e+00> : vector<8x128xf32>
    %9 = tpu.matmul %7, %8, %cst_8 {dimension_numbers = #tpu.dot_dimension_numbers<[1], [0], [0], [1], [0, 0, 1, 1], [], []>} : vector<8x128xf32>, vector<128x128xf32>, vector<8x128xf32> -> vector<8x128xf32>
    %c0_9 = arith.constant 0 : index
    %c0_10 = arith.constant 0 : index
    %10 = vector.load %arg5[%c0_9, %c0_10] : memref<1x128xf32, #tpu.memory_space<vmem>>, vector<1x128xf32>
    %11 = vector.broadcast %10 : vector<1x128xf32> to vector<8x128xf32>
    %12 = arith.addf %9, %11 : vector<8x128xf32>
    %c0_11 = arith.constant 0 : index
    %c0_12 = arith.constant 0 : index
    %13 = vector.load %arg6[%c0_11, %c0_12] : memref<8x128xf32, #tpu.memory_space<vmem>>, vector<8x128xf32>
    tpu.vector_store %arg6[%c0_11, %c0_12], %12 {strides = array<i32>} : memref<8x128xf32, #tpu.memory_space<vmem>>, vector<8x128xf32>,
    return
  }
  func.func @transform_0(%arg0: i32) -> (i32, i32) {
    %c0_i32 = arith.constant 0 : i32
    %c0_i32_0 = arith.constant 0 : i32
    return %arg0, %c0_i32 : i32, i32
  }
  func.func @transform_1(%arg0: i32) -> (i32, i32) {
    %c0_i32 = arith.constant 0 : i32
    %c0_i32_0 = arith.constant 0 : i32
    %c0_i32_1 = arith.constant 0 : i32
    return %c0_i32, %c0_i32_0 : i32, i32
  }
  func.func @transform_2(%arg0: i32) -> (i32, i32) {
    %c0_i32 = arith.constant 0 : i32
    %c0_i32_0 = arith.constant 0 : i32
    %c0_i32_1 = arith.constant 0 : i32
    return %c0_i32, %c0_i32_0 : i32, i32
  }
  func.func @transform_3(%arg0: i32) -> (i32, i32) {
    %c0_i32 = arith.constant 0 : i32
    %c0_i32_0 = arith.constant 0 : i32
    %c0_i32_1 = arith.constant 0 : i32
    return %c0_i32, %c0_i32_0 : i32, i32
  }
  func.func @transform_4(%arg0: i32) -> (i32, i32) {
    %c0_i32 = arith.constant 0 : i32
    %c0_i32_0 = arith.constant 0 : i32
    %c0_i32_1 = arith.constant 0 : i32
    return %c0_i32, %c0_i32_0 : i32, i32
  }
  func.func @transform_5(%arg0: i32) -> (i32, i32) {
    %c0_i32 = arith.constant 0 : i32
    %c0_i32_0 = arith.constant 0 : i32
    return %arg0, %c0_i32 : i32, i32
  }
}

</mosaic_0001>

<llo_original>
// kernel: tpu_custom_call.1
$region0: #{tpu_custom_call.1}
  #allocation0 [shape = 'u32[]', space=smem, size = 0x4, offset = 0x4, fixed_abs, tag = 'smem constant byte address 0x4 - core index']
  #allocation1 [shape = 'u32[144,128]{1,0:T(1,128)}', space=vmem, size = 0x12000, scoped, tag = 'internal scratch']
  %s0 = inlined_call_operand.hbm [shape: bf16[8,512], index: 0, kind: input, shape index: {}]
  %s1 = inlined_call_operand.hbm [shape: bf16[512,3712], index: 1, kind: input, shape index: {}]
  %s2 = inlined_call_operand.hbm [shape: bf16[3712,128], index: 2, kind: input, shape index: {}]
  %s3 = inlined_call_operand.hbm [shape: f32[128,128], index: 3, kind: input, shape index: {}]
  %s4 = inlined_call_operand.hbm [shape: f32[1,128], index: 4, kind: input, shape index: {}]
  %s5 = inlined_call_operand.hbm [shape: f32[8,128], index: 5, kind: output, shape index: {}]
  %s6 = sld [smem:[#allocation0]]
  $region50: #{tpu_custom_call.1} parent=0
    _
  %s8 = ssub.s32 1, %s6
  %s9 = scalar_select 0, %s8, %s6
  $region1: #{tpu_custom_call.1} parent=0
    #allocation2 [shape = 'u8[8192]{0}', space=vmem, size = 0x2000, scoped, tag = 'input window, operand 0, single buffered']
    #allocation3 [shape = 's32[1]{0}', space=sflag, size = 0x4, scoped, tag = 'scoped memory for tpu_custom_call.1']
    #allocation4 [shape = 's32[1]{0}', space=sflag, size = 0x4, scoped, tag = 'scoped memory for tpu_custom_call.1']
    #allocation5 [shape = 'u8[3801088]{0}', space=vmem, size = 0x3a0000, scoped, tag = 'input window, operand 1, single buffered']
    #allocation6 [shape = 's32[1]{0}', space=sflag, size = 0x4, scoped, tag = 'scoped memory for tpu_custom_call.1']
    #allocation7 [shape = 'u8[950272]{0}', space=vmem, size = 0xe8000, scoped, tag = 'input window, operand 2, single buffered']
    #allocation8 [shape = 'u8[65536]{0}', space=vmem, size = 0x10000, scoped, tag = 'input window, operand 3, single buffered']
    #allocation9 [shape = 's32[1]{0}', space=sflag, size = 0x4, scoped, tag = 'scoped memory for tpu_custom_call.1']
    #allocation10 [shape = 'u8[512]{0}', space=vmem, size = 0x400, scoped, tag = 'input window, operand 4, single buffered']
    #allocation11 [shape = 'u8[4096]{0}', space=vmem, size = 0x1000, scoped, tag = 'output window, operand 0, single buffered']
    %10 = vsyncpa [#allocation3], 0
    %11 = vsyncpa [#allocation6], 0
    %12 = vsyncpa [#allocation9], 0
    %13 = vsyncpa [#allocation4], 0
    // Predicated region
    $region2: #{tpu_custom_call.1} parent=1 // pred_check
      _
    $region3: #{tpu_custom_call.1} parent=1 // pred_check_branch
      %15 = sbr.rel (0) target = $region5
    $region4: #{tpu_custom_call.1} parent=1 // pred_region
      %s17 = ssub.s32 256, 256
      %18 = vsyncadd [#allocation3], %s17
      %s20 = sshll.u32 [#allocation2], 4
      %s21 = int_to_ptr.vmem [resolvable:$true] %s20
      %23 = dma.hbm_to_vmem [thread:$0]  %s0, 256, %s21, [#allocation3]
    $region5: #{tpu_custom_call.1} parent=1 // pred_fallthru
      _
    // Predicated region
    $region6: #{tpu_custom_call.1} parent=1 // pred_check
      _
    $region7: #{tpu_custom_call.1} parent=1 // pred_check_branch
      %25 = sbr.rel (0) target = $region9
    $region8: #{tpu_custom_call.1} parent=1 // pred_region
      %s27 = ssub.s32 118784, 118784
      %28 = vsyncadd [#allocation6], %s27
      %s29 = sshll.u32 [#allocation5], 4
      %s30 = int_to_ptr.vmem [resolvable:$true] %s29
      %35 = dma.hbm_to_vmem [thread:$0]  %s1, 118784, %s30, [#allocation6], 1856, 1856, 116
    $region9: #{tpu_custom_call.1} parent=1 // pred_fallthru
      _
    // Predicated region
    $region10: #{tpu_custom_call.1} parent=1 // pred_check
      _
    $region11: #{tpu_custom_call.1} parent=1 // pred_check_branch
      %37 = sbr.rel (0) target = $region13
    $region12: #{tpu_custom_call.1} parent=1 // pred_region
      %s39 = ssub.s32 29696, 29696
      %40 = vsyncadd [#allocation6], %s39
      %s41 = sshll.u32 [#allocation7], 4
      %s42 = int_to_ptr.vmem [resolvable:$true] %s41
      %47 = dma.hbm_to_vmem [thread:$0]  %s2, 29696, %s42, [#allocation6], 64, 64, 4
    $region13: #{tpu_custom_call.1} parent=1 // pred_fallthru
      _
    // Predicated region
    $region14: #{tpu_custom_call.1} parent=1 // pred_check
      _
    $region15: #{tpu_custom_call.1} parent=1 // pred_check_branch
      %49 = sbr.rel (0) target = $region17
    $region16: #{tpu_custom_call.1} parent=1 // pred_region
      %s51 = ssub.s32 2048, 2048
      %52 = vsyncadd [#allocation9], %s51
      %s53 = sshll.u32 [#allocation8], 4
      %s54 = int_to_ptr.vmem [resolvable:$true] %s53
      %59 = dma.hbm_to_vmem [thread:$0]  %s3, 2048, %s54, [#allocation9], 128, 128, 8
    $region17: #{tpu_custom_call.1} parent=1 // pred_fallthru
      _
    // Predicated region
    $region18: #{tpu_custom_call.1} parent=1 // pred_check
      _
    $region19: #{tpu_custom_call.1} parent=1 // pred_check_branch
      %61 = sbr.rel (0) target = $region21
    $region20: #{tpu_custom_call.1} parent=1 // pred_region
      %s63 = ssub.s32 16, 16
      %64 = vsyncadd [#allocation9], %s63
      %s66 = sshll.u32 [#allocation10], 4
      %s67 = int_to_ptr.vmem [resolvable:$true] %s66
      %69 = dma.hbm_to_vmem [thread:$0]  %s4, 16, %s67, [#allocation9]
    $region21: #{tpu_custom_call.1} parent=1 // pred_fallthru
      _
    // Predicated region
    $region22: #{tpu_custom_call.1} parent=1 // pred_check
      _
    $region23: #{tpu_custom_call.1} parent=1 // pred_check_branch
      %71 = sbr.rel (0) target = $region25
    $region24: #{tpu_custom_call.1} parent=1 // pred_region
      %72 = dma.done [#allocation3], 256
    $region25: #{tpu_custom_call.1} parent=1 // pred_fallthru
      _
    // Predicated region
    $region26: #{tpu_custom_call.1} parent=1 // pred_check
      _
    $region27: #{tpu_custom_call.1} parent=1 // pred_check_branch
      %74 = sbr.rel (0) target = $region29
    $region28: #{tpu_custom_call.1} parent=1 // pred_region
      %75 = dma.done [#allocation6], 118784
    $region29: #{tpu_custom_call.1} parent=1 // pred_fallthru
      _
    // Predicated region
    $region30: #{tpu_custom_call.1} parent=1 // pred_check
      _
    $region31: #{tpu_custom_call.1} parent=1 // pred_check_branch
      %77 = sbr.rel (0) target = $region33
    $region32: #{tpu_custom_call.1} parent=1 // pred_region
      %78 = dma.done [#allocation6], 29696
    $region33: #{tpu_custom_call.1} parent=1 // pred_fallthru
      _
    // Predicated region
    $region34: #{tpu_custom_call.1} parent=1 // pred_check
      _
    $region35: #{tpu_custom_call.1} parent=1 // pred_check_branch
      %80 = sbr.rel (0) target = $region37
    $region36: #{tpu_custom_call.1} parent=1 // pred_region
      %81 = dma.done [#allocation9], 2048
    $region37: #{tpu_custom_call.1} parent=1 // pred_fallthru
      _
    // Predicated region
    $region38: #{tpu_custom_call.1} parent=1 // pred_check
      _
    $region39: #{tpu_custom_call.1} parent=1 // pred_check_branch
      %83 = sbr.rel (0) target = $region41
    $region40: #{tpu_custom_call.1} parent=1 // pred_region
      %84 = dma.done [#allocation9], 16
    $region41: #{tpu_custom_call.1} parent=1 // pred_fallthru
      _
    %v86 = vld [vmem:[#allocation2] sm:$0xff]
    %v87 = vld [vmem:[#allocation2 + $0x8] sm:$0xff]
    %v88 = vld [vmem:[#allocation5] sm:$0xff]
    %v89 = vld [vmem:[#allocation5 + $0x8] sm:$0xff]
    %v90 = vld [vmem:[#allocation5 + $0x10] sm:$0xff]
    %v91 = vld [vmem:[#allocation5 + $0x18] sm:$0xff]
    %v92 = vld [vmem:[#allocation5 + $0x20] sm:$0xff]
    %v93 = vld [vmem:[#allocation5 + $0x28] sm:$0xff]
    %v94 = vld [vmem:[#allocation5 + $0x30] sm:$0xff]
    %v95 = vld [vmem:[#allocation5 + $0x38] sm:$0xff]
    %v96 = vld [vmem:[#allocation5 + $0x40] sm:$0xff]
    %v97 = vld [vmem:[#allocation5 + $0x48] sm:$0xff]
    %v98 = vld [vmem:[#allocation5 + $0x50] sm:$0xff]
    %v99 = vld [vmem:[#allocation5 + $0x58] sm:$0xff]
    %v100 = vld [vmem:[#allocation5 + $0x60] sm:$0xff]
    %v101 = vld [vmem:[#allocation5 + $0x68] sm:$0xff]
    %v102 = vld [vmem:[#allocation5 + $0x70] sm:$0xf]
    %v103 = vld [vmem:[#allocation5 + $0x74] sm:$0xff]
    %v104 = vld [vmem:[#allocation5 + $0x7c] sm:$0xff]
    %v105 = vld [vmem:[#allocation5 + $0x84] sm:$0xff]
    %v106 = vld [vmem:[#allocation5 + $0x8c] sm:$0xff]
    %v107 = vld [vmem:[#allocation5 + $0x94] sm:$0xff]
    %v108 = vld [vmem:[#allocation5 + $0x9c] sm:$0xff]
    %v109 = vld [vmem:[#allocation5 + $0xa4] sm:$0xff]
    %v110 = vld [vmem:[#allocation5 + $0xac] sm:$0xff]
    %v111 = vld [vmem:[#allocation5 + $0xb4] sm:$0xff]
    %v112 = vld [vmem:[#allocation5 + $0xbc] sm:$0xff]
    %v113 = vld [vmem:[#allocation5 + $0xc4] sm:$0xff]
    %v114 = vld [vmem:[#allocation5 + $0xcc] sm:$0xff]
    %v115 = vld [vmem:[#allocation5 + $0xd4] sm:$0xff]
    %v116 = vld [vmem:[#allocation5 + $0xdc] sm:$0xff]
    %v117 = vld [vmem:[#allocation5 + $0xe4] sm:$0xf]
    %v118 = vld [vmem:[#allocation5 + $0xe8] sm:$0xff]
    %v119 = vld [vmem:[#allocation5 + $0xf0] sm:$0xff]
    %v120 = vld [vmem:[#allocation5 + $0xf8] sm:$0xff]
    %v121 = vld [vmem:[#allocation5 + $0x100] sm:$0xff]
    %v122 = vld [vmem:[#allocation5 + $0x108] sm:$0xff]
    %v123 = vld [vmem:[#allocation5 + $0x110] sm:$0xff]
    %v124 = vld [vmem:[#allocation5 + $0x118] sm:$0xff]
    %v125 = vld [vmem:[#allocation5 + $0x120] sm:$0xff]
    %v126 = vld [vmem:[#allocation5 + $0x128] sm:$0xff]
    %v127 = vld [vmem:[#allocation5 + $0x130] sm:$0xff]
    %v128 = vld [vmem:[#allocation5 + $0x138] sm:$0xff]
    %v129 = vld [vmem:[#allocation5 + $0x140] sm:$0xff]
    %v130 = vld [vmem:[#allocation5 + $0x148] sm:$0xff]
    %v131 = vld [vmem:[#allocation5 + $0x150] sm:$0xff]
    %v132 = vld [vmem:[#allocation5 + $0x158] sm:$0xf]
    %v133 = vld [vmem:[#allocation5 + $0x15c] sm:$0xff]
    %v134 = vld [vmem:[#allocation5 + $0x164] sm:$0xff]
    %v135 = vld [vmem:[#allocation5 + $0x16c] sm:$0xff]
    %v136 = vld [vmem:[#allocation5 + $0x174] sm:$0xff]
    %v137 = vld [vmem:[#allocation5 + $0x17c] sm:$0xff]
    %v138 = vld [vmem:[#allocation5 + $0x184] sm:$0xff]
    %v139 = vld [vmem:[#allocation5 + $0x18c] sm:$0xff]
    %v140 = vld [vmem:[#allocation5 + $0x194] sm:$0xff]
    %v141 = vld [vmem:[#allocation5 + $0x19c] sm:$0xff]
    %v142 = vld [vmem:[#allocation5 + $0x1a4] sm:$0xff]
    %v143 = vld [vmem:[#allocation5 + $0x1ac] sm:$0xff]
    %v144 = vld [vmem:[#allocation5 + $0x1b4] sm:$0xff]
    %v145 = vld [vmem:[#allocation5 + $0x1bc] sm:$0xff]
    %v146 = vld [vmem:[#allocation5 + $0x1c4] sm:$0xff]
    %v147 = vld [vmem:[#allocation5 + $0x1cc] sm:$0xf]
    %v148 = vld [vmem:[#allocation5 + $0x1d0] sm:$0xff]
    %v149 = vld [vmem:[#allocation5 + $0x1d8] sm:$0xff]
    %v150 = vld [vmem:[#allocation5 + $0x1e0] sm:$0xff]
    %v151 = vld [vmem:[#allocation5 + $0x1e8] sm:$0xff]
    %v152 = vld [vmem:[#allocation5 + $0x1f0] sm:$0xff]
    %v153 = vld [vmem:[#allocation5 + $0x1f8] sm:$0xff]
    %v154 = vld [vmem:[#allocation5 + $0x200] sm:$0xff]
    %v155 = vld [vmem:[#allocation5 + $0x208] sm:$0xff]
    %v156 = vld [vmem:[#allocation5 + $0x210] sm:$0xff]
    %v157 = vld [vmem:[#allocation5 + $0x218] sm:$0xff]
    %v158 = vld [vmem:[#allocation5 + $0x220] sm:$0xff]
    %v159 = vld [vmem:[#allocation5 + $0x228] sm:$0xff]
    %v160 = vld [vmem:[#allocation5 + $0x230] sm:$0xff]
    %v161 = vld [vmem:[#allocation5 + $0x238] sm:$0xff]
    %v162 = vld [vmem:[#allocation5 + $0x240] sm:$0xf]
    %v163 = vld [vmem:[#allocation5 + $0x244] sm:$0xff]
    %v164 = vld [vmem:[#allocation5 + $0x24c] sm:$0xff]
    %v165 = vld [vmem:[#allocation5 + $0x254] sm:$0xff]
    %v166 = vld [vmem:[#allocation5 + $0x25c] sm:$0xff]
    %v167 = vld [vmem:[#allocation5 + $0x264] sm:$0xff]
    %v168 = vld [vmem:[#allocation5 + $0x26c] sm:$0xff]
    %v169 = vld [vmem:[#allocation5 + $0x274] sm:$0xff]
    %v170 = vld [vmem:[#allocation5 + $0x27c] sm:$0xff]
    %v171 = vld [vmem:[#allocation5 + $0x284] sm:$0xff]
    %v172 = vld [vmem:[#allocation5 + $0x28c] sm:$0xff]
    %v173 = vld [vmem:[#allocation5 + $0x294] sm:$0xff]
    %v174 = vld [vmem:[#allocation5 + $0x29c] sm:$0xff]
    %v175 = vld [vmem:[#allocation5 + $0x2a4] sm:$0xff]
    %v176 = vld [vmem:[#allocation5 + $0x2ac] sm:$0xff]
    %v177 = vld [vmem:[#allocation5 + $0x2b4] sm:$0xf]
    %v178 = vld [vmem:[#allocation5 + $0x2b8] sm:$0xff]
    %v179 = vld [vmem:[#allocation5 + $0x2c0] sm:$0xff]
    %v180 = vld [vmem:[#allocation5 + $0x2c8] sm:$0xff]
    %v181 = vld [vmem:[#allocation5 + $0x2d0] sm:$0xff]
    %v182 = vld [vmem:[#allocation5 + $0x2d8] sm:$0xff]
    %v183 = vld [vmem:[#allocation5 + $0x2e0] sm:$0xff]
    %v184 = vld [vmem:[#allocation5 + $0x2e8] sm:$0xff]
    %v185 = vld [vmem:[#allocation5 + $0x2f0] sm:$0xff]
    %v186 = vld [vmem:[#allocation5 + $0x2f8] sm:$0xff]
    %v187 = vld [vmem:[#allocation5 + $0x300] sm:$0xff]
    %v188 = vld [vmem:[#allocation5 + $0x308] sm:$0xff]
    %v189 = vld [vmem:[#allocation5 + $0x310] sm:$0xff]
    %v190 = vld [vmem:[#allocation5 + $0x318] sm:$0xff]
    %v191 = vld [vmem:[#allocation5 + $0x320] sm:$0xff]
    %v192 = vld [vmem:[#allocation5 + $0x328] sm:$0xf]
    %v193 = vld [vmem:[#allocation5 + $0x32c] sm:$0xff]
    %v194 = vld [vmem:[#allocation5 + $0x334] sm:$0xff]
    %v195 = vld [vmem:[#allocation5 + $0x33c] sm:$0xff]
    %v196 = vld [vmem:[#allocation5 + $0x344] sm:$0xff]
    %v197 = vld [vmem:[#allocation5 + $0x34c] sm:$0xff]
    %v198 = vld [vmem:[#allocation5 + $0x354] sm:$0xff]
    %v199 = vld [vmem:[#allocation5 + $0x35c] sm:$0xff]
    %v200 = vld [vmem:[#allocation5 + $0x364] sm:$0xff]
    %v201 = vld [vmem:[#allocation5 + $0x36c] sm:$0xff]
    %v202 = vld [vmem:[#allocation5 + $0x374] sm:$0xff]
    %v203 = vld [vmem:[#allocation5 + $0x37c] sm:$0xff]
    %v204 = vld [vmem:[#allocation5 + $0x384] sm:$0xff]
    %v205 = vld [vmem:[#allocation5 + $0x38c] sm:$0xff]
    %v206 = vld [vmem:[#allocation5 + $0x394] sm:$0xff]
    %v207 = vld [vmem:[#allocation5 + $0x39c] sm:$0xf]
    %v208 = vld [vmem:[#allocation5 + $0x3a0] sm:$0xff]
    %v209 = vld [vmem:[#allocation5 + $0x3a8] sm:$0xff]
    %v210 = vld [vmem:[#allocation5 + $0x3b0] sm:$0xff]
    %v211 = vld [vmem:[#allocation5 + $0x3b8] sm:$0xff]
    %v212 = vld [vmem:[#allocation5 + $0x3c0] sm:$0xff]
    %v213 = vld [vmem:[#allocation5 + $0x3c8] sm:$0xff]
    %v214 = vld [vmem:[#allocation5 + $0x3d0] sm:$0xff]
    %v215 = vld [vmem:[#allocation5 + $0x3d8] sm:$0xff]
    %v216 = vld [vmem:[#allocation5 + $0x3e0] sm:$0xff]
    %v217 = vld [vmem:[#allocation5 + $0x3e8] sm:$0xff]
    %v218 = vld [vmem:[#allocation5 + $0x3f0] sm:$0xff]
    %v219 = vld [vmem:[#allocation5 + $0x3f8] sm:$0xff]
    %v220 = vld [vmem:[#allocation5 + $0x400] sm:$0xff]
    %v221 = vld [vmem:[#allocation5 + $0x408] sm:$0xff]
    %v222 = vld [vmem:[#allocation5 + $0x410] sm:$0xf]
    %v223 = vld [vmem:[#allocation5 + $0x414] sm:$0xff]
    %v224 = vld [vmem:[#allocation5 + $0x41c] sm:$0xff]
    %v225 = vld [vmem:[#allocation5 + $0x424] sm:$0xff]
    %v226 = vld [vmem:[#allocation5 + $0x42c] sm:$0xff]
    %v227 = vld [vmem:[#allocation5 + $0x434] sm:$0xff]
    %v228 = vld [vmem:[#allocation5 + $0x43c] sm:$0xff]
    %v229 = vld [vmem:[#allocation5 + $0x444] sm:$0xff]
    %v230 = vld [vmem:[#allocation5 + $0x44c] sm:$0xff]
    %v231 = vld [vmem:[#allocation5 + $0x454] sm:$0xff]
    %v232 = vld [vmem:[#allocation5 + $0x45c] sm:$0xff]
    %v233 = vld [vmem:[#allocation5 + $0x464] sm:$0xff]
    %v234 = vld [vmem:[#allocation5 + $0x46c] sm:$0xff]
    %v235 = vld [vmem:[#allocation5 + $0x474] sm:$0xff]
    %v236 = vld [vmem:[#allocation5 + $0x47c] sm:$0xff]
    %v237 = vld [vmem:[#allocation5 + $0x484] sm:$0xf]
    %v238 = vld [vmem:[#allocation5 + $0x488] sm:$0xff]
    %v239 = vld [vmem:[#allocation5 + $0x490] sm:$0xff]
    %v240 = vld [vmem:[#allocation5 + $0x498] sm:$0xff]
    %v241 = vld [vmem:[#allocation5 + $0x4a0] sm:$0xff]
    %v242 = vld [vmem:[#allocation5 + $0x4a8] sm:$0xff]
    %v243 = vld [vmem:[#allocation5 + $0x4b0] sm:$0xff]
    %v244 = vld [vmem:[#allocation5 + $0x4b8] sm:$0xff]
    %v245 = vld [vmem:[#allocation5 + $0x4c0] sm:$0xff]
    %v246 = vld [vmem:[#allocation5 + $0x4c8] sm:$0xff]
    %v247 = vld [vmem:[#allocation5 + $0x4d0] sm:$0xff]
    %v248 = vld [vmem:[#allocation5 + $0x4d8] sm:$0xff]
    %v249 = vld [vmem:[#allocation5 + $0x4e0] sm:$0xff]
    %v250 = vld [vmem:[#allocation5 + $0x4e8] sm:$0xff]
    %v251 = vld [vmem:[#allocation5 + $0x4f0] sm:$0xff]
    %v252 = vld [vmem:[#allocation5 + $0x4f8] sm:$0xf]
    %v253 = vld [vmem:[#allocation5 + $0x4fc] sm:$0xff]
    %v254 = vld [vmem:[#allocation5 + $0x504] sm:$0xff]
    %v255 = vld [vmem:[#allocation5 + $0x50c] sm:$0xff]
    %v256 = vld [vmem:[#allocation5 + $0x514] sm:$0xff]
    %v257 = vld [vmem:[#allocation5 + $0x51c] sm:$0xff]
    %v258 = vld [vmem:[#allocation5 + $0x524] sm:$0xff]
    %v259 = vld [vmem:[#allocation5 + $0x52c] sm:$0xff]
    %v260 = vld [vmem:[#allocation5 + $0x534] sm:$0xff]
    %v261 = vld [vmem:[#allocation5 + $0x53c] sm:$0xff]
    %v262 = vld [vmem:[#allocation5 + $0x544] sm:$0xff]
    %v263 = vld [vmem:[#allocation5 + $0x54c] sm:$0xff]
    %v264 = vld [vmem:[#allocation5 + $0x554] sm:$0xff]
    %v265 = vld [vmem:[#allocation5 + $0x55c] sm:$0xff]
    %v266 = vld [vmem:[#allocation5 + $0x564] sm:$0xff]
    %v267 = vld [vmem:[#allocation5 + $0x56c] sm:$0xf]
    %v268 = vld [vmem:[#allocation5 + $0x570] sm:$0xff]
    %v269 = vld [vmem:[#allocation5 + $0x578] sm:$0xff]
    %v270 = vld [vmem:[#allocation5 + $0x580] sm:$0xff]
    %v271 = vld [vmem:[#allocation5 + $0x588] sm:$0xff]
    %v272 = vld [vmem:[#allocation5 + $0x590] sm:$0xff]
    %v273 = vld [vmem:[#allocation5 + $0x598] sm:$0xff]
    %v274 = vld [vmem:[#allocation5 + $0x5a0] sm:$0xff]
    %v275 = vld [vmem:[#allocation5 + $0x5a8] sm:$0xff]
    %v276 = vld [vmem:[#allocation5 + $0x5b0] sm:$0xff]
    %v277 = vld [vmem:[#allocation5 + $0x5b8] sm:$0xff]
    %v278 = vld [vmem:[#allocation5 + $0x5c0] sm:$0xff]
    %v279 = vld [vmem:[#allocation5 + $0x5c8] sm:$0xff]
    %v280 = vld [vmem:[#allocation5 + $0x5d0] sm:$0xff]
    %v281 = vld [vmem:[#allocation5 + $0x5d8] sm:$0xff]
    %v282 = vld [vmem:[#allocation5 + $0x5e0] sm:$0xf]
    %v283 = vld [vmem:[#allocation5 + $0x5e4] sm:$0xff]
    %v284 = vld [vmem:[#allocation5 + $0x5ec] sm:$0xff]
    %v285 = vld [vmem:[#allocation5 + $0x5f4] sm:$0xff]
    %v286 = vld [vmem:[#allocation5 + $0x5fc] sm:$0xff]
    %v287 = vld [vmem:[#allocation5 + $0x604] sm:$0xff]
    %v288 = vld [vmem:[#allocation5 + $0x60c] sm:$0xff]
    %v289 = vld [vmem:[#allocation5 + $0x614] sm:$0xff]
    %v290 = vld [vmem:[#allocation5 + $0x61c] sm:$0xff]
    %v291 = vld [vmem:[#allocation5 + $0x624] sm:$0xff]
    %v292 = vld [vmem:[#allocation5 + $0x62c] sm:$0xff]
    %v293 = vld [vmem:[#allocation5 + $0x634] sm:$0xff]
    %v294 = vld [vmem:[#allocation5 + $0x63c] sm:$0xff]
    %v295 = vld [vmem:[#allocation5 + $0x644] sm:$0xff]
    %v296 = vld [vmem:[#allocation5 + $0x64c] sm:$0xff]
    %v297 = vld [vmem:[#allocation5 + $0x654] sm:$0xf]
    %v298 = vld [vmem:[#allocation5 + $0x658] sm:$0xff]
    %v299 = vld [vmem:[#allocation5 + $0x660] sm:$0xff]
    %v300 = vld [vmem:[#allocation5 + $0x668] sm:$0xff]
    %v301 = vld [vmem:[#allocation5 + $0x670] sm:$0xff]
    %v302 = vld [vmem:[#allocation5 + $0x678] sm:$0xff]
    %v303 = vld [vmem:[#allocation5 + $0x680] sm:$0xff]
    %v304 = vld [vmem:[#allocation5 + $0x688] sm:$0xff]
    %v305 = vld [vmem:[#allocation5 + $0x690] sm:$0xff]
    %v306 = vld [vmem:[#allocation5 + $0x698] sm:$0xff]
    %v307 = vld [vmem:[#allocation5 + $0x6a0] sm:$0xff]
    %v308 = vld [vmem:[#allocation5 + $0x6a8] sm:$0xff]
    %v309 = vld [vmem:[#allocation5 + $0x6b0] sm:$0xff]
    %v310 = vld [vmem:[#allocation5 + $0x6b8] sm:$0xff]
    %v311 = vld [vmem:[#allocation5 + $0x6c0] sm:$0xff]
    %v312 = vld [vmem:[#allocation5 + $0x6c8] sm:$0xf]
    %v313 = vld [vmem:[#allocation5 + $0x6cc] sm:$0xff]
    %v314 = vld [vmem:[#allocation5 + $0x6d4] sm:$0xff]
    %v315 = vld [vmem:[#allocation5 + $0x6dc] sm:$0xff]
    %v316 = vld [vmem:[#allocation5 + $0x6e4] sm:$0xff]
    %v317 = vld [vmem:[#allocation5 + $0x6ec] sm:$0xff]
    %v318 = vld [vmem:[#allocation5 + $0x6f4] sm:$0xff]
    %v319 = vld [vmem:[#allocation5 + $0x6fc] sm:$0xff]
    %v320 = vld [vmem:[#allocation5 + $0x704] sm:$0xff]
    %v321 = vld [vmem:[#allocation5 + $0x70c] sm:$0xff]
    %v322 = vld [vmem:[#allocation5 + $0x714] sm:$0xff]
    %v323 = vld [vmem:[#allocation5 + $0x71c] sm:$0xff]
    %v324 = vld [vmem:[#allocation5 + $0x724] sm:$0xff]
    %v325 = vld [vmem:[#allocation5 + $0x72c] sm:$0xff]
    %v326 = vld [vmem:[#allocation5 + $0x734] sm:$0xff]
    %v327 = vld [vmem:[#allocation5 + $0x73c] sm:$0xf]
    %v328 = vld [vmem:[#allocation5 + $0x740] sm:$0xff]
    %v329 = vld [vmem:[#allocation5 + $0x748] sm:$0xff]
    %v330 = vld [vmem:[#allocation5 + $0x750] sm:$0xff]
    %v331 = vld [vmem:[#allocation5 + $0x758] sm:$0xff]
    %v332 = vld [vmem:[#allocation5 + $0x760] sm:$0xff]
    %v333 = vld [vmem:[#allocation5 + $0x768] sm:$0xff]
    %v334 = vld [vmem:[#allocation5 + $0x770] sm:$0xff]
    %v335 = vld [vmem:[#allocation5 + $0x778] sm:$0xff]
    %v336 = vld [vmem:[#allocation5 + $0x780] sm:$0xff]
    %v337 = vld [vmem:[#allocation5 + $0x788] sm:$0xff]
    %v338 = vld [vmem:[#allocation5 + $0x790] sm:$0xff]
    %v339 = vld [vmem:[#allocation5 + $0x798] sm:$0xff]
    %v340 = vld [vmem:[#allocation5 + $0x7a0] sm:$0xff]
    %v341 = vld [vmem:[#allocation5 + $0x7a8] sm:$0xff]
    %v342 = vld [vmem:[#allocation5 + $0x7b0] sm:$0xf]
    %v343 = vld [vmem:[#allocation5 + $0x7b4] sm:$0xff]
    %v344 = vld [vmem:[#allocation5 + $0x7bc] sm:$0xff]
    %v345 = vld [vmem:[#allocation5 + $0x7c4] sm:$0xff]
    %v346 = vld [vmem:[#allocation5 + $0x7cc] sm:$0xff]
    %v347 = vld [vmem:[#allocation5 + $0x7d4] sm:$0xff]
    %v348 = vld [vmem:[#allocation5 + $0x7dc] sm:$0xff]
    %v349 = vld [vmem:[#allocation5 + $0x7e4] sm:$0xff]
    %v350 = vld [vmem:[#allocation5 + $0x7ec] sm:$0xff]
    %v351 = vld [vmem:[#allocation5 + $0x7f4] sm:$0xff]
    %v352 = vld [vmem:[#allocation5 + $0x7fc] sm:$0xff]
    %v353 = vld [vmem:[#allocation5 + $0x804] sm:$0xff]
    %v354 = vld [vmem:[#allocation5 + $0x80c] sm:$0xff]
    %v355 = vld [vmem:[#allocation5 + $0x814] sm:$0xff]
    %v356 = vld [vmem:[#allocation5 + $0x81c] sm:$0xff]
    %v357 = vld [vmem:[#allocation5 + $0x824] sm:$0xf]
    %v358 = vld [vmem:[#allocation5 + $0x828] sm:$0xff]
    %v359 = vld [vmem:[#allocation5 + $0x830] sm:$0xff]
    %v360 = vld [vmem:[#allocation5 + $0x838] sm:$0xff]
    %v361 = vld [vmem:[#allocation5 + $0x840] sm:$0xff]
    %v362 = vld [vmem:[#allocation5 + $0x848] sm:$0xff]
    %v363 = vld [vmem:[#allocation5 + $0x850] sm:$0xff]
    %v364 = vld [vmem:[#allocation5 + $0x858] sm:$0xff]
    %v365 = vld [vmem:[#allocation5 + $0x860] sm:$0xff]
    %v366 = vld [vmem:[#allocation5 + $0x868] sm:$0xff]
    %v367 = vld [vmem:[#allocation5 + $0x870] sm:$0xff]
    %v368 = vld [vmem:[#allocation5 + $0x878] sm:$0xff]
    %v369 = vld [vmem:[#allocation5 + $0x880] sm:$0xff]
    %v370 = vld [vmem:[#allocation5 + $0x888] sm:$0xff]
    %v371 = vld [vmem:[#allocation5 + $0x890] sm:$0xff]
    %v372 = vld [vmem:[#allocation5 + $0x898] sm:$0xf]
    %v373 = vld [vmem:[#allocation5 + $0x89c] sm:$0xff]
    %v374 = vld [vmem:[#allocation5 + $0x8a4] sm:$0xff]
    %v375 = vld [vmem:[#allocation5 + $0x8ac] sm:$0xff]
    %v376 = vld [vmem:[#allocation5 + $0x8b4] sm:$0xff]
    %v377 = vld [vmem:[#allocation5 + $0x8bc] sm:$0xff]
    %v378 = vld [vmem:[#allocation5 + $0x8c4] sm:$0xff]
    %v379 = vld [vmem:[#allocation5 + $0x8cc] sm:$0xff]
    %v380 = vld [vmem:[#allocation5 + $0x8d4] sm:$0xff]
    %v381 = vld [vmem:[#allocation5 + $0x8dc] sm:$0xff]
    %v382 = vld [vmem:[#allocation5 + $0x8e4] sm:$0xff]
    %v383 = vld [vmem:[#allocation5 + $0x8ec] sm:$0xff]
    %v384 = vld [vmem:[#allocation5 + $0x8f4] sm:$0xff]
    %v385 = vld [vmem:[#allocation5 + $0x8fc] sm:$0xff]
    %v386 = vld [vmem:[#allocation5 + $0x904] sm:$0xff]
    %v387 = vld [vmem:[#allocation5 + $0x90c] sm:$0xf]
    %v388 = vld [vmem:[#allocation5 + $0x910] sm:$0xff]
    %v389 = vld [vmem:[#allocation5 + $0x918] sm:$0xff]
    %v390 = vld [vmem:[#allocation5 + $0x920] sm:$0xff]
    %v391 = vld [vmem:[#allocation5 + $0x928] sm:$0xff]
    %v392 = vld [vmem:[#allocation5 + $0x930] sm:$0xff]
    %v393 = vld [vmem:[#allocation5 + $0x938] sm:$0xff]
    %v394 = vld [vmem:[#allocation5 + $0x940] sm:$0xff]
    %v395 = vld [vmem:[#allocation5 + $0x948] sm:$0xff]
    %v396 = vld [vmem:[#allocation5 + $0x950] sm:$0xff]
    %v397 = vld [vmem:[#allocation5 + $0x958] sm:$0xff]
    %v398 = vld [vmem:[#allocation5 + $0x960] sm:$0xff]
    %v399 = vld [vmem:[#allocation5 + $0x968] sm:$0xff]
    %v400 = vld [vmem:[#allocation5 + $0x970] sm:$0xff]
    %v401 = vld [vmem:[#allocation5 + $0x978] sm:$0xff]
    %v402 = vld [vmem:[#allocation5 + $0x980] sm:$0xf]
    %v403 = vld [vmem:[#allocation5 + $0x984] sm:$0xff]
    %v404 = vld [vmem:[#allocation5 + $0x98c] sm:$0xff]
    %v405 = vld [vmem:[#allocation5 + $0x994] sm:$0xff]
    %v406 = vld [vmem:[#allocation5 + $0x99c] sm:$0xff]
    %v407 = vld [vmem:[#allocation5 + $0x9a4] sm:$0xff]
    %v408 = vld [vmem:[#allocation5 + $0x9ac] sm:$0xff]
    %v409 = vld [vmem:[#allocation5 + $0x9b4] sm:$0xff]
    %v410 = vld [vmem:[#allocation5 + $0x9bc] sm:$0xff]
    %v411 = vld [vmem:[#allocation5 + $0x9c4] sm:$0xff]
    %v412 = vld [vmem:[#allocation5 + $0x9cc] sm:$0xff]
    %v413 = vld [vmem:[#allocation5 + $0x9d4] sm:$0xff]
    %v414 = vld [vmem:[#allocation5 + $0x9dc] sm:$0xff]
    %v415 = vld [vmem:[#allocation5 + $0x9e4] sm:$0xff]
    %v416 = vld [vmem:[#allocation5 + $0x9ec] sm:$0xff]
    %v417 = vld [vmem:[#allocation5 + $0x9f4] sm:$0xf]
    %v418 = vld [vmem:[#allocation5 + $0x9f8] sm:$0xff]
    %v419 = vld [vmem:[#allocation5 + $0xa00] sm:$0xff]
    %v420 = vld [vmem:[#allocation5 + $0xa08] sm:$0xff]
    %v421 = vld [vmem:[#allocation5 + $0xa10] sm:$0xff]
    %v422 = vld [vmem:[#allocation5 + $0xa18] sm:$0xff]
    %v423 = vld [vmem:[#allocation5 + $0xa20] sm:$0xff]
    %v424 = vld [vmem:[#allocation5 + $0xa28] sm:$0xff]
    %v425 = vld [vmem:[#allocation5 + $0xa30] sm:$0xff]
    %v426 = vld [vmem:[#allocation5 + $0xa38] sm:$0xff]
    %v427 = vld [vmem:[#allocation5 + $0xa40] sm:$0xff]
    %v428 = vld [vmem:[#allocation5 + $0xa48] sm:$0xff]
    %v429 = vld [vmem:[#allocation5 + $0xa50] sm:$0xff]
    %v430 = vld [vmem:[#allocation5 + $0xa58] sm:$0xff]
    %v431 = vld [vmem:[#allocation5 + $0xa60] sm:$0xff]
    %v432 = vld [vmem:[#allocation5 + $0xa68] sm:$0xf]
    %v433 = vld [vmem:[#allocation5 + $0xa6c] sm:$0xff]
    %v434 = vld [vmem:[#allocation5 + $0xa74] sm:$0xff]
    %v435 = vld [vmem:[#allocation5 + $0xa7c] sm:$0xff]
    %v436 = vld [vmem:[#allocation5 + $0xa84] sm:$0xff]
    %v437 = vld [vmem:[#allocation5 + $0xa8c] sm:$0xff]
    %v438 = vld [vmem:[#allocation5 + $0xa94] sm:$0xff]
    %v439 = vld [vmem:[#allocation5 + $0xa9c] sm:$0xff]
    %v440 = vld [vmem:[#allocation5 + $0xaa4] sm:$0xff]
    %v441 = vld [vmem:[#allocation5 + $0xaac] sm:$0xff]
    %v442 = vld [vmem:[#allocation5 + $0xab4] sm:$0xff]
    %v443 = vld [vmem:[#allocation5 + $0xabc] sm:$0xff]
    %v444 = vld [vmem:[#allocation5 + $0xac4] sm:$0xff]
    %v445 = vld [vmem:[#allocation5 + $0xacc] sm:$0xff]
    %v446 = vld [vmem:[#allocation5 + $0xad4] sm:$0xff]
    %v447 = vld [vmem:[#allocation5 + $0xadc] sm:$0xf]
    %v448 = vld [vmem:[#allocation5 + $0xae0] sm:$0xff]
    %v449 = vld [vmem:[#allocation5 + $0xae8] sm:$0xff]
    %v450 = vld [vmem:[#allocation5 + $0xaf0] sm:$0xff]
    %v451 = vld [vmem:[#allocation5 + $0xaf8] sm:$0xff]
    %v452 = vld [vmem:[#allocation5 + $0xb00] sm:$0xff]
    %v453 = vld [vmem:[#allocation5 + $0xb08] sm:$0xff]
    %v454 = vld [vmem:[#allocation5 + $0xb10] sm:$0xff]
    %v455 = vld [vmem:[#allocation5 + $0xb18] sm:$0xff]
    %v456 = vld [vmem:[#allocation5 + $0xb20] sm:$0xff]
    %v457 = vld [vmem:[#allocation5 + $0xb28] sm:$0xff]
    %v458 = vld [vmem:[#allocation5 + $0xb30] sm:$0xff]
    %v459 = vld [vmem:[#allocation5 + $0xb38] sm:$0xff]
    %v460 = vld [vmem:[#allocation5 + $0xb40] sm:$0xff]
    %v461 = vld [vmem:[#allocation5 + $0xb48] sm:$0xff]
    %v462 = vld [vmem:[#allocation5 + $0xb50] sm:$0xf]
    %v463 = vld [vmem:[#allocation5 + $0xb54] sm:$0xff]
    %v464 = vld [vmem:[#allocation5 + $0xb5c] sm:$0xff]
    %v465 = vld [vmem:[#allocation5 + $0xb64] sm:$0xff]
    %v466 = vld [vmem:[#allocation5 + $0xb6c] sm:$0xff]
    %v467 = vld [vmem:[#allocation5 + $0xb74] sm:$0xff]
    %v468 = vld [vmem:[#allocation5 + $0xb7c] sm:$0xff]
    %v469 = vld [vmem:[#allocation5 + $0xb84] sm:$0xff]
    %v470 = vld [vmem:[#allocation5 + $0xb8c] sm:$0xff]
    %v471 = vld [vmem:[#allocation5 + $0xb94] sm:$0xff]
    %v472 = vld [vmem:[#allocation5 + $0xb9c] sm:$0xff]
    %v473 = vld [vmem:[#allocation5 + $0xba4] sm:$0xff]
    %v474 = vld [vmem:[#allocation5 + $0xbac] sm:$0xff]
    %v475 = vld [vmem:[#allocation5 + $0xbb4] sm:$0xff]
    %v476 = vld [vmem:[#allocation5 + $0xbbc] sm:$0xff]
    %v477 = vld [vmem:[#allocation5 + $0xbc4] sm:$0xf]
    %v478 = vld [vmem:[#allocation5 + $0xbc8] sm:$0xff]
    %v479 = vld [vmem:[#allocation5 + $0xbd0] sm:$0xff]
    %v480 = vld [vmem:[#allocation5 + $0xbd8] sm:$0xff]
    %v481 = vld [vmem:[#allocation5 + $0xbe0] sm:$0xff]
    %v482 = vld [vmem:[#allocation5 + $0xbe8] sm:$0xff]
    %v483 = vld [vmem:[#allocation5 + $0xbf0] sm:$0xff]
    %v484 = vld [vmem:[#allocation5 + $0xbf8] sm:$0xff]
    %v485 = vld [vmem:[#allocation5 + $0xc00] sm:$0xff]
    %v486 = vld [vmem:[#allocation5 + $0xc08] sm:$0xff]
    %v487 = vld [vmem:[#allocation5 + $0xc10] sm:$0xff]
    %v488 = vld [vmem:[#allocation5 + $0xc18] sm:$0xff]
    %v489 = vld [vmem:[#allocation5 + $0xc20] sm:$0xff]
    %v490 = vld [vmem:[#allocation5 + $0xc28] sm:$0xff]
    %v491 = vld [vmem:[#allocation5 + $0xc30] sm:$0xff]
    %v492 = vld [vmem:[#allocation5 + $0xc38] sm:$0xf]
    %v493 = vld [vmem:[#allocation5 + $0xc3c] sm:$0xff]
    %v494 = vld [vmem:[#allocation5 + $0xc44] sm:$0xff]
    %v495 = vld [vmem:[#allocation5 + $0xc4c] sm:$0xff]
    %v496 = vld [vmem:[#allocation5 + $0xc54] sm:$0xff]
    %v497 = vld [vmem:[#allocation5 + $0xc5c] sm:$0xff]
    %v498 = vld [vmem:[#allocation5 + $0xc64] sm:$0xff]
    %v499 = vld [vmem:[#allocation5 + $0xc6c] sm:$0xff]
    %v500 = vld [vmem:[#allocation5 + $0xc74] sm:$0xff]
    %v501 = vld [vmem:[#allocation5 + $0xc7c] sm:$0xff]
    %v502 = vld [vmem:[#allocation5 + $0xc84] sm:$0xff]
    %v503 = vld [vmem:[#allocation5 + $0xc8c] sm:$0xff]
    %v504 = vld [vmem:[#allocation5 + $0xc94] sm:$0xff]
    %v505 = vld [vmem:[#allocation5 + $0xc9c] sm:$0xff]
    %v506 = vld [vmem:[#allocation5 + $0xca4] sm:$0xff]
    %v507 = vld [vmem:[#allocation5 + $0xcac] sm:$0xf]
    %v508 = vld [vmem:[#allocation5 + $0xcb0] sm:$0xff]
    %v509 = vld [vmem:[#allocation5 + $0xcb8] sm:$0xff]
    %v510 = vld [vmem:[#allocation5 + $0xcc0] sm:$0xff]
    %v511 = vld [vmem:[#allocation5 + $0xcc8] sm:$0xff]
    %v512 = vld [vmem:[#allocation5 + $0xcd0] sm:$0xff]
    %v513 = vld [vmem:[#allocation5 + $0xcd8] sm:$0xff]
    %v514 = vld [vmem:[#allocation5 + $0xce0] sm:$0xff]
    %v515 = vld [vmem:[#allocation5 + $0xce8] sm:$0xff]
    %v516 = vld [vmem:[#allocation5 + $0xcf0] sm:$0xff]
    %v517 = vld [vmem:[#allocation5 + $0xcf8] sm:$0xff]
    %v518 = vld [vmem:[#allocation5 + $0xd00] sm:$0xff]
    %v519 = vld [vmem:[#allocation5 + $0xd08] sm:$0xff]
    %v520 = vld [vmem:[#allocation5 + $0xd10] sm:$0xff]
    %v521 = vld [vmem:[#allocation5 + $0xd18] sm:$0xff]
    %v522 = vld [vmem:[#allocation5 + $0xd20] sm:$0xf]
    %v523 = vld [vmem:[#allocation5 + $0xd24] sm:$0xff]
    %v524 = vld [vmem:[#allocation5 + $0xd2c] sm:$0xff]
    %v525 = vld [vmem:[#allocation5 + $0xd34] sm:$0xff]
    %v526 = vld [vmem:[#allocation5 + $0xd3c] sm:$0xff]
    %v527 = vld [vmem:[#allocation5 + $0xd44] sm:$0xff]
    %v528 = vld [vmem:[#allocation5 + $0xd4c] sm:$0xff]
    %v529 = vld [vmem:[#allocation5 + $0xd54] sm:$0xff]
    %v530 = vld [vmem:[#allocation5 + $0xd5c] sm:$0xff]
    %v531 = vld [vmem:[#allocation5 + $0xd64] sm:$0xff]
    %v532 = vld [vmem:[#allocation5 + $0xd6c] sm:$0xff]
    %v533 = vld [vmem:[#allocation5 + $0xd74] sm:$0xff]
    %v534 = vld [vmem:[#allocation5 + $0xd7c] sm:$0xff]
    %v535 = vld [vmem:[#allocation5 + $0xd84] sm:$0xff]
    %v536 = vld [vmem:[#allocation5 + $0xd8c] sm:$0xff]
    %v537 = vld [vmem:[#allocation5 + $0xd94] sm:$0xf]
    %v538 = vld [vmem:[#allocation5 + $0xd98] sm:$0xff]
    %v539 = vld [vmem:[#allocation5 + $0xda0] sm:$0xff]
    %v540 = vld [vmem:[#allocation5 + $0xda8] sm:$0xff]
    %v541 = vld [vmem:[#allocation5 + $0xdb0] sm:$0xff]
    %v542 = vld [vmem:[#allocation5 + $0xdb8] sm:$0xff]
    %v543 = vld [vmem:[#allocation5 + $0xdc0] sm:$0xff]
    %v544 = vld [vmem:[#allocation5 + $0xdc8] sm:$0xff]
    %v545 = vld [vmem:[#allocation5 + $0xdd0] sm:$0xff]
    %v546 = vld [vmem:[#allocation5 + $0xdd8] sm:$0xff]
    %v547 = vld [vmem:[#allocation5 + $0xde0] sm:$0xff]
    %v548 = vld [vmem:[#allocation5 + $0xde8] sm:$0xff]
    %v549 = vld [vmem:[#allocation5 + $0xdf0] sm:$0xff]
    %v550 = vld [vmem:[#allocation5 + $0xdf8] sm:$0xff]
    %v551 = vld [vmem:[#allocation5 + $0xe00] sm:$0xff]
    %v552 = vld [vmem:[#allocation5 + $0xe08] sm:$0xf]
    %v553 = vld [vmem:[#allocation5 + $0xe0c] sm:$0xff]
    %v554 = vld [vmem:[#allocation5 + $0xe14] sm:$0xff]
    %v555 = vld [vmem:[#allocation5 + $0xe1c] sm:$0xff]
    %v556 = vld [vmem:[#allocation5 + $0xe24] sm:$0xff]
    %v557 = vld [vmem:[#allocation5 + $0xe2c] sm:$0xff]
    %v558 = vld [vmem:[#allocation5 + $0xe34] sm:$0xff]
    %v559 = vld [vmem:[#allocation5 + $0xe3c] sm:$0xff]
    %v560 = vld [vmem:[#allocation5 + $0xe44] sm:$0xff]
    %v561 = vld [vmem:[#allocation5 + $0xe4c] sm:$0xff]
    %v562 = vld [vmem:[#allocation5 + $0xe54] sm:$0xff]
    %v563 = vld [vmem:[#allocation5 + $0xe5c] sm:$0xff]
    %v564 = vld [vmem:[#allocation5 + $0xe64] sm:$0xff]
    %v565 = vld [vmem:[#allocation5 + $0xe6c] sm:$0xff]
    %v566 = vld [vmem:[#allocation5 + $0xe74] sm:$0xff]
    %v567 = vld [vmem:[#allocation5 + $0xe7c] sm:$0xf]
    %v568 = vld [vmem:[#allocation5 + $0xe80] sm:$0xff]
    %v569 = vld [vmem:[#allocation5 + $0xe88] sm:$0xff]
    %v570 = vld [vmem:[#allocation5 + $0xe90] sm:$0xff]
    %v571 = vld [vmem:[#allocation5 + $0xe98] sm:$0xff]
    %v572 = vld [vmem:[#allocation5 + $0xea0] sm:$0xff]
    %v573 = vld [vmem:[#allocation5 + $0xea8] sm:$0xff]
    %v574 = vld [vmem:[#allocation5 + $0xeb0] sm:$0xff]
    %v575 = vld [vmem:[#allocation5 + $0xeb8] sm:$0xff]
    %v576 = vld [vmem:[#allocation5 + $0xec0] sm:$0xff]
    %v577 = vld [vmem:[#allocation5 + $0xec8] sm:$0xff]
    %v578 = vld [vmem:[#allocation5 + $0xed0] sm:$0xff]
    %v579 = vld [vmem:[#allocation5 + $0xed8] sm:$0xff]
    %v580 = vld [vmem:[#allocation5 + $0xee0] sm:$0xff]
    %v581 = vld [vmem:[#allocation5 + $0xee8] sm:$0xff]
    %v582 = vld [vmem:[#allocation5 + $0xef0] sm:$0xf]
    %v583 = vld [vmem:[#allocation5 + $0xef4] sm:$0xff]
    %v584 = vld [vmem:[#allocation5 + $0xefc] sm:$0xff]
    %v585 = vld [vmem:[#allocation5 + $0xf04] sm:$0xff]
    %v586 = vld [vmem:[#allocation5 + $0xf0c] sm:$0xff]
    %v587 = vld [vmem:[#allocation5 + $0xf14] sm:$0xff]
    %v588 = vld [vmem:[#allocation5 + $0xf1c] sm:$0xff]
    %v589 = vld [vmem:[#allocation5 + $0xf24] sm:$0xff]
    %v590 = vld [vmem:[#allocation5 + $0xf2c] sm:$0xff]
    %v591 = vld [vmem:[#allocation5 + $0xf34] sm:$0xff]
    %v592 = vld [vmem:[#allocation5 + $0xf3c] sm:$0xff]
    %v593 = vld [vmem:[#allocation5 + $0xf44] sm:$0xff]
    %v594 = vld [vmem:[#allocation5 + $0xf4c] sm:$0xff]
    %v595 = vld [vmem:[#allocation5 + $0xf54] sm:$0xff]
    %v596 = vld [vmem:[#allocation5 + $0xf5c] sm:$0xff]
    %v597 = vld [vmem:[#allocation5 + $0xf64] sm:$0xf]
    %v598 = vld [vmem:[#allocation5 + $0xf68] sm:$0xff]
    %v599 = vld [vmem:[#allocation5 + $0xf70] sm:$0xff]
    %v600 = vld [vmem:[#allocation5 + $0xf78] sm:$0xff]
    %v601 = vld [vmem:[#allocation5 + $0xf80] sm:$0xff]
    %v602 = vld [vmem:[#allocation5 + $0xf88] sm:$0xff]
    %v603 = vld [vmem:[#allocation5 + $0xf90] sm:$0xff]
    %v604 = vld [vmem:[#allocation5 + $0xf98] sm:$0xff]
    %v605 = vld [vmem:[#allocation5 + $0xfa0] sm:$0xff]
    %v606 = vld [vmem:[#allocation5 + $0xfa8] sm:$0xff]
    %v607 = vld [vmem:[#allocation5 + $0xfb0] sm:$0xff]
    %v608 = vld [vmem:[#allocation5 + $0xfb8] sm:$0xff]
    %v609 = vld [vmem:[#allocation5 + $0xfc0] sm:$0xff]
    %v610 = vld [vmem:[#allocation5 + $0xfc8] sm:$0xff]
    %v611 = vld [vmem:[#allocation5 + $0xfd0] sm:$0xff]
    %v612 = vld [vmem:[#allocation5 + $0xfd8] sm:$0xf]
    %v613 = vld [vmem:[#allocation5 + $0xfdc] sm:$0xff]
    %v614 = vld [vmem:[#allocation5 + $0xfe4] sm:$0xff]
    %v615 = vld [vmem:[#allocation5 + $0xfec] sm:$0xff]
    %v616 = vld [vmem:[#allocation5 + $0xff4] sm:$0xff]
    %v617 = vld [vmem:[#allocation5 + $0xffc] sm:$0xff]
    %v618 = vld [vmem:[#allocation5 + $0x1004] sm:$0xff]
    %v619 = vld [vmem:[#allocation5 + $0x100c] sm:$0xff]
    %v620 = vld [vmem:[#allocation5 + $0x1014] sm:$0xff]
    %v621 = vld [vmem:[#allocation5 + $0x101c] sm:$0xff]
    %v622 = vld [vmem:[#allocation5 + $0x1024] sm:$0xff]
    %v623 = vld [vmem:[#allocation5 + $0x102c] sm:$0xff]
    %v624 = vld [vmem:[#allocation5 + $0x1034] sm:$0xff]
    %v625 = vld [vmem:[#allocation5 + $0x103c] sm:$0xff]
    %v626 = vld [vmem:[#allocation5 + $0x1044] sm:$0xff]
    %v627 = vld [vmem:[#allocation5 + $0x104c] sm:$0xf]
    %v628 = vld [vmem:[#allocation5 + $0x1050] sm:$0xff]
    %v629 = vld [vmem:[#allocation5 + $0x1058] sm:$0xff]
    %v630 = vld [vmem:[#allocation5 + $0x1060] sm:$0xff]
    %v631 = vld [vmem:[#allocation5 + $0x1068] sm:$0xff]
    %v632 = vld [vmem:[#allocation5 + $0x1070] sm:$0xff]
    %v633 = vld [vmem:[#allocation5 + $0x1078] sm:$0xff]
    %v634 = vld [vmem:[#allocation5 + $0x1080] sm:$0xff]
    %v635 = vld [vmem:[#allocation5 + $0x1088] sm:$0xff]
    %v636 = vld [vmem:[#allocation5 + $0x1090] sm:$0xff]
    %v637 = vld [vmem:[#allocation5 + $0x1098] sm:$0xff]
    %v638 = vld [vmem:[#allocation5 + $0x10a0] sm:$0xff]
    %v639 = vld [vmem:[#allocation5 + $0x10a8] sm:$0xff]
    %v640 = vld [vmem:[#allocation5 + $0x10b0] sm:$0xff]
    %v641 = vld [vmem:[#allocation5 + $0x10b8] sm:$0xff]
    %v642 = vld [vmem:[#allocation5 + $0x10c0] sm:$0xf]
    %v643 = vld [vmem:[#allocation5 + $0x10c4] sm:$0xff]
    %v644 = vld [vmem:[#allocation5 + $0x10cc] sm:$0xff]
    %v645 = vld [vmem:[#allocation5 + $0x10d4] sm:$0xff]
    %v646 = vld [vmem:[#allocation5 + $0x10dc] sm:$0xff]
    %v647 = vld [vmem:[#allocation5 + $0x10e4] sm:$0xff]
    %v648 = vld [vmem:[#allocation5 + $0x10ec] sm:$0xff]
    %v649 = vld [vmem:[#allocation5 + $0x10f4] sm:$0xff]
    %v650 = vld [vmem:[#allocation5 + $0x10fc] sm:$0xff]
    %v651 = vld [vmem:[#allocation5 + $0x1104] sm:$0xff]
    %v652 = vld [vmem:[#allocation5 + $0x110c] sm:$0xff]
    %v653 = vld [vmem:[#allocation5 + $0x1114] sm:$0xff]
    %v654 = vld [vmem:[#allocation5 + $0x111c] sm:$0xff]
    %v655 = vld [vmem:[#allocation5 + $0x1124] sm:$0xff]
    %v656 = vld [vmem:[#allocation5 + $0x112c] sm:$0xff]
    %v657 = vld [vmem:[#allocation5 + $0x1134] sm:$0xf]
    %v658 = vld [vmem:[#allocation5 + $0x1138] sm:$0xff]
    %v659 = vld [vmem:[#allocation5 + $0x1140] sm:$0xff]
    %v660 = vld [vmem:[#allocation5 + $0x1148] sm:$0xff]
    %v661 = vld [vmem:[#allocation5 + $0x1150] sm:$0xff]
    %v662 = vld [vmem:[#allocation5 + $0x1158] sm:$0xff]
    %v663 = vld [vmem:[#allocation5 + $0x1160] sm:$0xff]
    %v664 = vld [vmem:[#allocation5 + $0x1168] sm:$0xff]
    %v665 = vld [vmem:[#allocation5 + $0x1170] sm:$0xff]
    %v666 = vld [vmem:[#allocation5 + $0x1178] sm:$0xff]
    %v667 = vld [vmem:[#allocation5 + $0x1180] sm:$0xff]
    %v668 = vld [vmem:[#allocation5 + $0x1188] sm:$0xff]
    %v669 = vld [vmem:[#allocation5 + $0x1190] sm:$0xff]
    %v670 = vld [vmem:[#allocation5 + $0x1198] sm:$0xff]
    %v671 = vld [vmem:[#allocation5 + $0x11a0] sm:$0xff]
    %v672 = vld [vmem:[#allocation5 + $0x11a8] sm:$0xf]
    %v673 = vld [vmem:[#allocation5 + $0x11ac] sm:$0xff]
    %v674 = vld [vmem:[#allocation5 + $0x11b4] sm:$0xff]
    %v675 = vld [vmem:[#allocation5 + $0x11bc] sm:$0xff]
    %v676 = vld [vmem:[#allocation5 + $0x11c4] sm:$0xff]
    %v677 = vld [vmem:[#allocation5 + $0x11cc] sm:$0xff]
    %v678 = vld [vmem:[#allocation5 + $0x11d4] sm:$0xff]
    %v679 = vld [vmem:[#allocation5 + $0x11dc] sm:$0xff]
    %v680 = vld [vmem:[#allocation5 + $0x11e4] sm:$0xff]
    %v681 = vld [vmem:[#allocation5 + $0x11ec] sm:$0xff]
    %v682 = vld [vmem:[#allocation5 + $0x11f4] sm:$0xff]
    %v683 = vld [vmem:[#allocation5 + $0x11fc] sm:$0xff]
    %v684 = vld [vmem:[#allocation5 + $0x1204] sm:$0xff]
    %v685 = vld [vmem:[#allocation5 + $0x120c] sm:$0xff]
    %v686 = vld [vmem:[#allocation5 + $0x1214] sm:$0xff]
    %v687 = vld [vmem:[#allocation5 + $0x121c] sm:$0xf]
    %v688 = vld [vmem:[#allocation5 + $0x1220] sm:$0xff]
    %v689 = vld [vmem:[#allocation5 + $0x1228] sm:$0xff]
    %v690 = vld [vmem:[#allocation5 + $0x1230] sm:$0xff]
    %v691 = vld [vmem:[#allocation5 + $0x1238] sm:$0xff]
    %v692 = vld [vmem:[#allocation5 + $0x1240] sm:$0xff]
    %v693 = vld [vmem:[#allocation5 + $0x1248] sm:$0xff]
    %v694 = vld [vmem:[#allocation5 + $0x1250] sm:$0xff]
    %v695 = vld [vmem:[#allocation5 + $0x1258] sm:$0xff]
    %v696 = vld [vmem:[#allocation5 + $0x1260] sm:$0xff]
    %v697 = vld [vmem:[#allocation5 + $0x1268] sm:$0xff]
    %v698 = vld [vmem:[#allocation5 + $0x1270] sm:$0xff]
    %v699 = vld [vmem:[#allocation5 + $0x1278] sm:$0xff]
    %v700 = vld [vmem:[#allocation5 + $0x1280] sm:$0xff]
    %v701 = vld [vmem:[#allocation5 + $0x1288] sm:$0xff]
    %v702 = vld [vmem:[#allocation5 + $0x1290] sm:$0xf]
    %v703 = vld [vmem:[#allocation5 + $0x1294] sm:$0xff]
    %v704 = vld [vmem:[#allocation5 + $0x129c] sm:$0xff]
    %v705 = vld [vmem:[#allocation5 + $0x12a4] sm:$0xff]
    %v706 = vld [vmem:[#allocation5 + $0x12ac] sm:$0xff]
    %v707 = vld [vmem:[#allocation5 + $0x12b4] sm:$0xff]
    %v708 = vld [vmem:[#allocation5 + $0x12bc] sm:$0xff]
    %v709 = vld [vmem:[#allocation5 + $0x12c4] sm:$0xff]
    %v710 = vld [vmem:[#allocation5 + $0x12cc] sm:$0xff]
    %v711 = vld [vmem:[#allocation5 + $0x12d4] sm:$0xff]
    %v712 = vld [vmem:[#allocation5 + $0x12dc] sm:$0xff]
    %v713 = vld [vmem:[#allocation5 + $0x12e4] sm:$0xff]
    %v714 = vld [vmem:[#allocation5 + $0x12ec] sm:$0xff]
    %v715 = vld [vmem:[#allocation5 + $0x12f4] sm:$0xff]
    %v716 = vld [vmem:[#allocation5 + $0x12fc] sm:$0xff]
    %v717 = vld [vmem:[#allocation5 + $0x1304] sm:$0xf]
    %v718 = vld [vmem:[#allocation5 + $0x1308] sm:$0xff]
    %v719 = vld [vmem:[#allocation5 + $0x1310] sm:$0xff]
    %v720 = vld [vmem:[#allocation5 + $0x1318] sm:$0xff]
    %v721 = vld [vmem:[#allocation5 + $0x1320] sm:$0xff]
    %v722 = vld [vmem:[#allocation5 + $0x1328] sm:$0xff]
    %v723 = vld [vmem:[#allocation5 + $0x1330] sm:$0xff]
    %v724 = vld [vmem:[#allocation5 + $0x1338] sm:$0xff]
    %v725 = vld [vmem:[#allocation5 + $0x1340] sm:$0xff]
    %v726 = vld [vmem:[#allocation5 + $0x1348] sm:$0xff]
    %v727 = vld [vmem:[#allocation5 + $0x1350] sm:$0xff]
    %v728 = vld [vmem:[#allocation5 + $0x1358] sm:$0xff]
    %v729 = vld [vmem:[#allocation5 + $0x1360] sm:$0xff]
    %v730 = vld [vmem:[#allocation5 + $0x1368] sm:$0xff]
    %v731 = vld [vmem:[#allocation5 + $0x1370] sm:$0xff]
    %v732 = vld [vmem:[#allocation5 + $0x1378] sm:$0xf]
    %v733 = vld [vmem:[#allocation5 + $0x137c] sm:$0xff]
    %v734 = vld [vmem:[#allocation5 + $0x1384] sm:$0xff]
    %v735 = vld [vmem:[#allocation5 + $0x138c] sm:$0xff]
    %v736 = vld [vmem:[#allocation5 + $0x1394] sm:$0xff]
    %v737 = vld [vmem:[#allocation5 + $0x139c] sm:$0xff]
    %v738 = vld [vmem:[#allocation5 + $0x13a4] sm:$0xff]
    %v739 = vld [vmem:[#allocation5 + $0x13ac] sm:$0xff]
    %v740 = vld [vmem:[#allocation5 + $0x13b4] sm:$0xff]
    %v741 = vld [vmem:[#allocation5 + $0x13bc] sm:$0xff]
    %v742 = vld [vmem:[#allocation5 + $0x13c4] sm:$0xff]
    %v743 = vld [vmem:[#allocation5 + $0x13cc] sm:$0xff]
    %v744 = vld [vmem:[#allocation5 + $0x13d4] sm:$0xff]
    %v745 = vld [vmem:[#allocation5 + $0x13dc] sm:$0xff]
    %v746 = vld [vmem:[#allocation5 + $0x13e4] sm:$0xff]
    %v747 = vld [vmem:[#allocation5 + $0x13ec] sm:$0xf]
    %v748 = vld [vmem:[#allocation5 + $0x13f0] sm:$0xff]
    %v749 = vld [vmem:[#allocation5 + $0x13f8] sm:$0xff]
    %v750 = vld [vmem:[#allocation5 + $0x1400] sm:$0xff]
    %v751 = vld [vmem:[#allocation5 + $0x1408] sm:$0xff]
    %v752 = vld [vmem:[#allocation5 + $0x1410] sm:$0xff]
    %v753 = vld [vmem:[#allocation5 + $0x1418] sm:$0xff]
    %v754 = vld [vmem:[#allocation5 + $0x1420] sm:$0xff]
    %v755 = vld [vmem:[#allocation5 + $0x1428] sm:$0xff]
    %v756 = vld [vmem:[#allocation5 + $0x1430] sm:$0xff]
    %v757 = vld [vmem:[#allocation5 + $0x1438] sm:$0xff]
    %v758 = vld [vmem:[#allocation5 + $0x1440] sm:$0xff]
    %v759 = vld [vmem:[#allocation5 + $0x1448] sm:$0xff]
    %v760 = vld [vmem:[#allocation5 + $0x1450] sm:$0xff]
    %v761 = vld [vmem:[#allocation5 + $0x1458] sm:$0xff]
    %v762 = vld [vmem:[#allocation5 + $0x1460] sm:$0xf]
    %v763 = vld [vmem:[#allocation5 + $0x1464] sm:$0xff]
    %v764 = vld [vmem:[#allocation5 + $0x146c] sm:$0xff]
    %v765 = vld [vmem:[#allocation5 + $0x1474] sm:$0xff]
    %v766 = vld [vmem:[#allocation5 + $0x147c] sm:$0xff]
    %v767 = vld [vmem:[#allocation5 + $0x1484] sm:$0xff]
    %v768 = vld [vmem:[#allocation5 + $0x148c] sm:$0xff]
    %v769 = vld [vmem:[#allocation5 + $0x1494] sm:$0xff]
    %v770 = vld [vmem:[#allocation5 + $0x149c] sm:$0xff]
    %v771 = vld [vmem:[#allocation5 + $0x14a4] sm:$0xff]
    %v772 = vld [vmem:[#allocation5 + $0x14ac] sm:$0xff]
    %v773 = vld [vmem:[#allocation5 + $0x14b4] sm:$0xff]
    %v774 = vld [vmem:[#allocation5 + $0x14bc] sm:$0xff]
    %v775 = vld [vmem:[#allocation5 + $0x14c4] sm:$0xff]
    %v776 = vld [vmem:[#allocation5 + $0x14cc] sm:$0xff]
    %v777 = vld [vmem:[#allocation5 + $0x14d4] sm:$0xf]
    %v778 = vld [vmem:[#allocation5 + $0x14d8] sm:$0xff]
    %v779 = vld [vmem:[#allocation5 + $0x14e0] sm:$0xff]
    %v780 = vld [vmem:[#allocation5 + $0x14e8] sm:$0xff]
    %v781 = vld [vmem:[#allocation5 + $0x14f0] sm:$0xff]
    %v782 = vld [vmem:[#allocation5 + $0x14f8] sm:$0xff]
    %v783 = vld [vmem:[#allocation5 + $0x1500] sm:$0xff]
    %v784 = vld [vmem:[#allocation5 + $0x1508] sm:$0xff]
    %v785 = vld [vmem:[#allocation5 + $0x1510] sm:$0xff]
    %v786 = vld [vmem:[#allocation5 + $0x1518] sm:$0xff]
    %v787 = vld [vmem:[#allocation5 + $0x1520] sm:$0xff]
    %v788 = vld [vmem:[#allocation5 + $0x1528] sm:$0xff]
    %v789 = vld [vmem:[#allocation5 + $0x1530] sm:$0xff]
    %v790 = vld [vmem:[#allocation5 + $0x1538] sm:$0xff]
    %v791 = vld [vmem:[#allocation5 + $0x1540] sm:$0xff]
    %v792 = vld [vmem:[#allocation5 + $0x1548] sm:$0xf]
    %v793 = vld [vmem:[#allocation5 + $0x154c] sm:$0xff]
    %v794 = vld [vmem:[#allocation5 + $0x1554] sm:$0xff]
    %v795 = vld [vmem:[#allocation5 + $0x155c] sm:$0xff]
    %v796 = vld [vmem:[#allocation5 + $0x1564] sm:$0xff]
    %v797 = vld [vmem:[#allocation5 + $0x156c] sm:$0xff]
    %v798 = vld [vmem:[#allocation5 + $0x1574] sm:$0xff]
    %v799 = vld [vmem:[#allocation5 + $0x157c] sm:$0xff]
    %v800 = vld [vmem:[#allocation5 + $0x1584] sm:$0xff]
    %v801 = vld [vmem:[#allocation5 + $0x158c] sm:$0xff]
    %v802 = vld [vmem:[#allocation5 + $0x1594] sm:$0xff]
    %v803 = vld [vmem:[#allocation5 + $0x159c] sm:$0xff]
    %v804 = vld [vmem:[#allocation5 + $0x15a4] sm:$0xff]
    %v805 = vld [vmem:[#allocation5 + $0x15ac] sm:$0xff]
    %v806 = vld [vmem:[#allocation5 + $0x15b4] sm:$0xff]
    %v807 = vld [vmem:[#allocation5 + $0x15bc] sm:$0xf]
    %v808 = vld [vmem:[#allocation5 + $0x15c0] sm:$0xff]
    %v809 = vld [vmem:[#allocation5 + $0x15c8] sm:$0xff]
    %v810 = vld [vmem:[#allocation5 + $0x15d0] sm:$0xff]
    %v811 = vld [vmem:[#allocation5 + $0x15d8] sm:$0xff]
    %v812 = vld [vmem:[#allocation5 + $0x15e0] sm:$0xff]
    %v813 = vld [vmem:[#allocation5 + $0x15e8] sm:$0xff]
    %v814 = vld [vmem:[#allocation5 + $0x15f0] sm:$0xff]
    %v815 = vld [vmem:[#allocation5 + $0x15f8] sm:$0xff]
    %v816 = vld [vmem:[#allocation5 + $0x1600] sm:$0xff]
    %v817 = vld [vmem:[#allocation5 + $0x1608] sm:$0xff]
    %v818 = vld [vmem:[#allocation5 + $0x1610] sm:$0xff]
    %v819 = vld [vmem:[#allocation5 + $0x1618] sm:$0xff]
    %v820 = vld [vmem:[#allocation5 + $0x1620] sm:$0xff]
    %v821 = vld [vmem:[#allocation5 + $0x1628] sm:$0xff]
    %v822 = vld [vmem:[#allocation5 + $0x1630] sm:$0xf]
    %v823 = vld [vmem:[#allocation5 + $0x1634] sm:$0xff]
    %v824 = vld [vmem:[#allocation5 + $0x163c] sm:$0xff]
    %v825 = vld [vmem:[#allocation5 + $0x1644] sm:$0xff]
    %v826 = vld [vmem:[#allocation5 + $0x164c] sm:$0xff]
    %v827 = vld [vmem:[#allocation5 + $0x1654] sm:$0xff]
    %v828 = vld [vmem:[#allocation5 + $0x165c] sm:$0xff]
    %v829 = vld [vmem:[#allocation5 + $0x1664] sm:$0xff]
    %v830 = vld [vmem:[#allocation5 + $0x166c] sm:$0xff]
    %v831 = vld [vmem:[#allocation5 + $0x1674] sm:$0xff]
    %v832 = vld [vmem:[#allocation5 + $0x167c] sm:$0xff]
    %v833 = vld [vmem:[#allocation5 + $0x1684] sm:$0xff]
    %v834 = vld [vmem:[#allocation5 + $0x168c] sm:$0xff]
    %v835 = vld [vmem:[#allocation5 + $0x1694] sm:$0xff]
    %v836 = vld [vmem:[#allocation5 + $0x169c] sm:$0xff]
    %v837 = vld [vmem:[#allocation5 + $0x16a4] sm:$0xf]
    %v838 = vld [vmem:[#allocation5 + $0x16a8] sm:$0xff]
    %v839 = vld [vmem:[#allocation5 + $0x16b0] sm:$0xff]
    %v840 = vld [vmem:[#allocation5 + $0x16b8] sm:$0xff]
    %v841 = vld [vmem:[#allocation5 + $0x16c0] sm:$0xff]
    %v842 = vld [vmem:[#allocation5 + $0x16c8] sm:$0xff]
    %v843 = vld [vmem:[#allocation5 + $0x16d0] sm:$0xff]
    %v844 = vld [vmem:[#allocation5 + $0x16d8] sm:$0xff]
    %v845 = vld [vmem:[#allocation5 + $0x16e0] sm:$0xff]
    %v846 = vld [vmem:[#allocation5 + $0x16e8] sm:$0xff]
    %v847 = vld [vmem:[#allocation5 + $0x16f0] sm:$0xff]
    %v848 = vld [vmem:[#allocation5 + $0x16f8] sm:$0xff]
    %v849 = vld [vmem:[#allocation5 + $0x1700] sm:$0xff]
    %v850 = vld [vmem:[#allocation5 + $0x1708] sm:$0xff]
    %v851 = vld [vmem:[#allocation5 + $0x1710] sm:$0xff]
    %v852 = vld [vmem:[#allocation5 + $0x1718] sm:$0xf]
    %v853 = vld [vmem:[#allocation5 + $0x171c] sm:$0xff]
    %v854 = vld [vmem:[#allocation5 + $0x1724] sm:$0xff]
    %v855 = vld [vmem:[#allocation5 + $0x172c] sm:$0xff]
    %v856 = vld [vmem:[#allocation5 + $0x1734] sm:$0xff]
    %v857 = vld [vmem:[#allocation5 + $0x173c] sm:$0xff]
    %v858 = vld [vmem:[#allocation5 + $0x1744] sm:$0xff]
    %v859 = vld [vmem:[#allocation5 + $0x174c] sm:$0xff]
    %v860 = vld [vmem:[#allocation5 + $0x1754] sm:$0xff]
    %v861 = vld [vmem:[#allocation5 + $0x175c] sm:$0xff]
    %v862 = vld [vmem:[#allocation5 + $0x1764] sm:$0xff]
    %v863 = vld [vmem:[#allocation5 + $0x176c] sm:$0xff]
    %v864 = vld [vmem:[#allocation5 + $0x1774] sm:$0xff]
    %v865 = vld [vmem:[#allocation5 + $0x177c] sm:$0xff]
    %v866 = vld [vmem:[#allocation5 + $0x1784] sm:$0xff]
    %v867 = vld [vmem:[#allocation5 + $0x178c] sm:$0xf]
    %v868 = vld [vmem:[#allocation5 + $0x1790] sm:$0xff]
    %v869 = vld [vmem:[#allocation5 + $0x1798] sm:$0xff]
    %v870 = vld [vmem:[#allocation5 + $0x17a0] sm:$0xff]
    %v871 = vld [vmem:[#allocation5 + $0x17a8] sm:$0xff]
    %v872 = vld [vmem:[#allocation5 + $0x17b0] sm:$0xff]
    %v873 = vld [vmem:[#allocation5 + $0x17b8] sm:$0xff]
    %v874 = vld [vmem:[#allocation5 + $0x17c0] sm:$0xff]
    %v875 = vld [vmem:[#allocation5 + $0x17c8] sm:$0xff]
    %v876 = vld [vmem:[#allocation5 + $0x17d0] sm:$0xff]
    %v877 = vld [vmem:[#allocation5 + $0x17d8] sm:$0xff]
    %v878 = vld [vmem:[#allocation5 + $0x17e0] sm:$0xff]
    %v879 = vld [vmem:[#allocation5 + $0x17e8] sm:$0xff]
    %v880 = vld [vmem:[#allocation5 + $0x17f0] sm:$0xff]
    %v881 = vld [vmem:[#allocation5 + $0x17f8] sm:$0xff]
    %v882 = vld [vmem:[#allocation5 + $0x1800] sm:$0xf]
    %v883 = vld [vmem:[#allocation5 + $0x1804] sm:$0xff]
    %v884 = vld [vmem:[#allocation5 + $0x180c] sm:$0xff]
    %v885 = vld [vmem:[#allocation5 + $0x1814] sm:$0xff]
    %v886 = vld [vmem:[#allocation5 + $0x181c] sm:$0xff]
    %v887 = vld [vmem:[#allocation5 + $0x1824] sm:$0xff]
    %v888 = vld [vmem:[#allocation5 + $0x182c] sm:$0xff]
    %v889 = vld [vmem:[#allocation5 + $0x1834] sm:$0xff]
    %v890 = vld [vmem:[#allocation5 + $0x183c] sm:$0xff]
    %v891 = vld [vmem:[#allocation5 + $0x1844] sm:$0xff]
    %v892 = vld [vmem:[#allocation5 + $0x184c] sm:$0xff]
    %v893 = vld [vmem:[#allocation5 + $0x1854] sm:$0xff]
    %v894 = vld [vmem:[#allocation5 + $0x185c] sm:$0xff]
    %v895 = vld [vmem:[#allocation5 + $0x1864] sm:$0xff]
    %v896 = vld [vmem:[#allocation5 + $0x186c] sm:$0xff]
    %v897 = vld [vmem:[#allocation5 + $0x1874] sm:$0xf]
    %v898 = vld [vmem:[#allocation5 + $0x1878] sm:$0xff]
    %v899 = vld [vmem:[#allocation5 + $0x1880] sm:$0xff]
    %v900 = vld [vmem:[#allocation5 + $0x1888] sm:$0xff]
    %v901 = vld [vmem:[#allocation5 + $0x1890] sm:$0xff]
    %v902 = vld [vmem:[#allocation5 + $0x1898] sm:$0xff]
    %v903 = vld [vmem:[#allocation5 + $0x18a0] sm:$0xff]
    %v904 = vld [vmem:[#allocation5 + $0x18a8] sm:$0xff]
    %v905 = vld [vmem:[#allocation5 + $0x18b0] sm:$0xff]
    %v906 = vld [vmem:[#allocation5 + $0x18b8] sm:$0xff]
    %v907 = vld [vmem:[#allocation5 + $0x18c0] sm:$0xff]
    %v908 = vld [vmem:[#allocation5 + $0x18c8] sm:$0xff]
    %v909 = vld [vmem:[#allocation5 + $0x18d0] sm:$0xff]
    %v910 = vld [vmem:[#allocation5 + $0x18d8] sm:$0xff]
    %v911 = vld [vmem:[#allocation5 + $0x18e0] sm:$0xff]
    %v912 = vld [vmem:[#allocation5 + $0x18e8] sm:$0xf]
    %v913 = vld [vmem:[#allocation5 + $0x18ec] sm:$0xff]
    %v914 = vld [vmem:[#allocation5 + $0x18f4] sm:$0xff]
    %v915 = vld [vmem:[#allocation5 + $0x18fc] sm:$0xff]
    %v916 = vld [vmem:[#allocation5 + $0x1904] sm:$0xff]
    %v917 = vld [vmem:[#allocation5 + $0x190c] sm:$0xff]
    %v918 = vld [vmem:[#allocation5 + $0x1914] sm:$0xff]
    %v919 = vld [vmem:[#allocation5 + $0x191c] sm:$0xff]
    %v920 = vld [vmem:[#allocation5 + $0x1924] sm:$0xff]
    %v921 = vld [vmem:[#allocation5 + $0x192c] sm:$0xff]
    %v922 = vld [vmem:[#allocation5 + $0x1934] sm:$0xff]
    %v923 = vld [vmem:[#allocation5 + $0x193c] sm:$0xff]
    %v924 = vld [vmem:[#allocation5 + $0x1944] sm:$0xff]
    %v925 = vld [vmem:[#allocation5 + $0x194c] sm:$0xff]
    %v926 = vld [vmem:[#allocation5 + $0x1954] sm:$0xff]
    %v927 = vld [vmem:[#allocation5 + $0x195c] sm:$0xf]
    %v928 = vld [vmem:[#allocation5 + $0x1960] sm:$0xff]
    %v929 = vld [vmem:[#allocation5 + $0x1968] sm:$0xff]
    %v930 = vld [vmem:[#allocation5 + $0x1970] sm:$0xff]
    %v931 = vld [vmem:[#allocation5 + $0x1978] sm:$0xff]
    %v932 = vld [vmem:[#allocation5 + $0x1980] sm:$0xff]
    %v933 = vld [vmem:[#allocation5 + $0x1988] sm:$0xff]
    %v934 = vld [vmem:[#allocation5 + $0x1990] sm:$0xff]
    %v935 = vld [vmem:[#allocation5 + $0x1998] sm:$0xff]
    %v936 = vld [vmem:[#allocation5 + $0x19a0] sm:$0xff]
    %v937 = vld [vmem:[#allocation5 + $0x19a8] sm:$0xff]
    %v938 = vld [vmem:[#allocation5 + $0x19b0] sm:$0xff]
    %v939 = vld [vmem:[#allocation5 + $0x19b8] sm:$0xff]
    %v940 = vld [vmem:[#allocation5 + $0x19c0] sm:$0xff]
    %v941 = vld [vmem:[#allocation5 + $0x19c8] sm:$0xff]
    %v942 = vld [vmem:[#allocation5 + $0x19d0] sm:$0xf]
    %v943 = vld [vmem:[#allocation5 + $0x19d4] sm:$0xff]
    %v944 = vld [vmem:[#allocation5 + $0x19dc] sm:$0xff]
    %v945 = vld [vmem:[#allocation5 + $0x19e4] sm:$0xff]
    %v946 = vld [vmem:[#allocation5 + $0x19ec] sm:$0xff]
    %v947 = vld [vmem:[#allocation5 + $0x19f4] sm:$0xff]
    %v948 = vld [vmem:[#allocation5 + $0x19fc] sm:$0xff]
    %v949 = vld [vmem:[#allocation5 + $0x1a04] sm:$0xff]
    %v950 = vld [vmem:[#allocation5 + $0x1a0c] sm:$0xff]
    %v951 = vld [vmem:[#allocation5 + $0x1a14] sm:$0xff]
    %v952 = vld [vmem:[#allocation5 + $0x1a1c] sm:$0xff]
    %v953 = vld [vmem:[#allocation5 + $0x1a24] sm:$0xff]
    %v954 = vld [vmem:[#allocation5 + $0x1a2c] sm:$0xff]
    %v955 = vld [vmem:[#allocation5 + $0x1a34] sm:$0xff]
    %v956 = vld [vmem:[#allocation5 + $0x1a3c] sm:$0xff]
    %v957 = vld [vmem:[#allocation5 + $0x1a44] sm:$0xf]
    %v958 = vld [vmem:[#allocation5 + $0x1a48] sm:$0xff]
    %v959 = vld [vmem:[#allocation5 + $0x1a50] sm:$0xff]
    %v960 = vld [vmem:[#allocation5 + $0x1a58] sm:$0xff]
    %v961 = vld [vmem:[#allocation5 + $0x1a60] sm:$0xff]
    %v962 = vld [vmem:[#allocation5 + $0x1a68] sm:$0xff]
    %v963 = vld [vmem:[#allocation5 + $0x1a70] sm:$0xff]
    %v964 = vld [vmem:[#allocation5 + $0x1a78] sm:$0xff]
    %v965 = vld [vmem:[#allocation5 + $0x1a80] sm:$0xff]
    %v966 = vld [vmem:[#allocation5 + $0x1a88] sm:$0xff]
    %v967 = vld [vmem:[#allocation5 + $0x1a90] sm:$0xff]
    %v968 = vld [vmem:[#allocation5 + $0x1a98] sm:$0xff]
    %v969 = vld [vmem:[#allocation5 + $0x1aa0] sm:$0xff]
    %v970 = vld [vmem:[#allocation5 + $0x1aa8] sm:$0xff]
    %v971 = vld [vmem:[#allocation5 + $0x1ab0] sm:$0xff]
    %v972 = vld [vmem:[#allocation5 + $0x1ab8] sm:$0xf]
    %v973 = vld [vmem:[#allocation5 + $0x1abc] sm:$0xff]
    %v974 = vld [vmem:[#allocation5 + $0x1ac4] sm:$0xff]
    %v975 = vld [vmem:[#allocation5 + $0x1acc] sm:$0xff]
    %v976 = vld [vmem:[#allocation5 + $0x1ad4] sm:$0xff]
    %v977 = vld [vmem:[#allocation5 + $0x1adc] sm:$0xff]
    %v978 = vld [vmem:[#allocation5 + $0x1ae4] sm:$0xff]
    %v979 = vld [vmem:[#allocation5 + $0x1aec] sm:$0xff]
    %v980 = vld [vmem:[#allocation5 + $0x1af4] sm:$0xff]
    %v981 = vld [vmem:[#allocation5 + $0x1afc] sm:$0xff]
    %v982 = vld [vmem:[#allocation5 + $0x1b04] sm:$0xff]
    %v983 = vld [vmem:[#allocation5 + $0x1b0c] sm:$0xff]
    %v984 = vld [vmem:[#allocation5 + $0x1b14] sm:$0xff]
    %v985 = vld [vmem:[#allocation5 + $0x1b1c] sm:$0xff]
    %v986 = vld [vmem:[#allocation5 + $0x1b24] sm:$0xff]
    %v987 = vld [vmem:[#allocation5 + $0x1b2c] sm:$0xf]
    %v988 = vld [vmem:[#allocation5 + $0x1b30] sm:$0xff]
    %v989 = vld [vmem:[#allocation5 + $0x1b38] sm:$0xff]
    %v990 = vld [vmem:[#allocation5 + $0x1b40] sm:$0xff]
    %v991 = vld [vmem:[#allocation5 + $0x1b48] sm:$0xff]
    %v992 = vld [vmem:[#allocation5 + $0x1b50] sm:$0xff]
    %v993 = vld [vmem:[#allocation5 + $0x1b58] sm:$0xff]
    %v994 = vld [vmem:[#allocation5 + $0x1b60] sm:$0xff]
    %v995 = vld [vmem:[#allocation5 + $0x1b68] sm:$0xff]
    %v996 = vld [vmem:[#allocation5 + $0x1b70] sm:$0xff]
    %v997 = vld [vmem:[#allocation5 + $0x1b78] sm:$0xff]
    %v998 = vld [vmem:[#allocation5 + $0x1b80] sm:$0xff]
    %v999 = vld [vmem:[#allocation5 + $0x1b88] sm:$0xff]
    %v1000 = vld [vmem:[#allocation5 + $0x1b90] sm:$0xff]
    %v1001 = vld [vmem:[#allocation5 + $0x1b98] sm:$0xff]
    %v1002 = vld [vmem:[#allocation5 + $0x1ba0] sm:$0xf]
    %v1003 = vld [vmem:[#allocation5 + $0x1ba4] sm:$0xff]
    %v1004 = vld [vmem:[#allocation5 + $0x1bac] sm:$0xff]
    %v1005 = vld [vmem:[#allocation5 + $0x1bb4] sm:$0xff]
    %v1006 = vld [vmem:[#allocation5 + $0x1bbc] sm:$0xff]
    %v1007 = vld [vmem:[#allocation5 + $0x1bc4] sm:$0xff]
    %v1008 = vld [vmem:[#allocation5 + $0x1bcc] sm:$0xff]
    %v1009 = vld [vmem:[#allocation5 + $0x1bd4] sm:$0xff]
    %v1010 = vld [vmem:[#allocation5 + $0x1bdc] sm:$0xff]
    %v1011 = vld [vmem:[#allocation5 + $0x1be4] sm:$0xff]
    %v1012 = vld [vmem:[#allocation5 + $0x1bec] sm:$0xff]
    %v1013 = vld [vmem:[#allocation5 + $0x1bf4] sm:$0xff]
    %v1014 = vld [vmem:[#allocation5 + $0x1bfc] sm:$0xff]
    %v1015 = vld [vmem:[#allocation5 + $0x1c04] sm:$0xff]
    %v1016 = vld [vmem:[#allocation5 + $0x1c0c] sm:$0xff]
    %v1017 = vld [vmem:[#allocation5 + $0x1c14] sm:$0xf]
    %v1018 = vld [vmem:[#allocation5 + $0x1c18] sm:$0xff]
    %v1019 = vld [vmem:[#allocation5 + $0x1c20] sm:$0xff]
    %v1020 = vld [vmem:[#allocation5 + $0x1c28] sm:$0xff]
    %v1021 = vld [vmem:[#allocation5 + $0x1c30] sm:$0xff]
    %v1022 = vld [vmem:[#allocation5 + $0x1c38] sm:$0xff]
    %v1023 = vld [vmem:[#allocation5 + $0x1c40] sm:$0xff]
    %v1024 = vld [vmem:[#allocation5 + $0x1c48] sm:$0xff]
    %v1025 = vld [vmem:[#allocation5 + $0x1c50] sm:$0xff]
    %v1026 = vld [vmem:[#allocation5 + $0x1c58] sm:$0xff]
    %v1027 = vld [vmem:[#allocation5 + $0x1c60] sm:$0xff]
    %v1028 = vld [vmem:[#allocation5 + $0x1c68] sm:$0xff]
    %v1029 = vld [vmem:[#allocation5 + $0x1c70] sm:$0xff]
    %v1030 = vld [vmem:[#allocation5 + $0x1c78] sm:$0xff]
    %v1031 = vld [vmem:[#allocation5 + $0x1c80] sm:$0xff]
    %v1032 = vld [vmem:[#allocation5 + $0x1c88] sm:$0xf]
    %v1033 = vld [vmem:[#allocation5 + $0x1c8c] sm:$0xff]
    %v1034 = vld [vmem:[#allocation5 + $0x1c94] sm:$0xff]
    %v1035 = vld [vmem:[#allocation5 + $0x1c9c] sm:$0xff]
    %v1036 = vld [vmem:[#allocation5 + $0x1ca4] sm:$0xff]
    %v1037 = vld [vmem:[#allocation5 + $0x1cac] sm:$0xff]
    %v1038 = vld [vmem:[#allocation5 + $0x1cb4] sm:$0xff]
    %v1039 = vld [vmem:[#allocation5 + $0x1cbc] sm:$0xff]
    %v1040 = vld [vmem:[#allocation5 + $0x1cc4] sm:$0xff]
    %v1041 = vld [vmem:[#allocation5 + $0x1ccc] sm:$0xff]
    %v1042 = vld [vmem:[#allocation5 + $0x1cd4] sm:$0xff]
    %v1043 = vld [vmem:[#allocation5 + $0x1cdc] sm:$0xff]
    %v1044 = vld [vmem:[#allocation5 + $0x1ce4] sm:$0xff]
    %v1045 = vld [vmem:[#allocation5 + $0x1cec] sm:$0xff]
    %v1046 = vld [vmem:[#allocation5 + $0x1cf4] sm:$0xff]
    %v1047 = vld [vmem:[#allocation5 + $0x1cfc] sm:$0xf]
    %v1050 = vunpack.c.l.b16 %v86
    %v1051 = vunpack.c.h.b16 %v86
    %v1052 = vunpack.c.l.b16 %v87
    %v1053 = vunpack.c.h.b16 %v87
    %v1054 = vpack.c.b16 %v1050, %v1050
    %v1055 = vpack.c.b16 %v1051, %v1051
    %v1056 = vpack.c.b16 %v1052, %v1052
    %v1057 = vpack.c.b16 %v1053, %v1053
    %v2022 = vunpack.c.l.b16 %v88
    %v2023 = vunpack.c.h.b16 %v88
    %v2024 = vunpack.c.l.b16 %v89
    %v2025 = vunpack.c.h.b16 %v89
    %v2026 = vunpack.c.l.b16 %v90
    %v2027 = vunpack.c.h.b16 %v90
    %v2028 = vunpack.c.l.b16 %v91
    %v2029 = vunpack.c.h.b16 %v91
    %v2030 = vunpack.c.l.b16 %v92
    %v2031 = vunpack.c.h.b16 %v92
    %v2032 = vunpack.c.l.b16 %v93
    %v2033 = vunpack.c.h.b16 %v93
    %v2034 = vunpack.c.l.b16 %v94
    %v2035 = vunpack.c.h.b16 %v94
    %v2036 = vunpack.c.l.b16 %v95
    %v2037 = vunpack.c.h.b16 %v95
    %v2038 = vunpack.c.l.b16 %v96
    %v2039 = vunpack.c.h.b16 %v96
    %v2040 = vunpack.c.l.b16 %v97
    %v2041 = vunpack.c.h.b16 %v97
    %v2042 = vunpack.c.l.b16 %v98
    %v2043 = vunpack.c.h.b16 %v98
    %v2044 = vunpack.c.l.b16 %v99
    %v2045 = vunpack.c.h.b16 %v99
    %v2046 = vunpack.c.l.b16 %v100
    %v2047 = vunpack.c.h.b16 %v100
    %v2048 = vunpack.c.l.b16 %v101
    %v2049 = vunpack.c.h.b16 %v101
    %v2050 = vunpack.c.l.b16 %v102
    %v2051 = vunpack.c.l.b16 %v103
    %v2052 = vunpack.c.h.b16 %v103
    %v2053 = vunpack.c.l.b16 %v104
    %v2054 = vunpack.c.h.b16 %v104
    %v2055 = vunpack.c.l.b16 %v105
    %v2056 = vunpack.c.h.b16 %v105
    %v2057 = vunpack.c.l.b16 %v106
    %v2058 = vunpack.c.h.b16 %v106
    %v2059 = vunpack.c.l.b16 %v107
    %v2060 = vunpack.c.h.b16 %v107
    %v2061 = vunpack.c.l.b16 %v108
    %v2062 = vunpack.c.h.b16 %v108
    %v2063 = vunpack.c.l.b16 %v109
    %v2064 = vunpack.c.h.b16 %v109
    %v2065 = vunpack.c.l.b16 %v110
    %v2066 = vunpack.c.h.b16 %v110
    %v2067 = vunpack.c.l.b16 %v111
    %v2068 = vunpack.c.h.b16 %v111
    %v2069 = vunpack.c.l.b16 %v112
    %v2070 = vunpack.c.h.b16 %v112
    %v2071 = vunpack.c.l.b16 %v113
    %v2072 = vunpack.c.h.b16 %v113
    %v2073 = vunpack.c.l.b16 %v114
    %v2074 = vunpack.c.h.b16 %v114
    %v2075 = vunpack.c.l.b16 %v115
    %v2076 = vunpack.c.h.b16 %v115
    %v2077 = vunpack.c.l.b16 %v116
    %v2078 = vunpack.c.h.b16 %v116
    %v2079 = vunpack.c.l.b16 %v117
    %v2080 = vunpack.c.l.b16 %v118
    %v2081 = vunpack.c.h.b16 %v118
    %v2082 = vunpack.c.l.b16 %v119
    %v2083 = vunpack.c.h.b16 %v119
    %v2084 = vunpack.c.l.b16 %v120
    %v2085 = vunpack.c.h.b16 %v120
    %v2086 = vunpack.c.l.b16 %v121
    %v2087 = vunpack.c.h.b16 %v121
    %v2088 = vunpack.c.l.b16 %v122
    %v2089 = vunpack.c.h.b16 %v122
    %v2090 = vunpack.c.l.b16 %v123
    %v2091 = vunpack.c.h.b16 %v123
    %v2092 = vunpack.c.l.b16 %v124
    %v2093 = vunpack.c.h.b16 %v124
    %v2094 = vunpack.c.l.b16 %v125
    %v2095 = vunpack.c.h.b16 %v125
    %v2096 = vunpack.c.l.b16 %v126
    %v2097 = vunpack.c.h.b16 %v126
    %v2098 = vunpack.c.l.b16 %v127
    %v2099 = vunpack.c.h.b16 %v127
    %v2100 = vunpack.c.l.b16 %v128
    %v2101 = vunpack.c.h.b16 %v128
    %v2102 = vunpack.c.l.b16 %v129
    %v2103 = vunpack.c.h.b16 %v129
    %v2104 = vunpack.c.l.b16 %v130
    %v2105 = vunpack.c.h.b16 %v130
    %v2106 = vunpack.c.l.b16 %v131
    %v2107 = vunpack.c.h.b16 %v131
    %v2108 = vunpack.c.l.b16 %v132
    %v2109 = vunpack.c.l.b16 %v133
    %v2110 = vunpack.c.h.b16 %v133
    %v2111 = vunpack.c.l.b16 %v134
    %v2112 = vunpack.c.h.b16 %v134
    %v2113 = vunpack.c.l.b16 %v135
    %v2114 = vunpack.c.h.b16 %v135
    %v2115 = vunpack.c.l.b16 %v136
    %v2116 = vunpack.c.h.b16 %v136
    %v2117 = vunpack.c.l.b16 %v137
    %v2118 = vunpack.c.h.b16 %v137
    %v2119 = vunpack.c.l.b16 %v138
    %v2120 = vunpack.c.h.b16 %v138
    %v2121 = vunpack.c.l.b16 %v139
    %v2122 = vunpack.c.h.b16 %v139
    %v2123 = vunpack.c.l.b16 %v140
    %v2124 = vunpack.c.h.b16 %v140
    %v2125 = vunpack.c.l.b16 %v141
    %v2126 = vunpack.c.h.b16 %v141
    %v2127 = vunpack.c.l.b16 %v142
    %v2128 = vunpack.c.h.b16 %v142
    %v2129 = vunpack.c.l.b16 %v143
    %v2130 = vunpack.c.h.b16 %v143
    %v2131 = vunpack.c.l.b16 %v144
    %v2132 = vunpack.c.h.b16 %v144
    %v2133 = vunpack.c.l.b16 %v145
    %v2134 = vunpack.c.h.b16 %v145
    %v2135 = vunpack.c.l.b16 %v146
    %v2136 = vunpack.c.h.b16 %v146
    %v2137 = vunpack.c.l.b16 %v147
    %v2138 = vunpack.c.l.b16 %v148
    %v2139 = vunpack.c.h.b16 %v148
    %v2140 = vunpack.c.l.b16 %v149
    %v2141 = vunpack.c.h.b16 %v149
    %v2142 = vunpack.c.l.b16 %v150
    %v2143 = vunpack.c.h.b16 %v150
    %v2144 = vunpack.c.l.b16 %v151
    %v2145 = vunpack.c.h.b16 %v151
    %v2146 = vunpack.c.l.b16 %v152
    %v2147 = vunpack.c.h.b16 %v152
    %v2148 = vunpack.c.l.b16 %v153
    %v2149 = vunpack.c.h.b16 %v153
    %v2150 = vunpack.c.l.b16 %v154
    %v2151 = vunpack.c.h.b16 %v154
    %v2152 = vunpack.c.l.b16 %v155
    %v2153 = vunpack.c.h.b16 %v155
    %v2154 = vunpack.c.l.b16 %v156
    %v2155 = vunpack.c.h.b16 %v156
    %v2156 = vunpack.c.l.b16 %v157
    %v2157 = vunpack.c.h.b16 %v157
    %v2158 = vunpack.c.l.b16 %v158
    %v2159 = vunpack.c.h.b16 %v158
    %v2160 = vunpack.c.l.b16 %v159
    %v2161 = vunpack.c.h.b16 %v159
    %v2162 = vunpack.c.l.b16 %v160
    %v2163 = vunpack.c.h.b16 %v160
    %v2164 = vunpack.c.l.b16 %v161
    %v2165 = vunpack.c.h.b16 %v161
    %v2166 = vunpack.c.l.b16 %v162
    %v2167 = vunpack.c.l.b16 %v163
    %v2168 = vunpack.c.h.b16 %v163
    %v2169 = vunpack.c.l.b16 %v164
    %v2170 = vunpack.c.h.b16 %v164
    %v2171 = vunpack.c.l.b16 %v165
    %v2172 = vunpack.c.h.b16 %v165
    %v2173 = vunpack.c.l.b16 %v166
    %v2174 = vunpack.c.h.b16 %v166
    %v2175 = vunpack.c.l.b16 %v167
    %v2176 = vunpack.c.h.b16 %v167
    %v2177 = vunpack.c.l.b16 %v168
    %v2178 = vunpack.c.h.b16 %v168
    %v2179 = vunpack.c.l.b16 %v169
    %v2180 = vunpack.c.h.b16 %v169
    %v2181 = vunpack.c.l.b16 %v170
    %v2182 = vunpack.c.h.b16 %v170
    %v2183 = vunpack.c.l.b16 %v171
    %v2184 = vunpack.c.h.b16 %v171
    %v2185 = vunpack.c.l.b16 %v172
    %v2186 = vunpack.c.h.b16 %v172
    %v2187 = vunpack.c.l.b16 %v173
    %v2188 = vunpack.c.h.b16 %v173
    %v2189 = vunpack.c.l.b16 %v174
    %v2190 = vunpack.c.h.b16 %v174
    %v2191 = vunpack.c.l.b16 %v175
    %v2192 = vunpack.c.h.b16 %v175
    %v2193 = vunpack.c.l.b16 %v176
    %v2194 = vunpack.c.h.b16 %v176
    %v2195 = vunpack.c.l.b16 %v177
    %v2196 = vunpack.c.l.b16 %v178
    %v2197 = vunpack.c.h.b16 %v178
    %v2198 = vunpack.c.l.b16 %v179
    %v2199 = vunpack.c.h.b16 %v179
    %v2200 = vunpack.c.l.b16 %v180
    %v2201 = vunpack.c.h.b16 %v180
    %v2202 = vunpack.c.l.b16 %v181
    %v2203 = vunpack.c.h.b16 %v181
    %v2204 = vunpack.c.l.b16 %v182
    %v2205 = vunpack.c.h.b16 %v182
    %v2206 = vunpack.c.l.b16 %v183
    %v2207 = vunpack.c.h.b16 %v183
    %v2208 = vunpack.c.l.b16 %v184
    %v2209 = vunpack.c.h.b16 %v184
    %v2210 = vunpack.c.l.b16 %v185
    %v2211 = vunpack.c.h.b16 %v185
    %v2212 = vunpack.c.l.b16 %v186
    %v2213 = vunpack.c.h.b16 %v186
    %v2214 = vunpack.c.l.b16 %v187
    %v2215 = vunpack.c.h.b16 %v187
    %v2216 = vunpack.c.l.b16 %v188
    %v2217 = vunpack.c.h.b16 %v188
    %v2218 = vunpack.c.l.b16 %v189
    %v2219 = vunpack.c.h.b16 %v189
    %v2220 = vunpack.c.l.b16 %v190
    %v2221 = vunpack.c.h.b16 %v190
    %v2222 = vunpack.c.l.b16 %v191
    %v2223 = vunpack.c.h.b16 %v191
    %v2224 = vunpack.c.l.b16 %v192
    %v2225 = vunpack.c.l.b16 %v193
    %v2226 = vunpack.c.h.b16 %v193
    %v2227 = vunpack.c.l.b16 %v194
    %v2228 = vunpack.c.h.b16 %v194
    %v2229 = vunpack.c.l.b16 %v195
    %v2230 = vunpack.c.h.b16 %v195
    %v2231 = vunpack.c.l.b16 %v196
    %v2232 = vunpack.c.h.b16 %v196
    %v2233 = vunpack.c.l.b16 %v197
    %v2234 = vunpack.c.h.b16 %v197
    %v2235 = vunpack.c.l.b16 %v198
    %v2236 = vunpack.c.h.b16 %v198
    %v2237 = vunpack.c.l.b16 %v199
    %v2238 = vunpack.c.h.b16 %v199
    %v2239 = vunpack.c.l.b16 %v200
    %v2240 = vunpack.c.h.b16 %v200
    %v2241 = vunpack.c.l.b16 %v201
    %v2242 = vunpack.c.h.b16 %v201
    %v2243 = vunpack.c.l.b16 %v202
    %v2244 = vunpack.c.h.b16 %v202
    %v2245 = vunpack.c.l.b16 %v203
    %v2246 = vunpack.c.h.b16 %v203
    %v2247 = vunpack.c.l.b16 %v204
    %v2248 = vunpack.c.h.b16 %v204
    %v2249 = vunpack.c.l.b16 %v205
    %v2250 = vunpack.c.h.b16 %v205
    %v2251 = vunpack.c.l.b16 %v206
    %v2252 = vunpack.c.h.b16 %v206
    %v2253 = vunpack.c.l.b16 %v207
    %v2254 = vunpack.c.l.b16 %v208
    %v2255 = vunpack.c.h.b16 %v208
    %v2256 = vunpack.c.l.b16 %v209
    %v2257 = vunpack.c.h.b16 %v209
    %v2258 = vunpack.c.l.b16 %v210
    %v2259 = vunpack.c.h.b16 %v210
    %v2260 = vunpack.c.l.b16 %v211
    %v2261 = vunpack.c.h.b16 %v211
    %v2262 = vunpack.c.l.b16 %v212
    %v2263 = vunpack.c.h.b16 %v212
    %v2264 = vunpack.c.l.b16 %v213
    %v2265 = vunpack.c.h.b16 %v213
    %v2266 = vunpack.c.l.b16 %v214
    %v2267 = vunpack.c.h.b16 %v214
    %v2268 = vunpack.c.l.b16 %v215
    %v2269 = vunpack.c.h.b16 %v215
    %v2270 = vunpack.c.l.b16 %v216
    %v2271 = vunpack.c.h.b16 %v216
    %v2272 = vunpack.c.l.b16 %v217
    %v2273 = vunpack.c.h.b16 %v217
    %v2274 = vunpack.c.l.b16 %v218
    %v2275 = vunpack.c.h.b16 %v218
    %v2276 = vunpack.c.l.b16 %v219
    %v2277 = vunpack.c.h.b16 %v219
    %v2278 = vunpack.c.l.b16 %v220
    %v2279 = vunpack.c.h.b16 %v220
    %v2280 = vunpack.c.l.b16 %v221
    %v2281 = vunpack.c.h.b16 %v221
    %v2282 = vunpack.c.l.b16 %v222
    %v2283 = vunpack.c.l.b16 %v223
    %v2284 = vunpack.c.h.b16 %v223
    %v2285 = vunpack.c.l.b16 %v224
    %v2286 = vunpack.c.h.b16 %v224
    %v2287 = vunpack.c.l.b16 %v225
    %v2288 = vunpack.c.h.b16 %v225
    %v2289 = vunpack.c.l.b16 %v226
    %v2290 = vunpack.c.h.b16 %v226
    %v2291 = vunpack.c.l.b16 %v227
    %v2292 = vunpack.c.h.b16 %v227
    %v2293 = vunpack.c.l.b16 %v228
    %v2294 = vunpack.c.h.b16 %v228
    %v2295 = vunpack.c.l.b16 %v229
    %v2296 = vunpack.c.h.b16 %v229
    %v2297 = vunpack.c.l.b16 %v230
    %v2298 = vunpack.c.h.b16 %v230
    %v2299 = vunpack.c.l.b16 %v231
    %v2300 = vunpack.c.h.b16 %v231
    %v2301 = vunpack.c.l.b16 %v232
    %v2302 = vunpack.c.h.b16 %v232
    %v2303 = vunpack.c.l.b16 %v233
    %v2304 = vunpack.c.h.b16 %v233
    %v2305 = vunpack.c.l.b16 %v234
    %v2306 = vunpack.c.h.b16 %v234
    %v2307 = vunpack.c.l.b16 %v235
    %v2308 = vunpack.c.h.b16 %v235
    %v2309 = vunpack.c.l.b16 %v236
    %v2310 = vunpack.c.h.b16 %v236
    %v2311 = vunpack.c.l.b16 %v237
    %v2312 = vunpack.c.l.b16 %v238
    %v2313 = vunpack.c.h.b16 %v238
    %v2314 = vunpack.c.l.b16 %v239
    %v2315 = vunpack.c.h.b16 %v239
    %v2316 = vunpack.c.l.b16 %v240
    %v2317 = vunpack.c.h.b16 %v240
    %v2318 = vunpack.c.l.b16 %v241
    %v2319 = vunpack.c.h.b16 %v241
    %v2320 = vunpack.c.l.b16 %v242
    %v2321 = vunpack.c.h.b16 %v242
    %v2322 = vunpack.c.l.b16 %v243
    %v2323 = vunpack.c.h.b16 %v243
    %v2324 = vunpack.c.l.b16 %v244
    %v2325 = vunpack.c.h.b16 %v244
    %v2326 = vunpack.c.l.b16 %v245
    %v2327 = vunpack.c.h.b16 %v245
    %v2328 = vunpack.c.l.b16 %v246
    %v2329 = vunpack.c.h.b16 %v246
    %v2330 = vunpack.c.l.b16 %v247
    %v2331 = vunpack.c.h.b16 %v247
    %v2332 = vunpack.c.l.b16 %v248
    %v2333 = vunpack.c.h.b16 %v248
    %v2334 = vunpack.c.l.b16 %v249
    %v2335 = vunpack.c.h.b16 %v249
    %v2336 = vunpack.c.l.b16 %v250
    %v2337 = vunpack.c.h.b16 %v250
    %v2338 = vunpack.c.l.b16 %v251
    %v2339 = vunpack.c.h.b16 %v251
    %v2340 = vunpack.c.l.b16 %v252
    %v2341 = vunpack.c.l.b16 %v253
    %v2342 = vunpack.c.h.b16 %v253
    %v2343 = vunpack.c.l.b16 %v254
    %v2344 = vunpack.c.h.b16 %v254
    %v2345 = vunpack.c.l.b16 %v255
    %v2346 = vunpack.c.h.b16 %v255
    %v2347 = vunpack.c.l.b16 %v256
    %v2348 = vunpack.c.h.b16 %v256
    %v2349 = vunpack.c.l.b16 %v257
    %v2350 = vunpack.c.h.b16 %v257
    %v2351 = vunpack.c.l.b16 %v258
    %v2352 = vunpack.c.h.b16 %v258
    %v2353 = vunpack.c.l.b16 %v259
    %v2354 = vunpack.c.h.b16 %v259
    %v2355 = vunpack.c.l.b16 %v260
    %v2356 = vunpack.c.h.b16 %v260
    %v2357 = vunpack.c.l.b16 %v261
    %v2358 = vunpack.c.h.b16 %v261
    %v2359 = vunpack.c.l.b16 %v262
    %v2360 = vunpack.c.h.b16 %v262
    %v2361 = vunpack.c.l.b16 %v263
    %v2362 = vunpack.c.h.b16 %v263
    %v2363 = vunpack.c.l.b16 %v264
    %v2364 = vunpack.c.h.b16 %v264
    %v2365 = vunpack.c.l.b16 %v265
    %v2366 = vunpack.c.h.b16 %v265
    %v2367 = vunpack.c.l.b16 %v266
    %v2368 = vunpack.c.h.b16 %v266
    %v2369 = vunpack.c.l.b16 %v267
    %v2370 = vunpack.c.l.b16 %v268
    %v2371 = vunpack.c.h.b16 %v268
    %v2372 = vunpack.c.l.b16 %v269
    %v2373 = vunpack.c.h.b16 %v269
    %v2374 = vunpack.c.l.b16 %v270
    %v2375 = vunpack.c.h.b16 %v270
    %v2376 = vunpack.c.l.b16 %v271
    %v2377 = vunpack.c.h.b16 %v271
    %v2378 = vunpack.c.l.b16 %v272
    %v2379 = vunpack.c.h.b16 %v272
    %v2380 = vunpack.c.l.b16 %v273
    %v2381 = vunpack.c.h.b16 %v273
    %v2382 = vunpack.c.l.b16 %v274
    %v2383 = vunpack.c.h.b16 %v274
    %v2384 = vunpack.c.l.b16 %v275
    %v2385 = vunpack.c.h.b16 %v275
    %v2386 = vunpack.c.l.b16 %v276
    %v2387 = vunpack.c.h.b16 %v276
    %v2388 = vunpack.c.l.b16 %v277
    %v2389 = vunpack.c.h.b16 %v277
    %v2390 = vunpack.c.l.b16 %v278
    %v2391 = vunpack.c.h.b16 %v278
    %v2392 = vunpack.c.l.b16 %v279
    %v2393 = vunpack.c.h.b16 %v279
    %v2394 = vunpack.c.l.b16 %v280
    %v2395 = vunpack.c.h.b16 %v280
    %v2396 = vunpack.c.l.b16 %v281
    %v2397 = vunpack.c.h.b16 %v281
    %v2398 = vunpack.c.l.b16 %v282
    %v2399 = vunpack.c.l.b16 %v283
    %v2400 = vunpack.c.h.b16 %v283
    %v2401 = vunpack.c.l.b16 %v284
    %v2402 = vunpack.c.h.b16 %v284
    %v2403 = vunpack.c.l.b16 %v285
    %v2404 = vunpack.c.h.b16 %v285
    %v2405 = vunpack.c.l.b16 %v286
    %v2406 = vunpack.c.h.b16 %v286
    %v2407 = vunpack.c.l.b16 %v287
    %v2408 = vunpack.c.h.b16 %v287
    %v2409 = vunpack.c.l.b16 %v288
    %v2410 = vunpack.c.h.b16 %v288
    %v2411 = vunpack.c.l.b16 %v289
    %v2412 = vunpack.c.h.b16 %v289
    %v2413 = vunpack.c.l.b16 %v290
    %v2414 = vunpack.c.h.b16 %v290
    %v2415 = vunpack.c.l.b16 %v291
    %v2416 = vunpack.c.h.b16 %v291
    %v2417 = vunpack.c.l.b16 %v292
    %v2418 = vunpack.c.h.b16 %v292
    %v2419 = vunpack.c.l.b16 %v293
    %v2420 = vunpack.c.h.b16 %v293
    %v2421 = vunpack.c.l.b16 %v294
    %v2422 = vunpack.c.h.b16 %v294
    %v2423 = vunpack.c.l.b16 %v295
    %v2424 = vunpack.c.h.b16 %v295
    %v2425 = vunpack.c.l.b16 %v296
    %v2426 = vunpack.c.h.b16 %v296
    %v2427 = vunpack.c.l.b16 %v297
    %v2428 = vunpack.c.l.b16 %v298
    %v2429 = vunpack.c.h.b16 %v298
    %v2430 = vunpack.c.l.b16 %v299
    %v2431 = vunpack.c.h.b16 %v299
    %v2432 = vunpack.c.l.b16 %v300
    %v2433 = vunpack.c.h.b16 %v300
    %v2434 = vunpack.c.l.b16 %v301
    %v2435 = vunpack.c.h.b16 %v301
    %v2436 = vunpack.c.l.b16 %v302
    %v2437 = vunpack.c.h.b16 %v302
    %v2438 = vunpack.c.l.b16 %v303
    %v2439 = vunpack.c.h.b16 %v303
    %v2440 = vunpack.c.l.b16 %v304
    %v2441 = vunpack.c.h.b16 %v304
    %v2442 = vunpack.c.l.b16 %v305
    %v2443 = vunpack.c.h.b16 %v305
    %v2444 = vunpack.c.l.b16 %v306
    %v2445 = vunpack.c.h.b16 %v306
    %v2446 = vunpack.c.l.b16 %v307
    %v2447 = vunpack.c.h.b16 %v307
    %v2448 = vunpack.c.l.b16 %v308
    %v2449 = vunpack.c.h.b16 %v308
    %v2450 = vunpack.c.l.b16 %v309
    %v2451 = vunpack.c.h.b16 %v309
    %v2452 = vunpack.c.l.b16 %v310
    %v2453 = vunpack.c.h.b16 %v310
    %v2454 = vunpack.c.l.b16 %v311
    %v2455 = vunpack.c.h.b16 %v311
    %v2456 = vunpack.c.l.b16 %v312
    %v2457 = vunpack.c.l.b16 %v313
    %v2458 = vunpack.c.h.b16 %v313
    %v2459 = vunpack.c.l.b16 %v314
    %v2460 = vunpack.c.h.b16 %v314
    %v2461 = vunpack.c.l.b16 %v315
    %v2462 = vunpack.c.h.b16 %v315
    %v2463 = vunpack.c.l.b16 %v316
    %v2464 = vunpack.c.h.b16 %v316
    %v2465 = vunpack.c.l.b16 %v317
    %v2466 = vunpack.c.h.b16 %v317
    %v2467 = vunpack.c.l.b16 %v318
    %v2468 = vunpack.c.h.b16 %v318
    %v2469 = vunpack.c.l.b16 %v319
    %v2470 = vunpack.c.h.b16 %v319
    %v2471 = vunpack.c.l.b16 %v320
    %v2472 = vunpack.c.h.b16 %v320
    %v2473 = vunpack.c.l.b16 %v321
    %v2474 = vunpack.c.h.b16 %v321
    %v2475 = vunpack.c.l.b16 %v322
    %v2476 = vunpack.c.h.b16 %v322
    %v2477 = vunpack.c.l.b16 %v323
    %v2478 = vunpack.c.h.b16 %v323
    %v2479 = vunpack.c.l.b16 %v324
    %v2480 = vunpack.c.h.b16 %v324
    %v2481 = vunpack.c.l.b16 %v325
    %v2482 = vunpack.c.h.b16 %v325
    %v2483 = vunpack.c.l.b16 %v326
    %v2484 = vunpack.c.h.b16 %v326
    %v2485 = vunpack.c.l.b16 %v327
    %v2486 = vunpack.c.l.b16 %v328
    %v2487 = vunpack.c.h.b16 %v328
    %v2488 = vunpack.c.l.b16 %v329
    %v2489 = vunpack.c.h.b16 %v329
    %v2490 = vunpack.c.l.b16 %v330
    %v2491 = vunpack.c.h.b16 %v330
    %v2492 = vunpack.c.l.b16 %v331
    %v2493 = vunpack.c.h.b16 %v331
    %v2494 = vunpack.c.l.b16 %v332
    %v2495 = vunpack.c.h.b16 %v332
    %v2496 = vunpack.c.l.b16 %v333
    %v2497 = vunpack.c.h.b16 %v333
    %v2498 = vunpack.c.l.b16 %v334
    %v2499 = vunpack.c.h.b16 %v334
    %v2500 = vunpack.c.l.b16 %v335
    %v2501 = vunpack.c.h.b16 %v335
    %v2502 = vunpack.c.l.b16 %v336
    %v2503 = vunpack.c.h.b16 %v336
    %v2504 = vunpack.c.l.b16 %v337
    %v2505 = vunpack.c.h.b16 %v337
    %v2506 = vunpack.c.l.b16 %v338
    %v2507 = vunpack.c.h.b16 %v338
    %v2508 = vunpack.c.l.b16 %v339
    %v2509 = vunpack.c.h.b16 %v339
    %v2510 = vunpack.c.l.b16 %v340
    %v2511 = vunpack.c.h.b16 %v340
    %v2512 = vunpack.c.l.b16 %v341
    %v2513 = vunpack.c.h.b16 %v341
    %v2514 = vunpack.c.l.b16 %v342
    %v2515 = vunpack.c.l.b16 %v343
    %v2516 = vunpack.c.h.b16 %v343
    %v2517 = vunpack.c.l.b16 %v344
    %v2518 = vunpack.c.h.b16 %v344
    %v2519 = vunpack.c.l.b16 %v345
    %v2520 = vunpack.c.h.b16 %v345
    %v2521 = vunpack.c.l.b16 %v346
    %v2522 = vunpack.c.h.b16 %v346
    %v2523 = vunpack.c.l.b16 %v347
    %v2524 = vunpack.c.h.b16 %v347
    %v2525 = vunpack.c.l.b16 %v348
    %v2526 = vunpack.c.h.b16 %v348
    %v2527 = vunpack.c.l.b16 %v349
    %v2528 = vunpack.c.h.b16 %v349
    %v2529 = vunpack.c.l.b16 %v350
    %v2530 = vunpack.c.h.b16 %v350
    %v2531 = vunpack.c.l.b16 %v351
    %v2532 = vunpack.c.h.b16 %v351
    %v2533 = vunpack.c.l.b16 %v352
    %v2534 = vunpack.c.h.b16 %v352
    %v2535 = vunpack.c.l.b16 %v353
    %v2536 = vunpack.c.h.b16 %v353
    %v2537 = vunpack.c.l.b16 %v354
    %v2538 = vunpack.c.h.b16 %v354
    %v2539 = vunpack.c.l.b16 %v355
    %v2540 = vunpack.c.h.b16 %v355
    %v2541 = vunpack.c.l.b16 %v356
    %v2542 = vunpack.c.h.b16 %v356
    %v2543 = vunpack.c.l.b16 %v357
    %v2544 = vunpack.c.l.b16 %v358
    %v2545 = vunpack.c.h.b16 %v358
    %v2546 = vunpack.c.l.b16 %v359
    %v2547 = vunpack.c.h.b16 %v359
    %v2548 = vunpack.c.l.b16 %v360
    %v2549 = vunpack.c.h.b16 %v360
    %v2550 = vunpack.c.l.b16 %v361
    %v2551 = vunpack.c.h.b16 %v361
    %v2552 = vunpack.c.l.b16 %v362
    %v2553 = vunpack.c.h.b16 %v362
    %v2554 = vunpack.c.l.b16 %v363
    %v2555 = vunpack.c.h.b16 %v363
    %v2556 = vunpack.c.l.b16 %v364
    %v2557 = vunpack.c.h.b16 %v364
    %v2558 = vunpack.c.l.b16 %v365
    %v2559 = vunpack.c.h.b16 %v365
    %v2560 = vunpack.c.l.b16 %v366
    %v2561 = vunpack.c.h.b16 %v366
    %v2562 = vunpack.c.l.b16 %v367
    %v2563 = vunpack.c.h.b16 %v367
    %v2564 = vunpack.c.l.b16 %v368
    %v2565 = vunpack.c.h.b16 %v368
    %v2566 = vunpack.c.l.b16 %v369
    %v2567 = vunpack.c.h.b16 %v369
    %v2568 = vunpack.c.l.b16 %v370
    %v2569 = vunpack.c.h.b16 %v370
    %v2570 = vunpack.c.l.b16 %v371
    %v2571 = vunpack.c.h.b16 %v371
    %v2572 = vunpack.c.l.b16 %v372
    %v2573 = vunpack.c.l.b16 %v373
    %v2574 = vunpack.c.h.b16 %v373
    %v2575 = vunpack.c.l.b16 %v374
    %v2576 = vunpack.c.h.b16 %v374
    %v2577 = vunpack.c.l.b16 %v375
    %v2578 = vunpack.c.h.b16 %v375
    %v2579 = vunpack.c.l.b16 %v376
    %v2580 = vunpack.c.h.b16 %v376
    %v2581 = vunpack.c.l.b16 %v377
    %v2582 = vunpack.c.h.b16 %v377
    %v2583 = vunpack.c.l.b16 %v378
    %v2584 = vunpack.c.h.b16 %v378
    %v2585 = vunpack.c.l.b16 %v379
    %v2586 = vunpack.c.h.b16 %v379
    %v2587 = vunpack.c.l.b16 %v380
    %v2588 = vunpack.c.h.b16 %v380
    %v2589 = vunpack.c.l.b16 %v381
    %v2590 = vunpack.c.h.b16 %v381
    %v2591 = vunpack.c.l.b16 %v382
    %v2592 = vunpack.c.h.b16 %v382
    %v2593 = vunpack.c.l.b16 %v383
    %v2594 = vunpack.c.h.b16 %v383
    %v2595 = vunpack.c.l.b16 %v384
    %v2596 = vunpack.c.h.b16 %v384
    %v2597 = vunpack.c.l.b16 %v385
    %v2598 = vunpack.c.h.b16 %v385
    %v2599 = vunpack.c.l.b16 %v386
    %v2600 = vunpack.c.h.b16 %v386
    %v2601 = vunpack.c.l.b16 %v387
    %v2602 = vunpack.c.l.b16 %v388
    %v2603 = vunpack.c.h.b16 %v388
    %v2604 = vunpack.c.l.b16 %v389
    %v2605 = vunpack.c.h.b16 %v389
    %v2606 = vunpack.c.l.b16 %v390
    %v2607 = vunpack.c.h.b16 %v390
    %v2608 = vunpack.c.l.b16 %v391
    %v2609 = vunpack.c.h.b16 %v391
    %v2610 = vunpack.c.l.b16 %v392
    %v2611 = vunpack.c.h.b16 %v392
    %v2612 = vunpack.c.l.b16 %v393
    %v2613 = vunpack.c.h.b16 %v393
    %v2614 = vunpack.c.l.b16 %v394
    %v2615 = vunpack.c.h.b16 %v394
    %v2616 = vunpack.c.l.b16 %v395
    %v2617 = vunpack.c.h.b16 %v395
    %v2618 = vunpack.c.l.b16 %v396
    %v2619 = vunpack.c.h.b16 %v396
    %v2620 = vunpack.c.l.b16 %v397
    %v2621 = vunpack.c.h.b16 %v397
    %v2622 = vunpack.c.l.b16 %v398
    %v2623 = vunpack.c.h.b16 %v398
    %v2624 = vunpack.c.l.b16 %v399
    %v2625 = vunpack.c.h.b16 %v399
    %v2626 = vunpack.c.l.b16 %v400
    %v2627 = vunpack.c.h.b16 %v400
    %v2628 = vunpack.c.l.b16 %v401
    %v2629 = vunpack.c.h.b16 %v401
    %v2630 = vunpack.c.l.b16 %v402
    %v2631 = vunpack.c.l.b16 %v403
    %v2632 = vunpack.c.h.b16 %v403
    %v2633 = vunpack.c.l.b16 %v404
    %v2634 = vunpack.c.h.b16 %v404
    %v2635 = vunpack.c.l.b16 %v405
    %v2636 = vunpack.c.h.b16 %v405
    %v2637 = vunpack.c.l.b16 %v406
    %v2638 = vunpack.c.h.b16 %v406
    %v2639 = vunpack.c.l.b16 %v407
    %v2640 = vunpack.c.h.b16 %v407
    %v2641 = vunpack.c.l.b16 %v408
    %v2642 = vunpack.c.h.b16 %v408
    %v2643 = vunpack.c.l.b16 %v409
    %v2644 = vunpack.c.h.b16 %v409
    %v2645 = vunpack.c.l.b16 %v410
    %v2646 = vunpack.c.h.b16 %v410
    %v2647 = vunpack.c.l.b16 %v411
    %v2648 = vunpack.c.h.b16 %v411
    %v2649 = vunpack.c.l.b16 %v412
    %v2650 = vunpack.c.h.b16 %v412
    %v2651 = vunpack.c.l.b16 %v413
    %v2652 = vunpack.c.h.b16 %v413
    %v2653 = vunpack.c.l.b16 %v414
    %v2654 = vunpack.c.h.b16 %v414
    %v2655 = vunpack.c.l.b16 %v415
    %v2656 = vunpack.c.h.b16 %v415
    %v2657 = vunpack.c.l.b16 %v416
    %v2658 = vunpack.c.h.b16 %v416
    %v2659 = vunpack.c.l.b16 %v417
    %v2660 = vunpack.c.l.b16 %v418
    %v2661 = vunpack.c.h.b16 %v418
    %v2662 = vunpack.c.l.b16 %v419
    %v2663 = vunpack.c.h.b16 %v419
    %v2664 = vunpack.c.l.b16 %v420
    %v2665 = vunpack.c.h.b16 %v420
    %v2666 = vunpack.c.l.b16 %v421
    %v2667 = vunpack.c.h.b16 %v421
    %v2668 = vunpack.c.l.b16 %v422
    %v2669 = vunpack.c.h.b16 %v422
    %v2670 = vunpack.c.l.b16 %v423
    %v2671 = vunpack.c.h.b16 %v423
    %v2672 = vunpack.c.l.b16 %v424
    %v2673 = vunpack.c.h.b16 %v424
    %v2674 = vunpack.c.l.b16 %v425
    %v2675 = vunpack.c.h.b16 %v425
    %v2676 = vunpack.c.l.b16 %v426
    %v2677 = vunpack.c.h.b16 %v426
    %v2678 = vunpack.c.l.b16 %v427
    %v2679 = vunpack.c.h.b16 %v427
    %v2680 = vunpack.c.l.b16 %v428
    %v2681 = vunpack.c.h.b16 %v428
    %v2682 = vunpack.c.l.b16 %v429
    %v2683 = vunpack.c.h.b16 %v429
    %v2684 = vunpack.c.l.b16 %v430
    %v2685 = vunpack.c.h.b16 %v430
    %v2686 = vunpack.c.l.b16 %v431
    %v2687 = vunpack.c.h.b16 %v431
    %v2688 = vunpack.c.l.b16 %v432
    %v2689 = vunpack.c.l.b16 %v433
    %v2690 = vunpack.c.h.b16 %v433
    %v2691 = vunpack.c.l.b16 %v434
    %v2692 = vunpack.c.h.b16 %v434
    %v2693 = vunpack.c.l.b16 %v435
    %v2694 = vunpack.c.h.b16 %v435
    %v2695 = vunpack.c.l.b16 %v436
    %v2696 = vunpack.c.h.b16 %v436
    %v2697 = vunpack.c.l.b16 %v437
    %v2698 = vunpack.c.h.b16 %v437
    %v2699 = vunpack.c.l.b16 %v438
    %v2700 = vunpack.c.h.b16 %v438
    %v2701 = vunpack.c.l.b16 %v439
    %v2702 = vunpack.c.h.b16 %v439
    %v2703 = vunpack.c.l.b16 %v440
    %v2704 = vunpack.c.h.b16 %v440
    %v2705 = vunpack.c.l.b16 %v441
    %v2706 = vunpack.c.h.b16 %v441
    %v2707 = vunpack.c.l.b16 %v442
    %v2708 = vunpack.c.h.b16 %v442
    %v2709 = vunpack.c.l.b16 %v443
    %v2710 = vunpack.c.h.b16 %v443
    %v2711 = vunpack.c.l.b16 %v444
    %v2712 = vunpack.c.h.b16 %v444
    %v2713 = vunpack.c.l.b16 %v445
    %v2714 = vunpack.c.h.b16 %v445
    %v2715 = vunpack.c.l.b16 %v446
    %v2716 = vunpack.c.h.b16 %v446
    %v2717 = vunpack.c.l.b16 %v447
    %v2718 = vunpack.c.l.b16 %v448
    %v2719 = vunpack.c.h.b16 %v448
    %v2720 = vunpack.c.l.b16 %v449
    %v2721 = vunpack.c.h.b16 %v449
    %v2722 = vunpack.c.l.b16 %v450
    %v2723 = vunpack.c.h.b16 %v450
    %v2724 = vunpack.c.l.b16 %v451
    %v2725 = vunpack.c.h.b16 %v451
    %v2726 = vunpack.c.l.b16 %v452
    %v2727 = vunpack.c.h.b16 %v452
    %v2728 = vunpack.c.l.b16 %v453
    %v2729 = vunpack.c.h.b16 %v453
    %v2730 = vunpack.c.l.b16 %v454
    %v2731 = vunpack.c.h.b16 %v454
    %v2732 = vunpack.c.l.b16 %v455
    %v2733 = vunpack.c.h.b16 %v455
    %v2734 = vunpack.c.l.b16 %v456
    %v2735 = vunpack.c.h.b16 %v456
    %v2736 = vunpack.c.l.b16 %v457
    %v2737 = vunpack.c.h.b16 %v457
    %v2738 = vunpack.c.l.b16 %v458
    %v2739 = vunpack.c.h.b16 %v458
    %v2740 = vunpack.c.l.b16 %v459
    %v2741 = vunpack.c.h.b16 %v459
    %v2742 = vunpack.c.l.b16 %v460
    %v2743 = vunpack.c.h.b16 %v460
    %v2744 = vunpack.c.l.b16 %v461
    %v2745 = vunpack.c.h.b16 %v461
    %v2746 = vunpack.c.l.b16 %v462
    %v2747 = vunpack.c.l.b16 %v463
    %v2748 = vunpack.c.h.b16 %v463
    %v2749 = vunpack.c.l.b16 %v464
    %v2750 = vunpack.c.h.b16 %v464
    %v2751 = vunpack.c.l.b16 %v465
    %v2752 = vunpack.c.h.b16 %v465
    %v2753 = vunpack.c.l.b16 %v466
    %v2754 = vunpack.c.h.b16 %v466
    %v2755 = vunpack.c.l.b16 %v467
    %v2756 = vunpack.c.h.b16 %v467
    %v2757 = vunpack.c.l.b16 %v468
    %v2758 = vunpack.c.h.b16 %v468
    %v2759 = vunpack.c.l.b16 %v469
    %v2760 = vunpack.c.h.b16 %v469
    %v2761 = vunpack.c.l.b16 %v470
    %v2762 = vunpack.c.h.b16 %v470
    %v2763 = vunpack.c.l.b16 %v471
    %v2764 = vunpack.c.h.b16 %v471
    %v2765 = vunpack.c.l.b16 %v472
    %v2766 = vunpack.c.h.b16 %v472
    %v2767 = vunpack.c.l.b16 %v473
    %v2768 = vunpack.c.h.b16 %v473
    %v2769 = vunpack.c.l.b16 %v474
    %v2770 = vunpack.c.h.b16 %v474
    %v2771 = vunpack.c.l.b16 %v475
    %v2772 = vunpack.c.h.b16 %v475
    %v2773 = vunpack.c.l.b16 %v476
    %v2774 = vunpack.c.h.b16 %v476
    %v2775 = vunpack.c.l.b16 %v477
    %v2776 = vunpack.c.l.b16 %v478
    %v2777 = vunpack.c.h.b16 %v478
    %v2778 = vunpack.c.l.b16 %v479
    %v2779 = vunpack.c.h.b16 %v479
    %v2780 = vunpack.c.l.b16 %v480
    %v2781 = vunpack.c.h.b16 %v480
    %v2782 = vunpack.c.l.b16 %v481
    %v2783 = vunpack.c.h.b16 %v481
    %v2784 = vunpack.c.l.b16 %v482
    %v2785 = vunpack.c.h.b16 %v482
    %v2786 = vunpack.c.l.b16 %v483
    %v2787 = vunpack.c.h.b16 %v483
    %v2788 = vunpack.c.l.b16 %v484
    %v2789 = vunpack.c.h.b16 %v484
    %v2790 = vunpack.c.l.b16 %v485
    %v2791 = vunpack.c.h.b16 %v485
    %v2792 = vunpack.c.l.b16 %v486
    %v2793 = vunpack.c.h.b16 %v486
    %v2794 = vunpack.c.l.b16 %v487
    %v2795 = vunpack.c.h.b16 %v487
    %v2796 = vunpack.c.l.b16 %v488
    %v2797 = vunpack.c.h.b16 %v488
    %v2798 = vunpack.c.l.b16 %v489
    %v2799 = vunpack.c.h.b16 %v489
    %v2800 = vunpack.c.l.b16 %v490
    %v2801 = vunpack.c.h.b16 %v490
    %v2802 = vunpack.c.l.b16 %v491
    %v2803 = vunpack.c.h.b16 %v491
    %v2804 = vunpack.c.l.b16 %v492
    %v2805 = vunpack.c.l.b16 %v493
    %v2806 = vunpack.c.h.b16 %v493
    %v2807 = vunpack.c.l.b16 %v494
    %v2808 = vunpack.c.h.b16 %v494
    %v2809 = vunpack.c.l.b16 %v495
    %v2810 = vunpack.c.h.b16 %v495
    %v2811 = vunpack.c.l.b16 %v496
    %v2812 = vunpack.c.h.b16 %v496
    %v2813 = vunpack.c.l.b16 %v497
    %v2814 = vunpack.c.h.b16 %v497
    %v2815 = vunpack.c.l.b16 %v498
    %v2816 = vunpack.c.h.b16 %v498
    %v2817 = vunpack.c.l.b16 %v499
    %v2818 = vunpack.c.h.b16 %v499
    %v2819 = vunpack.c.l.b16 %v500
    %v2820 = vunpack.c.h.b16 %v500
    %v2821 = vunpack.c.l.b16 %v501
    %v2822 = vunpack.c.h.b16 %v501
    %v2823 = vunpack.c.l.b16 %v502
    %v2824 = vunpack.c.h.b16 %v502
    %v2825 = vunpack.c.l.b16 %v503
    %v2826 = vunpack.c.h.b16 %v503
    %v2827 = vunpack.c.l.b16 %v504
    %v2828 = vunpack.c.h.b16 %v504
    %v2829 = vunpack.c.l.b16 %v505
    %v2830 = vunpack.c.h.b16 %v505
    %v2831 = vunpack.c.l.b16 %v506
    %v2832 = vunpack.c.h.b16 %v506
    %v2833 = vunpack.c.l.b16 %v507
    %v2834 = vunpack.c.l.b16 %v508
    %v2835 = vunpack.c.h.b16 %v508
    %v2836 = vunpack.c.l.b16 %v509
    %v2837 = vunpack.c.h.b16 %v509
    %v2838 = vunpack.c.l.b16 %v510
    %v2839 = vunpack.c.h.b16 %v510
    %v2840 = vunpack.c.l.b16 %v511
    %v2841 = vunpack.c.h.b16 %v511
    %v2842 = vunpack.c.l.b16 %v512
    %v2843 = vunpack.c.h.b16 %v512
    %v2844 = vunpack.c.l.b16 %v513
    %v2845 = vunpack.c.h.b16 %v513
    %v2846 = vunpack.c.l.b16 %v514
    %v2847 = vunpack.c.h.b16 %v514
    %v2848 = vunpack.c.l.b16 %v515
    %v2849 = vunpack.c.h.b16 %v515
    %v2850 = vunpack.c.l.b16 %v516
    %v2851 = vunpack.c.h.b16 %v516
    %v2852 = vunpack.c.l.b16 %v517
    %v2853 = vunpack.c.h.b16 %v517
    %v2854 = vunpack.c.l.b16 %v518
    %v2855 = vunpack.c.h.b16 %v518
    %v2856 = vunpack.c.l.b16 %v519
    %v2857 = vunpack.c.h.b16 %v519
    %v2858 = vunpack.c.l.b16 %v520
    %v2859 = vunpack.c.h.b16 %v520
    %v2860 = vunpack.c.l.b16 %v521
    %v2861 = vunpack.c.h.b16 %v521
    %v2862 = vunpack.c.l.b16 %v522
    %v2863 = vunpack.c.l.b16 %v523
    %v2864 = vunpack.c.h.b16 %v523
    %v2865 = vunpack.c.l.b16 %v524
    %v2866 = vunpack.c.h.b16 %v524
    %v2867 = vunpack.c.l.b16 %v525
    %v2868 = vunpack.c.h.b16 %v525
    %v2869 = vunpack.c.l.b16 %v526
    %v2870 = vunpack.c.h.b16 %v526
    %v2871 = vunpack.c.l.b16 %v527
    %v2872 = vunpack.c.h.b16 %v527
    %v2873 = vunpack.c.l.b16 %v528
    %v2874 = vunpack.c.h.b16 %v528
    %v2875 = vunpack.c.l.b16 %v529
    %v2876 = vunpack.c.h.b16 %v529
    %v2877 = vunpack.c.l.b16 %v530
    %v2878 = vunpack.c.h.b16 %v530
    %v2879 = vunpack.c.l.b16 %v531
    %v2880 = vunpack.c.h.b16 %v531
    %v2881 = vunpack.c.l.b16 %v532
    %v2882 = vunpack.c.h.b16 %v532
    %v2883 = vunpack.c.l.b16 %v533
    %v2884 = vunpack.c.h.b16 %v533
    %v2885 = vunpack.c.l.b16 %v534
    %v2886 = vunpack.c.h.b16 %v534
    %v2887 = vunpack.c.l.b16 %v535
    %v2888 = vunpack.c.h.b16 %v535
    %v2889 = vunpack.c.l.b16 %v536
    %v2890 = vunpack.c.h.b16 %v536
    %v2891 = vunpack.c.l.b16 %v537
    %v2892 = vunpack.c.l.b16 %v538
    %v2893 = vunpack.c.h.b16 %v538
    %v2894 = vunpack.c.l.b16 %v539
    %v2895 = vunpack.c.h.b16 %v539
    %v2896 = vunpack.c.l.b16 %v540
    %v2897 = vunpack.c.h.b16 %v540
    %v2898 = vunpack.c.l.b16 %v541
    %v2899 = vunpack.c.h.b16 %v541
    %v2900 = vunpack.c.l.b16 %v542
    %v2901 = vunpack.c.h.b16 %v542
    %v2902 = vunpack.c.l.b16 %v543
    %v2903 = vunpack.c.h.b16 %v543
    %v2904 = vunpack.c.l.b16 %v544
    %v2905 = vunpack.c.h.b16 %v544
    %v2906 = vunpack.c.l.b16 %v545
    %v2907 = vunpack.c.h.b16 %v545
    %v2908 = vunpack.c.l.b16 %v546
    %v2909 = vunpack.c.h.b16 %v546
    %v2910 = vunpack.c.l.b16 %v547
    %v2911 = vunpack.c.h.b16 %v547
    %v2912 = vunpack.c.l.b16 %v548
    %v2913 = vunpack.c.h.b16 %v548
    %v2914 = vunpack.c.l.b16 %v549
    %v2915 = vunpack.c.h.b16 %v549
    %v2916 = vunpack.c.l.b16 %v550
    %v2917 = vunpack.c.h.b16 %v550
    %v2918 = vunpack.c.l.b16 %v551
    %v2919 = vunpack.c.h.b16 %v551
    %v2920 = vunpack.c.l.b16 %v552
    %v2921 = vunpack.c.l.b16 %v553
    %v2922 = vunpack.c.h.b16 %v553
    %v2923 = vunpack.c.l.b16 %v554
    %v2924 = vunpack.c.h.b16 %v554
    %v2925 = vunpack.c.l.b16 %v555
    %v2926 = vunpack.c.h.b16 %v555
    %v2927 = vunpack.c.l.b16 %v556
    %v2928 = vunpack.c.h.b16 %v556
    %v2929 = vunpack.c.l.b16 %v557
    %v2930 = vunpack.c.h.b16 %v557
    %v2931 = vunpack.c.l.b16 %v558
    %v2932 = vunpack.c.h.b16 %v558
    %v2933 = vunpack.c.l.b16 %v559
    %v2934 = vunpack.c.h.b16 %v559
    %v2935 = vunpack.c.l.b16 %v560
    %v2936 = vunpack.c.h.b16 %v560
    %v2937 = vunpack.c.l.b16 %v561
    %v2938 = vunpack.c.h.b16 %v561
    %v2939 = vunpack.c.l.b16 %v562
    %v2940 = vunpack.c.h.b16 %v562
    %v2941 = vunpack.c.l.b16 %v563
    %v2942 = vunpack.c.h.b16 %v563
    %v2943 = vunpack.c.l.b16 %v564
    %v2944 = vunpack.c.h.b16 %v564
    %v2945 = vunpack.c.l.b16 %v565
    %v2946 = vunpack.c.h.b16 %v565
    %v2947 = vunpack.c.l.b16 %v566
    %v2948 = vunpack.c.h.b16 %v566
    %v2949 = vunpack.c.l.b16 %v567
    %v2950 = vunpack.c.l.b16 %v568
    %v2951 = vunpack.c.h.b16 %v568
    %v2952 = vunpack.c.l.b16 %v569
    %v2953 = vunpack.c.h.b16 %v569
    %v2954 = vunpack.c.l.b16 %v570
    %v2955 = vunpack.c.h.b16 %v570
    %v2956 = vunpack.c.l.b16 %v571
    %v2957 = vunpack.c.h.b16 %v571
    %v2958 = vunpack.c.l.b16 %v572
    %v2959 = vunpack.c.h.b16 %v572
    %v2960 = vunpack.c.l.b16 %v573
    %v2961 = vunpack.c.h.b16 %v573
    %v2962 = vunpack.c.l.b16 %v574
    %v2963 = vunpack.c.h.b16 %v574
    %v2964 = vunpack.c.l.b16 %v575
    %v2965 = vunpack.c.h.b16 %v575
    %v2966 = vunpack.c.l.b16 %v576
    %v2967 = vunpack.c.h.b16 %v576
    %v2968 = vunpack.c.l.b16 %v577
    %v2969 = vunpack.c.h.b16 %v577
    %v2970 = vunpack.c.l.b16 %v578
    %v2971 = vunpack.c.h.b16 %v578
    %v2972 = vunpack.c.l.b16 %v579
    %v2973 = vunpack.c.h.b16 %v579
    %v2974 = vunpack.c.l.b16 %v580
    %v2975 = vunpack.c.h.b16 %v580
    %v2976 = vunpack.c.l.b16 %v581
    %v2977 = vunpack.c.h.b16 %v581
    %v2978 = vunpack.c.l.b16 %v582
    %v2979 = vunpack.c.l.b16 %v583
    %v2980 = vunpack.c.h.b16 %v583
    %v2981 = vunpack.c.l.b16 %v584
    %v2982 = vunpack.c.h.b16 %v584
    %v2983 = vunpack.c.l.b16 %v585
    %v2984 = vunpack.c.h.b16 %v585
    %v2985 = vunpack.c.l.b16 %v586
    %v2986 = vunpack.c.h.b16 %v586
    %v2987 = vunpack.c.l.b16 %v587
    %v2988 = vunpack.c.h.b16 %v587
    %v2989 = vunpack.c.l.b16 %v588
    %v2990 = vunpack.c.h.b16 %v588
    %v2991 = vunpack.c.l.b16 %v589
    %v2992 = vunpack.c.h.b16 %v589
    %v2993 = vunpack.c.l.b16 %v590
    %v2994 = vunpack.c.h.b16 %v590
    %v2995 = vunpack.c.l.b16 %v591
    %v2996 = vunpack.c.h.b16 %v591
    %v2997 = vunpack.c.l.b16 %v592
    %v2998 = vunpack.c.h.b16 %v592
    %v2999 = vunpack.c.l.b16 %v593
    %v3000 = vunpack.c.h.b16 %v593
    %v3001 = vunpack.c.l.b16 %v594
    %v3002 = vunpack.c.h.b16 %v594
    %v3003 = vunpack.c.l.b16 %v595
    %v3004 = vunpack.c.h.b16 %v595
    %v3005 = vunpack.c.l.b16 %v596
    %v3006 = vunpack.c.h.b16 %v596
    %v3007 = vunpack.c.l.b16 %v597
    %v3008 = vunpack.c.l.b16 %v598
    %v3009 = vunpack.c.h.b16 %v598
    %v3010 = vunpack.c.l.b16 %v599
    %v3011 = vunpack.c.h.b16 %v599
    %v3012 = vunpack.c.l.b16 %v600
    %v3013 = vunpack.c.h.b16 %v600
    %v3014 = vunpack.c.l.b16 %v601
    %v3015 = vunpack.c.h.b16 %v601
    %v3016 = vunpack.c.l.b16 %v602
    %v3017 = vunpack.c.h.b16 %v602
    %v3018 = vunpack.c.l.b16 %v603
    %v3019 = vunpack.c.h.b16 %v603
    %v3020 = vunpack.c.l.b16 %v604
    %v3021 = vunpack.c.h.b16 %v604
    %v3022 = vunpack.c.l.b16 %v605
    %v3023 = vunpack.c.h.b16 %v605
    %v3024 = vunpack.c.l.b16 %v606
    %v3025 = vunpack.c.h.b16 %v606
    %v3026 = vunpack.c.l.b16 %v607
    %v3027 = vunpack.c.h.b16 %v607
    %v3028 = vunpack.c.l.b16 %v608
    %v3029 = vunpack.c.h.b16 %v608
    %v3030 = vunpack.c.l.b16 %v609
    %v3031 = vunpack.c.h.b16 %v609
    %v3032 = vunpack.c.l.b16 %v610
    %v3033 = vunpack.c.h.b16 %v610
    %v3034 = vunpack.c.l.b16 %v611
    %v3035 = vunpack.c.h.b16 %v611
    %v3036 = vunpack.c.l.b16 %v612
    %v3037 = vunpack.c.l.b16 %v613
    %v3038 = vunpack.c.h.b16 %v613
    %v3039 = vunpack.c.l.b16 %v614
    %v3040 = vunpack.c.h.b16 %v614
    %v3041 = vunpack.c.l.b16 %v615
    %v3042 = vunpack.c.h.b16 %v615
    %v3043 = vunpack.c.l.b16 %v616
    %v3044 = vunpack.c.h.b16 %v616
    %v3045 = vunpack.c.l.b16 %v617
    %v3046 = vunpack.c.h.b16 %v617
    %v3047 = vunpack.c.l.b16 %v618
    %v3048 = vunpack.c.h.b16 %v618
    %v3049 = vunpack.c.l.b16 %v619
    %v3050 = vunpack.c.h.b16 %v619
    %v3051 = vunpack.c.l.b16 %v620
    %v3052 = vunpack.c.h.b16 %v620
    %v3053 = vunpack.c.l.b16 %v621
    %v3054 = vunpack.c.h.b16 %v621
    %v3055 = vunpack.c.l.b16 %v622
    %v3056 = vunpack.c.h.b16 %v622
    %v3057 = vunpack.c.l.b16 %v623
    %v3058 = vunpack.c.h.b16 %v623
    %v3059 = vunpack.c.l.b16 %v624
    %v3060 = vunpack.c.h.b16 %v624
    %v3061 = vunpack.c.l.b16 %v625
    %v3062 = vunpack.c.h.b16 %v625
    %v3063 = vunpack.c.l.b16 %v626
    %v3064 = vunpack.c.h.b16 %v626
    %v3065 = vunpack.c.l.b16 %v627
    %v3066 = vunpack.c.l.b16 %v628
    %v3067 = vunpack.c.h.b16 %v628
    %v3068 = vunpack.c.l.b16 %v629
    %v3069 = vunpack.c.h.b16 %v629
    %v3070 = vunpack.c.l.b16 %v630
    %v3071 = vunpack.c.h.b16 %v630
    %v3072 = vunpack.c.l.b16 %v631
    %v3073 = vunpack.c.h.b16 %v631
    %v3074 = vunpack.c.l.b16 %v632
    %v3075 = vunpack.c.h.b16 %v632
    %v3076 = vunpack.c.l.b16 %v633
    %v3077 = vunpack.c.h.b16 %v633
    %v3078 = vunpack.c.l.b16 %v634
    %v3079 = vunpack.c.h.b16 %v634
    %v3080 = vunpack.c.l.b16 %v635
    %v3081 = vunpack.c.h.b16 %v635
    %v3082 = vunpack.c.l.b16 %v636
    %v3083 = vunpack.c.h.b16 %v636
    %v3084 = vunpack.c.l.b16 %v637
    %v3085 = vunpack.c.h.b16 %v637
    %v3086 = vunpack.c.l.b16 %v638
    %v3087 = vunpack.c.h.b16 %v638
    %v3088 = vunpack.c.l.b16 %v639
    %v3089 = vunpack.c.h.b16 %v639
    %v3090 = vunpack.c.l.b16 %v640
    %v3091 = vunpack.c.h.b16 %v640
    %v3092 = vunpack.c.l.b16 %v641
    %v3093 = vunpack.c.h.b16 %v641
    %v3094 = vunpack.c.l.b16 %v642
    %v3095 = vunpack.c.l.b16 %v643
    %v3096 = vunpack.c.h.b16 %v643
    %v3097 = vunpack.c.l.b16 %v644
    %v3098 = vunpack.c.h.b16 %v644
    %v3099 = vunpack.c.l.b16 %v645
    %v3100 = vunpack.c.h.b16 %v645
    %v3101 = vunpack.c.l.b16 %v646
    %v3102 = vunpack.c.h.b16 %v646
    %v3103 = vunpack.c.l.b16 %v647
    %v3104 = vunpack.c.h.b16 %v647
    %v3105 = vunpack.c.l.b16 %v648
    %v3106 = vunpack.c.h.b16 %v648
    %v3107 = vunpack.c.l.b16 %v649
    %v3108 = vunpack.c.h.b16 %v649
    %v3109 = vunpack.c.l.b16 %v650
    %v3110 = vunpack.c.h.b16 %v650
    %v3111 = vunpack.c.l.b16 %v651
    %v3112 = vunpack.c.h.b16 %v651
    %v3113 = vunpack.c.l.b16 %v652
    %v3114 = vunpack.c.h.b16 %v652
    %v3115 = vunpack.c.l.b16 %v653
    %v3116 = vunpack.c.h.b16 %v653
    %v3117 = vunpack.c.l.b16 %v654
    %v3118 = vunpack.c.h.b16 %v654
    %v3119 = vunpack.c.l.b16 %v655
    %v3120 = vunpack.c.h.b16 %v655
    %v3121 = vunpack.c.l.b16 %v656
    %v3122 = vunpack.c.h.b16 %v656
    %v3123 = vunpack.c.l.b16 %v657
    %v3124 = vunpack.c.l.b16 %v658
    %v3125 = vunpack.c.h.b16 %v658
    %v3126 = vunpack.c.l.b16 %v659
    %v3127 = vunpack.c.h.b16 %v659
    %v3128 = vunpack.c.l.b16 %v660
    %v3129 = vunpack.c.h.b16 %v660
    %v3130 = vunpack.c.l.b16 %v661
    %v3131 = vunpack.c.h.b16 %v661
    %v3132 = vunpack.c.l.b16 %v662
    %v3133 = vunpack.c.h.b16 %v662
    %v3134 = vunpack.c.l.b16 %v663
    %v3135 = vunpack.c.h.b16 %v663
    %v3136 = vunpack.c.l.b16 %v664
    %v3137 = vunpack.c.h.b16 %v664
    %v3138 = vunpack.c.l.b16 %v665
    %v3139 = vunpack.c.h.b16 %v665
    %v3140 = vunpack.c.l.b16 %v666
    %v3141 = vunpack.c.h.b16 %v666
    %v3142 = vunpack.c.l.b16 %v667
    %v3143 = vunpack.c.h.b16 %v667
    %v3144 = vunpack.c.l.b16 %v668
    %v3145 = vunpack.c.h.b16 %v668
    %v3146 = vunpack.c.l.b16 %v669
    %v3147 = vunpack.c.h.b16 %v669
    %v3148 = vunpack.c.l.b16 %v670
    %v3149 = vunpack.c.h.b16 %v670
    %v3150 = vunpack.c.l.b16 %v671
    %v3151 = vunpack.c.h.b16 %v671
    %v3152 = vunpack.c.l.b16 %v672
    %v3153 = vunpack.c.l.b16 %v673
    %v3154 = vunpack.c.h.b16 %v673
    %v3155 = vunpack.c.l.b16 %v674
    %v3156 = vunpack.c.h.b16 %v674
    %v3157 = vunpack.c.l.b16 %v675
    %v3158 = vunpack.c.h.b16 %v675
    %v3159 = vunpack.c.l.b16 %v676
    %v3160 = vunpack.c.h.b16 %v676
    %v3161 = vunpack.c.l.b16 %v677
    %v3162 = vunpack.c.h.b16 %v677
    %v3163 = vunpack.c.l.b16 %v678
    %v3164 = vunpack.c.h.b16 %v678
    %v3165 = vunpack.c.l.b16 %v679
    %v3166 = vunpack.c.h.b16 %v679
    %v3167 = vunpack.c.l.b16 %v680
    %v3168 = vunpack.c.h.b16 %v680
    %v3169 = vunpack.c.l.b16 %v681
    %v3170 = vunpack.c.h.b16 %v681
    %v3171 = vunpack.c.l.b16 %v682
    %v3172 = vunpack.c.h.b16 %v682
    %v3173 = vunpack.c.l.b16 %v683
    %v3174 = vunpack.c.h.b16 %v683
    %v3175 = vunpack.c.l.b16 %v684
    %v3176 = vunpack.c.h.b16 %v684
    %v3177 = vunpack.c.l.b16 %v685
    %v3178 = vunpack.c.h.b16 %v685
    %v3179 = vunpack.c.l.b16 %v686
    %v3180 = vunpack.c.h.b16 %v686
    %v3181 = vunpack.c.l.b16 %v687
    %v3182 = vunpack.c.l.b16 %v688
    %v3183 = vunpack.c.h.b16 %v688
    %v3184 = vunpack.c.l.b16 %v689
    %v3185 = vunpack.c.h.b16 %v689
    %v3186 = vunpack.c.l.b16 %v690
    %v3187 = vunpack.c.h.b16 %v690
    %v3188 = vunpack.c.l.b16 %v691
    %v3189 = vunpack.c.h.b16 %v691
    %v3190 = vunpack.c.l.b16 %v692
    %v3191 = vunpack.c.h.b16 %v692
    %v3192 = vunpack.c.l.b16 %v693
    %v3193 = vunpack.c.h.b16 %v693
    %v3194 = vunpack.c.l.b16 %v694
    %v3195 = vunpack.c.h.b16 %v694
    %v3196 = vunpack.c.l.b16 %v695
    %v3197 = vunpack.c.h.b16 %v695
    %v3198 = vunpack.c.l.b16 %v696
    %v3199 = vunpack.c.h.b16 %v696
    %v3200 = vunpack.c.l.b16 %v697
    %v3201 = vunpack.c.h.b16 %v697
    %v3202 = vunpack.c.l.b16 %v698
    %v3203 = vunpack.c.h.b16 %v698
    %v3204 = vunpack.c.l.b16 %v699
    %v3205 = vunpack.c.h.b16 %v699
    %v3206 = vunpack.c.l.b16 %v700
    %v3207 = vunpack.c.h.b16 %v700
    %v3208 = vunpack.c.l.b16 %v701
    %v3209 = vunpack.c.h.b16 %v701
    %v3210 = vunpack.c.l.b16 %v702
    %v3211 = vunpack.c.l.b16 %v703
    %v3212 = vunpack.c.h.b16 %v703
    %v3213 = vunpack.c.l.b16 %v704
    %v3214 = vunpack.c.h.b16 %v704
    %v3215 = vunpack.c.l.b16 %v705
    %v3216 = vunpack.c.h.b16 %v705
    %v3217 = vunpack.c.l.b16 %v706
    %v3218 = vunpack.c.h.b16 %v706
    %v3219 = vunpack.c.l.b16 %v707
    %v3220 = vunpack.c.h.b16 %v707
    %v3221 = vunpack.c.l.b16 %v708
    %v3222 = vunpack.c.h.b16 %v708
    %v3223 = vunpack.c.l.b16 %v709
    %v3224 = vunpack.c.h.b16 %v709
    %v3225 = vunpack.c.l.b16 %v710
    %v3226 = vunpack.c.h.b16 %v710
    %v3227 = vunpack.c.l.b16 %v711
    %v3228 = vunpack.c.h.b16 %v711
    %v3229 = vunpack.c.l.b16 %v712
    %v3230 = vunpack.c.h.b16 %v712
    %v3231 = vunpack.c.l.b16 %v713
    %v3232 = vunpack.c.h.b16 %v713
    %v3233 = vunpack.c.l.b16 %v714
    %v3234 = vunpack.c.h.b16 %v714
    %v3235 = vunpack.c.l.b16 %v715
    %v3236 = vunpack.c.h.b16 %v715
    %v3237 = vunpack.c.l.b16 %v716
    %v3238 = vunpack.c.h.b16 %v716
    %v3239 = vunpack.c.l.b16 %v717
    %v3240 = vunpack.c.l.b16 %v718
    %v3241 = vunpack.c.h.b16 %v718
    %v3242 = vunpack.c.l.b16 %v719
    %v3243 = vunpack.c.h.b16 %v719
    %v3244 = vunpack.c.l.b16 %v720
    %v3245 = vunpack.c.h.b16 %v720
    %v3246 = vunpack.c.l.b16 %v721
    %v3247 = vunpack.c.h.b16 %v721
    %v3248 = vunpack.c.l.b16 %v722
    %v3249 = vunpack.c.h.b16 %v722
    %v3250 = vunpack.c.l.b16 %v723
    %v3251 = vunpack.c.h.b16 %v723
    %v3252 = vunpack.c.l.b16 %v724
    %v3253 = vunpack.c.h.b16 %v724
    %v3254 = vunpack.c.l.b16 %v725
    %v3255 = vunpack.c.h.b16 %v725
    %v3256 = vunpack.c.l.b16 %v726
    %v3257 = vunpack.c.h.b16 %v726
    %v3258 = vunpack.c.l.b16 %v727
    %v3259 = vunpack.c.h.b16 %v727
    %v3260 = vunpack.c.l.b16 %v728
    %v3261 = vunpack.c.h.b16 %v728
    %v3262 = vunpack.c.l.b16 %v729
    %v3263 = vunpack.c.h.b16 %v729
    %v3264 = vunpack.c.l.b16 %v730
    %v3265 = vunpack.c.h.b16 %v730
    %v3266 = vunpack.c.l.b16 %v731
    %v3267 = vunpack.c.h.b16 %v731
    %v3268 = vunpack.c.l.b16 %v732
    %v3269 = vunpack.c.l.b16 %v733
    %v3270 = vunpack.c.h.b16 %v733
    %v3271 = vunpack.c.l.b16 %v734
    %v3272 = vunpack.c.h.b16 %v734
    %v3273 = vunpack.c.l.b16 %v735
    %v3274 = vunpack.c.h.b16 %v735
    %v3275 = vunpack.c.l.b16 %v736
    %v3276 = vunpack.c.h.b16 %v736
    %v3277 = vunpack.c.l.b16 %v737
    %v3278 = vunpack.c.h.b16 %v737
    %v3279 = vunpack.c.l.b16 %v738
    %v3280 = vunpack.c.h.b16 %v738
    %v3281 = vunpack.c.l.b16 %v739
    %v3282 = vunpack.c.h.b16 %v739
    %v3283 = vunpack.c.l.b16 %v740
    %v3284 = vunpack.c.h.b16 %v740
    %v3285 = vunpack.c.l.b16 %v741
    %v3286 = vunpack.c.h.b16 %v741
    %v3287 = vunpack.c.l.b16 %v742
    %v3288 = vunpack.c.h.b16 %v742
    %v3289 = vunpack.c.l.b16 %v743
    %v3290 = vunpack.c.h.b16 %v743
    %v3291 = vunpack.c.l.b16 %v744
    %v3292 = vunpack.c.h.b16 %v744
    %v3293 = vunpack.c.l.b16 %v745
    %v3294 = vunpack.c.h.b16 %v745
    %v3295 = vunpack.c.l.b16 %v746
    %v3296 = vunpack.c.h.b16 %v746
    %v3297 = vunpack.c.l.b16 %v747
    %v3298 = vunpack.c.l.b16 %v748
    %v3299 = vunpack.c.h.b16 %v748
    %v3300 = vunpack.c.l.b16 %v749
    %v3301 = vunpack.c.h.b16 %v749
    %v3302 = vunpack.c.l.b16 %v750
    %v3303 = vunpack.c.h.b16 %v750
    %v3304 = vunpack.c.l.b16 %v751
    %v3305 = vunpack.c.h.b16 %v751
    %v3306 = vunpack.c.l.b16 %v752
    %v3307 = vunpack.c.h.b16 %v752
    %v3308 = vunpack.c.l.b16 %v753
    %v3309 = vunpack.c.h.b16 %v753
    %v3310 = vunpack.c.l.b16 %v754
    %v3311 = vunpack.c.h.b16 %v754
    %v3312 = vunpack.c.l.b16 %v755
    %v3313 = vunpack.c.h.b16 %v755
    %v3314 = vunpack.c.l.b16 %v756
    %v3315 = vunpack.c.h.b16 %v756
    %v3316 = vunpack.c.l.b16 %v757
    %v3317 = vunpack.c.h.b16 %v757
    %v3318 = vunpack.c.l.b16 %v758
    %v3319 = vunpack.c.h.b16 %v758
    %v3320 = vunpack.c.l.b16 %v759
    %v3321 = vunpack.c.h.b16 %v759
    %v3322 = vunpack.c.l.b16 %v760
    %v3323 = vunpack.c.h.b16 %v760
    %v3324 = vunpack.c.l.b16 %v761
    %v3325 = vunpack.c.h.b16 %v761
    %v3326 = vunpack.c.l.b16 %v762
    %v3327 = vunpack.c.l.b16 %v763
    %v3328 = vunpack.c.h.b16 %v763
    %v3329 = vunpack.c.l.b16 %v764
    %v3330 = vunpack.c.h.b16 %v764
    %v3331 = vunpack.c.l.b16 %v765
    %v3332 = vunpack.c.h.b16 %v765
    %v3333 = vunpack.c.l.b16 %v766
    %v3334 = vunpack.c.h.b16 %v766
    %v3335 = vunpack.c.l.b16 %v767
    %v3336 = vunpack.c.h.b16 %v767
    %v3337 = vunpack.c.l.b16 %v768
    %v3338 = vunpack.c.h.b16 %v768
    %v3339 = vunpack.c.l.b16 %v769
    %v3340 = vunpack.c.h.b16 %v769
    %v3341 = vunpack.c.l.b16 %v770
    %v3342 = vunpack.c.h.b16 %v770
    %v3343 = vunpack.c.l.b16 %v771
    %v3344 = vunpack.c.h.b16 %v771
    %v3345 = vunpack.c.l.b16 %v772
    %v3346 = vunpack.c.h.b16 %v772
    %v3347 = vunpack.c.l.b16 %v773
    %v3348 = vunpack.c.h.b16 %v773
    %v3349 = vunpack.c.l.b16 %v774
    %v3350 = vunpack.c.h.b16 %v774
    %v3351 = vunpack.c.l.b16 %v775
    %v3352 = vunpack.c.h.b16 %v775
    %v3353 = vunpack.c.l.b16 %v776
    %v3354 = vunpack.c.h.b16 %v776
    %v3355 = vunpack.c.l.b16 %v777
    %v3356 = vunpack.c.l.b16 %v778
    %v3357 = vunpack.c.h.b16 %v778
    %v3358 = vunpack.c.l.b16 %v779
    %v3359 = vunpack.c.h.b16 %v779
    %v3360 = vunpack.c.l.b16 %v780
    %v3361 = vunpack.c.h.b16 %v780
    %v3362 = vunpack.c.l.b16 %v781
    %v3363 = vunpack.c.h.b16 %v781
    %v3364 = vunpack.c.l.b16 %v782
    %v3365 = vunpack.c.h.b16 %v782
    %v3366 = vunpack.c.l.b16 %v783
    %v3367 = vunpack.c.h.b16 %v783
    %v3368 = vunpack.c.l.b16 %v784
    %v3369 = vunpack.c.h.b16 %v784
    %v3370 = vunpack.c.l.b16 %v785
    %v3371 = vunpack.c.h.b16 %v785
    %v3372 = vunpack.c.l.b16 %v786
    %v3373 = vunpack.c.h.b16 %v786
    %v3374 = vunpack.c.l.b16 %v787
    %v3375 = vunpack.c.h.b16 %v787
    %v3376 = vunpack.c.l.b16 %v788
    %v3377 = vunpack.c.h.b16 %v788
    %v3378 = vunpack.c.l.b16 %v789
    %v3379 = vunpack.c.h.b16 %v789
    %v3380 = vunpack.c.l.b16 %v790
    %v3381 = vunpack.c.h.b16 %v790
    %v3382 = vunpack.c.l.b16 %v791
    %v3383 = vunpack.c.h.b16 %v791
    %v3384 = vunpack.c.l.b16 %v792
    %v3385 = vunpack.c.l.b16 %v793
    %v3386 = vunpack.c.h.b16 %v793
    %v3387 = vunpack.c.l.b16 %v794
    %v3388 = vunpack.c.h.b16 %v794
    %v3389 = vunpack.c.l.b16 %v795
    %v3390 = vunpack.c.h.b16 %v795
    %v3391 = vunpack.c.l.b16 %v796
    %v3392 = vunpack.c.h.b16 %v796
    %v3393 = vunpack.c.l.b16 %v797
    %v3394 = vunpack.c.h.b16 %v797
    %v3395 = vunpack.c.l.b16 %v798
    %v3396 = vunpack.c.h.b16 %v798
    %v3397 = vunpack.c.l.b16 %v799
    %v3398 = vunpack.c.h.b16 %v799
    %v3399 = vunpack.c.l.b16 %v800
    %v3400 = vunpack.c.h.b16 %v800
    %v3401 = vunpack.c.l.b16 %v801
    %v3402 = vunpack.c.h.b16 %v801
    %v3403 = vunpack.c.l.b16 %v802
    %v3404 = vunpack.c.h.b16 %v802
    %v3405 = vunpack.c.l.b16 %v803
    %v3406 = vunpack.c.h.b16 %v803
    %v3407 = vunpack.c.l.b16 %v804
    %v3408 = vunpack.c.h.b16 %v804
    %v3409 = vunpack.c.l.b16 %v805
    %v3410 = vunpack.c.h.b16 %v805
    %v3411 = vunpack.c.l.b16 %v806
    %v3412 = vunpack.c.h.b16 %v806
    %v3413 = vunpack.c.l.b16 %v807
    %v3414 = vunpack.c.l.b16 %v808
    %v3415 = vunpack.c.h.b16 %v808
    %v3416 = vunpack.c.l.b16 %v809
    %v3417 = vunpack.c.h.b16 %v809
    %v3418 = vunpack.c.l.b16 %v810
    %v3419 = vunpack.c.h.b16 %v810
    %v3420 = vunpack.c.l.b16 %v811
    %v3421 = vunpack.c.h.b16 %v811
    %v3422 = vunpack.c.l.b16 %v812
    %v3423 = vunpack.c.h.b16 %v812
    %v3424 = vunpack.c.l.b16 %v813
    %v3425 = vunpack.c.h.b16 %v813
    %v3426 = vunpack.c.l.b16 %v814
    %v3427 = vunpack.c.h.b16 %v814
    %v3428 = vunpack.c.l.b16 %v815
    %v3429 = vunpack.c.h.b16 %v815
    %v3430 = vunpack.c.l.b16 %v816
    %v3431 = vunpack.c.h.b16 %v816
    %v3432 = vunpack.c.l.b16 %v817
    %v3433 = vunpack.c.h.b16 %v817
    %v3434 = vunpack.c.l.b16 %v818
    %v3435 = vunpack.c.h.b16 %v818
    %v3436 = vunpack.c.l.b16 %v819
    %v3437 = vunpack.c.h.b16 %v819
    %v3438 = vunpack.c.l.b16 %v820
    %v3439 = vunpack.c.h.b16 %v820
    %v3440 = vunpack.c.l.b16 %v821
    %v3441 = vunpack.c.h.b16 %v821
    %v3442 = vunpack.c.l.b16 %v822
    %v3443 = vunpack.c.l.b16 %v823
    %v3444 = vunpack.c.h.b16 %v823
    %v3445 = vunpack.c.l.b16 %v824
    %v3446 = vunpack.c.h.b16 %v824
    %v3447 = vunpack.c.l.b16 %v825
    %v3448 = vunpack.c.h.b16 %v825
    %v3449 = vunpack.c.l.b16 %v826
    %v3450 = vunpack.c.h.b16 %v826
    %v3451 = vunpack.c.l.b16 %v827
    %v3452 = vunpack.c.h.b16 %v827
    %v3453 = vunpack.c.l.b16 %v828
    %v3454 = vunpack.c.h.b16 %v828
    %v3455 = vunpack.c.l.b16 %v829
    %v3456 = vunpack.c.h.b16 %v829
    %v3457 = vunpack.c.l.b16 %v830
    %v3458 = vunpack.c.h.b16 %v830
    %v3459 = vunpack.c.l.b16 %v831
    %v3460 = vunpack.c.h.b16 %v831
    %v3461 = vunpack.c.l.b16 %v832
    %v3462 = vunpack.c.h.b16 %v832
    %v3463 = vunpack.c.l.b16 %v833
    %v3464 = vunpack.c.h.b16 %v833
    %v3465 = vunpack.c.l.b16 %v834
    %v3466 = vunpack.c.h.b16 %v834
    %v3467 = vunpack.c.l.b16 %v835
    %v3468 = vunpack.c.h.b16 %v835
    %v3469 = vunpack.c.l.b16 %v836
    %v3470 = vunpack.c.h.b16 %v836
    %v3471 = vunpack.c.l.b16 %v837
    %v3472 = vunpack.c.l.b16 %v838
    %v3473 = vunpack.c.h.b16 %v838
    %v3474 = vunpack.c.l.b16 %v839
    %v3475 = vunpack.c.h.b16 %v839
    %v3476 = vunpack.c.l.b16 %v840
    %v3477 = vunpack.c.h.b16 %v840
    %v3478 = vunpack.c.l.b16 %v841
    %v3479 = vunpack.c.h.b16 %v841
    %v3480 = vunpack.c.l.b16 %v842
    %v3481 = vunpack.c.h.b16 %v842
    %v3482 = vunpack.c.l.b16 %v843
    %v3483 = vunpack.c.h.b16 %v843
    %v3484 = vunpack.c.l.b16 %v844
    %v3485 = vunpack.c.h.b16 %v844
    %v3486 = vunpack.c.l.b16 %v845
    %v3487 = vunpack.c.h.b16 %v845
    %v3488 = vunpack.c.l.b16 %v846
    %v3489 = vunpack.c.h.b16 %v846
    %v3490 = vunpack.c.l.b16 %v847
    %v3491 = vunpack.c.h.b16 %v847
    %v3492 = vunpack.c.l.b16 %v848
    %v3493 = vunpack.c.h.b16 %v848
    %v3494 = vunpack.c.l.b16 %v849
    %v3495 = vunpack.c.h.b16 %v849
    %v3496 = vunpack.c.l.b16 %v850
    %v3497 = vunpack.c.h.b16 %v850
    %v3498 = vunpack.c.l.b16 %v851
    %v3499 = vunpack.c.h.b16 %v851
    %v3500 = vunpack.c.l.b16 %v852
    %v3501 = vunpack.c.l.b16 %v853
    %v3502 = vunpack.c.h.b16 %v853
    %v3503 = vunpack.c.l.b16 %v854
    %v3504 = vunpack.c.h.b16 %v854
    %v3505 = vunpack.c.l.b16 %v855
    %v3506 = vunpack.c.h.b16 %v855
    %v3507 = vunpack.c.l.b16 %v856
    %v3508 = vunpack.c.h.b16 %v856
    %v3509 = vunpack.c.l.b16 %v857
    %v3510 = vunpack.c.h.b16 %v857
    %v3511 = vunpack.c.l.b16 %v858
    %v3512 = vunpack.c.h.b16 %v858
    %v3513 = vunpack.c.l.b16 %v859
    %v3514 = vunpack.c.h.b16 %v859
    %v3515 = vunpack.c.l.b16 %v860
    %v3516 = vunpack.c.h.b16 %v860
    %v3517 = vunpack.c.l.b16 %v861
    %v3518 = vunpack.c.h.b16 %v861
    %v3519 = vunpack.c.l.b16 %v862
    %v3520 = vunpack.c.h.b16 %v862
    %v3521 = vunpack.c.l.b16 %v863
    %v3522 = vunpack.c.h.b16 %v863
    %v3523 = vunpack.c.l.b16 %v864
    %v3524 = vunpack.c.h.b16 %v864
    %v3525 = vunpack.c.l.b16 %v865
    %v3526 = vunpack.c.h.b16 %v865
    %v3527 = vunpack.c.l.b16 %v866
    %v3528 = vunpack.c.h.b16 %v866
    %v3529 = vunpack.c.l.b16 %v867
    %v3530 = vunpack.c.l.b16 %v868
    %v3531 = vunpack.c.h.b16 %v868
    %v3532 = vunpack.c.l.b16 %v869
    %v3533 = vunpack.c.h.b16 %v869
    %v3534 = vunpack.c.l.b16 %v870
    %v3535 = vunpack.c.h.b16 %v870
    %v3536 = vunpack.c.l.b16 %v871
    %v3537 = vunpack.c.h.b16 %v871
    %v3538 = vunpack.c.l.b16 %v872
    %v3539 = vunpack.c.h.b16 %v872
    %v3540 = vunpack.c.l.b16 %v873
    %v3541 = vunpack.c.h.b16 %v873
    %v3542 = vunpack.c.l.b16 %v874
    %v3543 = vunpack.c.h.b16 %v874
    %v3544 = vunpack.c.l.b16 %v875
    %v3545 = vunpack.c.h.b16 %v875
    %v3546 = vunpack.c.l.b16 %v876
    %v3547 = vunpack.c.h.b16 %v876
    %v3548 = vunpack.c.l.b16 %v877
    %v3549 = vunpack.c.h.b16 %v877
    %v3550 = vunpack.c.l.b16 %v878
    %v3551 = vunpack.c.h.b16 %v878
    %v3552 = vunpack.c.l.b16 %v879
    %v3553 = vunpack.c.h.b16 %v879
    %v3554 = vunpack.c.l.b16 %v880
    %v3555 = vunpack.c.h.b16 %v880
    %v3556 = vunpack.c.l.b16 %v881
    %v3557 = vunpack.c.h.b16 %v881
    %v3558 = vunpack.c.l.b16 %v882
    %v3559 = vunpack.c.l.b16 %v883
    %v3560 = vunpack.c.h.b16 %v883
    %v3561 = vunpack.c.l.b16 %v884
    %v3562 = vunpack.c.h.b16 %v884
    %v3563 = vunpack.c.l.b16 %v885
    %v3564 = vunpack.c.h.b16 %v885
    %v3565 = vunpack.c.l.b16 %v886
    %v3566 = vunpack.c.h.b16 %v886
    %v3567 = vunpack.c.l.b16 %v887
    %v3568 = vunpack.c.h.b16 %v887
    %v3569 = vunpack.c.l.b16 %v888
    %v3570 = vunpack.c.h.b16 %v888
    %v3571 = vunpack.c.l.b16 %v889
    %v3572 = vunpack.c.h.b16 %v889
    %v3573 = vunpack.c.l.b16 %v890
    %v3574 = vunpack.c.h.b16 %v890
    %v3575 = vunpack.c.l.b16 %v891
    %v3576 = vunpack.c.h.b16 %v891
    %v3577 = vunpack.c.l.b16 %v892
    %v3578 = vunpack.c.h.b16 %v892
    %v3579 = vunpack.c.l.b16 %v893
    %v3580 = vunpack.c.h.b16 %v893
    %v3581 = vunpack.c.l.b16 %v894
    %v3582 = vunpack.c.h.b16 %v894
    %v3583 = vunpack.c.l.b16 %v895
    %v3584 = vunpack.c.h.b16 %v895
    %v3585 = vunpack.c.l.b16 %v896
    %v3586 = vunpack.c.h.b16 %v896
    %v3587 = vunpack.c.l.b16 %v897
    %v3588 = vunpack.c.l.b16 %v898
    %v3589 = vunpack.c.h.b16 %v898
    %v3590 = vunpack.c.l.b16 %v899
    %v3591 = vunpack.c.h.b16 %v899
    %v3592 = vunpack.c.l.b16 %v900
    %v3593 = vunpack.c.h.b16 %v900
    %v3594 = vunpack.c.l.b16 %v901
    %v3595 = vunpack.c.h.b16 %v901
    %v3596 = vunpack.c.l.b16 %v902
    %v3597 = vunpack.c.h.b16 %v902
    %v3598 = vunpack.c.l.b16 %v903
    %v3599 = vunpack.c.h.b16 %v903
    %v3600 = vunpack.c.l.b16 %v904
    %v3601 = vunpack.c.h.b16 %v904
    %v3602 = vunpack.c.l.b16 %v905
    %v3603 = vunpack.c.h.b16 %v905
    %v3604 = vunpack.c.l.b16 %v906
    %v3605 = vunpack.c.h.b16 %v906
    %v3606 = vunpack.c.l.b16 %v907
    %v3607 = vunpack.c.h.b16 %v907
    %v3608 = vunpack.c.l.b16 %v908
    %v3609 = vunpack.c.h.b16 %v908
    %v3610 = vunpack.c.l.b16 %v909
    %v3611 = vunpack.c.h.b16 %v909
    %v3612 = vunpack.c.l.b16 %v910
    %v3613 = vunpack.c.h.b16 %v910
    %v3614 = vunpack.c.l.b16 %v911
    %v3615 = vunpack.c.h.b16 %v911
    %v3616 = vunpack.c.l.b16 %v912
    %v3617 = vunpack.c.l.b16 %v913
    %v3618 = vunpack.c.h.b16 %v913
    %v3619 = vunpack.c.l.b16 %v914
    %v3620 = vunpack.c.h.b16 %v914
    %v3621 = vunpack.c.l.b16 %v915
    %v3622 = vunpack.c.h.b16 %v915
    %v3623 = vunpack.c.l.b16 %v916
    %v3624 = vunpack.c.h.b16 %v916
    %v3625 = vunpack.c.l.b16 %v917
    %v3626 = vunpack.c.h.b16 %v917
    %v3627 = vunpack.c.l.b16 %v918
    %v3628 = vunpack.c.h.b16 %v918
    %v3629 = vunpack.c.l.b16 %v919
    %v3630 = vunpack.c.h.b16 %v919
    %v3631 = vunpack.c.l.b16 %v920
    %v3632 = vunpack.c.h.b16 %v920
    %v3633 = vunpack.c.l.b16 %v921
    %v3634 = vunpack.c.h.b16 %v921
    %v3635 = vunpack.c.l.b16 %v922
    %v3636 = vunpack.c.h.b16 %v922
    %v3637 = vunpack.c.l.b16 %v923
    %v3638 = vunpack.c.h.b16 %v923
    %v3639 = vunpack.c.l.b16 %v924
    %v3640 = vunpack.c.h.b16 %v924
    %v3641 = vunpack.c.l.b16 %v925
    %v3642 = vunpack.c.h.b16 %v925
    %v3643 = vunpack.c.l.b16 %v926
    %v3644 = vunpack.c.h.b16 %v926
    %v3645 = vunpack.c.l.b16 %v927
    %v3646 = vunpack.c.l.b16 %v928
    %v3647 = vunpack.c.h.b16 %v928
    %v3648 = vunpack.c.l.b16 %v929
    %v3649 = vunpack.c.h.b16 %v929
    %v3650 = vunpack.c.l.b16 %v930
    %v3651 = vunpack.c.h.b16 %v930
    %v3652 = vunpack.c.l.b16 %v931
    %v3653 = vunpack.c.h.b16 %v931
    %v3654 = vunpack.c.l.b16 %v932
    %v3655 = vunpack.c.h.b16 %v932
    %v3656 = vunpack.c.l.b16 %v933
    %v3657 = vunpack.c.h.b16 %v933
    %v3658 = vunpack.c.l.b16 %v934
    %v3659 = vunpack.c.h.b16 %v934
    %v3660 = vunpack.c.l.b16 %v935
    %v3661 = vunpack.c.h.b16 %v935
    %v3662 = vunpack.c.l.b16 %v936
    %v3663 = vunpack.c.h.b16 %v936
    %v3664 = vunpack.c.l.b16 %v937
    %v3665 = vunpack.c.h.b16 %v937
    %v3666 = vunpack.c.l.b16 %v938
    %v3667 = vunpack.c.h.b16 %v938
    %v3668 = vunpack.c.l.b16 %v939
    %v3669 = vunpack.c.h.b16 %v939
    %v3670 = vunpack.c.l.b16 %v940
    %v3671 = vunpack.c.h.b16 %v940
    %v3672 = vunpack.c.l.b16 %v941
    %v3673 = vunpack.c.h.b16 %v941
    %v3674 = vunpack.c.l.b16 %v942
    %v3675 = vunpack.c.l.b16 %v943
    %v3676 = vunpack.c.h.b16 %v943
    %v3677 = vunpack.c.l.b16 %v944
    %v3678 = vunpack.c.h.b16 %v944
    %v3679 = vunpack.c.l.b16 %v945
    %v3680 = vunpack.c.h.b16 %v945
    %v3681 = vunpack.c.l.b16 %v946
    %v3682 = vunpack.c.h.b16 %v946
    %v3683 = vunpack.c.l.b16 %v947
    %v3684 = vunpack.c.h.b16 %v947
    %v3685 = vunpack.c.l.b16 %v948
    %v3686 = vunpack.c.h.b16 %v948
    %v3687 = vunpack.c.l.b16 %v949
    %v3688 = vunpack.c.h.b16 %v949
    %v3689 = vunpack.c.l.b16 %v950
    %v3690 = vunpack.c.h.b16 %v950
    %v3691 = vunpack.c.l.b16 %v951
    %v3692 = vunpack.c.h.b16 %v951
    %v3693 = vunpack.c.l.b16 %v952
    %v3694 = vunpack.c.h.b16 %v952
    %v3695 = vunpack.c.l.b16 %v953
    %v3696 = vunpack.c.h.b16 %v953
    %v3697 = vunpack.c.l.b16 %v954
    %v3698 = vunpack.c.h.b16 %v954
    %v3699 = vunpack.c.l.b16 %v955
    %v3700 = vunpack.c.h.b16 %v955
    %v3701 = vunpack.c.l.b16 %v956
    %v3702 = vunpack.c.h.b16 %v956
    %v3703 = vunpack.c.l.b16 %v957
    %v3704 = vunpack.c.l.b16 %v958
    %v3705 = vunpack.c.h.b16 %v958
    %v3706 = vunpack.c.l.b16 %v959
    %v3707 = vunpack.c.h.b16 %v959
    %v3708 = vunpack.c.l.b16 %v960
    %v3709 = vunpack.c.h.b16 %v960
    %v3710 = vunpack.c.l.b16 %v961
    %v3711 = vunpack.c.h.b16 %v961
    %v3712 = vunpack.c.l.b16 %v962
    %v3713 = vunpack.c.h.b16 %v962
    %v3714 = vunpack.c.l.b16 %v963
    %v3715 = vunpack.c.h.b16 %v963
    %v3716 = vunpack.c.l.b16 %v964
    %v3717 = vunpack.c.h.b16 %v964
    %v3718 = vunpack.c.l.b16 %v965
    %v3719 = vunpack.c.h.b16 %v965
    %v3720 = vunpack.c.l.b16 %v966
    %v3721 = vunpack.c.h.b16 %v966
    %v3722 = vunpack.c.l.b16 %v967
    %v3723 = vunpack.c.h.b16 %v967
    %v3724 = vunpack.c.l.b16 %v968
    %v3725 = vunpack.c.h.b16 %v968
    %v3726 = vunpack.c.l.b16 %v969
    %v3727 = vunpack.c.h.b16 %v969
    %v3728 = vunpack.c.l.b16 %v970
    %v3729 = vunpack.c.h.b16 %v970
    %v3730 = vunpack.c.l.b16 %v971
    %v3731 = vunpack.c.h.b16 %v971
    %v3732 = vunpack.c.l.b16 %v972
    %v3733 = vunpack.c.l.b16 %v973
    %v3734 = vunpack.c.h.b16 %v973
    %v3735 = vunpack.c.l.b16 %v974
    %v3736 = vunpack.c.h.b16 %v974
    %v3737 = vunpack.c.l.b16 %v975
    %v3738 = vunpack.c.h.b16 %v975
    %v3739 = vunpack.c.l.b16 %v976
    %v3740 = vunpack.c.h.b16 %v976
    %v3741 = vunpack.c.l.b16 %v977
    %v3742 = vunpack.c.h.b16 %v977
    %v3743 = vunpack.c.l.b16 %v978
    %v3744 = vunpack.c.h.b16 %v978
    %v3745 = vunpack.c.l.b16 %v979
    %v3746 = vunpack.c.h.b16 %v979
    %v3747 = vunpack.c.l.b16 %v980
    %v3748 = vunpack.c.h.b16 %v980
    %v3749 = vunpack.c.l.b16 %v981
    %v3750 = vunpack.c.h.b16 %v981
    %v3751 = vunpack.c.l.b16 %v982
    %v3752 = vunpack.c.h.b16 %v982
    %v3753 = vunpack.c.l.b16 %v983
    %v3754 = vunpack.c.h.b16 %v983
    %v3755 = vunpack.c.l.b16 %v984
    %v3756 = vunpack.c.h.b16 %v984
    %v3757 = vunpack.c.l.b16 %v985
    %v3758 = vunpack.c.h.b16 %v985
    %v3759 = vunpack.c.l.b16 %v986
    %v3760 = vunpack.c.h.b16 %v986
    %v3761 = vunpack.c.l.b16 %v987
    %v3762 = vunpack.c.l.b16 %v988
    %v3763 = vunpack.c.h.b16 %v988
    %v3764 = vunpack.c.l.b16 %v989
    %v3765 = vunpack.c.h.b16 %v989
    %v3766 = vunpack.c.l.b16 %v990
    %v3767 = vunpack.c.h.b16 %v990
    %v3768 = vunpack.c.l.b16 %v991
    %v3769 = vunpack.c.h.b16 %v991
    %v3770 = vunpack.c.l.b16 %v992
    %v3771 = vunpack.c.h.b16 %v992
    %v3772 = vunpack.c.l.b16 %v993
    %v3773 = vunpack.c.h.b16 %v993
    %v3774 = vunpack.c.l.b16 %v994
    %v3775 = vunpack.c.h.b16 %v994
    %v3776 = vunpack.c.l.b16 %v995
    %v3777 = vunpack.c.h.b16 %v995
    %v3778 = vunpack.c.l.b16 %v996
    %v3779 = vunpack.c.h.b16 %v996
    %v3780 = vunpack.c.l.b16 %v997
    %v3781 = vunpack.c.h.b16 %v997
    %v3782 = vunpack.c.l.b16 %v998
    %v3783 = vunpack.c.h.b16 %v998
    %v3784 = vunpack.c.l.b16 %v999
    %v3785 = vunpack.c.h.b16 %v999
    %v3786 = vunpack.c.l.b16 %v1000
    %v3787 = vunpack.c.h.b16 %v1000
    %v3788 = vunpack.c.l.b16 %v1001
    %v3789 = vunpack.c.h.b16 %v1001
    %v3790 = vunpack.c.l.b16 %v1002
    %v3791 = vunpack.c.l.b16 %v1003
    %v3792 = vunpack.c.h.b16 %v1003
    %v3793 = vunpack.c.l.b16 %v1004
    %v3794 = vunpack.c.h.b16 %v1004
    %v3795 = vunpack.c.l.b16 %v1005
    %v3796 = vunpack.c.h.b16 %v1005
    %v3797 = vunpack.c.l.b16 %v1006
    %v3798 = vunpack.c.h.b16 %v1006
    %v3799 = vunpack.c.l.b16 %v1007
    %v3800 = vunpack.c.h.b16 %v1007
    %v3801 = vunpack.c.l.b16 %v1008
    %v3802 = vunpack.c.h.b16 %v1008
    %v3803 = vunpack.c.l.b16 %v1009
    %v3804 = vunpack.c.h.b16 %v1009
    %v3805 = vunpack.c.l.b16 %v1010
    %v3806 = vunpack.c.h.b16 %v1010
    %v3807 = vunpack.c.l.b16 %v1011
    %v3808 = vunpack.c.h.b16 %v1011
    %v3809 = vunpack.c.l.b16 %v1012
    %v3810 = vunpack.c.h.b16 %v1012
    %v3811 = vunpack.c.l.b16 %v1013
    %v3812 = vunpack.c.h.b16 %v1013
    %v3813 = vunpack.c.l.b16 %v1014
    %v3814 = vunpack.c.h.b16 %v1014
    %v3815 = vunpack.c.l.b16 %v1015
    %v3816 = vunpack.c.h.b16 %v1015
    %v3817 = vunpack.c.l.b16 %v1016
    %v3818 = vunpack.c.h.b16 %v1016
    %v3819 = vunpack.c.l.b16 %v1017
    %v3820 = vunpack.c.l.b16 %v1018
    %v3821 = vunpack.c.h.b16 %v1018
    %v3822 = vunpack.c.l.b16 %v1019
    %v3823 = vunpack.c.h.b16 %v1019
    %v3824 = vunpack.c.l.b16 %v1020
    %v3825 = vunpack.c.h.b16 %v1020
    %v3826 = vunpack.c.l.b16 %v1021
    %v3827 = vunpack.c.h.b16 %v1021
    %v3828 = vunpack.c.l.b16 %v1022
    %v3829 = vunpack.c.h.b16 %v1022
    %v3830 = vunpack.c.l.b16 %v1023
    %v3831 = vunpack.c.h.b16 %v1023
    %v3832 = vunpack.c.l.b16 %v1024
    %v3833 = vunpack.c.h.b16 %v1024
    %v3834 = vunpack.c.l.b16 %v1025
    %v3835 = vunpack.c.h.b16 %v1025
    %v3836 = vunpack.c.l.b16 %v1026
    %v3837 = vunpack.c.h.b16 %v1026
    %v3838 = vunpack.c.l.b16 %v1027
    %v3839 = vunpack.c.h.b16 %v1027
    %v3840 = vunpack.c.l.b16 %v1028
    %v3841 = vunpack.c.h.b16 %v1028
    %v3842 = vunpack.c.l.b16 %v1029
    %v3843 = vunpack.c.h.b16 %v1029
    %v3844 = vunpack.c.l.b16 %v1030
    %v3845 = vunpack.c.h.b16 %v1030
    %v3846 = vunpack.c.l.b16 %v1031
    %v3847 = vunpack.c.h.b16 %v1031
    %v3848 = vunpack.c.l.b16 %v1032
    %v3849 = vunpack.c.l.b16 %v1033
    %v3850 = vunpack.c.h.b16 %v1033
    %v3851 = vunpack.c.l.b16 %v1034
    %v3852 = vunpack.c.h.b16 %v1034
    %v3853 = vunpack.c.l.b16 %v1035
    %v3854 = vunpack.c.h.b16 %v1035
    %v3855 = vunpack.c.l.b16 %v1036
    %v3856 = vunpack.c.h.b16 %v1036
    %v3857 = vunpack.c.l.b16 %v1037
    %v3858 = vunpack.c.h.b16 %v1037
    %v3859 = vunpack.c.l.b16 %v1038
    %v3860 = vunpack.c.h.b16 %v1038
    %v3861 = vunpack.c.l.b16 %v1039
    %v3862 = vunpack.c.h.b16 %v1039
    %v3863 = vunpack.c.l.b16 %v1040
    %v3864 = vunpack.c.h.b16 %v1040
    %v3865 = vunpack.c.l.b16 %v1041
    %v3866 = vunpack.c.h.b16 %v1041
    %v3867 = vunpack.c.l.b16 %v1042
    %v3868 = vunpack.c.h.b16 %v1042
    %v3869 = vunpack.c.l.b16 %v1043
    %v3870 = vunpack.c.h.b16 %v1043
    %v3871 = vunpack.c.l.b16 %v1044
    %v3872 = vunpack.c.h.b16 %v1044
    %v3873 = vunpack.c.l.b16 %v1045
    %v3874 = vunpack.c.h.b16 %v1045
    %v3875 = vunpack.c.l.b16 %v1046
    %v3876 = vunpack.c.h.b16 %v1046
    %v3877 = vunpack.c.l.b16 %v1047
    %v3878 = vpack.c.b16 %v2051, %v2022
    %v3879 = vpack.c.b16 %v2052, %v2023
    %v3880 = vpack.c.b16 %v2053, %v2024
    %v3881 = vpack.c.b16 %v2054, %v2025
    %v3882 = vpack.c.b16 %v2055, %v2026
    %v3883 = vpack.c.b16 %v2056, %v2027
    %v3884 = vpack.c.b16 %v2057, %v2028
    %v3885 = vpack.c.b16 %v2058, %v2029
    %v3886 = vpack.c.b16 %v2059, %v2030
    %v3887 = vpack.c.b16 %v2060, %v2031
    %v3888 = vpack.c.b16 %v2061, %v2032
    %v3889 = vpack.c.b16 %v2062, %v2033
    %v3890 = vpack.c.b16 %v2063, %v2034
    %v3891 = vpack.c.b16 %v2064, %v2035
    %v3892 = vpack.c.b16 %v2065, %v2036
    %v3893 = vpack.c.b16 %v2066, %v2037
    %v3894 = vpack.c.b16 %v2067, %v2038
    %v3895 = vpack.c.b16 %v2068, %v2039
    %v3896 = vpack.c.b16 %v2069, %v2040
    %v3897 = vpack.c.b16 %v2070, %v2041
    %v3898 = vpack.c.b16 %v2071, %v2042
    %v3899 = vpack.c.b16 %v2072, %v2043
    %v3900 = vpack.c.b16 %v2073, %v2044
    %v3901 = vpack.c.b16 %v2074, %v2045
    %v3902 = vpack.c.b16 %v2075, %v2046
    %v3903 = vpack.c.b16 %v2076, %v2047
    %v3904 = vpack.c.b16 %v2077, %v2048
    %v3905 = vpack.c.b16 %v2078, %v2049
    %v3906 = vpack.c.b16 %v2079, %v2050
    %v3907 = vpack.c.b16 %v2109, %v2080
    %v3908 = vpack.c.b16 %v2110, %v2081
    %v3909 = vpack.c.b16 %v2111, %v2082
    %v3910 = vpack.c.b16 %v2112, %v2083
    %v3911 = vpack.c.b16 %v2113, %v2084
    %v3912 = vpack.c.b16 %v2114, %v2085
    %v3913 = vpack.c.b16 %v2115, %v2086
    %v3914 = vpack.c.b16 %v2116, %v2087
    %v3915 = vpack.c.b16 %v2117, %v2088
    %v3916 = vpack.c.b16 %v2118, %v2089
    %v3917 = vpack.c.b16 %v2119, %v2090
    %v3918 = vpack.c.b16 %v2120, %v2091
    %v3919 = vpack.c.b16 %v2121, %v2092
    %v3920 = vpack.c.b16 %v2122, %v2093
    %v3921 = vpack.c.b16 %v2123, %v2094
    %v3922 = vpack.c.b16 %v2124, %v2095
    %v3923 = vpack.c.b16 %v2125, %v2096
    %v3924 = vpack.c.b16 %v2126, %v2097
    %v3925 = vpack.c.b16 %v2127, %v2098
    %v3926 = vpack.c.b16 %v2128, %v2099
    %v3927 = vpack.c.b16 %v2129, %v2100
    %v3928 = vpack.c.b16 %v2130, %v2101
    %v3929 = vpack.c.b16 %v2131, %v2102
    %v3930 = vpack.c.b16 %v2132, %v2103
    %v3931 = vpack.c.b16 %v2133, %v2104
    %v3932 = vpack.c.b16 %v2134, %v2105
    %v3933 = vpack.c.b16 %v2135, %v2106
    %v3934 = vpack.c.b16 %v2136, %v2107
    %v3935 = vpack.c.b16 %v2137, %v2108
    %v3936 = vpack.c.b16 %v2167, %v2138
    %v3937 = vpack.c.b16 %v2168, %v2139
    %v3938 = vpack.c.b16 %v2169, %v2140
    %v3939 = vpack.c.b16 %v2170, %v2141
    %v3940 = vpack.c.b16 %v2171, %v2142
    %v3941 = vpack.c.b16 %v2172, %v2143
    %v3942 = vpack.c.b16 %v2173, %v2144
    %v3943 = vpack.c.b16 %v2174, %v2145
    %v3944 = vpack.c.b16 %v2175, %v2146
    %v3945 = vpack.c.b16 %v2176, %v2147
    %v3946 = vpack.c.b16 %v2177, %v2148
    %v3947 = vpack.c.b16 %v2178, %v2149
    %v3948 = vpack.c.b16 %v2179, %v2150
    %v3949 = vpack.c.b16 %v2180, %v2151
    %v3950 = vpack.c.b16 %v2181, %v2152
    %v3951 = vpack.c.b16 %v2182, %v2153
    %v3952 = vpack.c.b16 %v2183, %v2154
    %v3953 = vpack.c.b16 %v2184, %v2155
    %v3954 = vpack.c.b16 %v2185, %v2156
    %v3955 = vpack.c.b16 %v2186, %v2157
    %v3956 = vpack.c.b16 %v2187, %v2158
    %v3957 = vpack.c.b16 %v2188, %v2159
    %v3958 = vpack.c.b16 %v2189, %v2160
    %v3959 = vpack.c.b16 %v2190, %v2161
    %v3960 = vpack.c.b16 %v2191, %v2162
    %v3961 = vpack.c.b16 %v2192, %v2163
    %v3962 = vpack.c.b16 %v2193, %v2164
    %v3963 = vpack.c.b16 %v2194, %v2165
    %v3964 = vpack.c.b16 %v2195, %v2166
    %v3965 = vpack.c.b16 %v2225, %v2196
    %v3966 = vpack.c.b16 %v2226, %v2197
    %v3967 = vpack.c.b16 %v2227, %v2198
    %v3968 = vpack.c.b16 %v2228, %v2199
    %v3969 = vpack.c.b16 %v2229, %v2200
    %v3970 = vpack.c.b16 %v2230, %v2201
    %v3971 = vpack.c.b16 %v2231, %v2202
    %v3972 = vpack.c.b16 %v2232, %v2203
    %v3973 = vpack.c.b16 %v2233, %v2204
    %v3974 = vpack.c.b16 %v2234, %v2205
    %v3975 = vpack.c.b16 %v2235, %v2206
    %v3976 = vpack.c.b16 %v2236, %v2207
    %v3977 = vpack.c.b16 %v2237, %v2208
    %v3978 = vpack.c.b16 %v2238, %v2209
    %v3979 = vpack.c.b16 %v2239, %v2210
    %v3980 = vpack.c.b16 %v2240, %v2211
    %v3981 = vpack.c.b16 %v2241, %v2212
    %v3982 = vpack.c.b16 %v2242, %v2213
    %v3983 = vpack.c.b16 %v2243, %v2214
    %v3984 = vpack.c.b16 %v2244, %v2215
    %v3985 = vpack.c.b16 %v2245, %v2216
    %v3986 = vpack.c.b16 %v2246, %v2217
    %v3987 = vpack.c.b16 %v2247, %v2218
    %v3988 = vpack.c.b16 %v2248, %v2219
    %v3989 = vpack.c.b16 %v2249, %v2220
    %v3990 = vpack.c.b16 %v2250, %v2221
    %v3991 = vpack.c.b16 %v2251, %v2222
    %v3992 = vpack.c.b16 %v2252, %v2223
    %v3993 = vpack.c.b16 %v2253, %v2224
    %v3994 = vpack.c.b16 %v2283, %v2254
    %v3995 = vpack.c.b16 %v2284, %v2255
    %v3996 = vpack.c.b16 %v2285, %v2256
    %v3997 = vpack.c.b16 %v2286, %v2257
    %v3998 = vpack.c.b16 %v2287, %v2258
    %v3999 = vpack.c.b16 %v2288, %v2259
    %v4000 = vpack.c.b16 %v2289, %v2260
    %v4001 = vpack.c.b16 %v2290, %v2261
    %v4002 = vpack.c.b16 %v2291, %v2262
    %v4003 = vpack.c.b16 %v2292, %v2263
    %v4004 = vpack.c.b16 %v2293, %v2264
    %v4005 = vpack.c.b16 %v2294, %v2265
    %v4006 = vpack.c.b16 %v2295, %v2266
    %v4007 = vpack.c.b16 %v2296, %v2267
    %v4008 = vpack.c.b16 %v2297, %v2268
    %v4009 = vpack.c.b16 %v2298, %v2269
    %v4010 = vpack.c.b16 %v2299, %v2270
    %v4011 = vpack.c.b16 %v2300, %v2271
    %v4012 = vpack.c.b16 %v2301, %v2272
    %v4013 = vpack.c.b16 %v2302, %v2273
    %v4014 = vpack.c.b16 %v2303, %v2274
    %v4015 = vpack.c.b16 %v2304, %v2275
    %v4016 = vpack.c.b16 %v2305, %v2276
    %v4017 = vpack.c.b16 %v2306, %v2277
    %v4018 = vpack.c.b16 %v2307, %v2278
    %v4019 = vpack.c.b16 %v2308, %v2279
    %v4020 = vpack.c.b16 %v2309, %v2280
    %v4021 = vpack.c.b16 %v2310, %v2281
    %v4022 = vpack.c.b16 %v2311, %v2282
    %v4023 = vpack.c.b16 %v2341, %v2312
    %v4024 = vpack.c.b16 %v2342, %v2313
    %v4025 = vpack.c.b16 %v2343, %v2314
    %v4026 = vpack.c.b16 %v2344, %v2315
    %v4027 = vpack.c.b16 %v2345, %v2316
    %v4028 = vpack.c.b16 %v2346, %v2317
    %v4029 = vpack.c.b16 %v2347, %v2318
    %v4030 = vpack.c.b16 %v2348, %v2319
    %v4031 = vpack.c.b16 %v2349, %v2320
    %v4032 = vpack.c.b16 %v2350, %v2321
    %v4033 = vpack.c.b16 %v2351, %v2322
    %v4034 = vpack.c.b16 %v2352, %v2323
    %v4035 = vpack.c.b16 %v2353, %v2324
    %v4036 = vpack.c.b16 %v2354, %v2325
    %v4037 = vpack.c.b16 %v2355, %v2326
    %v4038 = vpack.c.b16 %v2356, %v2327
    %v4039 = vpack.c.b16 %v2357, %v2328
    %v4040 = vpack.c.b16 %v2358, %v2329
    %v4041 = vpack.c.b16 %v2359, %v2330
    %v4042 = vpack.c.b16 %v2360, %v2331
    %v4043 = vpack.c.b16 %v2361, %v2332
    %v4044 = vpack.c.b16 %v2362, %v2333
    %v4045 = vpack.c.b16 %v2363, %v2334
    %v4046 = vpack.c.b16 %v2364, %v2335
    %v4047 = vpack.c.b16 %v2365, %v2336
    %v4048 = vpack.c.b16 %v2366, %v2337
    %v4049 = vpack.c.b16 %v2367, %v2338
    %v4050 = vpack.c.b16 %v2368, %v2339
    %v4051 = vpack.c.b16 %v2369, %v2340
    %v4052 = vpack.c.b16 %v2399, %v2370
    %v4053 = vpack.c.b16 %v2400, %v2371
    %v4054 = vpack.c.b16 %v2401, %v2372
    %v4055 = vpack.c.b16 %v2402, %v2373
    %v4056 = vpack.c.b16 %v2403, %v2374
    %v4057 = vpack.c.b16 %v2404, %v2375
    %v4058 = vpack.c.b16 %v2405, %v2376
    %v4059 = vpack.c.b16 %v2406, %v2377
    %v4060 = vpack.c.b16 %v2407, %v2378
    %v4061 = vpack.c.b16 %v2408, %v2379
    %v4062 = vpack.c.b16 %v2409, %v2380
    %v4063 = vpack.c.b16 %v2410, %v2381
    %v4064 = vpack.c.b16 %v2411, %v2382
    %v4065 = vpack.c.b16 %v2412, %v2383
    %v4066 = vpack.c.b16 %v2413, %v2384
    %v4067 = vpack.c.b16 %v2414, %v2385
    %v4068 = vpack.c.b16 %v2415, %v2386
    %v4069 = vpack.c.b16 %v2416, %v2387
    %v4070 = vpack.c.b16 %v2417, %v2388
    %v4071 = vpack.c.b16 %v2418, %v2389
    %v4072 = vpack.c.b16 %v2419, %v2390
    %v4073 = vpack.c.b16 %v2420, %v2391
    %v4074 = vpack.c.b16 %v2421, %v2392
    %v4075 = vpack.c.b16 %v2422, %v2393
    %v4076 = vpack.c.b16 %v2423, %v2394
    %v4077 = vpack.c.b16 %v2424, %v2395
    %v4078 = vpack.c.b16 %v2425, %v2396
    %v4079 = vpack.c.b16 %v2426, %v2397
    %v4080 = vpack.c.b16 %v2427, %v2398
    %v4081 = vpack.c.b16 %v2457, %v2428
    %v4082 = vpack.c.b16 %v2458, %v2429
    %v4083 = vpack.c.b16 %v2459, %v2430
    %v4084 = vpack.c.b16 %v2460, %v2431
    %v4085 = vpack.c.b16 %v2461, %v2432
    %v4086 = vpack.c.b16 %v2462, %v2433
    %v4087 = vpack.c.b16 %v2463, %v2434
    %v4088 = vpack.c.b16 %v2464, %v2435
    %v4089 = vpack.c.b16 %v2465, %v2436
    %v4090 = vpack.c.b16 %v2466, %v2437
    %v4091 = vpack.c.b16 %v2467, %v2438
    %v4092 = vpack.c.b16 %v2468, %v2439
    %v4093 = vpack.c.b16 %v2469, %v2440
    %v4094 = vpack.c.b16 %v2470, %v2441
    %v4095 = vpack.c.b16 %v2471, %v2442
    %v4096 = vpack.c.b16 %v2472, %v2443
    %v4097 = vpack.c.b16 %v2473, %v2444
    %v4098 = vpack.c.b16 %v2474, %v2445
    %v4099 = vpack.c.b16 %v2475, %v2446
    %v4100 = vpack.c.b16 %v2476, %v2447
    %v4101 = vpack.c.b16 %v2477, %v2448
    %v4102 = vpack.c.b16 %v2478, %v2449
    %v4103 = vpack.c.b16 %v2479, %v2450
    %v4104 = vpack.c.b16 %v2480, %v2451
    %v4105 = vpack.c.b16 %v2481, %v2452
    %v4106 = vpack.c.b16 %v2482, %v2453
    %v4107 = vpack.c.b16 %v2483, %v2454
    %v4108 = vpack.c.b16 %v2484, %v2455
    %v4109 = vpack.c.b16 %v2485, %v2456
    %v4110 = vpack.c.b16 %v2515, %v2486
    %v4111 = vpack.c.b16 %v2516, %v2487
    %v4112 = vpack.c.b16 %v2517, %v2488
    %v4113 = vpack.c.b16 %v2518, %v2489
    %v4114 = vpack.c.b16 %v2519, %v2490
    %v4115 = vpack.c.b16 %v2520, %v2491
    %v4116 = vpack.c.b16 %v2521, %v2492
    %v4117 = vpack.c.b16 %v2522, %v2493
    %v4118 = vpack.c.b16 %v2523, %v2494
    %v4119 = vpack.c.b16 %v2524, %v2495
    %v4120 = vpack.c.b16 %v2525, %v2496
    %v4121 = vpack.c.b16 %v2526, %v2497
    %v4122 = vpack.c.b16 %v2527, %v2498
    %v4123 = vpack.c.b16 %v2528, %v2499
    %v4124 = vpack.c.b16 %v2529, %v2500
    %v4125 = vpack.c.b16 %v2530, %v2501
    %v4126 = vpack.c.b16 %v2531, %v2502
    %v4127 = vpack.c.b16 %v2532, %v2503
    %v4128 = vpack.c.b16 %v2533, %v2504
    %v4129 = vpack.c.b16 %v2534, %v2505
    %v4130 = vpack.c.b16 %v2535, %v2506
    %v4131 = vpack.c.b16 %v2536, %v2507
    %v4132 = vpack.c.b16 %v2537, %v2508
    %v4133 = vpack.c.b16 %v2538, %v2509
    %v4134 = vpack.c.b16 %v2539, %v2510
    %v4135 = vpack.c.b16 %v2540, %v2511
    %v4136 = vpack.c.b16 %v2541, %v2512
    %v4137 = vpack.c.b16 %v2542, %v2513
    %v4138 = vpack.c.b16 %v2543, %v2514
    %v4139 = vpack.c.b16 %v2573, %v2544
    %v4140 = vpack.c.b16 %v2574, %v2545
    %v4141 = vpack.c.b16 %v2575, %v2546
    %v4142 = vpack.c.b16 %v2576, %v2547
    %v4143 = vpack.c.b16 %v2577, %v2548
    %v4144 = vpack.c.b16 %v2578, %v2549
    %v4145 = vpack.c.b16 %v2579, %v2550
    %v4146 = vpack.c.b16 %v2580, %v2551
    %v4147 = vpack.c.b16 %v2581, %v2552
    %v4148 = vpack.c.b16 %v2582, %v2553
    %v4149 = vpack.c.b16 %v2583, %v2554
    %v4150 = vpack.c.b16 %v2584, %v2555
    %v4151 = vpack.c.b16 %v2585, %v2556
    %v4152 = vpack.c.b16 %v2586, %v2557
    %v4153 = vpack.c.b16 %v2587, %v2558
    %v4154 = vpack.c.b16 %v2588, %v2559
    %v4155 = vpack.c.b16 %v2589, %v2560
    %v4156 = vpack.c.b16 %v2590, %v2561
    %v4157 = vpack.c.b16 %v2591, %v2562
    %v4158 = vpack.c.b16 %v2592, %v2563
    %v4159 = vpack.c.b16 %v2593, %v2564
    %v4160 = vpack.c.b16 %v2594, %v2565
    %v4161 = vpack.c.b16 %v2595, %v2566
    %v4162 = vpack.c.b16 %v2596, %v2567
    %v4163 = vpack.c.b16 %v2597, %v2568
    %v4164 = vpack.c.b16 %v2598, %v2569
    %v4165 = vpack.c.b16 %v2599, %v2570
    %v4166 = vpack.c.b16 %v2600, %v2571
    %v4167 = vpack.c.b16 %v2601, %v2572
    %v4168 = vpack.c.b16 %v2631, %v2602
    %v4169 = vpack.c.b16 %v2632, %v2603
    %v4170 = vpack.c.b16 %v2633, %v2604
    %v4171 = vpack.c.b16 %v2634, %v2605
    %v4172 = vpack.c.b16 %v2635, %v2606
    %v4173 = vpack.c.b16 %v2636, %v2607
    %v4174 = vpack.c.b16 %v2637, %v2608
    %v4175 = vpack.c.b16 %v2638, %v2609
    %v4176 = vpack.c.b16 %v2639, %v2610
    %v4177 = vpack.c.b16 %v2640, %v2611
    %v4178 = vpack.c.b16 %v2641, %v2612
    %v4179 = vpack.c.b16 %v2642, %v2613
    %v4180 = vpack.c.b16 %v2643, %v2614
    %v4181 = vpack.c.b16 %v2644, %v2615
    %v4182 = vpack.c.b16 %v2645, %v2616
    %v4183 = vpack.c.b16 %v2646, %v2617
    %v4184 = vpack.c.b16 %v2647, %v2618
    %v4185 = vpack.c.b16 %v2648, %v2619
    %v4186 = vpack.c.b16 %v2649, %v2620
    %v4187 = vpack.c.b16 %v2650, %v2621
    %v4188 = vpack.c.b16 %v2651, %v2622
    %v4189 = vpack.c.b16 %v2652, %v2623
    %v4190 = vpack.c.b16 %v2653, %v2624
    %v4191 = vpack.c.b16 %v2654, %v2625
    %v4192 = vpack.c.b16 %v2655, %v2626
    %v4193 = vpack.c.b16 %v2656, %v2627
    %v4194 = vpack.c.b16 %v2657, %v2628
    %v4195 = vpack.c.b16 %v2658, %v2629
    %v4196 = vpack.c.b16 %v2659, %v2630
    %v4197 = vpack.c.b16 %v2689, %v2660
    %v4198 = vpack.c.b16 %v2690, %v2661
    %v4199 = vpack.c.b16 %v2691, %v2662
    %v4200 = vpack.c.b16 %v2692, %v2663
    %v4201 = vpack.c.b16 %v2693, %v2664
    %v4202 = vpack.c.b16 %v2694, %v2665
    %v4203 = vpack.c.b16 %v2695, %v2666
    %v4204 = vpack.c.b16 %v2696, %v2667
    %v4205 = vpack.c.b16 %v2697, %v2668
    %v4206 = vpack.c.b16 %v2698, %v2669
    %v4207 = vpack.c.b16 %v2699, %v2670
    %v4208 = vpack.c.b16 %v2700, %v2671
    %v4209 = vpack.c.b16 %v2701, %v2672
    %v4210 = vpack.c.b16 %v2702, %v2673
    %v4211 = vpack.c.b16 %v2703, %v2674
    %v4212 = vpack.c.b16 %v2704, %v2675
    %v4213 = vpack.c.b16 %v2705, %v2676
    %v4214 = vpack.c.b16 %v2706, %v2677
    %v4215 = vpack.c.b16 %v2707, %v2678
    %v4216 = vpack.c.b16 %v2708, %v2679
    %v4217 = vpack.c.b16 %v2709, %v2680
    %v4218 = vpack.c.b16 %v2710, %v2681
    %v4219 = vpack.c.b16 %v2711, %v2682
    %v4220 = vpack.c.b16 %v2712, %v2683
    %v4221 = vpack.c.b16 %v2713, %v2684
    %v4222 = vpack.c.b16 %v2714, %v2685
    %v4223 = vpack.c.b16 %v2715, %v2686
    %v4224 = vpack.c.b16 %v2716, %v2687
    %v4225 = vpack.c.b16 %v2717, %v2688
    %v4226 = vpack.c.b16 %v2747, %v2718
    %v4227 = vpack.c.b16 %v2748, %v2719
    %v4228 = vpack.c.b16 %v2749, %v2720
    %v4229 = vpack.c.b16 %v2750, %v2721
    %v4230 = vpack.c.b16 %v2751, %v2722
    %v4231 = vpack.c.b16 %v2752, %v2723
    %v4232 = vpack.c.b16 %v2753, %v2724
    %v4233 = vpack.c.b16 %v2754, %v2725
    %v4234 = vpack.c.b16 %v2755, %v2726
    %v4235 = vpack.c.b16 %v2756, %v2727
    %v4236 = vpack.c.b16 %v2757, %v2728
    %v4237 = vpack.c.b16 %v2758, %v2729
    %v4238 = vpack.c.b16 %v2759, %v2730
    %v4239 = vpack.c.b16 %v2760, %v2731
    %v4240 = vpack.c.b16 %v2761, %v2732
    %v4241 = vpack.c.b16 %v2762, %v2733
    %v4242 = vpack.c.b16 %v2763, %v2734
    %v4243 = vpack.c.b16 %v2764, %v2735
    %v4244 = vpack.c.b16 %v2765, %v2736
    %v4245 = vpack.c.b16 %v2766, %v2737
    %v4246 = vpack.c.b16 %v2767, %v2738
    %v4247 = vpack.c.b16 %v2768, %v2739
    %v4248 = vpack.c.b16 %v2769, %v2740
    %v4249 = vpack.c.b16 %v2770, %v2741
    %v4250 = vpack.c.b16 %v2771, %v2742
    %v4251 = vpack.c.b16 %v2772, %v2743
    %v4252 = vpack.c.b16 %v2773, %v2744
    %v4253 = vpack.c.b16 %v2774, %v2745
    %v4254 = vpack.c.b16 %v2775, %v2746
    %v4255 = vpack.c.b16 %v2805, %v2776
    %v4256 = vpack.c.b16 %v2806, %v2777
    %v4257 = vpack.c.b16 %v2807, %v2778
    %v4258 = vpack.c.b16 %v2808, %v2779
    %v4259 = vpack.c.b16 %v2809, %v2780
    %v4260 = vpack.c.b16 %v2810, %v2781
    %v4261 = vpack.c.b16 %v2811, %v2782
    %v4262 = vpack.c.b16 %v2812, %v2783
    %v4263 = vpack.c.b16 %v2813, %v2784
    %v4264 = vpack.c.b16 %v2814, %v2785
    %v4265 = vpack.c.b16 %v2815, %v2786
    %v4266 = vpack.c.b16 %v2816, %v2787
    %v4267 = vpack.c.b16 %v2817, %v2788
    %v4268 = vpack.c.b16 %v2818, %v2789
    %v4269 = vpack.c.b16 %v2819, %v2790
    %v4270 = vpack.c.b16 %v2820, %v2791
    %v4271 = vpack.c.b16 %v2821, %v2792
    %v4272 = vpack.c.b16 %v2822, %v2793
    %v4273 = vpack.c.b16 %v2823, %v2794
    %v4274 = vpack.c.b16 %v2824, %v2795
    %v4275 = vpack.c.b16 %v2825, %v2796
    %v4276 = vpack.c.b16 %v2826, %v2797
    %v4277 = vpack.c.b16 %v2827, %v2798
    %v4278 = vpack.c.b16 %v2828, %v2799
    %v4279 = vpack.c.b16 %v2829, %v2800
    %v4280 = vpack.c.b16 %v2830, %v2801
    %v4281 = vpack.c.b16 %v2831, %v2802
    %v4282 = vpack.c.b16 %v2832, %v2803
    %v4283 = vpack.c.b16 %v2833, %v2804
    %v4284 = vpack.c.b16 %v2863, %v2834
    %v4285 = vpack.c.b16 %v2864, %v2835
    %v4286 = vpack.c.b16 %v2865, %v2836
    %v4287 = vpack.c.b16 %v2866, %v2837
    %v4288 = vpack.c.b16 %v2867, %v2838
    %v4289 = vpack.c.b16 %v2868, %v2839
    %v4290 = vpack.c.b16 %v2869, %v2840
    %v4291 = vpack.c.b16 %v2870, %v2841
    %v4292 = vpack.c.b16 %v2871, %v2842
    %v4293 = vpack.c.b16 %v2872, %v2843
    %v4294 = vpack.c.b16 %v2873, %v2844
    %v4295 = vpack.c.b16 %v2874, %v2845
    %v4296 = vpack.c.b16 %v2875, %v2846
    %v4297 = vpack.c.b16 %v2876, %v2847
    %v4298 = vpack.c.b16 %v2877, %v2848
    %v4299 = vpack.c.b16 %v2878, %v2849
    %v4300 = vpack.c.b16 %v2879, %v2850
    %v4301 = vpack.c.b16 %v2880, %v2851
    %v4302 = vpack.c.b16 %v2881, %v2852
    %v4303 = vpack.c.b16 %v2882, %v2853
    %v4304 = vpack.c.b16 %v2883, %v2854
    %v4305 = vpack.c.b16 %v2884, %v2855
    %v4306 = vpack.c.b16 %v2885, %v2856
    %v4307 = vpack.c.b16 %v2886, %v2857
    %v4308 = vpack.c.b16 %v2887, %v2858
    %v4309 = vpack.c.b16 %v2888, %v2859
    %v4310 = vpack.c.b16 %v2889, %v2860
    %v4311 = vpack.c.b16 %v2890, %v2861
    %v4312 = vpack.c.b16 %v2891, %v2862
    %v4313 = vpack.c.b16 %v2921, %v2892
    %v4314 = vpack.c.b16 %v2922, %v2893
    %v4315 = vpack.c.b16 %v2923, %v2894
    %v4316 = vpack.c.b16 %v2924, %v2895
    %v4317 = vpack.c.b16 %v2925, %v2896
    %v4318 = vpack.c.b16 %v2926, %v2897
    %v4319 = vpack.c.b16 %v2927, %v2898
    %v4320 = vpack.c.b16 %v2928, %v2899
    %v4321 = vpack.c.b16 %v2929, %v2900
    %v4322 = vpack.c.b16 %v2930, %v2901
    %v4323 = vpack.c.b16 %v2931, %v2902
    %v4324 = vpack.c.b16 %v2932, %v2903
    %v4325 = vpack.c.b16 %v2933, %v2904
    %v4326 = vpack.c.b16 %v2934, %v2905
    %v4327 = vpack.c.b16 %v2935, %v2906
    %v4328 = vpack.c.b16 %v2936, %v2907
    %v4329 = vpack.c.b16 %v2937, %v2908
    %v4330 = vpack.c.b16 %v2938, %v2909
    %v4331 = vpack.c.b16 %v2939, %v2910
    %v4332 = vpack.c.b16 %v2940, %v2911
    %v4333 = vpack.c.b16 %v2941, %v2912
    %v4334 = vpack.c.b16 %v2942, %v2913
    %v4335 = vpack.c.b16 %v2943, %v2914
    %v4336 = vpack.c.b16 %v2944, %v2915
    %v4337 = vpack.c.b16 %v2945, %v2916
    %v4338 = vpack.c.b16 %v2946, %v2917
    %v4339 = vpack.c.b16 %v2947, %v2918
    %v4340 = vpack.c.b16 %v2948, %v2919
    %v4341 = vpack.c.b16 %v2949, %v2920
    %v4342 = vpack.c.b16 %v2979, %v2950
    %v4343 = vpack.c.b16 %v2980, %v2951
    %v4344 = vpack.c.b16 %v2981, %v2952
    %v4345 = vpack.c.b16 %v2982, %v2953
    %v4346 = vpack.c.b16 %v2983, %v2954
    %v4347 = vpack.c.b16 %v2984, %v2955
    %v4348 = vpack.c.b16 %v2985, %v2956
    %v4349 = vpack.c.b16 %v2986, %v2957
    %v4350 = vpack.c.b16 %v2987, %v2958
    %v4351 = vpack.c.b16 %v2988, %v2959
    %v4352 = vpack.c.b16 %v2989, %v2960
    %v4353 = vpack.c.b16 %v2990, %v2961
    %v4354 = vpack.c.b16 %v2991, %v2962
    %v4355 = vpack.c.b16 %v2992, %v2963
    %v4356 = vpack.c.b16 %v2993, %v2964
    %v4357 = vpack.c.b16 %v2994, %v2965
    %v4358 = vpack.c.b16 %v2995, %v2966
    %v4359 = vpack.c.b16 %v2996, %v2967
    %v4360 = vpack.c.b16 %v2997, %v2968
    %v4361 = vpack.c.b16 %v2998, %v2969
    %v4362 = vpack.c.b16 %v2999, %v2970
    %v4363 = vpack.c.b16 %v3000, %v2971
    %v4364 = vpack.c.b16 %v3001, %v2972
    %v4365 = vpack.c.b16 %v3002, %v2973
    %v4366 = vpack.c.b16 %v3003, %v2974
    %v4367 = vpack.c.b16 %v3004, %v2975
    %v4368 = vpack.c.b16 %v3005, %v2976
    %v4369 = vpack.c.b16 %v3006, %v2977
    %v4370 = vpack.c.b16 %v3007, %v2978
    %v4371 = vpack.c.b16 %v3037, %v3008
    %v4372 = vpack.c.b16 %v3038, %v3009
    %v4373 = vpack.c.b16 %v3039, %v3010
    %v4374 = vpack.c.b16 %v3040, %v3011
    %v4375 = vpack.c.b16 %v3041, %v3012
    %v4376 = vpack.c.b16 %v3042, %v3013
    %v4377 = vpack.c.b16 %v3043, %v3014
    %v4378 = vpack.c.b16 %v3044, %v3015
    %v4379 = vpack.c.b16 %v3045, %v3016
    %v4380 = vpack.c.b16 %v3046, %v3017
    %v4381 = vpack.c.b16 %v3047, %v3018
    %v4382 = vpack.c.b16 %v3048, %v3019
    %v4383 = vpack.c.b16 %v3049, %v3020
    %v4384 = vpack.c.b16 %v3050, %v3021
    %v4385 = vpack.c.b16 %v3051, %v3022
    %v4386 = vpack.c.b16 %v3052, %v3023
    %v4387 = vpack.c.b16 %v3053, %v3024
    %v4388 = vpack.c.b16 %v3054, %v3025
    %v4389 = vpack.c.b16 %v3055, %v3026
    %v4390 = vpack.c.b16 %v3056, %v3027
    %v4391 = vpack.c.b16 %v3057, %v3028
    %v4392 = vpack.c.b16 %v3058, %v3029
    %v4393 = vpack.c.b16 %v3059, %v3030
    %v4394 = vpack.c.b16 %v3060, %v3031
    %v4395 = vpack.c.b16 %v3061, %v3032
    %v4396 = vpack.c.b16 %v3062, %v3033
    %v4397 = vpack.c.b16 %v3063, %v3034
    %v4398 = vpack.c.b16 %v3064, %v3035
    %v4399 = vpack.c.b16 %v3065, %v3036
    %v4400 = vpack.c.b16 %v3095, %v3066
    %v4401 = vpack.c.b16 %v3096, %v3067
    %v4402 = vpack.c.b16 %v3097, %v3068
    %v4403 = vpack.c.b16 %v3098, %v3069
    %v4404 = vpack.c.b16 %v3099, %v3070
    %v4405 = vpack.c.b16 %v3100, %v3071
    %v4406 = vpack.c.b16 %v3101, %v3072
    %v4407 = vpack.c.b16 %v3102, %v3073
    %v4408 = vpack.c.b16 %v3103, %v3074
    %v4409 = vpack.c.b16 %v3104, %v3075
    %v4410 = vpack.c.b16 %v3105, %v3076
    %v4411 = vpack.c.b16 %v3106, %v3077
    %v4412 = vpack.c.b16 %v3107, %v3078
    %v4413 = vpack.c.b16 %v3108, %v3079
    %v4414 = vpack.c.b16 %v3109, %v3080
    %v4415 = vpack.c.b16 %v3110, %v3081
    %v4416 = vpack.c.b16 %v3111, %v3082
    %v4417 = vpack.c.b16 %v3112, %v3083
    %v4418 = vpack.c.b16 %v3113, %v3084
    %v4419 = vpack.c.b16 %v3114, %v3085
    %v4420 = vpack.c.b16 %v3115, %v3086
    %v4421 = vpack.c.b16 %v3116, %v3087
    %v4422 = vpack.c.b16 %v3117, %v3088
    %v4423 = vpack.c.b16 %v3118, %v3089
    %v4424 = vpack.c.b16 %v3119, %v3090
    %v4425 = vpack.c.b16 %v3120, %v3091
    %v4426 = vpack.c.b16 %v3121, %v3092
    %v4427 = vpack.c.b16 %v3122, %v3093
    %v4428 = vpack.c.b16 %v3123, %v3094
    %v4429 = vpack.c.b16 %v3153, %v3124
    %v4430 = vpack.c.b16 %v3154, %v3125
    %v4431 = vpack.c.b16 %v3155, %v3126
    %v4432 = vpack.c.b16 %v3156, %v3127
    %v4433 = vpack.c.b16 %v3157, %v3128
    %v4434 = vpack.c.b16 %v3158, %v3129
    %v4435 = vpack.c.b16 %v3159, %v3130
    %v4436 = vpack.c.b16 %v3160, %v3131
    %v4437 = vpack.c.b16 %v3161, %v3132
    %v4438 = vpack.c.b16 %v3162, %v3133
    %v4439 = vpack.c.b16 %v3163, %v3134
    %v4440 = vpack.c.b16 %v3164, %v3135
    %v4441 = vpack.c.b16 %v3165, %v3136
    %v4442 = vpack.c.b16 %v3166, %v3137
    %v4443 = vpack.c.b16 %v3167, %v3138
    %v4444 = vpack.c.b16 %v3168, %v3139
    %v4445 = vpack.c.b16 %v3169, %v3140
    %v4446 = vpack.c.b16 %v3170, %v3141
    %v4447 = vpack.c.b16 %v3171, %v3142
    %v4448 = vpack.c.b16 %v3172, %v3143
    %v4449 = vpack.c.b16 %v3173, %v3144
    %v4450 = vpack.c.b16 %v3174, %v3145
    %v4451 = vpack.c.b16 %v3175, %v3146
    %v4452 = vpack.c.b16 %v3176, %v3147
    %v4453 = vpack.c.b16 %v3177, %v3148
    %v4454 = vpack.c.b16 %v3178, %v3149
    %v4455 = vpack.c.b16 %v3179, %v3150
    %v4456 = vpack.c.b16 %v3180, %v3151
    %v4457 = vpack.c.b16 %v3181, %v3152
    %v4458 = vpack.c.b16 %v3211, %v3182
    %v4459 = vpack.c.b16 %v3212, %v3183
    %v4460 = vpack.c.b16 %v3213, %v3184
    %v4461 = vpack.c.b16 %v3214, %v3185
    %v4462 = vpack.c.b16 %v3215, %v3186
    %v4463 = vpack.c.b16 %v3216, %v3187
    %v4464 = vpack.c.b16 %v3217, %v3188
    %v4465 = vpack.c.b16 %v3218, %v3189
    %v4466 = vpack.c.b16 %v3219, %v3190
    %v4467 = vpack.c.b16 %v3220, %v3191
    %v4468 = vpack.c.b16 %v3221, %v3192
    %v4469 = vpack.c.b16 %v3222, %v3193
    %v4470 = vpack.c.b16 %v3223, %v3194
    %v4471 = vpack.c.b16 %v3224, %v3195
    %v4472 = vpack.c.b16 %v3225, %v3196
    %v4473 = vpack.c.b16 %v3226, %v3197
    %v4474 = vpack.c.b16 %v3227, %v3198
    %v4475 = vpack.c.b16 %v3228, %v3199
    %v4476 = vpack.c.b16 %v3229, %v3200
    %v4477 = vpack.c.b16 %v3230, %v3201
    %v4478 = vpack.c.b16 %v3231, %v3202
    %v4479 = vpack.c.b16 %v3232, %v3203
    %v4480 = vpack.c.b16 %v3233, %v3204
    %v4481 = vpack.c.b16 %v3234, %v3205
    %v4482 = vpack.c.b16 %v3235, %v3206
    %v4483 = vpack.c.b16 %v3236, %v3207
    %v4484 = vpack.c.b16 %v3237, %v3208
    %v4485 = vpack.c.b16 %v3238, %v3209
    %v4486 = vpack.c.b16 %v3239, %v3210
    %v4487 = vpack.c.b16 %v3269, %v3240
    %v4488 = vpack.c.b16 %v3270, %v3241
    %v4489 = vpack.c.b16 %v3271, %v3242
    %v4490 = vpack.c.b16 %v3272, %v3243
    %v4491 = vpack.c.b16 %v3273, %v3244
    %v4492 = vpack.c.b16 %v3274, %v3245
    %v4493 = vpack.c.b16 %v3275, %v3246
    %v4494 = vpack.c.b16 %v3276, %v3247
    %v4495 = vpack.c.b16 %v3277, %v3248
    %v4496 = vpack.c.b16 %v3278, %v3249
    %v4497 = vpack.c.b16 %v3279, %v3250
    %v4498 = vpack.c.b16 %v3280, %v3251
    %v4499 = vpack.c.b16 %v3281, %v3252
    %v4500 = vpack.c.b16 %v3282, %v3253
    %v4501 = vpack.c.b16 %v3283, %v3254
    %v4502 = vpack.c.b16 %v3284, %v3255
    %v4503 = vpack.c.b16 %v3285, %v3256
    %v4504 = vpack.c.b16 %v3286, %v3257
    %v4505 = vpack.c.b16 %v3287, %v3258
    %v4506 = vpack.c.b16 %v3288, %v3259
    %v4507 = vpack.c.b16 %v3289, %v3260
    %v4508 = vpack.c.b16 %v3290, %v3261
    %v4509 = vpack.c.b16 %v3291, %v3262
    %v4510 = vpack.c.b16 %v3292, %v3263
    %v4511 = vpack.c.b16 %v3293, %v3264
    %v4512 = vpack.c.b16 %v3294, %v3265
    %v4513 = vpack.c.b16 %v3295, %v3266
    %v4514 = vpack.c.b16 %v3296, %v3267
    %v4515 = vpack.c.b16 %v3297, %v3268
    %v4516 = vpack.c.b16 %v3327, %v3298
    %v4517 = vpack.c.b16 %v3328, %v3299
    %v4518 = vpack.c.b16 %v3329, %v3300
    %v4519 = vpack.c.b16 %v3330, %v3301
    %v4520 = vpack.c.b16 %v3331, %v3302
    %v4521 = vpack.c.b16 %v3332, %v3303
    %v4522 = vpack.c.b16 %v3333, %v3304
    %v4523 = vpack.c.b16 %v3334, %v3305
    %v4524 = vpack.c.b16 %v3335, %v3306
    %v4525 = vpack.c.b16 %v3336, %v3307
    %v4526 = vpack.c.b16 %v3337, %v3308
    %v4527 = vpack.c.b16 %v3338, %v3309
    %v4528 = vpack.c.b16 %v3339, %v3310
    %v4529 = vpack.c.b16 %v3340, %v3311
    %v4530 = vpack.c.b16 %v3341, %v3312
    %v4531 = vpack.c.b16 %v3342, %v3313
    %v4532 = vpack.c.b16 %v3343, %v3314
    %v4533 = vpack.c.b16 %v3344, %v3315
    %v4534 = vpack.c.b16 %v3345, %v3316
    %v4535 = vpack.c.b16 %v3346, %v3317
    %v4536 = vpack.c.b16 %v3347, %v3318
    %v4537 = vpack.c.b16 %v3348, %v3319
    %v4538 = vpack.c.b16 %v3349, %v3320
    %v4539 = vpack.c.b16 %v3350, %v3321
    %v4540 = vpack.c.b16 %v3351, %v3322
    %v4541 = vpack.c.b16 %v3352, %v3323
    %v4542 = vpack.c.b16 %v3353, %v3324
    %v4543 = vpack.c.b16 %v3354, %v3325
    %v4544 = vpack.c.b16 %v3355, %v3326
    %v4545 = vpack.c.b16 %v3385, %v3356
    %v4546 = vpack.c.b16 %v3386, %v3357
    %v4547 = vpack.c.b16 %v3387, %v3358
    %v4548 = vpack.c.b16 %v3388, %v3359
    %v4549 = vpack.c.b16 %v3389, %v3360
    %v4550 = vpack.c.b16 %v3390, %v3361
    %v4551 = vpack.c.b16 %v3391, %v3362
    %v4552 = vpack.c.b16 %v3392, %v3363
    %v4553 = vpack.c.b16 %v3393, %v3364
    %v4554 = vpack.c.b16 %v3394, %v3365
    %v4555 = vpack.c.b16 %v3395, %v3366
    %v4556 = vpack.c.b16 %v3396, %v3367
    %v4557 = vpack.c.b16 %v3397, %v3368
    %v4558 = vpack.c.b16 %v3398, %v3369
    %v4559 = vpack.c.b16 %v3399, %v3370
    %v4560 = vpack.c.b16 %v3400, %v3371
    %v4561 = vpack.c.b16 %v3401, %v3372
    %v4562 = vpack.c.b16 %v3402, %v3373
    %v4563 = vpack.c.b16 %v3403, %v3374
    %v4564 = vpack.c.b16 %v3404, %v3375
    %v4565 = vpack.c.b16 %v3405, %v3376
    %v4566 = vpack.c.b16 %v3406, %v3377
    %v4567 = vpack.c.b16 %v3407, %v3378
    %v4568 = vpack.c.b16 %v3408, %v3379
    %v4569 = vpack.c.b16 %v3409, %v3380
    %v4570 = vpack.c.b16 %v3410, %v3381
    %v4571 = vpack.c.b16 %v3411, %v3382
    %v4572 = vpack.c.b16 %v3412, %v3383
    %v4573 = vpack.c.b16 %v3413, %v3384
    %v4574 = vpack.c.b16 %v3443, %v3414
    %v4575 = vpack.c.b16 %v3444, %v3415
    %v4576 = vpack.c.b16 %v3445, %v3416
    %v4577 = vpack.c.b16 %v3446, %v3417
    %v4578 = vpack.c.b16 %v3447, %v3418
    %v4579 = vpack.c.b16 %v3448, %v3419
    %v4580 = vpack.c.b16 %v3449, %v3420
    %v4581 = vpack.c.b16 %v3450, %v3421
    %v4582 = vpack.c.b16 %v3451, %v3422
    %v4583 = vpack.c.b16 %v3452, %v3423
    %v4584 = vpack.c.b16 %v3453, %v3424
    %v4585 = vpack.c.b16 %v3454, %v3425
    %v4586 = vpack.c.b16 %v3455, %v3426
    %v4587 = vpack.c.b16 %v3456, %v3427
    %v4588 = vpack.c.b16 %v3457, %v3428
    %v4589 = vpack.c.b16 %v3458, %v3429
    %v4590 = vpack.c.b16 %v3459, %v3430
    %v4591 = vpack.c.b16 %v3460, %v3431
    %v4592 = vpack.c.b16 %v3461, %v3432
    %v4593 = vpack.c.b16 %v3462, %v3433
    %v4594 = vpack.c.b16 %v3463, %v3434
    %v4595 = vpack.c.b16 %v3464, %v3435
    %v4596 = vpack.c.b16 %v3465, %v3436
    %v4597 = vpack.c.b16 %v3466, %v3437
    %v4598 = vpack.c.b16 %v3467, %v3438
    %v4599 = vpack.c.b16 %v3468, %v3439
    %v4600 = vpack.c.b16 %v3469, %v3440
    %v4601 = vpack.c.b16 %v3470, %v3441
    %v4602 = vpack.c.b16 %v3471, %v3442
    %v4603 = vpack.c.b16 %v3501, %v3472
    %v4604 = vpack.c.b16 %v3502, %v3473
    %v4605 = vpack.c.b16 %v3503, %v3474
    %v4606 = vpack.c.b16 %v3504, %v3475
    %v4607 = vpack.c.b16 %v3505, %v3476
    %v4608 = vpack.c.b16 %v3506, %v3477
    %v4609 = vpack.c.b16 %v3507, %v3478
    %v4610 = vpack.c.b16 %v3508, %v3479
    %v4611 = vpack.c.b16 %v3509, %v3480
    %v4612 = vpack.c.b16 %v3510, %v3481
    %v4613 = vpack.c.b16 %v3511, %v3482
    %v4614 = vpack.c.b16 %v3512, %v3483
    %v4615 = vpack.c.b16 %v3513, %v3484
    %v4616 = vpack.c.b16 %v3514, %v3485
    %v4617 = vpack.c.b16 %v3515, %v3486
    %v4618 = vpack.c.b16 %v3516, %v3487
    %v4619 = vpack.c.b16 %v3517, %v3488
    %v4620 = vpack.c.b16 %v3518, %v3489
    %v4621 = vpack.c.b16 %v3519, %v3490
    %v4622 = vpack.c.b16 %v3520, %v3491
    %v4623 = vpack.c.b16 %v3521, %v3492
    %v4624 = vpack.c.b16 %v3522, %v3493
    %v4625 = vpack.c.b16 %v3523, %v3494
    %v4626 = vpack.c.b16 %v3524, %v3495
    %v4627 = vpack.c.b16 %v3525, %v3496
    %v4628 = vpack.c.b16 %v3526, %v3497
    %v4629 = vpack.c.b16 %v3527, %v3498
    %v4630 = vpack.c.b16 %v3528, %v3499
    %v4631 = vpack.c.b16 %v3529, %v3500
    %v4632 = vpack.c.b16 %v3559, %v3530
    %v4633 = vpack.c.b16 %v3560, %v3531
    %v4634 = vpack.c.b16 %v3561, %v3532
    %v4635 = vpack.c.b16 %v3562, %v3533
    %v4636 = vpack.c.b16 %v3563, %v3534
    %v4637 = vpack.c.b16 %v3564, %v3535
    %v4638 = vpack.c.b16 %v3565, %v3536
    %v4639 = vpack.c.b16 %v3566, %v3537
    %v4640 = vpack.c.b16 %v3567, %v3538
    %v4641 = vpack.c.b16 %v3568, %v3539
    %v4642 = vpack.c.b16 %v3569, %v3540
    %v4643 = vpack.c.b16 %v3570, %v3541
    %v4644 = vpack.c.b16 %v3571, %v3542
    %v4645 = vpack.c.b16 %v3572, %v3543
    %v4646 = vpack.c.b16 %v3573, %v3544
    %v4647 = vpack.c.b16 %v3574, %v3545
    %v4648 = vpack.c.b16 %v3575, %v3546
    %v4649 = vpack.c.b16 %v3576, %v3547
    %v4650 = vpack.c.b16 %v3577, %v3548
    %v4651 = vpack.c.b16 %v3578, %v3549
    %v4652 = vpack.c.b16 %v3579, %v3550
    %v4653 = vpack.c.b16 %v3580, %v3551
    %v4654 = vpack.c.b16 %v3581, %v3552
    %v4655 = vpack.c.b16 %v3582, %v3553
    %v4656 = vpack.c.b16 %v3583, %v3554
    %v4657 = vpack.c.b16 %v3584, %v3555
    %v4658 = vpack.c.b16 %v3585, %v3556
    %v4659 = vpack.c.b16 %v3586, %v3557
    %v4660 = vpack.c.b16 %v3587, %v3558
    %v4661 = vpack.c.b16 %v3617, %v3588
    %v4662 = vpack.c.b16 %v3618, %v3589
    %v4663 = vpack.c.b16 %v3619, %v3590
    %v4664 = vpack.c.b16 %v3620, %v3591
    %v4665 = vpack.c.b16 %v3621, %v3592
    %v4666 = vpack.c.b16 %v3622, %v3593
    %v4667 = vpack.c.b16 %v3623, %v3594
    %v4668 = vpack.c.b16 %v3624, %v3595
    %v4669 = vpack.c.b16 %v3625, %v3596
    %v4670 = vpack.c.b16 %v3626, %v3597
    %v4671 = vpack.c.b16 %v3627, %v3598
    %v4672 = vpack.c.b16 %v3628, %v3599
    %v4673 = vpack.c.b16 %v3629, %v3600
    %v4674 = vpack.c.b16 %v3630, %v3601
    %v4675 = vpack.c.b16 %v3631, %v3602
    %v4676 = vpack.c.b16 %v3632, %v3603
    %v4677 = vpack.c.b16 %v3633, %v3604
    %v4678 = vpack.c.b16 %v3634, %v3605
    %v4679 = vpack.c.b16 %v3635, %v3606
    %v4680 = vpack.c.b16 %v3636, %v3607
    %v4681 = vpack.c.b16 %v3637, %v3608
    %v4682 = vpack.c.b16 %v3638, %v3609
    %v4683 = vpack.c.b16 %v3639, %v3610
    %v4684 = vpack.c.b16 %v3640, %v3611
    %v4685 = vpack.c.b16 %v3641, %v3612
    %v4686 = vpack.c.b16 %v3642, %v3613
    %v4687 = vpack.c.b16 %v3643, %v3614
    %v4688 = vpack.c.b16 %v3644, %v3615
    %v4689 = vpack.c.b16 %v3645, %v3616
    %v4690 = vpack.c.b16 %v3675, %v3646
    %v4691 = vpack.c.b16 %v3676, %v3647
    %v4692 = vpack.c.b16 %v3677, %v3648
    %v4693 = vpack.c.b16 %v3678, %v3649
    %v4694 = vpack.c.b16 %v3679, %v3650
    %v4695 = vpack.c.b16 %v3680, %v3651
    %v4696 = vpack.c.b16 %v3681, %v3652
    %v4697 = vpack.c.b16 %v3682, %v3653
    %v4698 = vpack.c.b16 %v3683, %v3654
    %v4699 = vpack.c.b16 %v3684, %v3655
    %v4700 = vpack.c.b16 %v3685, %v3656
    %v4701 = vpack.c.b16 %v3686, %v3657
    %v4702 = vpack.c.b16 %v3687, %v3658
    %v4703 = vpack.c.b16 %v3688, %v3659
    %v4704 = vpack.c.b16 %v3689, %v3660
    %v4705 = vpack.c.b16 %v3690, %v3661
    %v4706 = vpack.c.b16 %v3691, %v3662
    %v4707 = vpack.c.b16 %v3692, %v3663
    %v4708 = vpack.c.b16 %v3693, %v3664
    %v4709 = vpack.c.b16 %v3694, %v3665
    %v4710 = vpack.c.b16 %v3695, %v3666
    %v4711 = vpack.c.b16 %v3696, %v3667
    %v4712 = vpack.c.b16 %v3697, %v3668
    %v4713 = vpack.c.b16 %v3698, %v3669
    %v4714 = vpack.c.b16 %v3699, %v3670
    %v4715 = vpack.c.b16 %v3700, %v3671
    %v4716 = vpack.c.b16 %v3701, %v3672
    %v4717 = vpack.c.b16 %v3702, %v3673
    %v4718 = vpack.c.b16 %v3703, %v3674
    %v4719 = vpack.c.b16 %v3733, %v3704
    %v4720 = vpack.c.b16 %v3734, %v3705
    %v4721 = vpack.c.b16 %v3735, %v3706
    %v4722 = vpack.c.b16 %v3736, %v3707
    %v4723 = vpack.c.b16 %v3737, %v3708
    %v4724 = vpack.c.b16 %v3738, %v3709
    %v4725 = vpack.c.b16 %v3739, %v3710
    %v4726 = vpack.c.b16 %v3740, %v3711
    %v4727 = vpack.c.b16 %v3741, %v3712
    %v4728 = vpack.c.b16 %v3742, %v3713
    %v4729 = vpack.c.b16 %v3743, %v3714
    %v4730 = vpack.c.b16 %v3744, %v3715
    %v4731 = vpack.c.b16 %v3745, %v3716
    %v4732 = vpack.c.b16 %v3746, %v3717
    %v4733 = vpack.c.b16 %v3747, %v3718
    %v4734 = vpack.c.b16 %v3748, %v3719
    %v4735 = vpack.c.b16 %v3749, %v3720
    %v4736 = vpack.c.b16 %v3750, %v3721
    %v4737 = vpack.c.b16 %v3751, %v3722
    %v4738 = vpack.c.b16 %v3752, %v3723
    %v4739 = vpack.c.b16 %v3753, %v3724
    %v4740 = vpack.c.b16 %v3754, %v3725
    %v4741 = vpack.c.b16 %v3755, %v3726
    %v4742 = vpack.c.b16 %v3756, %v3727
    %v4743 = vpack.c.b16 %v3757, %v3728
    %v4744 = vpack.c.b16 %v3758, %v3729
    %v4745 = vpack.c.b16 %v3759, %v3730
    %v4746 = vpack.c.b16 %v3760, %v3731
    %v4747 = vpack.c.b16 %v3761, %v3732
    %v4748 = vpack.c.b16 %v3791, %v3762
    %v4749 = vpack.c.b16 %v3792, %v3763
    %v4750 = vpack.c.b16 %v3793, %v3764
    %v4751 = vpack.c.b16 %v3794, %v3765
    %v4752 = vpack.c.b16 %v3795, %v3766
    %v4753 = vpack.c.b16 %v3796, %v3767
    %v4754 = vpack.c.b16 %v3797, %v3768
    %v4755 = vpack.c.b16 %v3798, %v3769
    %v4756 = vpack.c.b16 %v3799, %v3770
    %v4757 = vpack.c.b16 %v3800, %v3771
    %v4758 = vpack.c.b16 %v3801, %v3772
    %v4759 = vpack.c.b16 %v3802, %v3773
    %v4760 = vpack.c.b16 %v3803, %v3774
    %v4761 = vpack.c.b16 %v3804, %v3775
    %v4762 = vpack.c.b16 %v3805, %v3776
    %v4763 = vpack.c.b16 %v3806, %v3777
    %v4764 = vpack.c.b16 %v3807, %v3778
    %v4765 = vpack.c.b16 %v3808, %v3779
    %v4766 = vpack.c.b16 %v3809, %v3780
    %v4767 = vpack.c.b16 %v3810, %v3781
    %v4768 = vpack.c.b16 %v3811, %v3782
    %v4769 = vpack.c.b16 %v3812, %v3783
    %v4770 = vpack.c.b16 %v3813, %v3784
    %v4771 = vpack.c.b16 %v3814, %v3785
    %v4772 = vpack.c.b16 %v3815, %v3786
    %v4773 = vpack.c.b16 %v3816, %v3787
    %v4774 = vpack.c.b16 %v3817, %v3788
    %v4775 = vpack.c.b16 %v3818, %v3789
    %v4776 = vpack.c.b16 %v3819, %v3790
    %v4777 = vpack.c.b16 %v3849, %v3820
    %v4778 = vpack.c.b16 %v3850, %v3821
    %v4779 = vpack.c.b16 %v3851, %v3822
    %v4780 = vpack.c.b16 %v3852, %v3823
    %v4781 = vpack.c.b16 %v3853, %v3824
    %v4782 = vpack.c.b16 %v3854, %v3825
    %v4783 = vpack.c.b16 %v3855, %v3826
    %v4784 = vpack.c.b16 %v3856, %v3827
    %v4785 = vpack.c.b16 %v3857, %v3828
    %v4786 = vpack.c.b16 %v3858, %v3829
    %v4787 = vpack.c.b16 %v3859, %v3830
    %v4788 = vpack.c.b16 %v3860, %v3831
    %v4789 = vpack.c.b16 %v3861, %v3832
    %v4790 = vpack.c.b16 %v3862, %v3833
    %v4791 = vpack.c.b16 %v3863, %v3834
    %v4792 = vpack.c.b16 %v3864, %v3835
    %v4793 = vpack.c.b16 %v3865, %v3836
    %v4794 = vpack.c.b16 %v3866, %v3837
    %v4795 = vpack.c.b16 %v3867, %v3838
    %v4796 = vpack.c.b16 %v3868, %v3839
    %v4797 = vpack.c.b16 %v3869, %v3840
    %v4798 = vpack.c.b16 %v3870, %v3841
    %v4799 = vpack.c.b16 %v3871, %v3842
    %v4800 = vpack.c.b16 %v3872, %v3843
    %v4801 = vpack.c.b16 %v3873, %v3844
    %v4802 = vpack.c.b16 %v3874, %v3845
    %v4803 = vpack.c.b16 %v3875, %v3846
    %v4804 = vpack.c.b16 %v3876, %v3847
    %v4805 = vpack.c.b16 %v3877, %v3848
    %5734 = vmatprep.subr.bf16.mxu0 %v4082
    %5735 = vmatpush1.bf16.msra.mxu0 %v4081
    %5736 = vmatprep.subr.bf16.mxu0 %v4053
    %5737 = vmatpush1.bf16.msra.mxu0 %v4052
    %5738 = vmatprep.subr.bf16.mxu0 %v4024
    %5739 = vmatpush1.bf16.msra.mxu0 %v4023
    %5740 = vmatprep.subr.bf16.mxu0 %v3995
    %5741 = vmatpush1.bf16.msra.mxu0 %v3994
    %5742 = vmatprep.subr.bf16.mxu0 %v3966
    %5743 = vmatpush1.bf16.msra.mxu0 %v3965
    %5744 = vmatprep.subr.bf16.mxu0 %v3937
    %5745 = vmatpush1.bf16.msra.mxu0 %v3936
    %5746 = vmatprep.subr.bf16.mxu0 %v3908
    %5747 = vmatpush1.bf16.msra.mxu0 %v3907
    %5748 = vmatprep.subr.bf16.mxu0 %v3879
    %5749 = vmatpush1.bf16.msra.mxu0 %v3878
    %5750 = vmatprep.subr.bf16.mxu0 %v4314
    %5751 = vmatpush2.bf16.msra.mxu0 %v4313
    %5752 = vmatprep.subr.bf16.mxu0 %v4285
    %5753 = vmatpush2.bf16.msra.mxu0 %v4284
    %5754 = vmatprep.subr.bf16.mxu0 %v4256
    %5755 = vmatpush2.bf16.msra.mxu0 %v4255
    %5756 = vmatprep.subr.bf16.mxu0 %v4227
    %5757 = vmatpush2.bf16.msra.mxu0 %v4226
    %5758 = vmatprep.subr.bf16.mxu0 %v4198
    %5759 = vmatpush2.bf16.msra.mxu0 %v4197
    %5760 = vmatprep.subr.bf16.mxu0 %v4169
    %5761 = vmatpush2.bf16.msra.mxu0 %v4168
    %5762 = vmatprep.subr.bf16.mxu0 %v4140
    %5763 = vmatpush2.bf16.msra.mxu0 %v4139
    %5764 = vmatprep.subr.bf16.mxu0 %v4111
    %5765 = vmatpush2.bf16.msra.mxu0 %v4110
    %5766 = vmatprep.mubr.bf16.mxu0 %v1055
    %5767 = vmatmul.mubr.bf16.gmra.mxu0 %v1054
    %v5768 = vpop.f32.mrf.mxu0
    %v5769 = vadd.f32 0.0, %v5768
    %v5770 = vpop.f32.mrf.mxu0
    %v5771 = vadd.f32 0.0, %v5770
    %v5772 = vpop.f32.mrf.mxu0
    %v5773 = vpop.f32.mrf.mxu0
    %5774 = vdwg.mxu0
    %5775 = vmatprep.subr.bf16.mxu0 %v4546
    %5776 = vmatpush1.bf16.msra.mxu0 %v4545
    %5777 = vmatprep.subr.bf16.mxu0 %v4517
    %5778 = vmatpush1.bf16.msra.mxu0 %v4516
    %5779 = vmatprep.subr.bf16.mxu0 %v4488
    %5780 = vmatpush1.bf16.msra.mxu0 %v4487
    %5781 = vmatprep.subr.bf16.mxu0 %v4459
    %5782 = vmatpush1.bf16.msra.mxu0 %v4458
    %5783 = vmatprep.subr.bf16.mxu0 %v4430
    %5784 = vmatpush1.bf16.msra.mxu0 %v4429
    %5785 = vmatprep.subr.bf16.mxu0 %v4401
    %5786 = vmatpush1.bf16.msra.mxu0 %v4400
    %5787 = vmatprep.subr.bf16.mxu0 %v4372
    %5788 = vmatpush1.bf16.msra.mxu0 %v4371
    %5789 = vmatprep.subr.bf16.mxu0 %v4343
    %5790 = vmatpush1.bf16.msra.mxu0 %v4342
    %5791 = vmatprep.subr.bf16.mxu0 %v4778
    %5792 = vmatpush2.bf16.msra.mxu0 %v4777
    %5793 = vmatprep.subr.bf16.mxu0 %v4749
    %5794 = vmatpush2.bf16.msra.mxu0 %v4748
    %5795 = vmatprep.subr.bf16.mxu0 %v4720
    %5796 = vmatpush2.bf16.msra.mxu0 %v4719
    %5797 = vmatprep.subr.bf16.mxu0 %v4691
    %5798 = vmatpush2.bf16.msra.mxu0 %v4690
    %5799 = vmatprep.subr.bf16.mxu0 %v4662
    %5800 = vmatpush2.bf16.msra.mxu0 %v4661
    %5801 = vmatprep.subr.bf16.mxu0 %v4633
    %5802 = vmatpush2.bf16.msra.mxu0 %v4632
    %5803 = vmatprep.subr.bf16.mxu0 %v4604
    %5804 = vmatpush2.bf16.msra.mxu0 %v4603
    %5805 = vmatprep.subr.bf16.mxu0 %v4575
    %5806 = vmatpush2.bf16.msra.mxu0 %v4574
    %5807 = vmatprep.mubr.bf16.mxu0 %v1057
    %5808 = vmatmul.mubr.bf16.gmra.mxu0 %v1056
    %v5809 = vpop.f32.mrf.mxu0
    %v5810 = vadd.f32 %v5769, %v5809
    %v5811 = vpop.f32.mrf.mxu0
    %v5812 = vadd.f32 %v5771, %v5811
    %v5813 = vpop.f32.mrf.mxu0
    %v5814 = vpop.f32.mrf.mxu0
    %5815 = vdwg.mxu0
    %5816 = vmatprep.subr.bf16.mxu0 %v4084
    %5817 = vmatpush1.bf16.msra.mxu0 %v4083
    %5818 = vmatprep.subr.bf16.mxu0 %v4055
    %5819 = vmatpush1.bf16.msra.mxu0 %v4054
    %5820 = vmatprep.subr.bf16.mxu0 %v4026
    %5821 = vmatpush1.bf16.msra.mxu0 %v4025
    %5822 = vmatprep.subr.bf16.mxu0 %v3997
    %5823 = vmatpush1.bf16.msra.mxu0 %v3996
    %5824 = vmatprep.subr.bf16.mxu0 %v3968
    %5825 = vmatpush1.bf16.msra.mxu0 %v3967
    %5826 = vmatprep.subr.bf16.mxu0 %v3939
    %5827 = vmatpush1.bf16.msra.mxu0 %v3938
    %5828 = vmatprep.subr.bf16.mxu0 %v3910
    %5829 = vmatpush1.bf16.msra.mxu0 %v3909
    %5830 = vmatprep.subr.bf16.mxu0 %v3881
    %5831 = vmatpush1.bf16.msra.mxu0 %v3880
    %5832 = vmatprep.subr.bf16.mxu0 %v4316
    %5833 = vmatpush2.bf16.msra.mxu0 %v4315
    %5834 = vmatprep.subr.bf16.mxu0 %v4287
    %5835 = vmatpush2.bf16.msra.mxu0 %v4286
    %5836 = vmatprep.subr.bf16.mxu0 %v4258
    %5837 = vmatpush2.bf16.msra.mxu0 %v4257
    %5838 = vmatprep.subr.bf16.mxu0 %v4229
    %5839 = vmatpush2.bf16.msra.mxu0 %v4228
    %5840 = vmatprep.subr.bf16.mxu0 %v4200
    %5841 = vmatpush2.bf16.msra.mxu0 %v4199
    %5842 = vmatprep.subr.bf16.mxu0 %v4171
    %5843 = vmatpush2.bf16.msra.mxu0 %v4170
    %5844 = vmatprep.subr.bf16.mxu0 %v4142
    %5845 = vmatpush2.bf16.msra.mxu0 %v4141
    %5846 = vmatprep.subr.bf16.mxu0 %v4113
    %5847 = vmatpush2.bf16.msra.mxu0 %v4112
    %5848 = vmatprep.mubr.bf16.mxu0 %v1055
    %5849 = vmatmul.mubr.bf16.gmra.mxu0 %v1054
    %v5850 = vpop.f32.mrf.mxu0
    %v5851 = vadd.f32 0.0, %v5850
    %v5852 = vpop.f32.mrf.mxu0
    %v5853 = vadd.f32 0.0, %v5852
    %v5854 = vpop.f32.mrf.mxu0
    %v5855 = vpop.f32.mrf.mxu0
    %5856 = vdwg.mxu0
    %5857 = vmatprep.subr.bf16.mxu0 %v4548
    %5858 = vmatpush1.bf16.msra.mxu0 %v4547
    %5859 = vmatprep.subr.bf16.mxu0 %v4519
    %5860 = vmatpush1.bf16.msra.mxu0 %v4518
    %5861 = vmatprep.subr.bf16.mxu0 %v4490
    %5862 = vmatpush1.bf16.msra.mxu0 %v4489
    %5863 = vmatprep.subr.bf16.mxu0 %v4461
    %5864 = vmatpush1.bf16.msra.mxu0 %v4460
    %5865 = vmatprep.subr.bf16.mxu0 %v4432
    %5866 = vmatpush1.bf16.msra.mxu0 %v4431
    %5867 = vmatprep.subr.bf16.mxu0 %v4403
    %5868 = vmatpush1.bf16.msra.mxu0 %v4402
    %5869 = vmatprep.subr.bf16.mxu0 %v4374
    %5870 = vmatpush1.bf16.msra.mxu0 %v4373
    %5871 = vmatprep.subr.bf16.mxu0 %v4345
    %5872 = vmatpush1.bf16.msra.mxu0 %v4344
    %5873 = vmatprep.subr.bf16.mxu0 %v4780
    %5874 = vmatpush2.bf16.msra.mxu0 %v4779
    %5875 = vmatprep.subr.bf16.mxu0 %v4751
    %5876 = vmatpush2.bf16.msra.mxu0 %v4750
    %5877 = vmatprep.subr.bf16.mxu0 %v4722
    %5878 = vmatpush2.bf16.msra.mxu0 %v4721
    %5879 = vmatprep.subr.bf16.mxu0 %v4693
    %5880 = vmatpush2.bf16.msra.mxu0 %v4692
    %5881 = vmatprep.subr.bf16.mxu0 %v4664
    %5882 = vmatpush2.bf16.msra.mxu0 %v4663
    %5883 = vmatprep.subr.bf16.mxu0 %v4635
    %5884 = vmatpush2.bf16.msra.mxu0 %v4634
    %5885 = vmatprep.subr.bf16.mxu0 %v4606
    %5886 = vmatpush2.bf16.msra.mxu0 %v4605
    %5887 = vmatprep.subr.bf16.mxu0 %v4577
    %5888 = vmatpush2.bf16.msra.mxu0 %v4576
    %5889 = vmatprep.mubr.bf16.mxu0 %v1057
    %5890 = vmatmul.mubr.bf16.gmra.mxu0 %v1056
    %v5891 = vpop.f32.mrf.mxu0
    %v5892 = vadd.f32 %v5851, %v5891
    %v5893 = vpop.f32.mrf.mxu0
    %v5894 = vadd.f32 %v5853, %v5893
    %v5895 = vpop.f32.mrf.mxu0
    %v5896 = vpop.f32.mrf.mxu0
    %5897 = vdwg.mxu0
    %5898 = vmatprep.subr.bf16.mxu0 %v4086
    %5899 = vmatpush1.bf16.msra.mxu0 %v4085
    %5900 = vmatprep.subr.bf16.mxu0 %v4057
    %5901 = vmatpush1.bf16.msra.mxu0 %v4056
    %5902 = vmatprep.subr.bf16.mxu0 %v4028
    %5903 = vmatpush1.bf16.msra.mxu0 %v4027
    %5904 = vmatprep.subr.bf16.mxu0 %v3999
    %5905 = vmatpush1.bf16.msra.mxu0 %v3998
    %5906 = vmatprep.subr.bf16.mxu0 %v3970
    %5907 = vmatpush1.bf16.msra.mxu0 %v3969
    %5908 = vmatprep.subr.bf16.mxu0 %v3941
    %5909 = vmatpush1.bf16.msra.mxu0 %v3940
    %5910 = vmatprep.subr.bf16.mxu0 %v3912
    %5911 = vmatpush1.bf16.msra.mxu0 %v3911
    %5912 = vmatprep.subr.bf16.mxu0 %v3883
    %5913 = vmatpush1.bf16.msra.mxu0 %v3882
    %5914 = vmatprep.subr.bf16.mxu0 %v4318
    %5915 = vmatpush2.bf16.msra.mxu0 %v4317
    %5916 = vmatprep.subr.bf16.mxu0 %v4289
    %5917 = vmatpush2.bf16.msra.mxu0 %v4288
    %5918 = vmatprep.subr.bf16.mxu0 %v4260
    %5919 = vmatpush2.bf16.msra.mxu0 %v4259
    %5920 = vmatprep.subr.bf16.mxu0 %v4231
    %5921 = vmatpush2.bf16.msra.mxu0 %v4230
    %5922 = vmatprep.subr.bf16.mxu0 %v4202
    %5923 = vmatpush2.bf16.msra.mxu0 %v4201
    %5924 = vmatprep.subr.bf16.mxu0 %v4173
    %5925 = vmatpush2.bf16.msra.mxu0 %v4172
    %5926 = vmatprep.subr.bf16.mxu0 %v4144
    %5927 = vmatpush2.bf16.msra.mxu0 %v4143
    %5928 = vmatprep.subr.bf16.mxu0 %v4115
    %5929 = vmatpush2.bf16.msra.mxu0 %v4114
    %5930 = vmatprep.mubr.bf16.mxu0 %v1055
    %5931 = vmatmul.mubr.bf16.gmra.mxu0 %v1054
    %v5932 = vpop.f32.mrf.mxu0
    %v5933 = vadd.f32 0.0, %v5932
    %v5934 = vpop.f32.mrf.mxu0
    %v5935 = vadd.f32 0.0, %v5934
    %v5936 = vpop.f32.mrf.mxu0
    %v5937 = vpop.f32.mrf.mxu0
    %5938 = vdwg.mxu0
    %5939 = vmatprep.subr.bf16.mxu0 %v4550
    %5940 = vmatpush1.bf16.msra.mxu0 %v4549
    %5941 = vmatprep.subr.bf16.mxu0 %v4521
    %5942 = vmatpush1.bf16.msra.mxu0 %v4520
    %5943 = vmatprep.subr.bf16.mxu0 %v4492
    %5944 = vmatpush1.bf16.msra.mxu0 %v4491
    %5945 = vmatprep.subr.bf16.mxu0 %v4463
    %5946 = vmatpush1.bf16.msra.mxu0 %v4462
    %5947 = vmatprep.subr.bf16.mxu0 %v4434
    %5948 = vmatpush1.bf16.msra.mxu0 %v4433
    %5949 = vmatprep.subr.bf16.mxu0 %v4405
    %5950 = vmatpush1.bf16.msra.mxu0 %v4404
    %5951 = vmatprep.subr.bf16.mxu0 %v4376
    %5952 = vmatpush1.bf16.msra.mxu0 %v4375
    %5953 = vmatprep.subr.bf16.mxu0 %v4347
    %5954 = vmatpush1.bf16.msra.mxu0 %v4346
    %5955 = vmatprep.subr.bf16.mxu0 %v4782
    %5956 = vmatpush2.bf16.msra.mxu0 %v4781
    %5957 = vmatprep.subr.bf16.mxu0 %v4753
    %5958 = vmatpush2.bf16.msra.mxu0 %v4752
    %5959 = vmatprep.subr.bf16.mxu0 %v4724
    %5960 = vmatpush2.bf16.msra.mxu0 %v4723
    %5961 = vmatprep.subr.bf16.mxu0 %v4695
    %5962 = vmatpush2.bf16.msra.mxu0 %v4694
    %5963 = vmatprep.subr.bf16.mxu0 %v4666
    %5964 = vmatpush2.bf16.msra.mxu0 %v4665
    %5965 = vmatprep.subr.bf16.mxu0 %v4637
    %5966 = vmatpush2.bf16.msra.mxu0 %v4636
    %5967 = vmatprep.subr.bf16.mxu0 %v4608
    %5968 = vmatpush2.bf16.msra.mxu0 %v4607
    %5969 = vmatprep.subr.bf16.mxu0 %v4579
    %5970 = vmatpush2.bf16.msra.mxu0 %v4578
    %5971 = vmatprep.mubr.bf16.mxu0 %v1057
    %5972 = vmatmul.mubr.bf16.gmra.mxu0 %v1056
    %v5973 = vpop.f32.mrf.mxu0
    %v5974 = vadd.f32 %v5933, %v5973
    %v5975 = vpop.f32.mrf.mxu0
    %v5976 = vadd.f32 %v5935, %v5975
    %v5977 = vpop.f32.mrf.mxu0
    %v5978 = vpop.f32.mrf.mxu0
    %5979 = vdwg.mxu0
    %5980 = vmatprep.subr.bf16.mxu0 %v4088
    %5981 = vmatpush1.bf16.msra.mxu0 %v4087
    %5982 = vmatprep.subr.bf16.mxu0 %v4059
    %5983 = vmatpush1.bf16.msra.mxu0 %v4058
    %5984 = vmatprep.subr.bf16.mxu0 %v4030
    %5985 = vmatpush1.bf16.msra.mxu0 %v4029
    %5986 = vmatprep.subr.bf16.mxu0 %v4001
    %5987 = vmatpush1.bf16.msra.mxu0 %v4000
    %5988 = vmatprep.subr.bf16.mxu0 %v3972
    %5989 = vmatpush1.bf16.msra.mxu0 %v3971
    %5990 = vmatprep.subr.bf16.mxu0 %v3943
    %5991 = vmatpush1.bf16.msra.mxu0 %v3942
    %5992 = vmatprep.subr.bf16.mxu0 %v3914
    %5993 = vmatpush1.bf16.msra.mxu0 %v3913
    %5994 = vmatprep.subr.bf16.mxu0 %v3885
    %5995 = vmatpush1.bf16.msra.mxu0 %v3884
    %5996 = vmatprep.subr.bf16.mxu0 %v4320
    %5997 = vmatpush2.bf16.msra.mxu0 %v4319
    %5998 = vmatprep.subr.bf16.mxu0 %v4291
    %5999 = vmatpush2.bf16.msra.mxu0 %v4290
    %6000 = vmatprep.subr.bf16.mxu0 %v4262
    %6001 = vmatpush2.bf16.msra.mxu0 %v4261
    %6002 = vmatprep.subr.bf16.mxu0 %v4233
    %6003 = vmatpush2.bf16.msra.mxu0 %v4232
    %6004 = vmatprep.subr.bf16.mxu0 %v4204
    %6005 = vmatpush2.bf16.msra.mxu0 %v4203
    %6006 = vmatprep.subr.bf16.mxu0 %v4175
    %6007 = vmatpush2.bf16.msra.mxu0 %v4174
    %6008 = vmatprep.subr.bf16.mxu0 %v4146
    %6009 = vmatpush2.bf16.msra.mxu0 %v4145
    %6010 = vmatprep.subr.bf16.mxu0 %v4117
    %6011 = vmatpush2.bf16.msra.mxu0 %v4116
    %6012 = vmatprep.mubr.bf16.mxu0 %v1055
    %6013 = vmatmul.mubr.bf16.gmra.mxu0 %v1054
    %v6014 = vpop.f32.mrf.mxu0
    %v6015 = vadd.f32 0.0, %v6014
    %v6016 = vpop.f32.mrf.mxu0
    %v6017 = vadd.f32 0.0, %v6016
    %v6018 = vpop.f32.mrf.mxu0
    %v6019 = vpop.f32.mrf.mxu0
    %6020 = vdwg.mxu0
    %6021 = vmatprep.subr.bf16.mxu0 %v4552
    %6022 = vmatpush1.bf16.msra.mxu0 %v4551
    %6023 = vmatprep.subr.bf16.mxu0 %v4523
    %6024 = vmatpush1.bf16.msra.mxu0 %v4522
    %6025 = vmatprep.subr.bf16.mxu0 %v4494
    %6026 = vmatpush1.bf16.msra.mxu0 %v4493
    %6027 = vmatprep.subr.bf16.mxu0 %v4465
    %6028 = vmatpush1.bf16.msra.mxu0 %v4464
    %6029 = vmatprep.subr.bf16.mxu0 %v4436
    %6030 = vmatpush1.bf16.msra.mxu0 %v4435
    %6031 = vmatprep.subr.bf16.mxu0 %v4407
    %6032 = vmatpush1.bf16.msra.mxu0 %v4406
    %6033 = vmatprep.subr.bf16.mxu0 %v4378
    %6034 = vmatpush1.bf16.msra.mxu0 %v4377
    %6035 = vmatprep.subr.bf16.mxu0 %v4349
    %6036 = vmatpush1.bf16.msra.mxu0 %v4348
    %6037 = vmatprep.subr.bf16.mxu0 %v4784
    %6038 = vmatpush2.bf16.msra.mxu0 %v4783
    %6039 = vmatprep.subr.bf16.mxu0 %v4755
    %6040 = vmatpush2.bf16.msra.mxu0 %v4754
    %6041 = vmatprep.subr.bf16.mxu0 %v4726
    %6042 = vmatpush2.bf16.msra.mxu0 %v4725
    %6043 = vmatprep.subr.bf16.mxu0 %v4697
    %6044 = vmatpush2.bf16.msra.mxu0 %v4696
    %6045 = vmatprep.subr.bf16.mxu0 %v4668
    %6046 = vmatpush2.bf16.msra.mxu0 %v4667
    %6047 = vmatprep.subr.bf16.mxu0 %v4639
    %6048 = vmatpush2.bf16.msra.mxu0 %v4638
    %6049 = vmatprep.subr.bf16.mxu0 %v4610
    %6050 = vmatpush2.bf16.msra.mxu0 %v4609
    %6051 = vmatprep.subr.bf16.mxu0 %v4581
    %6052 = vmatpush2.bf16.msra.mxu0 %v4580
    %6053 = vmatprep.mubr.bf16.mxu0 %v1057
    %6054 = vmatmul.mubr.bf16.gmra.mxu0 %v1056
    %v6055 = vpop.f32.mrf.mxu0
    %v6056 = vadd.f32 %v6015, %v6055
    %v6057 = vpop.f32.mrf.mxu0
    %v6058 = vadd.f32 %v6017, %v6057
    %v6059 = vpop.f32.mrf.mxu0
    %v6060 = vpop.f32.mrf.mxu0
    %6061 = vdwg.mxu0
    %6062 = vmatprep.subr.bf16.mxu0 %v4090
    %6063 = vmatpush1.bf16.msra.mxu0 %v4089
    %6064 = vmatprep.subr.bf16.mxu0 %v4061
    %6065 = vmatpush1.bf16.msra.mxu0 %v4060
    %6066 = vmatprep.subr.bf16.mxu0 %v4032
    %6067 = vmatpush1.bf16.msra.mxu0 %v4031
    %6068 = vmatprep.subr.bf16.mxu0 %v4003
    %6069 = vmatpush1.bf16.msra.mxu0 %v4002
    %6070 = vmatprep.subr.bf16.mxu0 %v3974
    %6071 = vmatpush1.bf16.msra.mxu0 %v3973
    %6072 = vmatprep.subr.bf16.mxu0 %v3945
    %6073 = vmatpush1.bf16.msra.mxu0 %v3944
    %6074 = vmatprep.subr.bf16.mxu0 %v3916
    %6075 = vmatpush1.bf16.msra.mxu0 %v3915
    %6076 = vmatprep.subr.bf16.mxu0 %v3887
    %6077 = vmatpush1.bf16.msra.mxu0 %v3886
    %6078 = vmatprep.subr.bf16.mxu0 %v4322
    %6079 = vmatpush2.bf16.msra.mxu0 %v4321
    %6080 = vmatprep.subr.bf16.mxu0 %v4293
    %6081 = vmatpush2.bf16.msra.mxu0 %v4292
    %6082 = vmatprep.subr.bf16.mxu0 %v4264
    %6083 = vmatpush2.bf16.msra.mxu0 %v4263
    %6084 = vmatprep.subr.bf16.mxu0 %v4235
    %6085 = vmatpush2.bf16.msra.mxu0 %v4234
    %6086 = vmatprep.subr.bf16.mxu0 %v4206
    %6087 = vmatpush2.bf16.msra.mxu0 %v4205
    %6088 = vmatprep.subr.bf16.mxu0 %v4177
    %6089 = vmatpush2.bf16.msra.mxu0 %v4176
    %6090 = vmatprep.subr.bf16.mxu0 %v4148
    %6091 = vmatpush2.bf16.msra.mxu0 %v4147
    %6092 = vmatprep.subr.bf16.mxu0 %v4119
    %6093 = vmatpush2.bf16.msra.mxu0 %v4118
    %6094 = vmatprep.mubr.bf16.mxu0 %v1055
    %6095 = vmatmul.mubr.bf16.gmra.mxu0 %v1054
    %v6096 = vpop.f32.mrf.mxu0
    %v6097 = vadd.f32 0.0, %v6096
    %v6098 = vpop.f32.mrf.mxu0
    %v6099 = vadd.f32 0.0, %v6098
    %v6100 = vpop.f32.mrf.mxu0
    %v6101 = vpop.f32.mrf.mxu0
    %6102 = vdwg.mxu0
    %6103 = vmatprep.subr.bf16.mxu0 %v4554
    %6104 = vmatpush1.bf16.msra.mxu0 %v4553
    %6105 = vmatprep.subr.bf16.mxu0 %v4525
    %6106 = vmatpush1.bf16.msra.mxu0 %v4524
    %6107 = vmatprep.subr.bf16.mxu0 %v4496
    %6108 = vmatpush1.bf16.msra.mxu0 %v4495
    %6109 = vmatprep.subr.bf16.mxu0 %v4467
    %6110 = vmatpush1.bf16.msra.mxu0 %v4466
    %6111 = vmatprep.subr.bf16.mxu0 %v4438
    %6112 = vmatpush1.bf16.msra.mxu0 %v4437
    %6113 = vmatprep.subr.bf16.mxu0 %v4409
    %6114 = vmatpush1.bf16.msra.mxu0 %v4408
    %6115 = vmatprep.subr.bf16.mxu0 %v4380
    %6116 = vmatpush1.bf16.msra.mxu0 %v4379
    %6117 = vmatprep.subr.bf16.mxu0 %v4351
    %6118 = vmatpush1.bf16.msra.mxu0 %v4350
    %6119 = vmatprep.subr.bf16.mxu0 %v4786
    %6120 = vmatpush2.bf16.msra.mxu0 %v4785
    %6121 = vmatprep.subr.bf16.mxu0 %v4757
    %6122 = vmatpush2.bf16.msra.mxu0 %v4756
    %6123 = vmatprep.subr.bf16.mxu0 %v4728
    %6124 = vmatpush2.bf16.msra.mxu0 %v4727
    %6125 = vmatprep.subr.bf16.mxu0 %v4699
    %6126 = vmatpush2.bf16.msra.mxu0 %v4698
    %6127 = vmatprep.subr.bf16.mxu0 %v4670
    %6128 = vmatpush2.bf16.msra.mxu0 %v4669
    %6129 = vmatprep.subr.bf16.mxu0 %v4641
    %6130 = vmatpush2.bf16.msra.mxu0 %v4640
    %6131 = vmatprep.subr.bf16.mxu0 %v4612
    %6132 = vmatpush2.bf16.msra.mxu0 %v4611
    %6133 = vmatprep.subr.bf16.mxu0 %v4583
    %6134 = vmatpush2.bf16.msra.mxu0 %v4582
    %6135 = vmatprep.mubr.bf16.mxu0 %v1057
    %6136 = vmatmul.mubr.bf16.gmra.mxu0 %v1056
    %v6137 = vpop.f32.mrf.mxu0
    %v6138 = vadd.f32 %v6097, %v6137
    %v6139 = vpop.f32.mrf.mxu0
    %v6140 = vadd.f32 %v6099, %v6139
    %v6141 = vpop.f32.mrf.mxu0
    %v6142 = vpop.f32.mrf.mxu0
    %6143 = vdwg.mxu0
    %6144 = vmatprep.subr.bf16.mxu0 %v4092
    %6145 = vmatpush1.bf16.msra.mxu0 %v4091
    %6146 = vmatprep.subr.bf16.mxu0 %v4063
    %6147 = vmatpush1.bf16.msra.mxu0 %v4062
    %6148 = vmatprep.subr.bf16.mxu0 %v4034
    %6149 = vmatpush1.bf16.msra.mxu0 %v4033
    %6150 = vmatprep.subr.bf16.mxu0 %v4005
    %6151 = vmatpush1.bf16.msra.mxu0 %v4004
    %6152 = vmatprep.subr.bf16.mxu0 %v3976
    %6153 = vmatpush1.bf16.msra.mxu0 %v3975
    %6154 = vmatprep.subr.bf16.mxu0 %v3947
    %6155 = vmatpush1.bf16.msra.mxu0 %v3946
    %6156 = vmatprep.subr.bf16.mxu0 %v3918
    %6157 = vmatpush1.bf16.msra.mxu0 %v3917
    %6158 = vmatprep.subr.bf16.mxu0 %v3889
    %6159 = vmatpush1.bf16.msra.mxu0 %v3888
    %6160 = vmatprep.subr.bf16.mxu0 %v4324
    %6161 = vmatpush2.bf16.msra.mxu0 %v4323
    %6162 = vmatprep.subr.bf16.mxu0 %v4295
    %6163 = vmatpush2.bf16.msra.mxu0 %v4294
    %6164 = vmatprep.subr.bf16.mxu0 %v4266
    %6165 = vmatpush2.bf16.msra.mxu0 %v4265
    %6166 = vmatprep.subr.bf16.mxu0 %v4237
    %6167 = vmatpush2.bf16.msra.mxu0 %v4236
    %6168 = vmatprep.subr.bf16.mxu0 %v4208
    %6169 = vmatpush2.bf16.msra.mxu0 %v4207
    %6170 = vmatprep.subr.bf16.mxu0 %v4179
    %6171 = vmatpush2.bf16.msra.mxu0 %v4178
    %6172 = vmatprep.subr.bf16.mxu0 %v4150
    %6173 = vmatpush2.bf16.msra.mxu0 %v4149
    %6174 = vmatprep.subr.bf16.mxu0 %v4121
    %6175 = vmatpush2.bf16.msra.mxu0 %v4120
    %6176 = vmatprep.mubr.bf16.mxu0 %v1055
    %6177 = vmatmul.mubr.bf16.gmra.mxu0 %v1054
    %v6178 = vpop.f32.mrf.mxu0
    %v6179 = vadd.f32 0.0, %v6178
    %v6180 = vpop.f32.mrf.mxu0
    %v6181 = vadd.f32 0.0, %v6180
    %v6182 = vpop.f32.mrf.mxu0
    %v6183 = vpop.f32.mrf.mxu0
    %6184 = vdwg.mxu0
    %6185 = vmatprep.subr.bf16.mxu0 %v4556
    %6186 = vmatpush1.bf16.msra.mxu0 %v4555
    %6187 = vmatprep.subr.bf16.mxu0 %v4527
    %6188 = vmatpush1.bf16.msra.mxu0 %v4526
    %6189 = vmatprep.subr.bf16.mxu0 %v4498
    %6190 = vmatpush1.bf16.msra.mxu0 %v4497
    %6191 = vmatprep.subr.bf16.mxu0 %v4469
    %6192 = vmatpush1.bf16.msra.mxu0 %v4468
    %6193 = vmatprep.subr.bf16.mxu0 %v4440
    %6194 = vmatpush1.bf16.msra.mxu0 %v4439
    %6195 = vmatprep.subr.bf16.mxu0 %v4411
    %6196 = vmatpush1.bf16.msra.mxu0 %v4410
    %6197 = vmatprep.subr.bf16.mxu0 %v4382
    %6198 = vmatpush1.bf16.msra.mxu0 %v4381
    %6199 = vmatprep.subr.bf16.mxu0 %v4353
    %6200 = vmatpush1.bf16.msra.mxu0 %v4352
    %6201 = vmatprep.subr.bf16.mxu0 %v4788
    %6202 = vmatpush2.bf16.msra.mxu0 %v4787
    %6203 = vmatprep.subr.bf16.mxu0 %v4759
    %6204 = vmatpush2.bf16.msra.mxu0 %v4758
    %6205 = vmatprep.subr.bf16.mxu0 %v4730
    %6206 = vmatpush2.bf16.msra.mxu0 %v4729
    %6207 = vmatprep.subr.bf16.mxu0 %v4701
    %6208 = vmatpush2.bf16.msra.mxu0 %v4700
    %6209 = vmatprep.subr.bf16.mxu0 %v4672
    %6210 = vmatpush2.bf16.msra.mxu0 %v4671
    %6211 = vmatprep.subr.bf16.mxu0 %v4643
    %6212 = vmatpush2.bf16.msra.mxu0 %v4642
    %6213 = vmatprep.subr.bf16.mxu0 %v4614
    %6214 = vmatpush2.bf16.msra.mxu0 %v4613
    %6215 = vmatprep.subr.bf16.mxu0 %v4585
    %6216 = vmatpush2.bf16.msra.mxu0 %v4584
    %6217 = vmatprep.mubr.bf16.mxu0 %v1057
    %6218 = vmatmul.mubr.bf16.gmra.mxu0 %v1056
    %v6219 = vpop.f32.mrf.mxu0
    %v6220 = vadd.f32 %v6179, %v6219
    %v6221 = vpop.f32.mrf.mxu0
    %v6222 = vadd.f32 %v6181, %v6221
    %v6223 = vpop.f32.mrf.mxu0
    %v6224 = vpop.f32.mrf.mxu0
    %6225 = vdwg.mxu0
    %6226 = vmatprep.subr.bf16.mxu0 %v4094
    %6227 = vmatpush1.bf16.msra.mxu0 %v4093
    %6228 = vmatprep.subr.bf16.mxu0 %v4065
    %6229 = vmatpush1.bf16.msra.mxu0 %v4064
    %6230 = vmatprep.subr.bf16.mxu0 %v4036
    %6231 = vmatpush1.bf16.msra.mxu0 %v4035
    %6232 = vmatprep.subr.bf16.mxu0 %v4007
    %6233 = vmatpush1.bf16.msra.mxu0 %v4006
    %6234 = vmatprep.subr.bf16.mxu0 %v3978
    %6235 = vmatpush1.bf16.msra.mxu0 %v3977
    %6236 = vmatprep.subr.bf16.mxu0 %v3949
    %6237 = vmatpush1.bf16.msra.mxu0 %v3948
    %6238 = vmatprep.subr.bf16.mxu0 %v3920
    %6239 = vmatpush1.bf16.msra.mxu0 %v3919
    %6240 = vmatprep.subr.bf16.mxu0 %v3891
    %6241 = vmatpush1.bf16.msra.mxu0 %v3890
    %6242 = vmatprep.subr.bf16.mxu0 %v4326
    %6243 = vmatpush2.bf16.msra.mxu0 %v4325
    %6244 = vmatprep.subr.bf16.mxu0 %v4297
    %6245 = vmatpush2.bf16.msra.mxu0 %v4296
    %6246 = vmatprep.subr.bf16.mxu0 %v4268
    %6247 = vmatpush2.bf16.msra.mxu0 %v4267
    %6248 = vmatprep.subr.bf16.mxu0 %v4239
    %6249 = vmatpush2.bf16.msra.mxu0 %v4238
    %6250 = vmatprep.subr.bf16.mxu0 %v4210
    %6251 = vmatpush2.bf16.msra.mxu0 %v4209
    %6252 = vmatprep.subr.bf16.mxu0 %v4181
    %6253 = vmatpush2.bf16.msra.mxu0 %v4180
    %6254 = vmatprep.subr.bf16.mxu0 %v4152
    %6255 = vmatpush2.bf16.msra.mxu0 %v4151
    %6256 = vmatprep.subr.bf16.mxu0 %v4123
    %6257 = vmatpush2.bf16.msra.mxu0 %v4122
    %6258 = vmatprep.mubr.bf16.mxu0 %v1055
    %6259 = vmatmul.mubr.bf16.gmra.mxu0 %v1054
    %v6260 = vpop.f32.mrf.mxu0
    %v6261 = vadd.f32 0.0, %v6260
    %v6262 = vpop.f32.mrf.mxu0
    %v6263 = vadd.f32 0.0, %v6262
    %v6264 = vpop.f32.mrf.mxu0
    %v6265 = vpop.f32.mrf.mxu0
    %6266 = vdwg.mxu0
    %6267 = vmatprep.subr.bf16.mxu0 %v4558
    %6268 = vmatpush1.bf16.msra.mxu0 %v4557
    %6269 = vmatprep.subr.bf16.mxu0 %v4529
    %6270 = vmatpush1.bf16.msra.mxu0 %v4528
    %6271 = vmatprep.subr.bf16.mxu0 %v4500
    %6272 = vmatpush1.bf16.msra.mxu0 %v4499
    %6273 = vmatprep.subr.bf16.mxu0 %v4471
    %6274 = vmatpush1.bf16.msra.mxu0 %v4470
    %6275 = vmatprep.subr.bf16.mxu0 %v4442
    %6276 = vmatpush1.bf16.msra.mxu0 %v4441
    %6277 = vmatprep.subr.bf16.mxu0 %v4413
    %6278 = vmatpush1.bf16.msra.mxu0 %v4412
    %6279 = vmatprep.subr.bf16.mxu0 %v4384
    %6280 = vmatpush1.bf16.msra.mxu0 %v4383
    %6281 = vmatprep.subr.bf16.mxu0 %v4355
    %6282 = vmatpush1.bf16.msra.mxu0 %v4354
    %6283 = vmatprep.subr.bf16.mxu0 %v4790
    %6284 = vmatpush2.bf16.msra.mxu0 %v4789
    %6285 = vmatprep.subr.bf16.mxu0 %v4761
    %6286 = vmatpush2.bf16.msra.mxu0 %v4760
    %6287 = vmatprep.subr.bf16.mxu0 %v4732
    %6288 = vmatpush2.bf16.msra.mxu0 %v4731
    %6289 = vmatprep.subr.bf16.mxu0 %v4703
    %6290 = vmatpush2.bf16.msra.mxu0 %v4702
    %6291 = vmatprep.subr.bf16.mxu0 %v4674
    %6292 = vmatpush2.bf16.msra.mxu0 %v4673
    %6293 = vmatprep.subr.bf16.mxu0 %v4645
    %6294 = vmatpush2.bf16.msra.mxu0 %v4644
    %6295 = vmatprep.subr.bf16.mxu0 %v4616
    %6296 = vmatpush2.bf16.msra.mxu0 %v4615
    %6297 = vmatprep.subr.bf16.mxu0 %v4587
    %6298 = vmatpush2.bf16.msra.mxu0 %v4586
    %6299 = vmatprep.mubr.bf16.mxu0 %v1057
    %6300 = vmatmul.mubr.bf16.gmra.mxu0 %v1056
    %v6301 = vpop.f32.mrf.mxu0
    %v6302 = vadd.f32 %v6261, %v6301
    %v6303 = vpop.f32.mrf.mxu0
    %v6304 = vadd.f32 %v6263, %v6303
    %v6305 = vpop.f32.mrf.mxu0
    %v6306 = vpop.f32.mrf.mxu0
    %6307 = vdwg.mxu0
    %6308 = vmatprep.subr.bf16.mxu0 %v4096
    %6309 = vmatpush1.bf16.msra.mxu0 %v4095
    %6310 = vmatprep.subr.bf16.mxu0 %v4067
    %6311 = vmatpush1.bf16.msra.mxu0 %v4066
    %6312 = vmatprep.subr.bf16.mxu0 %v4038
    %6313 = vmatpush1.bf16.msra.mxu0 %v4037
    %6314 = vmatprep.subr.bf16.mxu0 %v4009
    %6315 = vmatpush1.bf16.msra.mxu0 %v4008
    %6316 = vmatprep.subr.bf16.mxu0 %v3980
    %6317 = vmatpush1.bf16.msra.mxu0 %v3979
    %6318 = vmatprep.subr.bf16.mxu0 %v3951
    %6319 = vmatpush1.bf16.msra.mxu0 %v3950
    %6320 = vmatprep.subr.bf16.mxu0 %v3922
    %6321 = vmatpush1.bf16.msra.mxu0 %v3921
    %6322 = vmatprep.subr.bf16.mxu0 %v3893
    %6323 = vmatpush1.bf16.msra.mxu0 %v3892
    %6324 = vmatprep.subr.bf16.mxu0 %v4328
    %6325 = vmatpush2.bf16.msra.mxu0 %v4327
    %6326 = vmatprep.subr.bf16.mxu0 %v4299
    %6327 = vmatpush2.bf16.msra.mxu0 %v4298
    %6328 = vmatprep.subr.bf16.mxu0 %v4270
    %6329 = vmatpush2.bf16.msra.mxu0 %v4269
    %6330 = vmatprep.subr.bf16.mxu0 %v4241
    %6331 = vmatpush2.bf16.msra.mxu0 %v4240
    %6332 = vmatprep.subr.bf16.mxu0 %v4212
    %6333 = vmatpush2.bf16.msra.mxu0 %v4211
    %6334 = vmatprep.subr.bf16.mxu0 %v4183
    %6335 = vmatpush2.bf16.msra.mxu0 %v4182
    %6336 = vmatprep.subr.bf16.mxu0 %v4154
    %6337 = vmatpush2.bf16.msra.mxu0 %v4153
    %6338 = vmatprep.subr.bf16.mxu0 %v4125
    %6339 = vmatpush2.bf16.msra.mxu0 %v4124
    %6340 = vmatprep.mubr.bf16.mxu0 %v1055
    %6341 = vmatmul.mubr.bf16.gmra.mxu0 %v1054
    %v6342 = vpop.f32.mrf.mxu0
    %v6343 = vadd.f32 0.0, %v6342
    %v6344 = vpop.f32.mrf.mxu0
    %v6345 = vadd.f32 0.0, %v6344
    %v6346 = vpop.f32.mrf.mxu0
    %v6347 = vpop.f32.mrf.mxu0
    %6348 = vdwg.mxu0
    %6349 = vmatprep.subr.bf16.mxu0 %v4560
    %6350 = vmatpush1.bf16.msra.mxu0 %v4559
    %6351 = vmatprep.subr.bf16.mxu0 %v4531
    %6352 = vmatpush1.bf16.msra.mxu0 %v4530
    %6353 = vmatprep.subr.bf16.mxu0 %v4502
    %6354 = vmatpush1.bf16.msra.mxu0 %v4501
    %6355 = vmatprep.subr.bf16.mxu0 %v4473
    %6356 = vmatpush1.bf16.msra.mxu0 %v4472
    %6357 = vmatprep.subr.bf16.mxu0 %v4444
    %6358 = vmatpush1.bf16.msra.mxu0 %v4443
    %6359 = vmatprep.subr.bf16.mxu0 %v4415
    %6360 = vmatpush1.bf16.msra.mxu0 %v4414
    %6361 = vmatprep.subr.bf16.mxu0 %v4386
    %6362 = vmatpush1.bf16.msra.mxu0 %v4385
    %6363 = vmatprep.subr.bf16.mxu0 %v4357
    %6364 = vmatpush1.bf16.msra.mxu0 %v4356
    %6365 = vmatprep.subr.bf16.mxu0 %v4792
    %6366 = vmatpush2.bf16.msra.mxu0 %v4791
    %6367 = vmatprep.subr.bf16.mxu0 %v4763
    %6368 = vmatpush2.bf16.msra.mxu0 %v4762
    %6369 = vmatprep.subr.bf16.mxu0 %v4734
    %6370 = vmatpush2.bf16.msra.mxu0 %v4733
    %6371 = vmatprep.subr.bf16.mxu0 %v4705
    %6372 = vmatpush2.bf16.msra.mxu0 %v4704
    %6373 = vmatprep.subr.bf16.mxu0 %v4676
    %6374 = vmatpush2.bf16.msra.mxu0 %v4675
    %6375 = vmatprep.subr.bf16.mxu0 %v4647
    %6376 = vmatpush2.bf16.msra.mxu0 %v4646
    %6377 = vmatprep.subr.bf16.mxu0 %v4618
    %6378 = vmatpush2.bf16.msra.mxu0 %v4617
    %6379 = vmatprep.subr.bf16.mxu0 %v4589
    %6380 = vmatpush2.bf16.msra.mxu0 %v4588
    %6381 = vmatprep.mubr.bf16.mxu0 %v1057
    %6382 = vmatmul.mubr.bf16.gmra.mxu0 %v1056
    %v6383 = vpop.f32.mrf.mxu0
    %v6384 = vadd.f32 %v6343, %v6383
    %v6385 = vpop.f32.mrf.mxu0
    %v6386 = vadd.f32 %v6345, %v6385
    %v6387 = vpop.f32.mrf.mxu0
    %v6388 = vpop.f32.mrf.mxu0
    %6389 = vdwg.mxu0
    %6390 = vmatprep.subr.bf16.mxu0 %v4098
    %6391 = vmatpush1.bf16.msra.mxu0 %v4097
    %6392 = vmatprep.subr.bf16.mxu0 %v4069
    %6393 = vmatpush1.bf16.msra.mxu0 %v4068
    %6394 = vmatprep.subr.bf16.mxu0 %v4040
    %6395 = vmatpush1.bf16.msra.mxu0 %v4039
    %6396 = vmatprep.subr.bf16.mxu0 %v4011
    %6397 = vmatpush1.bf16.msra.mxu0 %v4010
    %6398 = vmatprep.subr.bf16.mxu0 %v3982
    %6399 = vmatpush1.bf16.msra.mxu0 %v3981
    %6400 = vmatprep.subr.bf16.mxu0 %v3953
    %6401 = vmatpush1.bf16.msra.mxu0 %v3952
    %6402 = vmatprep.subr.bf16.mxu0 %v3924
    %6403 = vmatpush1.bf16.msra.mxu0 %v3923
    %6404 = vmatprep.subr.bf16.mxu0 %v3895
    %6405 = vmatpush1.bf16.msra.mxu0 %v3894
    %6406 = vmatprep.subr.bf16.mxu0 %v4330
    %6407 = vmatpush2.bf16.msra.mxu0 %v4329
    %6408 = vmatprep.subr.bf16.mxu0 %v4301
    %6409 = vmatpush2.bf16.msra.mxu0 %v4300
    %6410 = vmatprep.subr.bf16.mxu0 %v4272
    %6411 = vmatpush2.bf16.msra.mxu0 %v4271
    %6412 = vmatprep.subr.bf16.mxu0 %v4243
    %6413 = vmatpush2.bf16.msra.mxu0 %v4242
    %6414 = vmatprep.subr.bf16.mxu0 %v4214
    %6415 = vmatpush2.bf16.msra.mxu0 %v4213
    %6416 = vmatprep.subr.bf16.mxu0 %v4185
    %6417 = vmatpush2.bf16.msra.mxu0 %v4184
    %6418 = vmatprep.subr.bf16.mxu0 %v4156
    %6419 = vmatpush2.bf16.msra.mxu0 %v4155
    %6420 = vmatprep.subr.bf16.mxu0 %v4127
    %6421 = vmatpush2.bf16.msra.mxu0 %v4126
    %6422 = vmatprep.mubr.bf16.mxu0 %v1055
    %6423 = vmatmul.mubr.bf16.gmra.mxu0 %v1054
    %v6424 = vpop.f32.mrf.mxu0
    %v6425 = vadd.f32 0.0, %v6424
    %v6426 = vpop.f32.mrf.mxu0
    %v6427 = vadd.f32 0.0, %v6426
    %v6428 = vpop.f32.mrf.mxu0
    %v6429 = vpop.f32.mrf.mxu0
    %6430 = vdwg.mxu0
    %6431 = vmatprep.subr.bf16.mxu0 %v4562
    %6432 = vmatpush1.bf16.msra.mxu0 %v4561
    %6433 = vmatprep.subr.bf16.mxu0 %v4533
    %6434 = vmatpush1.bf16.msra.mxu0 %v4532
    %6435 = vmatprep.subr.bf16.mxu0 %v4504
    %6436 = vmatpush1.bf16.msra.mxu0 %v4503
    %6437 = vmatprep.subr.bf16.mxu0 %v4475
    %6438 = vmatpush1.bf16.msra.mxu0 %v4474
    %6439 = vmatprep.subr.bf16.mxu0 %v4446
    %6440 = vmatpush1.bf16.msra.mxu0 %v4445
    %6441 = vmatprep.subr.bf16.mxu0 %v4417
    %6442 = vmatpush1.bf16.msra.mxu0 %v4416
    %6443 = vmatprep.subr.bf16.mxu0 %v4388
    %6444 = vmatpush1.bf16.msra.mxu0 %v4387
    %6445 = vmatprep.subr.bf16.mxu0 %v4359
    %6446 = vmatpush1.bf16.msra.mxu0 %v4358
    %6447 = vmatprep.subr.bf16.mxu0 %v4794
    %6448 = vmatpush2.bf16.msra.mxu0 %v4793
    %6449 = vmatprep.subr.bf16.mxu0 %v4765
    %6450 = vmatpush2.bf16.msra.mxu0 %v4764
    %6451 = vmatprep.subr.bf16.mxu0 %v4736
    %6452 = vmatpush2.bf16.msra.mxu0 %v4735
    %6453 = vmatprep.subr.bf16.mxu0 %v4707
    %6454 = vmatpush2.bf16.msra.mxu0 %v4706
    %6455 = vmatprep.subr.bf16.mxu0 %v4678
    %6456 = vmatpush2.bf16.msra.mxu0 %v4677
    %6457 = vmatprep.subr.bf16.mxu0 %v4649
    %6458 = vmatpush2.bf16.msra.mxu0 %v4648
    %6459 = vmatprep.subr.bf16.mxu0 %v4620
    %6460 = vmatpush2.bf16.msra.mxu0 %v4619
    %6461 = vmatprep.subr.bf16.mxu0 %v4591
    %6462 = vmatpush2.bf16.msra.mxu0 %v4590
    %6463 = vmatprep.mubr.bf16.mxu0 %v1057
    %6464 = vmatmul.mubr.bf16.gmra.mxu0 %v1056
    %v6465 = vpop.f32.mrf.mxu0
    %v6466 = vadd.f32 %v6425, %v6465
    %v6467 = vpop.f32.mrf.mxu0
    %v6468 = vadd.f32 %v6427, %v6467
    %v6469 = vpop.f32.mrf.mxu0
    %v6470 = vpop.f32.mrf.mxu0
    %6471 = vdwg.mxu0
    %6472 = vmatprep.subr.bf16.mxu0 %v4100
    %6473 = vmatpush1.bf16.msra.mxu0 %v4099
    %6474 = vmatprep.subr.bf16.mxu0 %v4071
    %6475 = vmatpush1.bf16.msra.mxu0 %v4070
    %6476 = vmatprep.subr.bf16.mxu0 %v4042
    %6477 = vmatpush1.bf16.msra.mxu0 %v4041
    %6478 = vmatprep.subr.bf16.mxu0 %v4013
    %6479 = vmatpush1.bf16.msra.mxu0 %v4012
    %6480 = vmatprep.subr.bf16.mxu0 %v3984
    %6481 = vmatpush1.bf16.msra.mxu0 %v3983
    %6482 = vmatprep.subr.bf16.mxu0 %v3955
    %6483 = vmatpush1.bf16.msra.mxu0 %v3954
    %6484 = vmatprep.subr.bf16.mxu0 %v3926
    %6485 = vmatpush1.bf16.msra.mxu0 %v3925
    %6486 = vmatprep.subr.bf16.mxu0 %v3897
    %6487 = vmatpush1.bf16.msra.mxu0 %v3896
    %6488 = vmatprep.subr.bf16.mxu0 %v4332
    %6489 = vmatpush2.bf16.msra.mxu0 %v4331
    %6490 = vmatprep.subr.bf16.mxu0 %v4303
    %6491 = vmatpush2.bf16.msra.mxu0 %v4302
    %6492 = vmatprep.subr.bf16.mxu0 %v4274
    %6493 = vmatpush2.bf16.msra.mxu0 %v4273
    %6494 = vmatprep.subr.bf16.mxu0 %v4245
    %6495 = vmatpush2.bf16.msra.mxu0 %v4244
    %6496 = vmatprep.subr.bf16.mxu0 %v4216
    %6497 = vmatpush2.bf16.msra.mxu0 %v4215
    %6498 = vmatprep.subr.bf16.mxu0 %v4187
    %6499 = vmatpush2.bf16.msra.mxu0 %v4186
    %6500 = vmatprep.subr.bf16.mxu0 %v4158
    %6501 = vmatpush2.bf16.msra.mxu0 %v4157
    %6502 = vmatprep.subr.bf16.mxu0 %v4129
    %6503 = vmatpush2.bf16.msra.mxu0 %v4128
    %6504 = vmatprep.mubr.bf16.mxu0 %v1055
    %6505 = vmatmul.mubr.bf16.gmra.mxu0 %v1054
    %v6506 = vpop.f32.mrf.mxu0
    %v6507 = vadd.f32 0.0, %v6506
    %v6508 = vpop.f32.mrf.mxu0
    %v6509 = vadd.f32 0.0, %v6508
    %v6510 = vpop.f32.mrf.mxu0
    %v6511 = vpop.f32.mrf.mxu0
    %6512 = vdwg.mxu0
    %6513 = vmatprep.subr.bf16.mxu0 %v4564
    %6514 = vmatpush1.bf16.msra.mxu0 %v4563
    %6515 = vmatprep.subr.bf16.mxu0 %v4535
    %6516 = vmatpush1.bf16.msra.mxu0 %v4534
    %6517 = vmatprep.subr.bf16.mxu0 %v4506
    %6518 = vmatpush1.bf16.msra.mxu0 %v4505
    %6519 = vmatprep.subr.bf16.mxu0 %v4477
    %6520 = vmatpush1.bf16.msra.mxu0 %v4476
    %6521 = vmatprep.subr.bf16.mxu0 %v4448
    %6522 = vmatpush1.bf16.msra.mxu0 %v4447
    %6523 = vmatprep.subr.bf16.mxu0 %v4419
    %6524 = vmatpush1.bf16.msra.mxu0 %v4418
    %6525 = vmatprep.subr.bf16.mxu0 %v4390
    %6526 = vmatpush1.bf16.msra.mxu0 %v4389
    %6527 = vmatprep.subr.bf16.mxu0 %v4361
    %6528 = vmatpush1.bf16.msra.mxu0 %v4360
    %6529 = vmatprep.subr.bf16.mxu0 %v4796
    %6530 = vmatpush2.bf16.msra.mxu0 %v4795
    %6531 = vmatprep.subr.bf16.mxu0 %v4767
    %6532 = vmatpush2.bf16.msra.mxu0 %v4766
    %6533 = vmatprep.subr.bf16.mxu0 %v4738
    %6534 = vmatpush2.bf16.msra.mxu0 %v4737
    %6535 = vmatprep.subr.bf16.mxu0 %v4709
    %6536 = vmatpush2.bf16.msra.mxu0 %v4708
    %6537 = vmatprep.subr.bf16.mxu0 %v4680
    %6538 = vmatpush2.bf16.msra.mxu0 %v4679
    %6539 = vmatprep.subr.bf16.mxu0 %v4651
    %6540 = vmatpush2.bf16.msra.mxu0 %v4650
    %6541 = vmatprep.subr.bf16.mxu0 %v4622
    %6542 = vmatpush2.bf16.msra.mxu0 %v4621
    %6543 = vmatprep.subr.bf16.mxu0 %v4593
    %6544 = vmatpush2.bf16.msra.mxu0 %v4592
    %6545 = vmatprep.mubr.bf16.mxu0 %v1057
    %6546 = vmatmul.mubr.bf16.gmra.mxu0 %v1056
    %v6547 = vpop.f32.mrf.mxu0
    %v6548 = vadd.f32 %v6507, %v6547
    %v6549 = vpop.f32.mrf.mxu0
    %v6550 = vadd.f32 %v6509, %v6549
    %v6551 = vpop.f32.mrf.mxu0
    %v6552 = vpop.f32.mrf.mxu0
    %6553 = vdwg.mxu0
    %6554 = vmatprep.subr.bf16.mxu0 %v4102
    %6555 = vmatpush1.bf16.msra.mxu0 %v4101
    %6556 = vmatprep.subr.bf16.mxu0 %v4073
    %6557 = vmatpush1.bf16.msra.mxu0 %v4072
    %6558 = vmatprep.subr.bf16.mxu0 %v4044
    %6559 = vmatpush1.bf16.msra.mxu0 %v4043
    %6560 = vmatprep.subr.bf16.mxu0 %v4015
    %6561 = vmatpush1.bf16.msra.mxu0 %v4014
    %6562 = vmatprep.subr.bf16.mxu0 %v3986
    %6563 = vmatpush1.bf16.msra.mxu0 %v3985
    %6564 = vmatprep.subr.bf16.mxu0 %v3957
    %6565 = vmatpush1.bf16.msra.mxu0 %v3956
    %6566 = vmatprep.subr.bf16.mxu0 %v3928
    %6567 = vmatpush1.bf16.msra.mxu0 %v3927
    %6568 = vmatprep.subr.bf16.mxu0 %v3899
    %6569 = vmatpush1.bf16.msra.mxu0 %v3898
    %6570 = vmatprep.subr.bf16.mxu0 %v4334
    %6571 = vmatpush2.bf16.msra.mxu0 %v4333
    %6572 = vmatprep.subr.bf16.mxu0 %v4305
    %6573 = vmatpush2.bf16.msra.mxu0 %v4304
    %6574 = vmatprep.subr.bf16.mxu0 %v4276
    %6575 = vmatpush2.bf16.msra.mxu0 %v4275
    %6576 = vmatprep.subr.bf16.mxu0 %v4247
    %6577 = vmatpush2.bf16.msra.mxu0 %v4246
    %6578 = vmatprep.subr.bf16.mxu0 %v4218
    %6579 = vmatpush2.bf16.msra.mxu0 %v4217
    %6580 = vmatprep.subr.bf16.mxu0 %v4189
    %6581 = vmatpush2.bf16.msra.mxu0 %v4188
    %6582 = vmatprep.subr.bf16.mxu0 %v4160
    %6583 = vmatpush2.bf16.msra.mxu0 %v4159
    %6584 = vmatprep.subr.bf16.mxu0 %v4131
    %6585 = vmatpush2.bf16.msra.mxu0 %v4130
    %6586 = vmatprep.mubr.bf16.mxu0 %v1055
    %6587 = vmatmul.mubr.bf16.gmra.mxu0 %v1054
    %v6588 = vpop.f32.mrf.mxu0
    %v6589 = vadd.f32 0.0, %v6588
    %v6590 = vpop.f32.mrf.mxu0
    %v6591 = vadd.f32 0.0, %v6590
    %v6592 = vpop.f32.mrf.mxu0
    %v6593 = vpop.f32.mrf.mxu0
    %6594 = vdwg.mxu0
    %6595 = vmatprep.subr.bf16.mxu0 %v4566
    %6596 = vmatpush1.bf16.msra.mxu0 %v4565
    %6597 = vmatprep.subr.bf16.mxu0 %v4537
    %6598 = vmatpush1.bf16.msra.mxu0 %v4536
    %6599 = vmatprep.subr.bf16.mxu0 %v4508
    %6600 = vmatpush1.bf16.msra.mxu0 %v4507
    %6601 = vmatprep.subr.bf16.mxu0 %v4479
    %6602 = vmatpush1.bf16.msra.mxu0 %v4478
    %6603 = vmatprep.subr.bf16.mxu0 %v4450
    %6604 = vmatpush1.bf16.msra.mxu0 %v4449
    %6605 = vmatprep.subr.bf16.mxu0 %v4421
    %6606 = vmatpush1.bf16.msra.mxu0 %v4420
    %6607 = vmatprep.subr.bf16.mxu0 %v4392
    %6608 = vmatpush1.bf16.msra.mxu0 %v4391
    %6609 = vmatprep.subr.bf16.mxu0 %v4363
    %6610 = vmatpush1.bf16.msra.mxu0 %v4362
    %6611 = vmatprep.subr.bf16.mxu0 %v4798
    %6612 = vmatpush2.bf16.msra.mxu0 %v4797
    %6613 = vmatprep.subr.bf16.mxu0 %v4769
    %6614 = vmatpush2.bf16.msra.mxu0 %v4768
    %6615 = vmatprep.subr.bf16.mxu0 %v4740
    %6616 = vmatpush2.bf16.msra.mxu0 %v4739
    %6617 = vmatprep.subr.bf16.mxu0 %v4711
    %6618 = vmatpush2.bf16.msra.mxu0 %v4710
    %6619 = vmatprep.subr.bf16.mxu0 %v4682
    %6620 = vmatpush2.bf16.msra.mxu0 %v4681
    %6621 = vmatprep.subr.bf16.mxu0 %v4653
    %6622 = vmatpush2.bf16.msra.mxu0 %v4652
    %6623 = vmatprep.subr.bf16.mxu0 %v4624
    %6624 = vmatpush2.bf16.msra.mxu0 %v4623
    %6625 = vmatprep.subr.bf16.mxu0 %v4595
    %6626 = vmatpush2.bf16.msra.mxu0 %v4594
    %6627 = vmatprep.mubr.bf16.mxu0 %v1057
    %6628 = vmatmul.mubr.bf16.gmra.mxu0 %v1056
    %v6629 = vpop.f32.mrf.mxu0
    %v6630 = vadd.f32 %v6589, %v6629
    %v6631 = vpop.f32.mrf.mxu0
    %v6632 = vadd.f32 %v6591, %v6631
    %v6633 = vpop.f32.mrf.mxu0
    %v6634 = vpop.f32.mrf.mxu0
    %6635 = vdwg.mxu0
    %6636 = vmatprep.subr.bf16.mxu0 %v4104
    %6637 = vmatpush1.bf16.msra.mxu0 %v4103
    %6638 = vmatprep.subr.bf16.mxu0 %v4075
    %6639 = vmatpush1.bf16.msra.mxu0 %v4074
    %6640 = vmatprep.subr.bf16.mxu0 %v4046
    %6641 = vmatpush1.bf16.msra.mxu0 %v4045
    %6642 = vmatprep.subr.bf16.mxu0 %v4017
    %6643 = vmatpush1.bf16.msra.mxu0 %v4016
    %6644 = vmatprep.subr.bf16.mxu0 %v3988
    %6645 = vmatpush1.bf16.msra.mxu0 %v3987
    %6646 = vmatprep.subr.bf16.mxu0 %v3959
    %6647 = vmatpush1.bf16.msra.mxu0 %v3958
    %6648 = vmatprep.subr.bf16.mxu0 %v3930
    %6649 = vmatpush1.bf16.msra.mxu0 %v3929
    %6650 = vmatprep.subr.bf16.mxu0 %v3901
    %6651 = vmatpush1.bf16.msra.mxu0 %v3900
    %6652 = vmatprep.subr.bf16.mxu0 %v4336
    %6653 = vmatpush2.bf16.msra.mxu0 %v4335
    %6654 = vmatprep.subr.bf16.mxu0 %v4307
    %6655 = vmatpush2.bf16.msra.mxu0 %v4306
    %6656 = vmatprep.subr.bf16.mxu0 %v4278
    %6657 = vmatpush2.bf16.msra.mxu0 %v4277
    %6658 = vmatprep.subr.bf16.mxu0 %v4249
    %6659 = vmatpush2.bf16.msra.mxu0 %v4248
    %6660 = vmatprep.subr.bf16.mxu0 %v4220
    %6661 = vmatpush2.bf16.msra.mxu0 %v4219
    %6662 = vmatprep.subr.bf16.mxu0 %v4191
    %6663 = vmatpush2.bf16.msra.mxu0 %v4190
    %6664 = vmatprep.subr.bf16.mxu0 %v4162
    %6665 = vmatpush2.bf16.msra.mxu0 %v4161
    %6666 = vmatprep.subr.bf16.mxu0 %v4133
    %6667 = vmatpush2.bf16.msra.mxu0 %v4132
    %6668 = vmatprep.mubr.bf16.mxu0 %v1055
    %6669 = vmatmul.mubr.bf16.gmra.mxu0 %v1054
    %v6670 = vpop.f32.mrf.mxu0
    %v6671 = vadd.f32 0.0, %v6670
    %v6672 = vpop.f32.mrf.mxu0
    %v6673 = vadd.f32 0.0, %v6672
    %v6674 = vpop.f32.mrf.mxu0
    %v6675 = vpop.f32.mrf.mxu0
    %6676 = vdwg.mxu0
    %6677 = vmatprep.subr.bf16.mxu0 %v4568
    %6678 = vmatpush1.bf16.msra.mxu0 %v4567
    %6679 = vmatprep.subr.bf16.mxu0 %v4539
    %6680 = vmatpush1.bf16.msra.mxu0 %v4538
    %6681 = vmatprep.subr.bf16.mxu0 %v4510
    %6682 = vmatpush1.bf16.msra.mxu0 %v4509
    %6683 = vmatprep.subr.bf16.mxu0 %v4481
    %6684 = vmatpush1.bf16.msra.mxu0 %v4480
    %6685 = vmatprep.subr.bf16.mxu0 %v4452
    %6686 = vmatpush1.bf16.msra.mxu0 %v4451
    %6687 = vmatprep.subr.bf16.mxu0 %v4423
    %6688 = vmatpush1.bf16.msra.mxu0 %v4422
    %6689 = vmatprep.subr.bf16.mxu0 %v4394
    %6690 = vmatpush1.bf16.msra.mxu0 %v4393
    %6691 = vmatprep.subr.bf16.mxu0 %v4365
    %6692 = vmatpush1.bf16.msra.mxu0 %v4364
    %6693 = vmatprep.subr.bf16.mxu0 %v4800
    %6694 = vmatpush2.bf16.msra.mxu0 %v4799
    %6695 = vmatprep.subr.bf16.mxu0 %v4771
    %6696 = vmatpush2.bf16.msra.mxu0 %v4770
    %6697 = vmatprep.subr.bf16.mxu0 %v4742
    %6698 = vmatpush2.bf16.msra.mxu0 %v4741
    %6699 = vmatprep.subr.bf16.mxu0 %v4713
    %6700 = vmatpush2.bf16.msra.mxu0 %v4712
    %6701 = vmatprep.subr.bf16.mxu0 %v4684
    %6702 = vmatpush2.bf16.msra.mxu0 %v4683
    %6703 = vmatprep.subr.bf16.mxu0 %v4655
    %6704 = vmatpush2.bf16.msra.mxu0 %v4654
    %6705 = vmatprep.subr.bf16.mxu0 %v4626
    %6706 = vmatpush2.bf16.msra.mxu0 %v4625
    %6707 = vmatprep.subr.bf16.mxu0 %v4597
    %6708 = vmatpush2.bf16.msra.mxu0 %v4596
    %6709 = vmatprep.mubr.bf16.mxu0 %v1057
    %6710 = vmatmul.mubr.bf16.gmra.mxu0 %v1056
    %v6711 = vpop.f32.mrf.mxu0
    %v6712 = vadd.f32 %v6671, %v6711
    %v6713 = vpop.f32.mrf.mxu0
    %v6714 = vadd.f32 %v6673, %v6713
    %v6715 = vpop.f32.mrf.mxu0
    %v6716 = vpop.f32.mrf.mxu0
    %6717 = vdwg.mxu0
    %6718 = vmatprep.subr.bf16.mxu0 %v4106
    %6719 = vmatpush1.bf16.msra.mxu0 %v4105
    %6720 = vmatprep.subr.bf16.mxu0 %v4077
    %6721 = vmatpush1.bf16.msra.mxu0 %v4076
    %6722 = vmatprep.subr.bf16.mxu0 %v4048
    %6723 = vmatpush1.bf16.msra.mxu0 %v4047
    %6724 = vmatprep.subr.bf16.mxu0 %v4019
    %6725 = vmatpush1.bf16.msra.mxu0 %v4018
    %6726 = vmatprep.subr.bf16.mxu0 %v3990
    %6727 = vmatpush1.bf16.msra.mxu0 %v3989
    %6728 = vmatprep.subr.bf16.mxu0 %v3961
    %6729 = vmatpush1.bf16.msra.mxu0 %v3960
    %6730 = vmatprep.subr.bf16.mxu0 %v3932
    %6731 = vmatpush1.bf16.msra.mxu0 %v3931
    %6732 = vmatprep.subr.bf16.mxu0 %v3903
    %6733 = vmatpush1.bf16.msra.mxu0 %v3902
    %6734 = vmatprep.subr.bf16.mxu0 %v4338
    %6735 = vmatpush2.bf16.msra.mxu0 %v4337
    %6736 = vmatprep.subr.bf16.mxu0 %v4309
    %6737 = vmatpush2.bf16.msra.mxu0 %v4308
    %6738 = vmatprep.subr.bf16.mxu0 %v4280
    %6739 = vmatpush2.bf16.msra.mxu0 %v4279
    %6740 = vmatprep.subr.bf16.mxu0 %v4251
    %6741 = vmatpush2.bf16.msra.mxu0 %v4250
    %6742 = vmatprep.subr.bf16.mxu0 %v4222
    %6743 = vmatpush2.bf16.msra.mxu0 %v4221
    %6744 = vmatprep.subr.bf16.mxu0 %v4193
    %6745 = vmatpush2.bf16.msra.mxu0 %v4192
    %6746 = vmatprep.subr.bf16.mxu0 %v4164
    %6747 = vmatpush2.bf16.msra.mxu0 %v4163
    %6748 = vmatprep.subr.bf16.mxu0 %v4135
    %6749 = vmatpush2.bf16.msra.mxu0 %v4134
    %6750 = vmatprep.mubr.bf16.mxu0 %v1055
    %6751 = vmatmul.mubr.bf16.gmra.mxu0 %v1054
    %v6752 = vpop.f32.mrf.mxu0
    %v6753 = vadd.f32 0.0, %v6752
    %v6754 = vpop.f32.mrf.mxu0
    %v6755 = vadd.f32 0.0, %v6754
    %v6756 = vpop.f32.mrf.mxu0
    %v6757 = vpop.f32.mrf.mxu0
    %6758 = vdwg.mxu0
    %6759 = vmatprep.subr.bf16.mxu0 %v4570
    %6760 = vmatpush1.bf16.msra.mxu0 %v4569
    %6761 = vmatprep.subr.bf16.mxu0 %v4541
    %6762 = vmatpush1.bf16.msra.mxu0 %v4540
    %6763 = vmatprep.subr.bf16.mxu0 %v4512
    %6764 = vmatpush1.bf16.msra.mxu0 %v4511
    %6765 = vmatprep.subr.bf16.mxu0 %v4483
    %6766 = vmatpush1.bf16.msra.mxu0 %v4482
    %6767 = vmatprep.subr.bf16.mxu0 %v4454
    %6768 = vmatpush1.bf16.msra.mxu0 %v4453
    %6769 = vmatprep.subr.bf16.mxu0 %v4425
    %6770 = vmatpush1.bf16.msra.mxu0 %v4424
    %6771 = vmatprep.subr.bf16.mxu0 %v4396
    %6772 = vmatpush1.bf16.msra.mxu0 %v4395
    %6773 = vmatprep.subr.bf16.mxu0 %v4367
    %6774 = vmatpush1.bf16.msra.mxu0 %v4366
    %6775 = vmatprep.subr.bf16.mxu0 %v4802
    %6776 = vmatpush2.bf16.msra.mxu0 %v4801
    %6777 = vmatprep.subr.bf16.mxu0 %v4773
    %6778 = vmatpush2.bf16.msra.mxu0 %v4772
    %6779 = vmatprep.subr.bf16.mxu0 %v4744
    %6780 = vmatpush2.bf16.msra.mxu0 %v4743
    %6781 = vmatprep.subr.bf16.mxu0 %v4715
    %6782 = vmatpush2.bf16.msra.mxu0 %v4714
    %6783 = vmatprep.subr.bf16.mxu0 %v4686
    %6784 = vmatpush2.bf16.msra.mxu0 %v4685
    %6785 = vmatprep.subr.bf16.mxu0 %v4657
    %6786 = vmatpush2.bf16.msra.mxu0 %v4656
    %6787 = vmatprep.subr.bf16.mxu0 %v4628
    %6788 = vmatpush2.bf16.msra.mxu0 %v4627
    %6789 = vmatprep.subr.bf16.mxu0 %v4599
    %6790 = vmatpush2.bf16.msra.mxu0 %v4598
    %6791 = vmatprep.mubr.bf16.mxu0 %v1057
    %6792 = vmatmul.mubr.bf16.gmra.mxu0 %v1056
    %v6793 = vpop.f32.mrf.mxu0
    %v6794 = vadd.f32 %v6753, %v6793
    %v6795 = vpop.f32.mrf.mxu0
    %v6796 = vadd.f32 %v6755, %v6795
    %v6797 = vpop.f32.mrf.mxu0
    %v6798 = vpop.f32.mrf.mxu0
    %6799 = vdwg.mxu0
    %6800 = vmatprep.subr.bf16.mxu0 %v4108
    %6801 = vmatpush1.bf16.msra.mxu0 %v4107
    %6802 = vmatprep.subr.bf16.mxu0 %v4079
    %6803 = vmatpush1.bf16.msra.mxu0 %v4078
    %6804 = vmatprep.subr.bf16.mxu0 %v4050
    %6805 = vmatpush1.bf16.msra.mxu0 %v4049
    %6806 = vmatprep.subr.bf16.mxu0 %v4021
    %6807 = vmatpush1.bf16.msra.mxu0 %v4020
    %6808 = vmatprep.subr.bf16.mxu0 %v3992
    %6809 = vmatpush1.bf16.msra.mxu0 %v3991
    %6810 = vmatprep.subr.bf16.mxu0 %v3963
    %6811 = vmatpush1.bf16.msra.mxu0 %v3962
    %6812 = vmatprep.subr.bf16.mxu0 %v3934
    %6813 = vmatpush1.bf16.msra.mxu0 %v3933
    %6814 = vmatprep.subr.bf16.mxu0 %v3905
    %6815 = vmatpush1.bf16.msra.mxu0 %v3904
    %6816 = vmatprep.subr.bf16.mxu0 %v4340
    %6817 = vmatpush2.bf16.msra.mxu0 %v4339
    %6818 = vmatprep.subr.bf16.mxu0 %v4311
    %6819 = vmatpush2.bf16.msra.mxu0 %v4310
    %6820 = vmatprep.subr.bf16.mxu0 %v4282
    %6821 = vmatpush2.bf16.msra.mxu0 %v4281
    %6822 = vmatprep.subr.bf16.mxu0 %v4253
    %6823 = vmatpush2.bf16.msra.mxu0 %v4252
    %6824 = vmatprep.subr.bf16.mxu0 %v4224
    %6825 = vmatpush2.bf16.msra.mxu0 %v4223
    %6826 = vmatprep.subr.bf16.mxu0 %v4195
    %6827 = vmatpush2.bf16.msra.mxu0 %v4194
    %6828 = vmatprep.subr.bf16.mxu0 %v4166
    %6829 = vmatpush2.bf16.msra.mxu0 %v4165
    %6830 = vmatprep.subr.bf16.mxu0 %v4137
    %6831 = vmatpush2.bf16.msra.mxu0 %v4136
    %6832 = vmatprep.mubr.bf16.mxu0 %v1055
    %6833 = vmatmul.mubr.bf16.gmra.mxu0 %v1054
    %v6834 = vpop.f32.mrf.mxu0
    %v6835 = vadd.f32 0.0, %v6834
    %v6836 = vpop.f32.mrf.mxu0
    %v6837 = vadd.f32 0.0, %v6836
    %v6838 = vpop.f32.mrf.mxu0
    %v6839 = vpop.f32.mrf.mxu0
    %6840 = vdwg.mxu0
    %6841 = vmatprep.subr.bf16.mxu0 %v4572
    %6842 = vmatpush1.bf16.msra.mxu0 %v4571
    %6843 = vmatprep.subr.bf16.mxu0 %v4543
    %6844 = vmatpush1.bf16.msra.mxu0 %v4542
    %6845 = vmatprep.subr.bf16.mxu0 %v4514
    %6846 = vmatpush1.bf16.msra.mxu0 %v4513
    %6847 = vmatprep.subr.bf16.mxu0 %v4485
    %6848 = vmatpush1.bf16.msra.mxu0 %v4484
    %6849 = vmatprep.subr.bf16.mxu0 %v4456
    %6850 = vmatpush1.bf16.msra.mxu0 %v4455
    %6851 = vmatprep.subr.bf16.mxu0 %v4427
    %6852 = vmatpush1.bf16.msra.mxu0 %v4426
    %6853 = vmatprep.subr.bf16.mxu0 %v4398
    %6854 = vmatpush1.bf16.msra.mxu0 %v4397
    %6855 = vmatprep.subr.bf16.mxu0 %v4369
    %6856 = vmatpush1.bf16.msra.mxu0 %v4368
    %6857 = vmatprep.subr.bf16.mxu0 %v4804
    %6858 = vmatpush2.bf16.msra.mxu0 %v4803
    %6859 = vmatprep.subr.bf16.mxu0 %v4775
    %6860 = vmatpush2.bf16.msra.mxu0 %v4774
    %6861 = vmatprep.subr.bf16.mxu0 %v4746
    %6862 = vmatpush2.bf16.msra.mxu0 %v4745
    %6863 = vmatprep.subr.bf16.mxu0 %v4717
    %6864 = vmatpush2.bf16.msra.mxu0 %v4716
    %6865 = vmatprep.subr.bf16.mxu0 %v4688
    %6866 = vmatpush2.bf16.msra.mxu0 %v4687
    %6867 = vmatprep.subr.bf16.mxu0 %v4659
    %6868 = vmatpush2.bf16.msra.mxu0 %v4658
    %6869 = vmatprep.subr.bf16.mxu0 %v4630
    %6870 = vmatpush2.bf16.msra.mxu0 %v4629
    %6871 = vmatprep.subr.bf16.mxu0 %v4601
    %6872 = vmatpush2.bf16.msra.mxu0 %v4600
    %6873 = vmatprep.mubr.bf16.mxu0 %v1057
    %6874 = vmatmul.mubr.bf16.gmra.mxu0 %v1056
    %v6875 = vpop.f32.mrf.mxu0
    %v6876 = vadd.f32 %v6835, %v6875
    %v6877 = vpop.f32.mrf.mxu0
    %v6878 = vadd.f32 %v6837, %v6877
    %v6879 = vpop.f32.mrf.mxu0
    %v6880 = vpop.f32.mrf.mxu0
    %6881 = vdwg.mxu0
    %6882 = vmatprep.subr.bf16.mxu0 0
    %6883 = vmatpush1.bf16.msra.mxu0 %v4109
    %6884 = vmatprep.subr.bf16.mxu0 0
    %6885 = vmatpush1.bf16.msra.mxu0 %v4080
    %6886 = vmatprep.subr.bf16.mxu0 0
    %6887 = vmatpush1.bf16.msra.mxu0 %v4051
    %6888 = vmatprep.subr.bf16.mxu0 0
    %6889 = vmatpush1.bf16.msra.mxu0 %v4022
    %6890 = vmatprep.subr.bf16.mxu0 0
    %6891 = vmatpush1.bf16.msra.mxu0 %v3993
    %6892 = vmatprep.subr.bf16.mxu0 0
    %6893 = vmatpush1.bf16.msra.mxu0 %v3964
    %6894 = vmatprep.subr.bf16.mxu0 0
    %6895 = vmatpush1.bf16.msra.mxu0 %v3935
    %6896 = vmatprep.subr.bf16.mxu0 0
    %6897 = vmatpush1.bf16.msra.mxu0 %v3906
    %6898 = vmatprep.subr.bf16.mxu0 0
    %6899 = vmatpush2.bf16.msra.mxu0 %v4341
    %6900 = vmatprep.subr.bf16.mxu0 0
    %6901 = vmatpush2.bf16.msra.mxu0 %v4312
    %6902 = vmatprep.subr.bf16.mxu0 0
    %6903 = vmatpush2.bf16.msra.mxu0 %v4283
    %6904 = vmatprep.subr.bf16.mxu0 0
    %6905 = vmatpush2.bf16.msra.mxu0 %v4254
    %6906 = vmatprep.subr.bf16.mxu0 0
    %6907 = vmatpush2.bf16.msra.mxu0 %v4225
    %6908 = vmatprep.subr.bf16.mxu0 0
    %6909 = vmatpush2.bf16.msra.mxu0 %v4196
    %6910 = vmatprep.subr.bf16.mxu0 0
    %6911 = vmatpush2.bf16.msra.mxu0 %v4167
    %6912 = vmatprep.subr.bf16.mxu0 0
    %6913 = vmatpush2.bf16.msra.mxu0 %v4138
    %6914 = vmatprep.mubr.bf16.mxu0 %v1055
    %6915 = vmatmul.mubr.bf16.gmra.mxu0 %v1054
    %v6916 = vpop.f32.mrf.mxu0
    %v6917 = vadd.f32 0.0, %v6916
    %v6918 = vpop.f32.mrf.mxu0
    %v6919 = vpop.f32.mrf.mxu0
    %v6920 = vpop.f32.mrf.mxu0
    %6921 = vdwg.mxu0
    %6922 = vmatprep.subr.bf16.mxu0 0
    %6923 = vmatpush1.bf16.msra.mxu0 %v4573
    %6924 = vmatprep.subr.bf16.mxu0 0
    %6925 = vmatpush1.bf16.msra.mxu0 %v4544
    %6926 = vmatprep.subr.bf16.mxu0 0
    %6927 = vmatpush1.bf16.msra.mxu0 %v4515
    %6928 = vmatprep.subr.bf16.mxu0 0
    %6929 = vmatpush1.bf16.msra.mxu0 %v4486
    %6930 = vmatprep.subr.bf16.mxu0 0
    %6931 = vmatpush1.bf16.msra.mxu0 %v4457
    %6932 = vmatprep.subr.bf16.mxu0 0
    %6933 = vmatpush1.bf16.msra.mxu0 %v4428
    %6934 = vmatprep.subr.bf16.mxu0 0
    %6935 = vmatpush1.bf16.msra.mxu0 %v4399
    %6936 = vmatprep.subr.bf16.mxu0 0
    %6937 = vmatpush1.bf16.msra.mxu0 %v4370
    %6938 = vmatprep.subr.bf16.mxu0 0
    %6939 = vmatpush2.bf16.msra.mxu0 %v4805
    %6940 = vmatprep.subr.bf16.mxu0 0
    %6941 = vmatpush2.bf16.msra.mxu0 %v4776
    %6942 = vmatprep.subr.bf16.mxu0 0
    %6943 = vmatpush2.bf16.msra.mxu0 %v4747
    %6944 = vmatprep.subr.bf16.mxu0 0
    %6945 = vmatpush2.bf16.msra.mxu0 %v4718
    %6946 = vmatprep.subr.bf16.mxu0 0
    %6947 = vmatpush2.bf16.msra.mxu0 %v4689
    %6948 = vmatprep.subr.bf16.mxu0 0
    %6949 = vmatpush2.bf16.msra.mxu0 %v4660
    %6950 = vmatprep.subr.bf16.mxu0 0
    %6951 = vmatpush2.bf16.msra.mxu0 %v4631
    %6952 = vmatprep.subr.bf16.mxu0 0
    %6953 = vmatpush2.bf16.msra.mxu0 %v4602
    %6954 = vmatprep.mubr.bf16.mxu0 %v1057
    %6955 = vmatmul.mubr.bf16.gmra.mxu0 %v1056
    %v6956 = vpop.f32.mrf.mxu0
    %v6957 = vadd.f32 %v6917, %v6956
    %v6958 = vpop.f32.mrf.mxu0
    %v6959 = vpop.f32.mrf.mxu0
    %v6960 = vpop.f32.mrf.mxu0
    %6961 = vdwg.mxu0
    %v6962 = vmul.f32 %v5810, %v5810
    %v6963 = vmul.f32 %v5812, %v5812
    %v6964 = vmul.f32 %v5892, %v5892
    %v6965 = vmul.f32 %v5894, %v5894
    %v6966 = vmul.f32 %v5974, %v5974
    %v6967 = vmul.f32 %v5976, %v5976
    %v6968 = vmul.f32 %v6056, %v6056
    %v6969 = vmul.f32 %v6058, %v6058
    %v6970 = vmul.f32 %v6138, %v6138
    %v6971 = vmul.f32 %v6140, %v6140
    %v6972 = vmul.f32 %v6220, %v6220
    %v6973 = vmul.f32 %v6222, %v6222
    %v6974 = vmul.f32 %v6302, %v6302
    %v6975 = vmul.f32 %v6304, %v6304
    %v6976 = vmul.f32 %v6384, %v6384
    %v6977 = vmul.f32 %v6386, %v6386
    %v6978 = vmul.f32 %v6466, %v6466
    %v6979 = vmul.f32 %v6468, %v6468
    %v6980 = vmul.f32 %v6548, %v6548
    %v6981 = vmul.f32 %v6550, %v6550
    %v6982 = vmul.f32 %v6630, %v6630
    %v6983 = vmul.f32 %v6632, %v6632
    %v6984 = vmul.f32 %v6712, %v6712
    %v6985 = vmul.f32 %v6714, %v6714
    %v6986 = vmul.f32 %v6794, %v6794
    %v6987 = vmul.f32 %v6796, %v6796
    %v6988 = vmul.f32 %v6876, %v6876
    %v6989 = vmul.f32 %v6878, %v6878
    %v6990 = vmul.f32 %v6957, %v6957
    %v6991 = vpack.c.bf16 %v6962, %v6962
    %v6992 = vpack.c.bf16 %v6963, %v6963
    %v6993 = vpack.c.bf16 %v6964, %v6964
    %v6994 = vpack.c.bf16 %v6965, %v6965
    %v6995 = vpack.c.bf16 %v6966, %v6966
    %v6996 = vpack.c.bf16 %v6967, %v6967
    %v6997 = vpack.c.bf16 %v6968, %v6968
    %v6998 = vpack.c.bf16 %v6969, %v6969
    %v6999 = vpack.c.bf16 %v6970, %v6970
    %v7000 = vpack.c.bf16 %v6971, %v6971
    %v7001 = vpack.c.bf16 %v6972, %v6972
    %v7002 = vpack.c.bf16 %v6973, %v6973
    %v7003 = vpack.c.bf16 %v6974, %v6974
    %v7004 = vpack.c.bf16 %v6975, %v6975
    %v7005 = vpack.c.bf16 %v6976, %v6976
    %v7006 = vpack.c.bf16 %v6977, %v6977
    %v7007 = vpack.c.bf16 %v6978, %v6978
    %v7008 = vpack.c.bf16 %v6979, %v6979
    %v7009 = vpack.c.bf16 %v6980, %v6980
    %v7010 = vpack.c.bf16 %v6981, %v6981
    %v7011 = vpack.c.bf16 %v6982, %v6982
    %v7012 = vpack.c.bf16 %v6983, %v6983
    %v7013 = vpack.c.bf16 %v6984, %v6984
    %v7014 = vpack.c.bf16 %v6985, %v6985
    %v7015 = vpack.c.bf16 %v6986, %v6986
    %v7016 = vpack.c.bf16 %v6987, %v6987
    %v7017 = vpack.c.bf16 %v6988, %v6988
    %v7018 = vpack.c.bf16 %v6989, %v6989
    %v7019 = vpack.c.bf16 %v6990, %v6990
    %v7020 = vld [vmem:[#allocation7] sm:$0xf]
    %v7021 = vld [vmem:[#allocation7 + $0x4] sm:$0xf]
    %v7022 = vld [vmem:[#allocation7 + $0x8] sm:$0xf]
    %v7023 = vld [vmem:[#allocation7 + $0xc] sm:$0xf]
    %v7024 = vld [vmem:[#allocation7 + $0x10] sm:$0xf]
    %v7025 = vld [vmem:[#allocation7 + $0x14] sm:$0xf]
    %v7026 = vld [vmem:[#allocation7 + $0x18] sm:$0xf]
    %v7027 = vld [vmem:[#allocation7 + $0x1c] sm:$0xf]
    %v7028 = vld [vmem:[#allocation7 + $0x20] sm:$0xf]
    %v7029 = vld [vmem:[#allocation7 + $0x24] sm:$0xf]
    %v7030 = vld [vmem:[#allocation7 + $0x28] sm:$0xf]
    %v7031 = vld [vmem:[#allocation7 + $0x2c] sm:$0xf]
    %v7032 = vld [vmem:[#allocation7 + $0x30] sm:$0xf]
    %v7033 = vld [vmem:[#allocation7 + $0x34] sm:$0xf]
    %v7034 = vld [vmem:[#allocation7 + $0x38] sm:$0xf]
    %v7035 = vld [vmem:[#allocation7 + $0x3c] sm:$0xf]
    %v7036 = vld [vmem:[#allocation7 + $0x40] sm:$0xf]
    %v7037 = vld [vmem:[#allocation7 + $0x44] sm:$0xf]
    %v7038 = vld [vmem:[#allocation7 + $0x48] sm:$0xf]
    %v7039 = vld [vmem:[#allocation7 + $0x4c] sm:$0xf]
    %v7040 = vld [vmem:[#allocation7 + $0x50] sm:$0xf]
    %v7041 = vld [vmem:[#allocation7 + $0x54] sm:$0xf]
    %v7042 = vld [vmem:[#allocation7 + $0x58] sm:$0xf]
    %v7043 = vld [vmem:[#allocation7 + $0x5c] sm:$0xf]
    %v7044 = vld [vmem:[#allocation7 + $0x60] sm:$0xf]
    %v7045 = vld [vmem:[#allocation7 + $0x64] sm:$0xf]
    %v7046 = vld [vmem:[#allocation7 + $0x68] sm:$0xf]
    %v7047 = vld [vmem:[#allocation7 + $0x6c] sm:$0xf]
    %v7048 = vld [vmem:[#allocation7 + $0x70] sm:$0xf]
    %v7049 = vld [vmem:[#allocation7 + $0x74] sm:$0xf]
    %v7050 = vld [vmem:[#allocation7 + $0x78] sm:$0xf]
    %v7051 = vld [vmem:[#allocation7 + $0x7c] sm:$0xf]
    %v7052 = vld [vmem:[#allocation7 + $0x80] sm:$0xf]
    %v7053 = vld [vmem:[#allocation7 + $0x84] sm:$0xf]
    %v7054 = vld [vmem:[#allocation7 + $0x88] sm:$0xf]
    %v7055 = vld [vmem:[#allocation7 + $0x8c] sm:$0xf]
    %v7056 = vld [vmem:[#allocation7 + $0x90] sm:$0xf]
    %v7057 = vld [vmem:[#allocation7 + $0x94] sm:$0xf]
    %v7058 = vld [vmem:[#allocation7 + $0x98] sm:$0xf]
    %v7059 = vld [vmem:[#allocation7 + $0x9c] sm:$0xf]
    %v7060 = vld [vmem:[#allocation7 + $0xa0] sm:$0xf]
    %v7061 = vld [vmem:[#allocation7 + $0xa4] sm:$0xf]
    %v7062 = vld [vmem:[#allocation7 + $0xa8] sm:$0xf]
    %v7063 = vld [vmem:[#allocation7 + $0xac] sm:$0xf]
    %v7064 = vld [vmem:[#allocation7 + $0xb0] sm:$0xf]
    %v7065 = vld [vmem:[#allocation7 + $0xb4] sm:$0xf]
    %v7066 = vld [vmem:[#allocation7 + $0xb8] sm:$0xf]
    %v7067 = vld [vmem:[#allocation7 + $0xbc] sm:$0xf]
    %v7068 = vld [vmem:[#allocation7 + $0xc0] sm:$0xf]
    %v7069 = vld [vmem:[#allocation7 + $0xc4] sm:$0xf]
    %v7070 = vld [vmem:[#allocation7 + $0xc8] sm:$0xf]
    %v7071 = vld [vmem:[#allocation7 + $0xcc] sm:$0xf]
    %v7072 = vld [vmem:[#allocation7 + $0xd0] sm:$0xf]
    %v7073 = vld [vmem:[#allocation7 + $0xd4] sm:$0xf]
    %v7074 = vld [vmem:[#allocation7 + $0xd8] sm:$0xf]
    %v7075 = vld [vmem:[#allocation7 + $0xdc] sm:$0xf]
    %v7076 = vld [vmem:[#allocation7 + $0xe0] sm:$0xf]
    %v7077 = vld [vmem:[#allocation7 + $0xe4] sm:$0xf]
    %v7078 = vld [vmem:[#allocation7 + $0xe8] sm:$0xf]
    %v7079 = vld [vmem:[#allocation7 + $0xec] sm:$0xf]
    %v7080 = vld [vmem:[#allocation7 + $0xf0] sm:$0xf]
    %v7081 = vld [vmem:[#allocation7 + $0xf4] sm:$0xf]
    %v7082 = vld [vmem:[#allocation7 + $0xf8] sm:$0xf]
    %v7083 = vld [vmem:[#allocation7 + $0xfc] sm:$0xf]
    %v7084 = vld [vmem:[#allocation7 + $0x100] sm:$0xf]
    %v7085 = vld [vmem:[#allocation7 + $0x104] sm:$0xf]
    %v7086 = vld [vmem:[#allocation7 + $0x108] sm:$0xf]
    %v7087 = vld [vmem:[#allocation7 + $0x10c] sm:$0xf]
    %v7088 = vld [vmem:[#allocation7 + $0x110] sm:$0xf]
    %v7089 = vld [vmem:[#allocation7 + $0x114] sm:$0xf]
    %v7090 = vld [vmem:[#allocation7 + $0x118] sm:$0xf]
    %v7091 = vld [vmem:[#allocation7 + $0x11c] sm:$0xf]
    %v7092 = vld [vmem:[#allocation7 + $0x120] sm:$0xf]
    %v7093 = vld [vmem:[#allocation7 + $0x124] sm:$0xf]
    %v7094 = vld [vmem:[#allocation7 + $0x128] sm:$0xf]
    %v7095 = vld [vmem:[#allocation7 + $0x12c] sm:$0xf]
    %v7096 = vld [vmem:[#allocation7 + $0x130] sm:$0xf]
    %v7097 = vld [vmem:[#allocation7 + $0x134] sm:$0xf]
    %v7098 = vld [vmem:[#allocation7 + $0x138] sm:$0xf]
    %v7099 = vld [vmem:[#allocation7 + $0x13c] sm:$0xf]
    %v7100 = vld [vmem:[#allocation7 + $0x140] sm:$0xf]
    %v7101 = vld [vmem:[#allocation7 + $0x144] sm:$0xf]
    %v7102 = vld [vmem:[#allocation7 + $0x148] sm:$0xf]
    %v7103 = vld [vmem:[#allocation7 + $0x14c] sm:$0xf]
    %v7104 = vld [vmem:[#allocation7 + $0x150] sm:$0xf]
    %v7105 = vld [vmem:[#allocation7 + $0x154] sm:$0xf]
    %v7106 = vld [vmem:[#allocation7 + $0x158] sm:$0xf]
    %v7107 = vld [vmem:[#allocation7 + $0x15c] sm:$0xf]
    %v7108 = vld [vmem:[#allocation7 + $0x160] sm:$0xf]
    %v7109 = vld [vmem:[#allocation7 + $0x164] sm:$0xf]
    %v7110 = vld [vmem:[#allocation7 + $0x168] sm:$0xf]
    %v7111 = vld [vmem:[#allocation7 + $0x16c] sm:$0xf]
    %v7112 = vld [vmem:[#allocation7 + $0x170] sm:$0xf]
    %v7113 = vld [vmem:[#allocation7 + $0x174] sm:$0xf]
    %v7114 = vld [vmem:[#allocation7 + $0x178] sm:$0xf]
    %v7115 = vld [vmem:[#allocation7 + $0x17c] sm:$0xf]
    %v7116 = vld [vmem:[#allocation7 + $0x180] sm:$0xf]
    %v7117 = vld [vmem:[#allocation7 + $0x184] sm:$0xf]
    %v7118 = vld [vmem:[#allocation7 + $0x188] sm:$0xf]
    %v7119 = vld [vmem:[#allocation7 + $0x18c] sm:$0xf]
    %v7120 = vld [vmem:[#allocation7 + $0x190] sm:$0xf]
    %v7121 = vld [vmem:[#allocation7 + $0x194] sm:$0xf]
    %v7122 = vld [vmem:[#allocation7 + $0x198] sm:$0xf]
    %v7123 = vld [vmem:[#allocation7 + $0x19c] sm:$0xf]
    %v7124 = vld [vmem:[#allocation7 + $0x1a0] sm:$0xf]
    %v7125 = vld [vmem:[#allocation7 + $0x1a4] sm:$0xf]
    %v7126 = vld [vmem:[#allocation7 + $0x1a8] sm:$0xf]
    %v7127 = vld [vmem:[#allocation7 + $0x1ac] sm:$0xf]
    %v7128 = vld [vmem:[#allocation7 + $0x1b0] sm:$0xf]
    %v7129 = vld [vmem:[#allocation7 + $0x1b4] sm:$0xf]
    %v7130 = vld [vmem:[#allocation7 + $0x1b8] sm:$0xf]
    %v7131 = vld [vmem:[#allocation7 + $0x1bc] sm:$0xf]
    %v7132 = vld [vmem:[#allocation7 + $0x1c0] sm:$0xf]
    %v7133 = vld [vmem:[#allocation7 + $0x1c4] sm:$0xf]
    %v7134 = vld [vmem:[#allocation7 + $0x1c8] sm:$0xf]
    %v7135 = vld [vmem:[#allocation7 + $0x1cc] sm:$0xf]
    %v7136 = vld [vmem:[#allocation7 + $0x1d0] sm:$0xf]
    %v7137 = vld [vmem:[#allocation7 + $0x1d4] sm:$0xf]
    %v7138 = vld [vmem:[#allocation7 + $0x1d8] sm:$0xf]
    %v7139 = vld [vmem:[#allocation7 + $0x1dc] sm:$0xf]
    %v7140 = vld [vmem:[#allocation7 + $0x1e0] sm:$0xf]
    %v7141 = vld [vmem:[#allocation7 + $0x1e4] sm:$0xf]
    %v7142 = vld [vmem:[#allocation7 + $0x1e8] sm:$0xf]
    %v7143 = vld [vmem:[#allocation7 + $0x1ec] sm:$0xf]
    %v7144 = vld [vmem:[#allocation7 + $0x1f0] sm:$0xf]
    %v7145 = vld [vmem:[#allocation7 + $0x1f4] sm:$0xf]
    %v7146 = vld [vmem:[#allocation7 + $0x1f8] sm:$0xf]
    %v7147 = vld [vmem:[#allocation7 + $0x1fc] sm:$0xf]
    %v7148 = vld [vmem:[#allocation7 + $0x200] sm:$0xf]
    %v7149 = vld [vmem:[#allocation7 + $0x204] sm:$0xf]
    %v7150 = vld [vmem:[#allocation7 + $0x208] sm:$0xf]
    %v7151 = vld [vmem:[#allocation7 + $0x20c] sm:$0xf]
    %v7152 = vld [vmem:[#allocation7 + $0x210] sm:$0xf]
    %v7153 = vld [vmem:[#allocation7 + $0x214] sm:$0xf]
    %v7154 = vld [vmem:[#allocation7 + $0x218] sm:$0xf]
    %v7155 = vld [vmem:[#allocation7 + $0x21c] sm:$0xf]
    %v7156 = vld [vmem:[#allocation7 + $0x220] sm:$0xf]
    %v7157 = vld [vmem:[#allocation7 + $0x224] sm:$0xf]
    %v7158 = vld [vmem:[#allocation7 + $0x228] sm:$0xf]
    %v7159 = vld [vmem:[#allocation7 + $0x22c] sm:$0xf]
    %v7160 = vld [vmem:[#allocation7 + $0x230] sm:$0xf]
    %v7161 = vld [vmem:[#allocation7 + $0x234] sm:$0xf]
    %v7162 = vld [vmem:[#allocation7 + $0x238] sm:$0xf]
    %v7163 = vld [vmem:[#allocation7 + $0x23c] sm:$0xf]
    %v7164 = vld [vmem:[#allocation7 + $0x240] sm:$0xf]
    %v7165 = vld [vmem:[#allocation7 + $0x244] sm:$0xf]
    %v7166 = vld [vmem:[#allocation7 + $0x248] sm:$0xf]
    %v7167 = vld [vmem:[#allocation7 + $0x24c] sm:$0xf]
    %v7168 = vld [vmem:[#allocation7 + $0x250] sm:$0xf]
    %v7169 = vld [vmem:[#allocation7 + $0x254] sm:$0xf]
    %v7170 = vld [vmem:[#allocation7 + $0x258] sm:$0xf]
    %v7171 = vld [vmem:[#allocation7 + $0x25c] sm:$0xf]
    %v7172 = vld [vmem:[#allocation7 + $0x260] sm:$0xf]
    %v7173 = vld [vmem:[#allocation7 + $0x264] sm:$0xf]
    %v7174 = vld [vmem:[#allocation7 + $0x268] sm:$0xf]
    %v7175 = vld [vmem:[#allocation7 + $0x26c] sm:$0xf]
    %v7176 = vld [vmem:[#allocation7 + $0x270] sm:$0xf]
    %v7177 = vld [vmem:[#allocation7 + $0x274] sm:$0xf]
    %v7178 = vld [vmem:[#allocation7 + $0x278] sm:$0xf]
    %v7179 = vld [vmem:[#allocation7 + $0x27c] sm:$0xf]
    %v7180 = vld [vmem:[#allocation7 + $0x280] sm:$0xf]
    %v7181 = vld [vmem:[#allocation7 + $0x284] sm:$0xf]
    %v7182 = vld [vmem:[#allocation7 + $0x288] sm:$0xf]
    %v7183 = vld [vmem:[#allocation7 + $0x28c] sm:$0xf]
    %v7184 = vld [vmem:[#allocation7 + $0x290] sm:$0xf]
    %v7185 = vld [vmem:[#allocation7 + $0x294] sm:$0xf]
    %v7186 = vld [vmem:[#allocation7 + $0x298] sm:$0xf]
    %v7187 = vld [vmem:[#allocation7 + $0x29c] sm:$0xf]
    %v7188 = vld [vmem:[#allocation7 + $0x2a0] sm:$0xf]
    %v7189 = vld [vmem:[#allocation7 + $0x2a4] sm:$0xf]
    %v7190 = vld [vmem:[#allocation7 + $0x2a8] sm:$0xf]
    %v7191 = vld [vmem:[#allocation7 + $0x2ac] sm:$0xf]
    %v7192 = vld [vmem:[#allocation7 + $0x2b0] sm:$0xf]
    %v7193 = vld [vmem:[#allocation7 + $0x2b4] sm:$0xf]
    %v7194 = vld [vmem:[#allocation7 + $0x2b8] sm:$0xf]
    %v7195 = vld [vmem:[#allocation7 + $0x2bc] sm:$0xf]
    %v7196 = vld [vmem:[#allocation7 + $0x2c0] sm:$0xf]
    %v7197 = vld [vmem:[#allocation7 + $0x2c4] sm:$0xf]
    %v7198 = vld [vmem:[#allocation7 + $0x2c8] sm:$0xf]
    %v7199 = vld [vmem:[#allocation7 + $0x2cc] sm:$0xf]
    %v7200 = vld [vmem:[#allocation7 + $0x2d0] sm:$0xf]
    %v7201 = vld [vmem:[#allocation7 + $0x2d4] sm:$0xf]
    %v7202 = vld [vmem:[#allocation7 + $0x2d8] sm:$0xf]
    %v7203 = vld [vmem:[#allocation7 + $0x2dc] sm:$0xf]
    %v7204 = vld [vmem:[#allocation7 + $0x2e0] sm:$0xf]
    %v7205 = vld [vmem:[#allocation7 + $0x2e4] sm:$0xf]
    %v7206 = vld [vmem:[#allocation7 + $0x2e8] sm:$0xf]
    %v7207 = vld [vmem:[#allocation7 + $0x2ec] sm:$0xf]
    %v7208 = vld [vmem:[#allocation7 + $0x2f0] sm:$0xf]
    %v7209 = vld [vmem:[#allocation7 + $0x2f4] sm:$0xf]
    %v7210 = vld [vmem:[#allocation7 + $0x2f8] sm:$0xf]
    %v7211 = vld [vmem:[#allocation7 + $0x2fc] sm:$0xf]
    %v7212 = vld [vmem:[#allocation7 + $0x300] sm:$0xf]
    %v7213 = vld [vmem:[#allocation7 + $0x304] sm:$0xf]
    %v7214 = vld [vmem:[#allocation7 + $0x308] sm:$0xf]
    %v7215 = vld [vmem:[#allocation7 + $0x30c] sm:$0xf]
    %v7216 = vld [vmem:[#allocation7 + $0x310] sm:$0xf]
    %v7217 = vld [vmem:[#allocation7 + $0x314] sm:$0xf]
    %v7218 = vld [vmem:[#allocation7 + $0x318] sm:$0xf]
    %v7219 = vld [vmem:[#allocation7 + $0x31c] sm:$0xf]
    %v7220 = vld [vmem:[#allocation7 + $0x320] sm:$0xf]
    %v7221 = vld [vmem:[#allocation7 + $0x324] sm:$0xf]
    %v7222 = vld [vmem:[#allocation7 + $0x328] sm:$0xf]
    %v7223 = vld [vmem:[#allocation7 + $0x32c] sm:$0xf]
    %v7224 = vld [vmem:[#allocation7 + $0x330] sm:$0xf]
    %v7225 = vld [vmem:[#allocation7 + $0x334] sm:$0xf]
    %v7226 = vld [vmem:[#allocation7 + $0x338] sm:$0xf]
    %v7227 = vld [vmem:[#allocation7 + $0x33c] sm:$0xf]
    %v7228 = vld [vmem:[#allocation7 + $0x340] sm:$0xf]
    %v7229 = vld [vmem:[#allocation7 + $0x344] sm:$0xf]
    %v7230 = vld [vmem:[#allocation7 + $0x348] sm:$0xf]
    %v7231 = vld [vmem:[#allocation7 + $0x34c] sm:$0xf]
    %v7232 = vld [vmem:[#allocation7 + $0x350] sm:$0xf]
    %v7233 = vld [vmem:[#allocation7 + $0x354] sm:$0xf]
    %v7234 = vld [vmem:[#allocation7 + $0x358] sm:$0xf]
    %v7235 = vld [vmem:[#allocation7 + $0x35c] sm:$0xf]
    %v7236 = vld [vmem:[#allocation7 + $0x360] sm:$0xf]
    %v7237 = vld [vmem:[#allocation7 + $0x364] sm:$0xf]
    %v7238 = vld [vmem:[#allocation7 + $0x368] sm:$0xf]
    %v7239 = vld [vmem:[#allocation7 + $0x36c] sm:$0xf]
    %v7240 = vld [vmem:[#allocation7 + $0x370] sm:$0xf]
    %v7241 = vld [vmem:[#allocation7 + $0x374] sm:$0xf]
    %v7242 = vld [vmem:[#allocation7 + $0x378] sm:$0xf]
    %v7243 = vld [vmem:[#allocation7 + $0x37c] sm:$0xf]
    %v7244 = vld [vmem:[#allocation7 + $0x380] sm:$0xf]
    %v7245 = vld [vmem:[#allocation7 + $0x384] sm:$0xf]
    %v7246 = vld [vmem:[#allocation7 + $0x388] sm:$0xf]
    %v7247 = vld [vmem:[#allocation7 + $0x38c] sm:$0xf]
    %v7248 = vld [vmem:[#allocation7 + $0x390] sm:$0xf]
    %v7249 = vld [vmem:[#allocation7 + $0x394] sm:$0xf]
    %v7250 = vld [vmem:[#allocation7 + $0x398] sm:$0xf]
    %v7251 = vld [vmem:[#allocation7 + $0x39c] sm:$0xf]
    %v7252 = vld [vmem:[#allocation7 + $0x3a0] sm:$0xf]
    %v7253 = vld [vmem:[#allocation7 + $0x3a4] sm:$0xf]
    %v7254 = vld [vmem:[#allocation7 + $0x3a8] sm:$0xf]
    %v7255 = vld [vmem:[#allocation7 + $0x3ac] sm:$0xf]
    %v7256 = vld [vmem:[#allocation7 + $0x3b0] sm:$0xf]
    %v7257 = vld [vmem:[#allocation7 + $0x3b4] sm:$0xf]
    %v7258 = vld [vmem:[#allocation7 + $0x3b8] sm:$0xf]
    %v7259 = vld [vmem:[#allocation7 + $0x3bc] sm:$0xf]
    %v7260 = vld [vmem:[#allocation7 + $0x3c0] sm:$0xf]
    %v7261 = vld [vmem:[#allocation7 + $0x3c4] sm:$0xf]
    %v7262 = vld [vmem:[#allocation7 + $0x3c8] sm:$0xf]
    %v7263 = vld [vmem:[#allocation7 + $0x3cc] sm:$0xf]
    %v7264 = vld [vmem:[#allocation7 + $0x3d0] sm:$0xf]
    %v7265 = vld [vmem:[#allocation7 + $0x3d4] sm:$0xf]
    %v7266 = vld [vmem:[#allocation7 + $0x3d8] sm:$0xf]
    %v7267 = vld [vmem:[#allocation7 + $0x3dc] sm:$0xf]
    %v7268 = vld [vmem:[#allocation7 + $0x3e0] sm:$0xf]
    %v7269 = vld [vmem:[#allocation7 + $0x3e4] sm:$0xf]
    %v7270 = vld [vmem:[#allocation7 + $0x3e8] sm:$0xf]
    %v7271 = vld [vmem:[#allocation7 + $0x3ec] sm:$0xf]
    %v7272 = vld [vmem:[#allocation7 + $0x3f0] sm:$0xf]
    %v7273 = vld [vmem:[#allocation7 + $0x3f4] sm:$0xf]
    %v7274 = vld [vmem:[#allocation7 + $0x3f8] sm:$0xf]
    %v7275 = vld [vmem:[#allocation7 + $0x3fc] sm:$0xf]
    %v7276 = vld [vmem:[#allocation7 + $0x400] sm:$0xf]
    %v7277 = vld [vmem:[#allocation7 + $0x404] sm:$0xf]
    %v7278 = vld [vmem:[#allocation7 + $0x408] sm:$0xf]
    %v7279 = vld [vmem:[#allocation7 + $0x40c] sm:$0xf]
    %v7280 = vld [vmem:[#allocation7 + $0x410] sm:$0xf]
    %v7281 = vld [vmem:[#allocation7 + $0x414] sm:$0xf]
    %v7282 = vld [vmem:[#allocation7 + $0x418] sm:$0xf]
    %v7283 = vld [vmem:[#allocation7 + $0x41c] sm:$0xf]
    %v7284 = vld [vmem:[#allocation7 + $0x420] sm:$0xf]
    %v7285 = vld [vmem:[#allocation7 + $0x424] sm:$0xf]
    %v7286 = vld [vmem:[#allocation7 + $0x428] sm:$0xf]
    %v7287 = vld [vmem:[#allocation7 + $0x42c] sm:$0xf]
    %v7288 = vld [vmem:[#allocation7 + $0x430] sm:$0xf]
    %v7289 = vld [vmem:[#allocation7 + $0x434] sm:$0xf]
    %v7290 = vld [vmem:[#allocation7 + $0x438] sm:$0xf]
    %v7291 = vld [vmem:[#allocation7 + $0x43c] sm:$0xf]
    %v7292 = vld [vmem:[#allocation7 + $0x440] sm:$0xf]
    %v7293 = vld [vmem:[#allocation7 + $0x444] sm:$0xf]
    %v7294 = vld [vmem:[#allocation7 + $0x448] sm:$0xf]
    %v7295 = vld [vmem:[#allocation7 + $0x44c] sm:$0xf]
    %v7296 = vld [vmem:[#allocation7 + $0x450] sm:$0xf]
    %v7297 = vld [vmem:[#allocation7 + $0x454] sm:$0xf]
    %v7298 = vld [vmem:[#allocation7 + $0x458] sm:$0xf]
    %v7299 = vld [vmem:[#allocation7 + $0x45c] sm:$0xf]
    %v7300 = vld [vmem:[#allocation7 + $0x460] sm:$0xf]
    %v7301 = vld [vmem:[#allocation7 + $0x464] sm:$0xf]
    %v7302 = vld [vmem:[#allocation7 + $0x468] sm:$0xf]
    %v7303 = vld [vmem:[#allocation7 + $0x46c] sm:$0xf]
    %v7304 = vld [vmem:[#allocation7 + $0x470] sm:$0xf]
    %v7305 = vld [vmem:[#allocation7 + $0x474] sm:$0xf]
    %v7306 = vld [vmem:[#allocation7 + $0x478] sm:$0xf]
    %v7307 = vld [vmem:[#allocation7 + $0x47c] sm:$0xf]
    %v7308 = vld [vmem:[#allocation7 + $0x480] sm:$0xf]
    %v7309 = vld [vmem:[#allocation7 + $0x484] sm:$0xf]
    %v7310 = vld [vmem:[#allocation7 + $0x488] sm:$0xf]
    %v7311 = vld [vmem:[#allocation7 + $0x48c] sm:$0xf]
    %v7312 = vld [vmem:[#allocation7 + $0x490] sm:$0xf]
    %v7313 = vld [vmem:[#allocation7 + $0x494] sm:$0xf]
    %v7314 = vld [vmem:[#allocation7 + $0x498] sm:$0xf]
    %v7315 = vld [vmem:[#allocation7 + $0x49c] sm:$0xf]
    %v7316 = vld [vmem:[#allocation7 + $0x4a0] sm:$0xf]
    %v7317 = vld [vmem:[#allocation7 + $0x4a4] sm:$0xf]
    %v7318 = vld [vmem:[#allocation7 + $0x4a8] sm:$0xf]
    %v7319 = vld [vmem:[#allocation7 + $0x4ac] sm:$0xf]
    %v7320 = vld [vmem:[#allocation7 + $0x4b0] sm:$0xf]
    %v7321 = vld [vmem:[#allocation7 + $0x4b4] sm:$0xf]
    %v7322 = vld [vmem:[#allocation7 + $0x4b8] sm:$0xf]
    %v7323 = vld [vmem:[#allocation7 + $0x4bc] sm:$0xf]
    %v7324 = vld [vmem:[#allocation7 + $0x4c0] sm:$0xf]
    %v7325 = vld [vmem:[#allocation7 + $0x4c4] sm:$0xf]
    %v7326 = vld [vmem:[#allocation7 + $0x4c8] sm:$0xf]
    %v7327 = vld [vmem:[#allocation7 + $0x4cc] sm:$0xf]
    %v7328 = vld [vmem:[#allocation7 + $0x4d0] sm:$0xf]
    %v7329 = vld [vmem:[#allocation7 + $0x4d4] sm:$0xf]
    %v7330 = vld [vmem:[#allocation7 + $0x4d8] sm:$0xf]
    %v7331 = vld [vmem:[#allocation7 + $0x4dc] sm:$0xf]
    %v7332 = vld [vmem:[#allocation7 + $0x4e0] sm:$0xf]
    %v7333 = vld [vmem:[#allocation7 + $0x4e4] sm:$0xf]
    %v7334 = vld [vmem:[#allocation7 + $0x4e8] sm:$0xf]
    %v7335 = vld [vmem:[#allocation7 + $0x4ec] sm:$0xf]
    %v7336 = vld [vmem:[#allocation7 + $0x4f0] sm:$0xf]
    %v7337 = vld [vmem:[#allocation7 + $0x4f4] sm:$0xf]
    %v7338 = vld [vmem:[#allocation7 + $0x4f8] sm:$0xf]
    %v7339 = vld [vmem:[#allocation7 + $0x4fc] sm:$0xf]
    %v7340 = vld [vmem:[#allocation7 + $0x500] sm:$0xf]
    %v7341 = vld [vmem:[#allocation7 + $0x504] sm:$0xf]
    %v7342 = vld [vmem:[#allocation7 + $0x508] sm:$0xf]
    %v7343 = vld [vmem:[#allocation7 + $0x50c] sm:$0xf]
    %v7344 = vld [vmem:[#allocation7 + $0x510] sm:$0xf]
    %v7345 = vld [vmem:[#allocation7 + $0x514] sm:$0xf]
    %v7346 = vld [vmem:[#allocation7 + $0x518] sm:$0xf]
    %v7347 = vld [vmem:[#allocation7 + $0x51c] sm:$0xf]
    %v7348 = vld [vmem:[#allocation7 + $0x520] sm:$0xf]
    %v7349 = vld [vmem:[#allocation7 + $0x524] sm:$0xf]
    %v7350 = vld [vmem:[#allocation7 + $0x528] sm:$0xf]
    %v7351 = vld [vmem:[#allocation7 + $0x52c] sm:$0xf]
    %v7352 = vld [vmem:[#allocation7 + $0x530] sm:$0xf]
    %v7353 = vld [vmem:[#allocation7 + $0x534] sm:$0xf]
    %v7354 = vld [vmem:[#allocation7 + $0x538] sm:$0xf]
    %v7355 = vld [vmem:[#allocation7 + $0x53c] sm:$0xf]
    %v7356 = vld [vmem:[#allocation7 + $0x540] sm:$0xf]
    %v7357 = vld [vmem:[#allocation7 + $0x544] sm:$0xf]
    %v7358 = vld [vmem:[#allocation7 + $0x548] sm:$0xf]
    %v7359 = vld [vmem:[#allocation7 + $0x54c] sm:$0xf]
    %v7360 = vld [vmem:[#allocation7 + $0x550] sm:$0xf]
    %v7361 = vld [vmem:[#allocation7 + $0x554] sm:$0xf]
    %v7362 = vld [vmem:[#allocation7 + $0x558] sm:$0xf]
    %v7363 = vld [vmem:[#allocation7 + $0x55c] sm:$0xf]
    %v7364 = vld [vmem:[#allocation7 + $0x560] sm:$0xf]
    %v7365 = vld [vmem:[#allocation7 + $0x564] sm:$0xf]
    %v7366 = vld [vmem:[#allocation7 + $0x568] sm:$0xf]
    %v7367 = vld [vmem:[#allocation7 + $0x56c] sm:$0xf]
    %v7368 = vld [vmem:[#allocation7 + $0x570] sm:$0xf]
    %v7369 = vld [vmem:[#allocation7 + $0x574] sm:$0xf]
    %v7370 = vld [vmem:[#allocation7 + $0x578] sm:$0xf]
    %v7371 = vld [vmem:[#allocation7 + $0x57c] sm:$0xf]
    %v7372 = vld [vmem:[#allocation7 + $0x580] sm:$0xf]
    %v7373 = vld [vmem:[#allocation7 + $0x584] sm:$0xf]
    %v7374 = vld [vmem:[#allocation7 + $0x588] sm:$0xf]
    %v7375 = vld [vmem:[#allocation7 + $0x58c] sm:$0xf]
    %v7376 = vld [vmem:[#allocation7 + $0x590] sm:$0xf]
    %v7377 = vld [vmem:[#allocation7 + $0x594] sm:$0xf]
    %v7378 = vld [vmem:[#allocation7 + $0x598] sm:$0xf]
    %v7379 = vld [vmem:[#allocation7 + $0x59c] sm:$0xf]
    %v7380 = vld [vmem:[#allocation7 + $0x5a0] sm:$0xf]
    %v7381 = vld [vmem:[#allocation7 + $0x5a4] sm:$0xf]
    %v7382 = vld [vmem:[#allocation7 + $0x5a8] sm:$0xf]
    %v7383 = vld [vmem:[#allocation7 + $0x5ac] sm:$0xf]
    %v7384 = vld [vmem:[#allocation7 + $0x5b0] sm:$0xf]
    %v7385 = vld [vmem:[#allocation7 + $0x5b4] sm:$0xf]
    %v7386 = vld [vmem:[#allocation7 + $0x5b8] sm:$0xf]
    %v7387 = vld [vmem:[#allocation7 + $0x5bc] sm:$0xf]
    %v7388 = vld [vmem:[#allocation7 + $0x5c0] sm:$0xf]
    %v7389 = vld [vmem:[#allocation7 + $0x5c4] sm:$0xf]
    %v7390 = vld [vmem:[#allocation7 + $0x5c8] sm:$0xf]
    %v7391 = vld [vmem:[#allocation7 + $0x5cc] sm:$0xf]
    %v7392 = vld [vmem:[#allocation7 + $0x5d0] sm:$0xf]
    %v7393 = vld [vmem:[#allocation7 + $0x5d4] sm:$0xf]
    %v7394 = vld [vmem:[#allocation7 + $0x5d8] sm:$0xf]
    %v7395 = vld [vmem:[#allocation7 + $0x5dc] sm:$0xf]
    %v7396 = vld [vmem:[#allocation7 + $0x5e0] sm:$0xf]
    %v7397 = vld [vmem:[#allocation7 + $0x5e4] sm:$0xf]
    %v7398 = vld [vmem:[#allocation7 + $0x5e8] sm:$0xf]
    %v7399 = vld [vmem:[#allocation7 + $0x5ec] sm:$0xf]
    %v7400 = vld [vmem:[#allocation7 + $0x5f0] sm:$0xf]
    %v7401 = vld [vmem:[#allocation7 + $0x5f4] sm:$0xf]
    %v7402 = vld [vmem:[#allocation7 + $0x5f8] sm:$0xf]
    %v7403 = vld [vmem:[#allocation7 + $0x5fc] sm:$0xf]
    %v7404 = vld [vmem:[#allocation7 + $0x600] sm:$0xf]
    %v7405 = vld [vmem:[#allocation7 + $0x604] sm:$0xf]
    %v7406 = vld [vmem:[#allocation7 + $0x608] sm:$0xf]
    %v7407 = vld [vmem:[#allocation7 + $0x60c] sm:$0xf]
    %v7408 = vld [vmem:[#allocation7 + $0x610] sm:$0xf]
    %v7409 = vld [vmem:[#allocation7 + $0x614] sm:$0xf]
    %v7410 = vld [vmem:[#allocation7 + $0x618] sm:$0xf]
    %v7411 = vld [vmem:[#allocation7 + $0x61c] sm:$0xf]
    %v7412 = vld [vmem:[#allocation7 + $0x620] sm:$0xf]
    %v7413 = vld [vmem:[#allocation7 + $0x624] sm:$0xf]
    %v7414 = vld [vmem:[#allocation7 + $0x628] sm:$0xf]
    %v7415 = vld [vmem:[#allocation7 + $0x62c] sm:$0xf]
    %v7416 = vld [vmem:[#allocation7 + $0x630] sm:$0xf]
    %v7417 = vld [vmem:[#allocation7 + $0x634] sm:$0xf]
    %v7418 = vld [vmem:[#allocation7 + $0x638] sm:$0xf]
    %v7419 = vld [vmem:[#allocation7 + $0x63c] sm:$0xf]
    %v7420 = vld [vmem:[#allocation7 + $0x640] sm:$0xf]
    %v7421 = vld [vmem:[#allocation7 + $0x644] sm:$0xf]
    %v7422 = vld [vmem:[#allocation7 + $0x648] sm:$0xf]
    %v7423 = vld [vmem:[#allocation7 + $0x64c] sm:$0xf]
    %v7424 = vld [vmem:[#allocation7 + $0x650] sm:$0xf]
    %v7425 = vld [vmem:[#allocation7 + $0x654] sm:$0xf]
    %v7426 = vld [vmem:[#allocation7 + $0x658] sm:$0xf]
    %v7427 = vld [vmem:[#allocation7 + $0x65c] sm:$0xf]
    %v7428 = vld [vmem:[#allocation7 + $0x660] sm:$0xf]
    %v7429 = vld [vmem:[#allocation7 + $0x664] sm:$0xf]
    %v7430 = vld [vmem:[#allocation7 + $0x668] sm:$0xf]
    %v7431 = vld [vmem:[#allocation7 + $0x66c] sm:$0xf]
    %v7432 = vld [vmem:[#allocation7 + $0x670] sm:$0xf]
    %v7433 = vld [vmem:[#allocation7 + $0x674] sm:$0xf]
    %v7434 = vld [vmem:[#allocation7 + $0x678] sm:$0xf]
    %v7435 = vld [vmem:[#allocation7 + $0x67c] sm:$0xf]
    %v7436 = vld [vmem:[#allocation7 + $0x680] sm:$0xf]
    %v7437 = vld [vmem:[#allocation7 + $0x684] sm:$0xf]
    %v7438 = vld [vmem:[#allocation7 + $0x688] sm:$0xf]
    %v7439 = vld [vmem:[#allocation7 + $0x68c] sm:$0xf]
    %v7440 = vld [vmem:[#allocation7 + $0x690] sm:$0xf]
    %v7441 = vld [vmem:[#allocation7 + $0x694] sm:$0xf]
    %v7442 = vld [vmem:[#allocation7 + $0x698] sm:$0xf]
    %v7443 = vld [vmem:[#allocation7 + $0x69c] sm:$0xf]
    %v7444 = vld [vmem:[#allocation7 + $0x6a0] sm:$0xf]
    %v7445 = vld [vmem:[#allocation7 + $0x6a4] sm:$0xf]
    %v7446 = vld [vmem:[#allocation7 + $0x6a8] sm:$0xf]
    %v7447 = vld [vmem:[#allocation7 + $0x6ac] sm:$0xf]
    %v7448 = vld [vmem:[#allocation7 + $0x6b0] sm:$0xf]
    %v7449 = vld [vmem:[#allocation7 + $0x6b4] sm:$0xf]
    %v7450 = vld [vmem:[#allocation7 + $0x6b8] sm:$0xf]
    %v7451 = vld [vmem:[#allocation7 + $0x6bc] sm:$0xf]
    %v7452 = vld [vmem:[#allocation7 + $0x6c0] sm:$0xf]
    %v7453 = vld [vmem:[#allocation7 + $0x6c4] sm:$0xf]
    %v7454 = vld [vmem:[#allocation7 + $0x6c8] sm:$0xf]
    %v7455 = vld [vmem:[#allocation7 + $0x6cc] sm:$0xf]
    %v7456 = vld [vmem:[#allocation7 + $0x6d0] sm:$0xf]
    %v7457 = vld [vmem:[#allocation7 + $0x6d4] sm:$0xf]
    %v7458 = vld [vmem:[#allocation7 + $0x6d8] sm:$0xf]
    %v7459 = vld [vmem:[#allocation7 + $0x6dc] sm:$0xf]
    %v7460 = vld [vmem:[#allocation7 + $0x6e0] sm:$0xf]
    %v7461 = vld [vmem:[#allocation7 + $0x6e4] sm:$0xf]
    %v7462 = vld [vmem:[#allocation7 + $0x6e8] sm:$0xf]
    %v7463 = vld [vmem:[#allocation7 + $0x6ec] sm:$0xf]
    %v7464 = vld [vmem:[#allocation7 + $0x6f0] sm:$0xf]
    %v7465 = vld [vmem:[#allocation7 + $0x6f4] sm:$0xf]
    %v7466 = vld [vmem:[#allocation7 + $0x6f8] sm:$0xf]
    %v7467 = vld [vmem:[#allocation7 + $0x6fc] sm:$0xf]
    %v7468 = vld [vmem:[#allocation7 + $0x700] sm:$0xf]
    %v7469 = vld [vmem:[#allocation7 + $0x704] sm:$0xf]
    %v7470 = vld [vmem:[#allocation7 + $0x708] sm:$0xf]
    %v7471 = vld [vmem:[#allocation7 + $0x70c] sm:$0xf]
    %v7472 = vld [vmem:[#allocation7 + $0x710] sm:$0xf]
    %v7473 = vld [vmem:[#allocation7 + $0x714] sm:$0xf]
    %v7474 = vld [vmem:[#allocation7 + $0x718] sm:$0xf]
    %v7475 = vld [vmem:[#allocation7 + $0x71c] sm:$0xf]
    %v7476 = vld [vmem:[#allocation7 + $0x720] sm:$0xf]
    %v7477 = vld [vmem:[#allocation7 + $0x724] sm:$0xf]
    %v7478 = vld [vmem:[#allocation7 + $0x728] sm:$0xf]
    %v7479 = vld [vmem:[#allocation7 + $0x72c] sm:$0xf]
    %v7480 = vld [vmem:[#allocation7 + $0x730] sm:$0xf]
    %v7481 = vld [vmem:[#allocation7 + $0x734] sm:$0xf]
    %v7482 = vld [vmem:[#allocation7 + $0x738] sm:$0xf]
    %v7483 = vld [vmem:[#allocation7 + $0x73c] sm:$0xf]
    %v7948 = vunpack.c.l.b16 %v7020
    %v7949 = vunpack.c.l.b16 %v7021
    %v7950 = vunpack.c.l.b16 %v7022
    %v7951 = vunpack.c.l.b16 %v7023
    %v7952 = vunpack.c.l.b16 %v7024
    %v7953 = vunpack.c.l.b16 %v7025
    %v7954 = vunpack.c.l.b16 %v7026
    %v7955 = vunpack.c.l.b16 %v7027
    %v7956 = vunpack.c.l.b16 %v7028
    %v7957 = vunpack.c.l.b16 %v7029
    %v7958 = vunpack.c.l.b16 %v7030
    %v7959 = vunpack.c.l.b16 %v7031
    %v7960 = vunpack.c.l.b16 %v7032
    %v7961 = vunpack.c.l.b16 %v7033
    %v7962 = vunpack.c.l.b16 %v7034
    %v7963 = vunpack.c.l.b16 %v7035
    %v7964 = vunpack.c.l.b16 %v7036
    %v7965 = vunpack.c.l.b16 %v7037
    %v7966 = vunpack.c.l.b16 %v7038
    %v7967 = vunpack.c.l.b16 %v7039
    %v7968 = vunpack.c.l.b16 %v7040
    %v7969 = vunpack.c.l.b16 %v7041
    %v7970 = vunpack.c.l.b16 %v7042
    %v7971 = vunpack.c.l.b16 %v7043
    %v7972 = vunpack.c.l.b16 %v7044
    %v7973 = vunpack.c.l.b16 %v7045
    %v7974 = vunpack.c.l.b16 %v7046
    %v7975 = vunpack.c.l.b16 %v7047
    %v7976 = vunpack.c.l.b16 %v7048
    %v7977 = vunpack.c.l.b16 %v7049
    %v7978 = vunpack.c.l.b16 %v7050
    %v7979 = vunpack.c.l.b16 %v7051
    %v7980 = vunpack.c.l.b16 %v7052
    %v7981 = vunpack.c.l.b16 %v7053
    %v7982 = vunpack.c.l.b16 %v7054
    %v7983 = vunpack.c.l.b16 %v7055
    %v7984 = vunpack.c.l.b16 %v7056
    %v7985 = vunpack.c.l.b16 %v7057
    %v7986 = vunpack.c.l.b16 %v7058
    %v7987 = vunpack.c.l.b16 %v7059
    %v7988 = vunpack.c.l.b16 %v7060
    %v7989 = vunpack.c.l.b16 %v7061
    %v7990 = vunpack.c.l.b16 %v7062
    %v7991 = vunpack.c.l.b16 %v7063
    %v7992 = vunpack.c.l.b16 %v7064
    %v7993 = vunpack.c.l.b16 %v7065
    %v7994 = vunpack.c.l.b16 %v7066
    %v7995 = vunpack.c.l.b16 %v7067
    %v7996 = vunpack.c.l.b16 %v7068
    %v7997 = vunpack.c.l.b16 %v7069
    %v7998 = vunpack.c.l.b16 %v7070
    %v7999 = vunpack.c.l.b16 %v7071
    %v8000 = vunpack.c.l.b16 %v7072
    %v8001 = vunpack.c.l.b16 %v7073
    %v8002 = vunpack.c.l.b16 %v7074
    %v8003 = vunpack.c.l.b16 %v7075
    %v8004 = vunpack.c.l.b16 %v7076
    %v8005 = vunpack.c.l.b16 %v7077
    %v8006 = vunpack.c.l.b16 %v7078
    %v8007 = vunpack.c.l.b16 %v7079
    %v8008 = vunpack.c.l.b16 %v7080
    %v8009 = vunpack.c.l.b16 %v7081
    %v8010 = vunpack.c.l.b16 %v7082
    %v8011 = vunpack.c.l.b16 %v7083
    %v8012 = vunpack.c.l.b16 %v7084
    %v8013 = vunpack.c.l.b16 %v7085
    %v8014 = vunpack.c.l.b16 %v7086
    %v8015 = vunpack.c.l.b16 %v7087
    %v8016 = vunpack.c.l.b16 %v7088
    %v8017 = vunpack.c.l.b16 %v7089
    %v8018 = vunpack.c.l.b16 %v7090
    %v8019 = vunpack.c.l.b16 %v7091
    %v8020 = vunpack.c.l.b16 %v7092
    %v8021 = vunpack.c.l.b16 %v7093
    %v8022 = vunpack.c.l.b16 %v7094
    %v8023 = vunpack.c.l.b16 %v7095
    %v8024 = vunpack.c.l.b16 %v7096
    %v8025 = vunpack.c.l.b16 %v7097
    %v8026 = vunpack.c.l.b16 %v7098
    %v8027 = vunpack.c.l.b16 %v7099
    %v8028 = vunpack.c.l.b16 %v7100
    %v8029 = vunpack.c.l.b16 %v7101
    %v8030 = vunpack.c.l.b16 %v7102
    %v8031 = vunpack.c.l.b16 %v7103
    %v8032 = vunpack.c.l.b16 %v7104
    %v8033 = vunpack.c.l.b16 %v7105
    %v8034 = vunpack.c.l.b16 %v7106
    %v8035 = vunpack.c.l.b16 %v7107
    %v8036 = vunpack.c.l.b16 %v7108
    %v8037 = vunpack.c.l.b16 %v7109
    %v8038 = vunpack.c.l.b16 %v7110
    %v8039 = vunpack.c.l.b16 %v7111
    %v8040 = vunpack.c.l.b16 %v7112
    %v8041 = vunpack.c.l.b16 %v7113
    %v8042 = vunpack.c.l.b16 %v7114
    %v8043 = vunpack.c.l.b16 %v7115
    %v8044 = vunpack.c.l.b16 %v7116
    %v8045 = vunpack.c.l.b16 %v7117
    %v8046 = vunpack.c.l.b16 %v7118
    %v8047 = vunpack.c.l.b16 %v7119
    %v8048 = vunpack.c.l.b16 %v7120
    %v8049 = vunpack.c.l.b16 %v7121
    %v8050 = vunpack.c.l.b16 %v7122
    %v8051 = vunpack.c.l.b16 %v7123
    %v8052 = vunpack.c.l.b16 %v7124
    %v8053 = vunpack.c.l.b16 %v7125
    %v8054 = vunpack.c.l.b16 %v7126
    %v8055 = vunpack.c.l.b16 %v7127
    %v8056 = vunpack.c.l.b16 %v7128
    %v8057 = vunpack.c.l.b16 %v7129
    %v8058 = vunpack.c.l.b16 %v7130
    %v8059 = vunpack.c.l.b16 %v7131
    %v8060 = vunpack.c.l.b16 %v7132
    %v8061 = vunpack.c.l.b16 %v7133
    %v8062 = vunpack.c.l.b16 %v7134
    %v8063 = vunpack.c.l.b16 %v7135
    %v8064 = vunpack.c.l.b16 %v7136
    %v8065 = vunpack.c.l.b16 %v7137
    %v8066 = vunpack.c.l.b16 %v7138
    %v8067 = vunpack.c.l.b16 %v7139
    %v8068 = vunpack.c.l.b16 %v7140
    %v8069 = vunpack.c.l.b16 %v7141
    %v8070 = vunpack.c.l.b16 %v7142
    %v8071 = vunpack.c.l.b16 %v7143
    %v8072 = vunpack.c.l.b16 %v7144
    %v8073 = vunpack.c.l.b16 %v7145
    %v8074 = vunpack.c.l.b16 %v7146
    %v8075 = vunpack.c.l.b16 %v7147
    %v8076 = vunpack.c.l.b16 %v7148
    %v8077 = vunpack.c.l.b16 %v7149
    %v8078 = vunpack.c.l.b16 %v7150
    %v8079 = vunpack.c.l.b16 %v7151
    %v8080 = vunpack.c.l.b16 %v7152
    %v8081 = vunpack.c.l.b16 %v7153
    %v8082 = vunpack.c.l.b16 %v7154
    %v8083 = vunpack.c.l.b16 %v7155
    %v8084 = vunpack.c.l.b16 %v7156
    %v8085 = vunpack.c.l.b16 %v7157
    %v8086 = vunpack.c.l.b16 %v7158
    %v8087 = vunpack.c.l.b16 %v7159
    %v8088 = vunpack.c.l.b16 %v7160
    %v8089 = vunpack.c.l.b16 %v7161
    %v8090 = vunpack.c.l.b16 %v7162
    %v8091 = vunpack.c.l.b16 %v7163
    %v8092 = vunpack.c.l.b16 %v7164
    %v8093 = vunpack.c.l.b16 %v7165
    %v8094 = vunpack.c.l.b16 %v7166
    %v8095 = vunpack.c.l.b16 %v7167
    %v8096 = vunpack.c.l.b16 %v7168
    %v8097 = vunpack.c.l.b16 %v7169
    %v8098 = vunpack.c.l.b16 %v7170
    %v8099 = vunpack.c.l.b16 %v7171
    %v8100 = vunpack.c.l.b16 %v7172
    %v8101 = vunpack.c.l.b16 %v7173
    %v8102 = vunpack.c.l.b16 %v7174
    %v8103 = vunpack.c.l.b16 %v7175
    %v8104 = vunpack.c.l.b16 %v7176
    %v8105 = vunpack.c.l.b16 %v7177
    %v8106 = vunpack.c.l.b16 %v7178
    %v8107 = vunpack.c.l.b16 %v7179
    %v8108 = vunpack.c.l.b16 %v7180
    %v8109 = vunpack.c.l.b16 %v7181
    %v8110 = vunpack.c.l.b16 %v7182
    %v8111 = vunpack.c.l.b16 %v7183
    %v8112 = vunpack.c.l.b16 %v7184
    %v8113 = vunpack.c.l.b16 %v7185
    %v8114 = vunpack.c.l.b16 %v7186
    %v8115 = vunpack.c.l.b16 %v7187
    %v8116 = vunpack.c.l.b16 %v7188
    %v8117 = vunpack.c.l.b16 %v7189
    %v8118 = vunpack.c.l.b16 %v7190
    %v8119 = vunpack.c.l.b16 %v7191
    %v8120 = vunpack.c.l.b16 %v7192
    %v8121 = vunpack.c.l.b16 %v7193
    %v8122 = vunpack.c.l.b16 %v7194
    %v8123 = vunpack.c.l.b16 %v7195
    %v8124 = vunpack.c.l.b16 %v7196
    %v8125 = vunpack.c.l.b16 %v7197
    %v8126 = vunpack.c.l.b16 %v7198
    %v8127 = vunpack.c.l.b16 %v7199
    %v8128 = vunpack.c.l.b16 %v7200
    %v8129 = vunpack.c.l.b16 %v7201
    %v8130 = vunpack.c.l.b16 %v7202
    %v8131 = vunpack.c.l.b16 %v7203
    %v8132 = vunpack.c.l.b16 %v7204
    %v8133 = vunpack.c.l.b16 %v7205
    %v8134 = vunpack.c.l.b16 %v7206
    %v8135 = vunpack.c.l.b16 %v7207
    %v8136 = vunpack.c.l.b16 %v7208
    %v8137 = vunpack.c.l.b16 %v7209
    %v8138 = vunpack.c.l.b16 %v7210
    %v8139 = vunpack.c.l.b16 %v7211
    %v8140 = vunpack.c.l.b16 %v7212
    %v8141 = vunpack.c.l.b16 %v7213
    %v8142 = vunpack.c.l.b16 %v7214
    %v8143 = vunpack.c.l.b16 %v7215
    %v8144 = vunpack.c.l.b16 %v7216
    %v8145 = vunpack.c.l.b16 %v7217
    %v8146 = vunpack.c.l.b16 %v7218
    %v8147 = vunpack.c.l.b16 %v7219
    %v8148 = vunpack.c.l.b16 %v7220
    %v8149 = vunpack.c.l.b16 %v7221
    %v8150 = vunpack.c.l.b16 %v7222
    %v8151 = vunpack.c.l.b16 %v7223
    %v8152 = vunpack.c.l.b16 %v7224
    %v8153 = vunpack.c.l.b16 %v7225
    %v8154 = vunpack.c.l.b16 %v7226
    %v8155 = vunpack.c.l.b16 %v7227
    %v8156 = vunpack.c.l.b16 %v7228
    %v8157 = vunpack.c.l.b16 %v7229
    %v8158 = vunpack.c.l.b16 %v7230
    %v8159 = vunpack.c.l.b16 %v7231
    %v8160 = vunpack.c.l.b16 %v7232
    %v8161 = vunpack.c.l.b16 %v7233
    %v8162 = vunpack.c.l.b16 %v7234
    %v8163 = vunpack.c.l.b16 %v7235
    %v8164 = vunpack.c.l.b16 %v7236
    %v8165 = vunpack.c.l.b16 %v7237
    %v8166 = vunpack.c.l.b16 %v7238
    %v8167 = vunpack.c.l.b16 %v7239
    %v8168 = vunpack.c.l.b16 %v7240
    %v8169 = vunpack.c.l.b16 %v7241
    %v8170 = vunpack.c.l.b16 %v7242
    %v8171 = vunpack.c.l.b16 %v7243
    %v8172 = vunpack.c.l.b16 %v7244
    %v8173 = vunpack.c.l.b16 %v7245
    %v8174 = vunpack.c.l.b16 %v7246
    %v8175 = vunpack.c.l.b16 %v7247
    %v8176 = vunpack.c.l.b16 %v7248
    %v8177 = vunpack.c.l.b16 %v7249
    %v8178 = vunpack.c.l.b16 %v7250
    %v8179 = vunpack.c.l.b16 %v7251
    %v8180 = vunpack.c.l.b16 %v7252
    %v8181 = vunpack.c.l.b16 %v7253
    %v8182 = vunpack.c.l.b16 %v7254
    %v8183 = vunpack.c.l.b16 %v7255
    %v8184 = vunpack.c.l.b16 %v7256
    %v8185 = vunpack.c.l.b16 %v7257
    %v8186 = vunpack.c.l.b16 %v7258
    %v8187 = vunpack.c.l.b16 %v7259
    %v8188 = vunpack.c.l.b16 %v7260
    %v8189 = vunpack.c.l.b16 %v7261
    %v8190 = vunpack.c.l.b16 %v7262
    %v8191 = vunpack.c.l.b16 %v7263
    %v8192 = vunpack.c.l.b16 %v7264
    %v8193 = vunpack.c.l.b16 %v7265
    %v8194 = vunpack.c.l.b16 %v7266
    %v8195 = vunpack.c.l.b16 %v7267
    %v8196 = vunpack.c.l.b16 %v7268
    %v8197 = vunpack.c.l.b16 %v7269
    %v8198 = vunpack.c.l.b16 %v7270
    %v8199 = vunpack.c.l.b16 %v7271
    %v8200 = vunpack.c.l.b16 %v7272
    %v8201 = vunpack.c.l.b16 %v7273
    %v8202 = vunpack.c.l.b16 %v7274
    %v8203 = vunpack.c.l.b16 %v7275
    %v8204 = vunpack.c.l.b16 %v7276
    %v8205 = vunpack.c.l.b16 %v7277
    %v8206 = vunpack.c.l.b16 %v7278
    %v8207 = vunpack.c.l.b16 %v7279
    %v8208 = vunpack.c.l.b16 %v7280
    %v8209 = vunpack.c.l.b16 %v7281
    %v8210 = vunpack.c.l.b16 %v7282
    %v8211 = vunpack.c.l.b16 %v7283
    %v8212 = vunpack.c.l.b16 %v7284
    %v8213 = vunpack.c.l.b16 %v7285
    %v8214 = vunpack.c.l.b16 %v7286
    %v8215 = vunpack.c.l.b16 %v7287
    %v8216 = vunpack.c.l.b16 %v7288
    %v8217 = vunpack.c.l.b16 %v7289
    %v8218 = vunpack.c.l.b16 %v7290
    %v8219 = vunpack.c.l.b16 %v7291
    %v8220 = vunpack.c.l.b16 %v7292
    %v8221 = vunpack.c.l.b16 %v7293
    %v8222 = vunpack.c.l.b16 %v7294
    %v8223 = vunpack.c.l.b16 %v7295
    %v8224 = vunpack.c.l.b16 %v7296
    %v8225 = vunpack.c.l.b16 %v7297
    %v8226 = vunpack.c.l.b16 %v7298
    %v8227 = vunpack.c.l.b16 %v7299
    %v8228 = vunpack.c.l.b16 %v7300
    %v8229 = vunpack.c.l.b16 %v7301
    %v8230 = vunpack.c.l.b16 %v7302
    %v8231 = vunpack.c.l.b16 %v7303
    %v8232 = vunpack.c.l.b16 %v7304
    %v8233 = vunpack.c.l.b16 %v7305
    %v8234 = vunpack.c.l.b16 %v7306
    %v8235 = vunpack.c.l.b16 %v7307
    %v8236 = vunpack.c.l.b16 %v7308
    %v8237 = vunpack.c.l.b16 %v7309
    %v8238 = vunpack.c.l.b16 %v7310
    %v8239 = vunpack.c.l.b16 %v7311
    %v8240 = vunpack.c.l.b16 %v7312
    %v8241 = vunpack.c.l.b16 %v7313
    %v8242 = vunpack.c.l.b16 %v7314
    %v8243 = vunpack.c.l.b16 %v7315
    %v8244 = vunpack.c.l.b16 %v7316
    %v8245 = vunpack.c.l.b16 %v7317
    %v8246 = vunpack.c.l.b16 %v7318
    %v8247 = vunpack.c.l.b16 %v7319
    %v8248 = vunpack.c.l.b16 %v7320
    %v8249 = vunpack.c.l.b16 %v7321
    %v8250 = vunpack.c.l.b16 %v7322
    %v8251 = vunpack.c.l.b16 %v7323
    %v8252 = vunpack.c.l.b16 %v7324
    %v8253 = vunpack.c.l.b16 %v7325
    %v8254 = vunpack.c.l.b16 %v7326
    %v8255 = vunpack.c.l.b16 %v7327
    %v8256 = vunpack.c.l.b16 %v7328
    %v8257 = vunpack.c.l.b16 %v7329
    %v8258 = vunpack.c.l.b16 %v7330
    %v8259 = vunpack.c.l.b16 %v7331
    %v8260 = vunpack.c.l.b16 %v7332
    %v8261 = vunpack.c.l.b16 %v7333
    %v8262 = vunpack.c.l.b16 %v7334
    %v8263 = vunpack.c.l.b16 %v7335
    %v8264 = vunpack.c.l.b16 %v7336
    %v8265 = vunpack.c.l.b16 %v7337
    %v8266 = vunpack.c.l.b16 %v7338
    %v8267 = vunpack.c.l.b16 %v7339
    %v8268 = vunpack.c.l.b16 %v7340
    %v8269 = vunpack.c.l.b16 %v7341
    %v8270 = vunpack.c.l.b16 %v7342
    %v8271 = vunpack.c.l.b16 %v7343
    %v8272 = vunpack.c.l.b16 %v7344
    %v8273 = vunpack.c.l.b16 %v7345
    %v8274 = vunpack.c.l.b16 %v7346
    %v8275 = vunpack.c.l.b16 %v7347
    %v8276 = vunpack.c.l.b16 %v7348
    %v8277 = vunpack.c.l.b16 %v7349
    %v8278 = vunpack.c.l.b16 %v7350
    %v8279 = vunpack.c.l.b16 %v7351
    %v8280 = vunpack.c.l.b16 %v7352
    %v8281 = vunpack.c.l.b16 %v7353
    %v8282 = vunpack.c.l.b16 %v7354
    %v8283 = vunpack.c.l.b16 %v7355
    %v8284 = vunpack.c.l.b16 %v7356
    %v8285 = vunpack.c.l.b16 %v7357
    %v8286 = vunpack.c.l.b16 %v7358
    %v8287 = vunpack.c.l.b16 %v7359
    %v8288 = vunpack.c.l.b16 %v7360
    %v8289 = vunpack.c.l.b16 %v7361
    %v8290 = vunpack.c.l.b16 %v7362
    %v8291 = vunpack.c.l.b16 %v7363
    %v8292 = vunpack.c.l.b16 %v7364
    %v8293 = vunpack.c.l.b16 %v7365
    %v8294 = vunpack.c.l.b16 %v7366
    %v8295 = vunpack.c.l.b16 %v7367
    %v8296 = vunpack.c.l.b16 %v7368
    %v8297 = vunpack.c.l.b16 %v7369
    %v8298 = vunpack.c.l.b16 %v7370
    %v8299 = vunpack.c.l.b16 %v7371
    %v8300 = vunpack.c.l.b16 %v7372
    %v8301 = vunpack.c.l.b16 %v7373
    %v8302 = vunpack.c.l.b16 %v7374
    %v8303 = vunpack.c.l.b16 %v7375
    %v8304 = vunpack.c.l.b16 %v7376
    %v8305 = vunpack.c.l.b16 %v7377
    %v8306 = vunpack.c.l.b16 %v7378
    %v8307 = vunpack.c.l.b16 %v7379
    %v8308 = vunpack.c.l.b16 %v7380
    %v8309 = vunpack.c.l.b16 %v7381
    %v8310 = vunpack.c.l.b16 %v7382
    %v8311 = vunpack.c.l.b16 %v7383
    %v8312 = vunpack.c.l.b16 %v7384
    %v8313 = vunpack.c.l.b16 %v7385
    %v8314 = vunpack.c.l.b16 %v7386
    %v8315 = vunpack.c.l.b16 %v7387
    %v8316 = vunpack.c.l.b16 %v7388
    %v8317 = vunpack.c.l.b16 %v7389
    %v8318 = vunpack.c.l.b16 %v7390
    %v8319 = vunpack.c.l.b16 %v7391
    %v8320 = vunpack.c.l.b16 %v7392
    %v8321 = vunpack.c.l.b16 %v7393
    %v8322 = vunpack.c.l.b16 %v7394
    %v8323 = vunpack.c.l.b16 %v7395
    %v8324 = vunpack.c.l.b16 %v7396
    %v8325 = vunpack.c.l.b16 %v7397
    %v8326 = vunpack.c.l.b16 %v7398
    %v8327 = vunpack.c.l.b16 %v7399
    %v8328 = vunpack.c.l.b16 %v7400
    %v8329 = vunpack.c.l.b16 %v7401
    %v8330 = vunpack.c.l.b16 %v7402
    %v8331 = vunpack.c.l.b16 %v7403
    %v8332 = vunpack.c.l.b16 %v7404
    %v8333 = vunpack.c.l.b16 %v7405
    %v8334 = vunpack.c.l.b16 %v7406
    %v8335 = vunpack.c.l.b16 %v7407
    %v8336 = vunpack.c.l.b16 %v7408
    %v8337 = vunpack.c.l.b16 %v7409
    %v8338 = vunpack.c.l.b16 %v7410
    %v8339 = vunpack.c.l.b16 %v7411
    %v8340 = vunpack.c.l.b16 %v7412
    %v8341 = vunpack.c.l.b16 %v7413
    %v8342 = vunpack.c.l.b16 %v7414
    %v8343 = vunpack.c.l.b16 %v7415
    %v8344 = vunpack.c.l.b16 %v7416
    %v8345 = vunpack.c.l.b16 %v7417
    %v8346 = vunpack.c.l.b16 %v7418
    %v8347 = vunpack.c.l.b16 %v7419
    %v8348 = vunpack.c.l.b16 %v7420
    %v8349 = vunpack.c.l.b16 %v7421
    %v8350 = vunpack.c.l.b16 %v7422
    %v8351 = vunpack.c.l.b16 %v7423
    %v8352 = vunpack.c.l.b16 %v7424
    %v8353 = vunpack.c.l.b16 %v7425
    %v8354 = vunpack.c.l.b16 %v7426
    %v8355 = vunpack.c.l.b16 %v7427
    %v8356 = vunpack.c.l.b16 %v7428
    %v8357 = vunpack.c.l.b16 %v7429
    %v8358 = vunpack.c.l.b16 %v7430
    %v8359 = vunpack.c.l.b16 %v7431
    %v8360 = vunpack.c.l.b16 %v7432
    %v8361 = vunpack.c.l.b16 %v7433
    %v8362 = vunpack.c.l.b16 %v7434
    %v8363 = vunpack.c.l.b16 %v7435
    %v8364 = vunpack.c.l.b16 %v7436
    %v8365 = vunpack.c.l.b16 %v7437
    %v8366 = vunpack.c.l.b16 %v7438
    %v8367 = vunpack.c.l.b16 %v7439
    %v8368 = vunpack.c.l.b16 %v7440
    %v8369 = vunpack.c.l.b16 %v7441
    %v8370 = vunpack.c.l.b16 %v7442
    %v8371 = vunpack.c.l.b16 %v7443
    %v8372 = vunpack.c.l.b16 %v7444
    %v8373 = vunpack.c.l.b16 %v7445
    %v8374 = vunpack.c.l.b16 %v7446
    %v8375 = vunpack.c.l.b16 %v7447
    %v8376 = vunpack.c.l.b16 %v7448
    %v8377 = vunpack.c.l.b16 %v7449
    %v8378 = vunpack.c.l.b16 %v7450
    %v8379 = vunpack.c.l.b16 %v7451
    %v8380 = vunpack.c.l.b16 %v7452
    %v8381 = vunpack.c.l.b16 %v7453
    %v8382 = vunpack.c.l.b16 %v7454
    %v8383 = vunpack.c.l.b16 %v7455
    %v8384 = vunpack.c.l.b16 %v7456
    %v8385 = vunpack.c.l.b16 %v7457
    %v8386 = vunpack.c.l.b16 %v7458
    %v8387 = vunpack.c.l.b16 %v7459
    %v8388 = vunpack.c.l.b16 %v7460
    %v8389 = vunpack.c.l.b16 %v7461
    %v8390 = vunpack.c.l.b16 %v7462
    %v8391 = vunpack.c.l.b16 %v7463
    %v8392 = vunpack.c.l.b16 %v7464
    %v8393 = vunpack.c.l.b16 %v7465
    %v8394 = vunpack.c.l.b16 %v7466
    %v8395 = vunpack.c.l.b16 %v7467
    %v8396 = vunpack.c.l.b16 %v7468
    %v8397 = vunpack.c.l.b16 %v7469
    %v8398 = vunpack.c.l.b16 %v7470
    %v8399 = vunpack.c.l.b16 %v7471
    %v8400 = vunpack.c.l.b16 %v7472
    %v8401 = vunpack.c.l.b16 %v7473
    %v8402 = vunpack.c.l.b16 %v7474
    %v8403 = vunpack.c.l.b16 %v7475
    %v8404 = vunpack.c.l.b16 %v7476
    %v8405 = vunpack.c.l.b16 %v7477
    %v8406 = vunpack.c.l.b16 %v7478
    %v8407 = vunpack.c.l.b16 %v7479
    %v8408 = vunpack.c.l.b16 %v7480
    %v8409 = vunpack.c.l.b16 %v7481
    %v8410 = vunpack.c.l.b16 %v7482
    %v8411 = vunpack.c.l.b16 %v7483
    %v8412 = vpack.c.b16 %v7949, %v7948
    %v8413 = vpack.c.b16 %v7951, %v7950
    %v8414 = vpack.c.b16 %v7953, %v7952
    %v8415 = vpack.c.b16 %v7955, %v7954
    %v8416 = vpack.c.b16 %v7957, %v7956
    %v8417 = vpack.c.b16 %v7959, %v7958
    %v8418 = vpack.c.b16 %v7961, %v7960
    %v8419 = vpack.c.b16 %v7963, %v7962
    %v8420 = vpack.c.b16 %v7965, %v7964
    %v8421 = vpack.c.b16 %v7967, %v7966
    %v8422 = vpack.c.b16 %v7969, %v7968
    %v8423 = vpack.c.b16 %v7971, %v7970
    %v8424 = vpack.c.b16 %v7973, %v7972
    %v8425 = vpack.c.b16 %v7975, %v7974
    %v8426 = vpack.c.b16 %v7977, %v7976
    %v8427 = vpack.c.b16 %v7979, %v7978
    %v8428 = vpack.c.b16 %v7981, %v7980
    %v8429 = vpack.c.b16 %v7983, %v7982
    %v8430 = vpack.c.b16 %v7985, %v7984
    %v8431 = vpack.c.b16 %v7987, %v7986
    %v8432 = vpack.c.b16 %v7989, %v7988
    %v8433 = vpack.c.b16 %v7991, %v7990
    %v8434 = vpack.c.b16 %v7993, %v7992
    %v8435 = vpack.c.b16 %v7995, %v7994
    %v8436 = vpack.c.b16 %v7997, %v7996
    %v8437 = vpack.c.b16 %v7999, %v7998
    %v8438 = vpack.c.b16 %v8001, %v8000
    %v8439 = vpack.c.b16 %v8003, %v8002
    %v8440 = vpack.c.b16 %v8005, %v8004
    %v8441 = vpack.c.b16 %v8007, %v8006
    %v8442 = vpack.c.b16 %v8009, %v8008
    %v8443 = vpack.c.b16 %v8011, %v8010
    %v8444 = vpack.c.b16 %v8013, %v8012
    %v8445 = vpack.c.b16 %v8015, %v8014
    %v8446 = vpack.c.b16 %v8017, %v8016
    %v8447 = vpack.c.b16 %v8019, %v8018
    %v8448 = vpack.c.b16 %v8021, %v8020
    %v8449 = vpack.c.b16 %v8023, %v8022
    %v8450 = vpack.c.b16 %v8025, %v8024
    %v8451 = vpack.c.b16 %v8027, %v8026
    %v8452 = vpack.c.b16 %v8029, %v8028
    %v8453 = vpack.c.b16 %v8031, %v8030
    %v8454 = vpack.c.b16 %v8033, %v8032
    %v8455 = vpack.c.b16 %v8035, %v8034
    %v8456 = vpack.c.b16 %v8037, %v8036
    %v8457 = vpack.c.b16 %v8039, %v8038
    %v8458 = vpack.c.b16 %v8041, %v8040
    %v8459 = vpack.c.b16 %v8043, %v8042
    %v8460 = vpack.c.b16 %v8045, %v8044
    %v8461 = vpack.c.b16 %v8047, %v8046
    %v8462 = vpack.c.b16 %v8049, %v8048
    %v8463 = vpack.c.b16 %v8051, %v8050
    %v8464 = vpack.c.b16 %v8053, %v8052
    %v8465 = vpack.c.b16 %v8055, %v8054
    %v8466 = vpack.c.b16 %v8057, %v8056
    %v8467 = vpack.c.b16 %v8059, %v8058
    %v8468 = vpack.c.b16 %v8061, %v8060
    %v8469 = vpack.c.b16 %v8063, %v8062
    %v8470 = vpack.c.b16 %v8065, %v8064
    %v8471 = vpack.c.b16 %v8067, %v8066
    %v8472 = vpack.c.b16 %v8069, %v8068
    %v8473 = vpack.c.b16 %v8071, %v8070
    %v8474 = vpack.c.b16 %v8073, %v8072
    %v8475 = vpack.c.b16 %v8075, %v8074
    %v8476 = vpack.c.b16 %v8077, %v8076
    %v8477 = vpack.c.b16 %v8079, %v8078
    %v8478 = vpack.c.b16 %v8081, %v8080
    %v8479 = vpack.c.b16 %v8083, %v8082
    %v8480 = vpack.c.b16 %v8085, %v8084
    %v8481 = vpack.c.b16 %v8087, %v8086
    %v8482 = vpack.c.b16 %v8089, %v8088
    %v8483 = vpack.c.b16 %v8091, %v8090
    %v8484 = vpack.c.b16 %v8093, %v8092
    %v8485 = vpack.c.b16 %v8095, %v8094
    %v8486 = vpack.c.b16 %v8097, %v8096
    %v8487 = vpack.c.b16 %v8099, %v8098
    %v8488 = vpack.c.b16 %v8101, %v8100
    %v8489 = vpack.c.b16 %v8103, %v8102
    %v8490 = vpack.c.b16 %v8105, %v8104
    %v8491 = vpack.c.b16 %v8107, %v8106
    %v8492 = vpack.c.b16 %v8109, %v8108
    %v8493 = vpack.c.b16 %v8111, %v8110
    %v8494 = vpack.c.b16 %v8113, %v8112
    %v8495 = vpack.c.b16 %v8115, %v8114
    %v8496 = vpack.c.b16 %v8117, %v8116
    %v8497 = vpack.c.b16 %v8119, %v8118
    %v8498 = vpack.c.b16 %v8121, %v8120
    %v8499 = vpack.c.b16 %v8123, %v8122
    %v8500 = vpack.c.b16 %v8125, %v8124
    %v8501 = vpack.c.b16 %v8127, %v8126
    %v8502 = vpack.c.b16 %v8129, %v8128
    %v8503 = vpack.c.b16 %v8131, %v8130
    %v8504 = vpack.c.b16 %v8133, %v8132
    %v8505 = vpack.c.b16 %v8135, %v8134
    %v8506 = vpack.c.b16 %v8137, %v8136
    %v8507 = vpack.c.b16 %v8139, %v8138
    %v8508 = vpack.c.b16 %v8141, %v8140
    %v8509 = vpack.c.b16 %v8143, %v8142
    %v8510 = vpack.c.b16 %v8145, %v8144
    %v8511 = vpack.c.b16 %v8147, %v8146
    %v8512 = vpack.c.b16 %v8149, %v8148
    %v8513 = vpack.c.b16 %v8151, %v8150
    %v8514 = vpack.c.b16 %v8153, %v8152
    %v8515 = vpack.c.b16 %v8155, %v8154
    %v8516 = vpack.c.b16 %v8157, %v8156
    %v8517 = vpack.c.b16 %v8159, %v8158
    %v8518 = vpack.c.b16 %v8161, %v8160
    %v8519 = vpack.c.b16 %v8163, %v8162
    %v8520 = vpack.c.b16 %v8165, %v8164
    %v8521 = vpack.c.b16 %v8167, %v8166
    %v8522 = vpack.c.b16 %v8169, %v8168
    %v8523 = vpack.c.b16 %v8171, %v8170
    %v8524 = vpack.c.b16 %v8173, %v8172
    %v8525 = vpack.c.b16 %v8175, %v8174
    %v8526 = vpack.c.b16 %v8177, %v8176
    %v8527 = vpack.c.b16 %v8179, %v8178
    %v8528 = vpack.c.b16 %v8181, %v8180
    %v8529 = vpack.c.b16 %v8183, %v8182
    %v8530 = vpack.c.b16 %v8185, %v8184
    %v8531 = vpack.c.b16 %v8187, %v8186
    %v8532 = vpack.c.b16 %v8189, %v8188
    %v8533 = vpack.c.b16 %v8191, %v8190
    %v8534 = vpack.c.b16 %v8193, %v8192
    %v8535 = vpack.c.b16 %v8195, %v8194
    %v8536 = vpack.c.b16 %v8197, %v8196
    %v8537 = vpack.c.b16 %v8199, %v8198
    %v8538 = vpack.c.b16 %v8201, %v8200
    %v8539 = vpack.c.b16 %v8203, %v8202
    %v8540 = vpack.c.b16 %v8205, %v8204
    %v8541 = vpack.c.b16 %v8207, %v8206
    %v8542 = vpack.c.b16 %v8209, %v8208
    %v8543 = vpack.c.b16 %v8211, %v8210
    %v8544 = vpack.c.b16 %v8213, %v8212
    %v8545 = vpack.c.b16 %v8215, %v8214
    %v8546 = vpack.c.b16 %v8217, %v8216
    %v8547 = vpack.c.b16 %v8219, %v8218
    %v8548 = vpack.c.b16 %v8221, %v8220
    %v8549 = vpack.c.b16 %v8223, %v8222
    %v8550 = vpack.c.b16 %v8225, %v8224
    %v8551 = vpack.c.b16 %v8227, %v8226
    %v8552 = vpack.c.b16 %v8229, %v8228
    %v8553 = vpack.c.b16 %v8231, %v8230
    %v8554 = vpack.c.b16 %v8233, %v8232
    %v8555 = vpack.c.b16 %v8235, %v8234
    %v8556 = vpack.c.b16 %v8237, %v8236
    %v8557 = vpack.c.b16 %v8239, %v8238
    %v8558 = vpack.c.b16 %v8241, %v8240
    %v8559 = vpack.c.b16 %v8243, %v8242
    %v8560 = vpack.c.b16 %v8245, %v8244
    %v8561 = vpack.c.b16 %v8247, %v8246
    %v8562 = vpack.c.b16 %v8249, %v8248
    %v8563 = vpack.c.b16 %v8251, %v8250
    %v8564 = vpack.c.b16 %v8253, %v8252
    %v8565 = vpack.c.b16 %v8255, %v8254
    %v8566 = vpack.c.b16 %v8257, %v8256
    %v8567 = vpack.c.b16 %v8259, %v8258
    %v8568 = vpack.c.b16 %v8261, %v8260
    %v8569 = vpack.c.b16 %v8263, %v8262
    %v8570 = vpack.c.b16 %v8265, %v8264
    %v8571 = vpack.c.b16 %v8267, %v8266
    %v8572 = vpack.c.b16 %v8269, %v8268
    %v8573 = vpack.c.b16 %v8271, %v8270
    %v8574 = vpack.c.b16 %v8273, %v8272
    %v8575 = vpack.c.b16 %v8275, %v8274
    %v8576 = vpack.c.b16 %v8277, %v8276
    %v8577 = vpack.c.b16 %v8279, %v8278
    %v8578 = vpack.c.b16 %v8281, %v8280
    %v8579 = vpack.c.b16 %v8283, %v8282
    %v8580 = vpack.c.b16 %v8285, %v8284
    %v8581 = vpack.c.b16 %v8287, %v8286
    %v8582 = vpack.c.b16 %v8289, %v8288
    %v8583 = vpack.c.b16 %v8291, %v8290
    %v8584 = vpack.c.b16 %v8293, %v8292
    %v8585 = vpack.c.b16 %v8295, %v8294
    %v8586 = vpack.c.b16 %v8297, %v8296
    %v8587 = vpack.c.b16 %v8299, %v8298
    %v8588 = vpack.c.b16 %v8301, %v8300
    %v8589 = vpack.c.b16 %v8303, %v8302
    %v8590 = vpack.c.b16 %v8305, %v8304
    %v8591 = vpack.c.b16 %v8307, %v8306
    %v8592 = vpack.c.b16 %v8309, %v8308
    %v8593 = vpack.c.b16 %v8311, %v8310
    %v8594 = vpack.c.b16 %v8313, %v8312
    %v8595 = vpack.c.b16 %v8315, %v8314
    %v8596 = vpack.c.b16 %v8317, %v8316
    %v8597 = vpack.c.b16 %v8319, %v8318
    %v8598 = vpack.c.b16 %v8321, %v8320
    %v8599 = vpack.c.b16 %v8323, %v8322
    %v8600 = vpack.c.b16 %v8325, %v8324
    %v8601 = vpack.c.b16 %v8327, %v8326
    %v8602 = vpack.c.b16 %v8329, %v8328
    %v8603 = vpack.c.b16 %v8331, %v8330
    %v8604 = vpack.c.b16 %v8333, %v8332
    %v8605 = vpack.c.b16 %v8335, %v8334
    %v8606 = vpack.c.b16 %v8337, %v8336
    %v8607 = vpack.c.b16 %v8339, %v8338
    %v8608 = vpack.c.b16 %v8341, %v8340
    %v8609 = vpack.c.b16 %v8343, %v8342
    %v8610 = vpack.c.b16 %v8345, %v8344
    %v8611 = vpack.c.b16 %v8347, %v8346
    %v8612 = vpack.c.b16 %v8349, %v8348
    %v8613 = vpack.c.b16 %v8351, %v8350
    %v8614 = vpack.c.b16 %v8353, %v8352
    %v8615 = vpack.c.b16 %v8355, %v8354
    %v8616 = vpack.c.b16 %v8357, %v8356
    %v8617 = vpack.c.b16 %v8359, %v8358
    %v8618 = vpack.c.b16 %v8361, %v8360
    %v8619 = vpack.c.b16 %v8363, %v8362
    %v8620 = vpack.c.b16 %v8365, %v8364
    %v8621 = vpack.c.b16 %v8367, %v8366
    %v8622 = vpack.c.b16 %v8369, %v8368
    %v8623 = vpack.c.b16 %v8371, %v8370
    %v8624 = vpack.c.b16 %v8373, %v8372
    %v8625 = vpack.c.b16 %v8375, %v8374
    %v8626 = vpack.c.b16 %v8377, %v8376
    %v8627 = vpack.c.b16 %v8379, %v8378
    %v8628 = vpack.c.b16 %v8381, %v8380
    %v8629 = vpack.c.b16 %v8383, %v8382
    %v8630 = vpack.c.b16 %v8385, %v8384
    %v8631 = vpack.c.b16 %v8387, %v8386
    %v8632 = vpack.c.b16 %v8389, %v8388
    %v8633 = vpack.c.b16 %v8391, %v8390
    %v8634 = vpack.c.b16 %v8393, %v8392
    %v8635 = vpack.c.b16 %v8395, %v8394
    %v8636 = vpack.c.b16 %v8397, %v8396
    %v8637 = vpack.c.b16 %v8399, %v8398
    %v8638 = vpack.c.b16 %v8401, %v8400
    %v8639 = vpack.c.b16 %v8403, %v8402
    %v8640 = vpack.c.b16 %v8405, %v8404
    %v8641 = vpack.c.b16 %v8407, %v8406
    %v8642 = vpack.c.b16 %v8409, %v8408
    %v8643 = vpack.c.b16 %v8411, %v8410
    %8876 = vmatprep.subr.bf16.mxu0 0
    %8877 = vmatpush1.bf16.msra.mxu0 %v8419
    %8878 = vmatprep.subr.bf16.mxu0 0
    %8879 = vmatpush1.bf16.msra.mxu0 %v8418
    %8880 = vmatprep.subr.bf16.mxu0 0
    %8881 = vmatpush1.bf16.msra.mxu0 %v8417
    %8882 = vmatprep.subr.bf16.mxu0 0
    %8883 = vmatpush1.bf16.msra.mxu0 %v8416
    %8884 = vmatprep.subr.bf16.mxu0 0
    %8885 = vmatpush1.bf16.msra.mxu0 %v8415
    %8886 = vmatprep.subr.bf16.mxu0 0
    %8887 = vmatpush1.bf16.msra.mxu0 %v8414
    %8888 = vmatprep.subr.bf16.mxu0 0
    %8889 = vmatpush1.bf16.msra.mxu0 %v8413
    %8890 = vmatprep.subr.bf16.mxu0 0
    %8891 = vmatpush1.bf16.msra.mxu0 %v8412
    %8892 = vmatprep.subr.bf16.mxu0 0
    %8893 = vmatpush2.bf16.msra.mxu0 %v8427
    %8894 = vmatprep.subr.bf16.mxu0 0
    %8895 = vmatpush2.bf16.msra.mxu0 %v8426
    %8896 = vmatprep.subr.bf16.mxu0 0
    %8897 = vmatpush2.bf16.msra.mxu0 %v8425
    %8898 = vmatprep.subr.bf16.mxu0 0
    %8899 = vmatpush2.bf16.msra.mxu0 %v8424
    %8900 = vmatprep.subr.bf16.mxu0 0
    %8901 = vmatpush2.bf16.msra.mxu0 %v8423
    %8902 = vmatprep.subr.bf16.mxu0 0
    %8903 = vmatpush2.bf16.msra.mxu0 %v8422
    %8904 = vmatprep.subr.bf16.mxu0 0
    %8905 = vmatpush2.bf16.msra.mxu0 %v8421
    %8906 = vmatprep.subr.bf16.mxu0 0
    %8907 = vmatpush2.bf16.msra.mxu0 %v8420
    %8908 = vmatprep.mubr.bf16.mxu0 %v6992
    %8909 = vmatmul.mubr.bf16.gmra.mxu0 %v6991
    %v8910 = vpop.f32.mrf.mxu0
    %v8911 = vadd.f32 0.0, %v8910
    %v8912 = vpop.f32.mrf.mxu0
    %v8913 = vpop.f32.mrf.mxu0
    %v8914 = vpop.f32.mrf.mxu0
    %8915 = vdwg.mxu0
    %8916 = vmatprep.subr.bf16.mxu0 0
    %8917 = vmatpush1.bf16.msra.mxu0 %v8435
    %8918 = vmatprep.subr.bf16.mxu0 0
    %8919 = vmatpush1.bf16.msra.mxu0 %v8434
    %8920 = vmatprep.subr.bf16.mxu0 0
    %8921 = vmatpush1.bf16.msra.mxu0 %v8433
    %8922 = vmatprep.subr.bf16.mxu0 0
    %8923 = vmatpush1.bf16.msra.mxu0 %v8432
    %8924 = vmatprep.subr.bf16.mxu0 0
    %8925 = vmatpush1.bf16.msra.mxu0 %v8431
    %8926 = vmatprep.subr.bf16.mxu0 0
    %8927 = vmatpush1.bf16.msra.mxu0 %v8430
    %8928 = vmatprep.subr.bf16.mxu0 0
    %8929 = vmatpush1.bf16.msra.mxu0 %v8429
    %8930 = vmatprep.subr.bf16.mxu0 0
    %8931 = vmatpush1.bf16.msra.mxu0 %v8428
    %8932 = vmatprep.subr.bf16.mxu0 0
    %8933 = vmatpush2.bf16.msra.mxu0 %v8443
    %8934 = vmatprep.subr.bf16.mxu0 0
    %8935 = vmatpush2.bf16.msra.mxu0 %v8442
    %8936 = vmatprep.subr.bf16.mxu0 0
    %8937 = vmatpush2.bf16.msra.mxu0 %v8441
    %8938 = vmatprep.subr.bf16.mxu0 0
    %8939 = vmatpush2.bf16.msra.mxu0 %v8440
    %8940 = vmatprep.subr.bf16.mxu0 0
    %8941 = vmatpush2.bf16.msra.mxu0 %v8439
    %8942 = vmatprep.subr.bf16.mxu0 0
    %8943 = vmatpush2.bf16.msra.mxu0 %v8438
    %8944 = vmatprep.subr.bf16.mxu0 0
    %8945 = vmatpush2.bf16.msra.mxu0 %v8437
    %8946 = vmatprep.subr.bf16.mxu0 0
    %8947 = vmatpush2.bf16.msra.mxu0 %v8436
    %8948 = vmatprep.mubr.bf16.mxu0 %v6994
    %8949 = vmatmul.mubr.bf16.gmra.mxu0 %v6993
    %v8950 = vpop.f32.mrf.mxu0
    %v8951 = vadd.f32 %v8911, %v8950
    %v8952 = vpop.f32.mrf.mxu0
    %v8953 = vpop.f32.mrf.mxu0
    %v8954 = vpop.f32.mrf.mxu0
    %8955 = vdwg.mxu0
    %8956 = vmatprep.subr.bf16.mxu0 0
    %8957 = vmatpush1.bf16.msra.mxu0 %v8451
    %8958 = vmatprep.subr.bf16.mxu0 0
    %8959 = vmatpush1.bf16.msra.mxu0 %v8450
    %8960 = vmatprep.subr.bf16.mxu0 0
    %8961 = vmatpush1.bf16.msra.mxu0 %v8449
    %8962 = vmatprep.subr.bf16.mxu0 0
    %8963 = vmatpush1.bf16.msra.mxu0 %v8448
    %8964 = vmatprep.subr.bf16.mxu0 0
    %8965 = vmatpush1.bf16.msra.mxu0 %v8447
    %8966 = vmatprep.subr.bf16.mxu0 0
    %8967 = vmatpush1.bf16.msra.mxu0 %v8446
    %8968 = vmatprep.subr.bf16.mxu0 0
    %8969 = vmatpush1.bf16.msra.mxu0 %v8445
    %8970 = vmatprep.subr.bf16.mxu0 0
    %8971 = vmatpush1.bf16.msra.mxu0 %v8444
    %8972 = vmatprep.subr.bf16.mxu0 0
    %8973 = vmatpush2.bf16.msra.mxu0 %v8459
    %8974 = vmatprep.subr.bf16.mxu0 0
    %8975 = vmatpush2.bf16.msra.mxu0 %v8458
    %8976 = vmatprep.subr.bf16.mxu0 0
    %8977 = vmatpush2.bf16.msra.mxu0 %v8457
    %8978 = vmatprep.subr.bf16.mxu0 0
    %8979 = vmatpush2.bf16.msra.mxu0 %v8456
    %8980 = vmatprep.subr.bf16.mxu0 0
    %8981 = vmatpush2.bf16.msra.mxu0 %v8455
    %8982 = vmatprep.subr.bf16.mxu0 0
    %8983 = vmatpush2.bf16.msra.mxu0 %v8454
    %8984 = vmatprep.subr.bf16.mxu0 0
    %8985 = vmatpush2.bf16.msra.mxu0 %v8453
    %8986 = vmatprep.subr.bf16.mxu0 0
    %8987 = vmatpush2.bf16.msra.mxu0 %v8452
    %8988 = vmatprep.mubr.bf16.mxu0 %v6996
    %8989 = vmatmul.mubr.bf16.gmra.mxu0 %v6995
    %v8990 = vpop.f32.mrf.mxu0
    %v8991 = vadd.f32 %v8951, %v8990
    %v8992 = vpop.f32.mrf.mxu0
    %v8993 = vpop.f32.mrf.mxu0
    %v8994 = vpop.f32.mrf.mxu0
    %8995 = vdwg.mxu0
    %8996 = vmatprep.subr.bf16.mxu0 0
    %8997 = vmatpush1.bf16.msra.mxu0 %v8467
    %8998 = vmatprep.subr.bf16.mxu0 0
    %8999 = vmatpush1.bf16.msra.mxu0 %v8466
    %9000 = vmatprep.subr.bf16.mxu0 0
    %9001 = vmatpush1.bf16.msra.mxu0 %v8465
    %9002 = vmatprep.subr.bf16.mxu0 0
    %9003 = vmatpush1.bf16.msra.mxu0 %v8464
    %9004 = vmatprep.subr.bf16.mxu0 0
    %9005 = vmatpush1.bf16.msra.mxu0 %v8463
    %9006 = vmatprep.subr.bf16.mxu0 0
    %9007 = vmatpush1.bf16.msra.mxu0 %v8462
    %9008 = vmatprep.subr.bf16.mxu0 0
    %9009 = vmatpush1.bf16.msra.mxu0 %v8461
    %9010 = vmatprep.subr.bf16.mxu0 0
    %9011 = vmatpush1.bf16.msra.mxu0 %v8460
    %9012 = vmatprep.subr.bf16.mxu0 0
    %9013 = vmatpush2.bf16.msra.mxu0 %v8475
    %9014 = vmatprep.subr.bf16.mxu0 0
    %9015 = vmatpush2.bf16.msra.mxu0 %v8474
    %9016 = vmatprep.subr.bf16.mxu0 0
    %9017 = vmatpush2.bf16.msra.mxu0 %v8473
    %9018 = vmatprep.subr.bf16.mxu0 0
    %9019 = vmatpush2.bf16.msra.mxu0 %v8472
    %9020 = vmatprep.subr.bf16.mxu0 0
    %9021 = vmatpush2.bf16.msra.mxu0 %v8471
    %9022 = vmatprep.subr.bf16.mxu0 0
    %9023 = vmatpush2.bf16.msra.mxu0 %v8470
    %9024 = vmatprep.subr.bf16.mxu0 0
    %9025 = vmatpush2.bf16.msra.mxu0 %v8469
    %9026 = vmatprep.subr.bf16.mxu0 0
    %9027 = vmatpush2.bf16.msra.mxu0 %v8468
    %9028 = vmatprep.mubr.bf16.mxu0 %v6998
    %9029 = vmatmul.mubr.bf16.gmra.mxu0 %v6997
    %v9030 = vpop.f32.mrf.mxu0
    %v9031 = vadd.f32 %v8991, %v9030
    %v9032 = vpop.f32.mrf.mxu0
    %v9033 = vpop.f32.mrf.mxu0
    %v9034 = vpop.f32.mrf.mxu0
    %9035 = vdwg.mxu0
    %9036 = vmatprep.subr.bf16.mxu0 0
    %9037 = vmatpush1.bf16.msra.mxu0 %v8483
    %9038 = vmatprep.subr.bf16.mxu0 0
    %9039 = vmatpush1.bf16.msra.mxu0 %v8482
    %9040 = vmatprep.subr.bf16.mxu0 0
    %9041 = vmatpush1.bf16.msra.mxu0 %v8481
    %9042 = vmatprep.subr.bf16.mxu0 0
    %9043 = vmatpush1.bf16.msra.mxu0 %v8480
    %9044 = vmatprep.subr.bf16.mxu0 0
    %9045 = vmatpush1.bf16.msra.mxu0 %v8479
    %9046 = vmatprep.subr.bf16.mxu0 0
    %9047 = vmatpush1.bf16.msra.mxu0 %v8478
    %9048 = vmatprep.subr.bf16.mxu0 0
    %9049 = vmatpush1.bf16.msra.mxu0 %v8477
    %9050 = vmatprep.subr.bf16.mxu0 0
    %9051 = vmatpush1.bf16.msra.mxu0 %v8476
    %9052 = vmatprep.subr.bf16.mxu0 0
    %9053 = vmatpush2.bf16.msra.mxu0 %v8491
    %9054 = vmatprep.subr.bf16.mxu0 0
    %9055 = vmatpush2.bf16.msra.mxu0 %v8490
    %9056 = vmatprep.subr.bf16.mxu0 0
    %9057 = vmatpush2.bf16.msra.mxu0 %v8489
    %9058 = vmatprep.subr.bf16.mxu0 0
    %9059 = vmatpush2.bf16.msra.mxu0 %v8488
    %9060 = vmatprep.subr.bf16.mxu0 0
    %9061 = vmatpush2.bf16.msra.mxu0 %v8487
    %9062 = vmatprep.subr.bf16.mxu0 0
    %9063 = vmatpush2.bf16.msra.mxu0 %v8486
    %9064 = vmatprep.subr.bf16.mxu0 0
    %9065 = vmatpush2.bf16.msra.mxu0 %v8485
    %9066 = vmatprep.subr.bf16.mxu0 0
    %9067 = vmatpush2.bf16.msra.mxu0 %v8484
    %9068 = vmatprep.mubr.bf16.mxu0 %v7000
    %9069 = vmatmul.mubr.bf16.gmra.mxu0 %v6999
    %v9070 = vpop.f32.mrf.mxu0
    %v9071 = vadd.f32 %v9031, %v9070
    %v9072 = vpop.f32.mrf.mxu0
    %v9073 = vpop.f32.mrf.mxu0
    %v9074 = vpop.f32.mrf.mxu0
    %9075 = vdwg.mxu0
    %9076 = vmatprep.subr.bf16.mxu0 0
    %9077 = vmatpush1.bf16.msra.mxu0 %v8499
    %9078 = vmatprep.subr.bf16.mxu0 0
    %9079 = vmatpush1.bf16.msra.mxu0 %v8498
    %9080 = vmatprep.subr.bf16.mxu0 0
    %9081 = vmatpush1.bf16.msra.mxu0 %v8497
    %9082 = vmatprep.subr.bf16.mxu0 0
    %9083 = vmatpush1.bf16.msra.mxu0 %v8496
    %9084 = vmatprep.subr.bf16.mxu0 0
    %9085 = vmatpush1.bf16.msra.mxu0 %v8495
    %9086 = vmatprep.subr.bf16.mxu0 0
    %9087 = vmatpush1.bf16.msra.mxu0 %v8494
    %9088 = vmatprep.subr.bf16.mxu0 0
    %9089 = vmatpush1.bf16.msra.mxu0 %v8493
    %9090 = vmatprep.subr.bf16.mxu0 0
    %9091 = vmatpush1.bf16.msra.mxu0 %v8492
    %9092 = vmatprep.subr.bf16.mxu0 0
    %9093 = vmatpush2.bf16.msra.mxu0 %v8507
    %9094 = vmatprep.subr.bf16.mxu0 0
    %9095 = vmatpush2.bf16.msra.mxu0 %v8506
    %9096 = vmatprep.subr.bf16.mxu0 0
    %9097 = vmatpush2.bf16.msra.mxu0 %v8505
    %9098 = vmatprep.subr.bf16.mxu0 0
    %9099 = vmatpush2.bf16.msra.mxu0 %v8504
    %9100 = vmatprep.subr.bf16.mxu0 0
    %9101 = vmatpush2.bf16.msra.mxu0 %v8503
    %9102 = vmatprep.subr.bf16.mxu0 0
    %9103 = vmatpush2.bf16.msra.mxu0 %v8502
    %9104 = vmatprep.subr.bf16.mxu0 0
    %9105 = vmatpush2.bf16.msra.mxu0 %v8501
    %9106 = vmatprep.subr.bf16.mxu0 0
    %9107 = vmatpush2.bf16.msra.mxu0 %v8500
    %9108 = vmatprep.mubr.bf16.mxu0 %v7002
    %9109 = vmatmul.mubr.bf16.gmra.mxu0 %v7001
    %v9110 = vpop.f32.mrf.mxu0
    %v9111 = vadd.f32 %v9071, %v9110
    %v9112 = vpop.f32.mrf.mxu0
    %v9113 = vpop.f32.mrf.mxu0
    %v9114 = vpop.f32.mrf.mxu0
    %9115 = vdwg.mxu0
    %9116 = vmatprep.subr.bf16.mxu0 0
    %9117 = vmatpush1.bf16.msra.mxu0 %v8515
    %9118 = vmatprep.subr.bf16.mxu0 0
    %9119 = vmatpush1.bf16.msra.mxu0 %v8514
    %9120 = vmatprep.subr.bf16.mxu0 0
    %9121 = vmatpush1.bf16.msra.mxu0 %v8513
    %9122 = vmatprep.subr.bf16.mxu0 0
    %9123 = vmatpush1.bf16.msra.mxu0 %v8512
    %9124 = vmatprep.subr.bf16.mxu0 0
    %9125 = vmatpush1.bf16.msra.mxu0 %v8511
    %9126 = vmatprep.subr.bf16.mxu0 0
    %9127 = vmatpush1.bf16.msra.mxu0 %v8510
    %9128 = vmatprep.subr.bf16.mxu0 0
    %9129 = vmatpush1.bf16.msra.mxu0 %v8509
    %9130 = vmatprep.subr.bf16.mxu0 0
    %9131 = vmatpush1.bf16.msra.mxu0 %v8508
    %9132 = vmatprep.subr.bf16.mxu0 0
    %9133 = vmatpush2.bf16.msra.mxu0 %v8523
    %9134 = vmatprep.subr.bf16.mxu0 0
    %9135 = vmatpush2.bf16.msra.mxu0 %v8522
    %9136 = vmatprep.subr.bf16.mxu0 0
    %9137 = vmatpush2.bf16.msra.mxu0 %v8521
    %9138 = vmatprep.subr.bf16.mxu0 0
    %9139 = vmatpush2.bf16.msra.mxu0 %v8520
    %9140 = vmatprep.subr.bf16.mxu0 0
    %9141 = vmatpush2.bf16.msra.mxu0 %v8519
    %9142 = vmatprep.subr.bf16.mxu0 0
    %9143 = vmatpush2.bf16.msra.mxu0 %v8518
    %9144 = vmatprep.subr.bf16.mxu0 0
    %9145 = vmatpush2.bf16.msra.mxu0 %v8517
    %9146 = vmatprep.subr.bf16.mxu0 0
    %9147 = vmatpush2.bf16.msra.mxu0 %v8516
    %9148 = vmatprep.mubr.bf16.mxu0 %v7004
    %9149 = vmatmul.mubr.bf16.gmra.mxu0 %v7003
    %v9150 = vpop.f32.mrf.mxu0
    %v9151 = vadd.f32 %v9111, %v9150
    %v9152 = vpop.f32.mrf.mxu0
    %v9153 = vpop.f32.mrf.mxu0
    %v9154 = vpop.f32.mrf.mxu0
    %9155 = vdwg.mxu0
    %9156 = vmatprep.subr.bf16.mxu0 0
    %9157 = vmatpush1.bf16.msra.mxu0 %v8531
    %9158 = vmatprep.subr.bf16.mxu0 0
    %9159 = vmatpush1.bf16.msra.mxu0 %v8530
    %9160 = vmatprep.subr.bf16.mxu0 0
    %9161 = vmatpush1.bf16.msra.mxu0 %v8529
    %9162 = vmatprep.subr.bf16.mxu0 0
    %9163 = vmatpush1.bf16.msra.mxu0 %v8528
    %9164 = vmatprep.subr.bf16.mxu0 0
    %9165 = vmatpush1.bf16.msra.mxu0 %v8527
    %9166 = vmatprep.subr.bf16.mxu0 0
    %9167 = vmatpush1.bf16.msra.mxu0 %v8526
    %9168 = vmatprep.subr.bf16.mxu0 0
    %9169 = vmatpush1.bf16.msra.mxu0 %v8525
    %9170 = vmatprep.subr.bf16.mxu0 0
    %9171 = vmatpush1.bf16.msra.mxu0 %v8524
    %9172 = vmatprep.subr.bf16.mxu0 0
    %9173 = vmatpush2.bf16.msra.mxu0 %v8539
    %9174 = vmatprep.subr.bf16.mxu0 0
    %9175 = vmatpush2.bf16.msra.mxu0 %v8538
    %9176 = vmatprep.subr.bf16.mxu0 0
    %9177 = vmatpush2.bf16.msra.mxu0 %v8537
    %9178 = vmatprep.subr.bf16.mxu0 0
    %9179 = vmatpush2.bf16.msra.mxu0 %v8536
    %9180 = vmatprep.subr.bf16.mxu0 0
    %9181 = vmatpush2.bf16.msra.mxu0 %v8535
    %9182 = vmatprep.subr.bf16.mxu0 0
    %9183 = vmatpush2.bf16.msra.mxu0 %v8534
    %9184 = vmatprep.subr.bf16.mxu0 0
    %9185 = vmatpush2.bf16.msra.mxu0 %v8533
    %9186 = vmatprep.subr.bf16.mxu0 0
    %9187 = vmatpush2.bf16.msra.mxu0 %v8532
    %9188 = vmatprep.mubr.bf16.mxu0 %v7006
    %9189 = vmatmul.mubr.bf16.gmra.mxu0 %v7005
    %v9190 = vpop.f32.mrf.mxu0
    %v9191 = vadd.f32 %v9151, %v9190
    %v9192 = vpop.f32.mrf.mxu0
    %v9193 = vpop.f32.mrf.mxu0
    %v9194 = vpop.f32.mrf.mxu0
    %9195 = vdwg.mxu0
    %9196 = vmatprep.subr.bf16.mxu0 0
    %9197 = vmatpush1.bf16.msra.mxu0 %v8547
    %9198 = vmatprep.subr.bf16.mxu0 0
    %9199 = vmatpush1.bf16.msra.mxu0 %v8546
    %9200 = vmatprep.subr.bf16.mxu0 0
    %9201 = vmatpush1.bf16.msra.mxu0 %v8545
    %9202 = vmatprep.subr.bf16.mxu0 0
    %9203 = vmatpush1.bf16.msra.mxu0 %v8544
    %9204 = vmatprep.subr.bf16.mxu0 0
    %9205 = vmatpush1.bf16.msra.mxu0 %v8543
    %9206 = vmatprep.subr.bf16.mxu0 0
    %9207 = vmatpush1.bf16.msra.mxu0 %v8542
    %9208 = vmatprep.subr.bf16.mxu0 0
    %9209 = vmatpush1.bf16.msra.mxu0 %v8541
    %9210 = vmatprep.subr.bf16.mxu0 0
    %9211 = vmatpush1.bf16.msra.mxu0 %v8540
    %9212 = vmatprep.subr.bf16.mxu0 0
    %9213 = vmatpush2.bf16.msra.mxu0 %v8555
    %9214 = vmatprep.subr.bf16.mxu0 0
    %9215 = vmatpush2.bf16.msra.mxu0 %v8554
    %9216 = vmatprep.subr.bf16.mxu0 0
    %9217 = vmatpush2.bf16.msra.mxu0 %v8553
    %9218 = vmatprep.subr.bf16.mxu0 0
    %9219 = vmatpush2.bf16.msra.mxu0 %v8552
    %9220 = vmatprep.subr.bf16.mxu0 0
    %9221 = vmatpush2.bf16.msra.mxu0 %v8551
    %9222 = vmatprep.subr.bf16.mxu0 0
    %9223 = vmatpush2.bf16.msra.mxu0 %v8550
    %9224 = vmatprep.subr.bf16.mxu0 0
    %9225 = vmatpush2.bf16.msra.mxu0 %v8549
    %9226 = vmatprep.subr.bf16.mxu0 0
    %9227 = vmatpush2.bf16.msra.mxu0 %v8548
    %9228 = vmatprep.mubr.bf16.mxu0 %v7008
    %9229 = vmatmul.mubr.bf16.gmra.mxu0 %v7007
    %v9230 = vpop.f32.mrf.mxu0
    %v9231 = vadd.f32 %v9191, %v9230
    %v9232 = vpop.f32.mrf.mxu0
    %v9233 = vpop.f32.mrf.mxu0
    %v9234 = vpop.f32.mrf.mxu0
    %9235 = vdwg.mxu0
    %9236 = vmatprep.subr.bf16.mxu0 0
    %9237 = vmatpush1.bf16.msra.mxu0 %v8563
    %9238 = vmatprep.subr.bf16.mxu0 0
    %9239 = vmatpush1.bf16.msra.mxu0 %v8562
    %9240 = vmatprep.subr.bf16.mxu0 0
    %9241 = vmatpush1.bf16.msra.mxu0 %v8561
    %9242 = vmatprep.subr.bf16.mxu0 0
    %9243 = vmatpush1.bf16.msra.mxu0 %v8560
    %9244 = vmatprep.subr.bf16.mxu0 0
    %9245 = vmatpush1.bf16.msra.mxu0 %v8559
    %9246 = vmatprep.subr.bf16.mxu0 0
    %9247 = vmatpush1.bf16.msra.mxu0 %v8558
    %9248 = vmatprep.subr.bf16.mxu0 0
    %9249 = vmatpush1.bf16.msra.mxu0 %v8557
    %9250 = vmatprep.subr.bf16.mxu0 0
    %9251 = vmatpush1.bf16.msra.mxu0 %v8556
    %9252 = vmatprep.subr.bf16.mxu0 0
    %9253 = vmatpush2.bf16.msra.mxu0 %v8571
    %9254 = vmatprep.subr.bf16.mxu0 0
    %9255 = vmatpush2.bf16.msra.mxu0 %v8570
    %9256 = vmatprep.subr.bf16.mxu0 0
    %9257 = vmatpush2.bf16.msra.mxu0 %v8569
    %9258 = vmatprep.subr.bf16.mxu0 0
    %9259 = vmatpush2.bf16.msra.mxu0 %v8568
    %9260 = vmatprep.subr.bf16.mxu0 0
    %9261 = vmatpush2.bf16.msra.mxu0 %v8567
    %9262 = vmatprep.subr.bf16.mxu0 0
    %9263 = vmatpush2.bf16.msra.mxu0 %v8566
    %9264 = vmatprep.subr.bf16.mxu0 0
    %9265 = vmatpush2.bf16.msra.mxu0 %v8565
    %9266 = vmatprep.subr.bf16.mxu0 0
    %9267 = vmatpush2.bf16.msra.mxu0 %v8564
    %9268 = vmatprep.mubr.bf16.mxu0 %v7010
    %9269 = vmatmul.mubr.bf16.gmra.mxu0 %v7009
    %v9270 = vpop.f32.mrf.mxu0
    %v9271 = vadd.f32 %v9231, %v9270
    %v9272 = vpop.f32.mrf.mxu0
    %v9273 = vpop.f32.mrf.mxu0
    %v9274 = vpop.f32.mrf.mxu0
    %9275 = vdwg.mxu0
    %9276 = vmatprep.subr.bf16.mxu0 0
    %9277 = vmatpush1.bf16.msra.mxu0 %v8579
    %9278 = vmatprep.subr.bf16.mxu0 0
    %9279 = vmatpush1.bf16.msra.mxu0 %v8578
    %9280 = vmatprep.subr.bf16.mxu0 0
    %9281 = vmatpush1.bf16.msra.mxu0 %v8577
    %9282 = vmatprep.subr.bf16.mxu0 0
    %9283 = vmatpush1.bf16.msra.mxu0 %v8576
    %9284 = vmatprep.subr.bf16.mxu0 0
    %9285 = vmatpush1.bf16.msra.mxu0 %v8575
    %9286 = vmatprep.subr.bf16.mxu0 0
    %9287 = vmatpush1.bf16.msra.mxu0 %v8574
    %9288 = vmatprep.subr.bf16.mxu0 0
    %9289 = vmatpush1.bf16.msra.mxu0 %v8573
    %9290 = vmatprep.subr.bf16.mxu0 0
    %9291 = vmatpush1.bf16.msra.mxu0 %v8572
    %9292 = vmatprep.subr.bf16.mxu0 0
    %9293 = vmatpush2.bf16.msra.mxu0 %v8587
    %9294 = vmatprep.subr.bf16.mxu0 0
    %9295 = vmatpush2.bf16.msra.mxu0 %v8586
    %9296 = vmatprep.subr.bf16.mxu0 0
    %9297 = vmatpush2.bf16.msra.mxu0 %v8585
    %9298 = vmatprep.subr.bf16.mxu0 0
    %9299 = vmatpush2.bf16.msra.mxu0 %v8584
    %9300 = vmatprep.subr.bf16.mxu0 0
    %9301 = vmatpush2.bf16.msra.mxu0 %v8583
    %9302 = vmatprep.subr.bf16.mxu0 0
    %9303 = vmatpush2.bf16.msra.mxu0 %v8582
    %9304 = vmatprep.subr.bf16.mxu0 0
    %9305 = vmatpush2.bf16.msra.mxu0 %v8581
    %9306 = vmatprep.subr.bf16.mxu0 0
    %9307 = vmatpush2.bf16.msra.mxu0 %v8580
    %9308 = vmatprep.mubr.bf16.mxu0 %v7012
    %9309 = vmatmul.mubr.bf16.gmra.mxu0 %v7011
    %v9310 = vpop.f32.mrf.mxu0
    %v9311 = vadd.f32 %v9271, %v9310
    %v9312 = vpop.f32.mrf.mxu0
    %v9313 = vpop.f32.mrf.mxu0
    %v9314 = vpop.f32.mrf.mxu0
    %9315 = vdwg.mxu0
    %9316 = vmatprep.subr.bf16.mxu0 0
    %9317 = vmatpush1.bf16.msra.mxu0 %v8595
    %9318 = vmatprep.subr.bf16.mxu0 0
    %9319 = vmatpush1.bf16.msra.mxu0 %v8594
    %9320 = vmatprep.subr.bf16.mxu0 0
    %9321 = vmatpush1.bf16.msra.mxu0 %v8593
    %9322 = vmatprep.subr.bf16.mxu0 0
    %9323 = vmatpush1.bf16.msra.mxu0 %v8592
    %9324 = vmatprep.subr.bf16.mxu0 0
    %9325 = vmatpush1.bf16.msra.mxu0 %v8591
    %9326 = vmatprep.subr.bf16.mxu0 0
    %9327 = vmatpush1.bf16.msra.mxu0 %v8590
    %9328 = vmatprep.subr.bf16.mxu0 0
    %9329 = vmatpush1.bf16.msra.mxu0 %v8589
    %9330 = vmatprep.subr.bf16.mxu0 0
    %9331 = vmatpush1.bf16.msra.mxu0 %v8588
    %9332 = vmatprep.subr.bf16.mxu0 0
    %9333 = vmatpush2.bf16.msra.mxu0 %v8603
    %9334 = vmatprep.subr.bf16.mxu0 0
    %9335 = vmatpush2.bf16.msra.mxu0 %v8602
    %9336 = vmatprep.subr.bf16.mxu0 0
    %9337 = vmatpush2.bf16.msra.mxu0 %v8601
    %9338 = vmatprep.subr.bf16.mxu0 0
    %9339 = vmatpush2.bf16.msra.mxu0 %v8600
    %9340 = vmatprep.subr.bf16.mxu0 0
    %9341 = vmatpush2.bf16.msra.mxu0 %v8599
    %9342 = vmatprep.subr.bf16.mxu0 0
    %9343 = vmatpush2.bf16.msra.mxu0 %v8598
    %9344 = vmatprep.subr.bf16.mxu0 0
    %9345 = vmatpush2.bf16.msra.mxu0 %v8597
    %9346 = vmatprep.subr.bf16.mxu0 0
    %9347 = vmatpush2.bf16.msra.mxu0 %v8596
    %9348 = vmatprep.mubr.bf16.mxu0 %v7014
    %9349 = vmatmul.mubr.bf16.gmra.mxu0 %v7013
    %v9350 = vpop.f32.mrf.mxu0
    %v9351 = vadd.f32 %v9311, %v9350
    %v9352 = vpop.f32.mrf.mxu0
    %v9353 = vpop.f32.mrf.mxu0
    %v9354 = vpop.f32.mrf.mxu0
    %9355 = vdwg.mxu0
    %9356 = vmatprep.subr.bf16.mxu0 0
    %9357 = vmatpush1.bf16.msra.mxu0 %v8611
    %9358 = vmatprep.subr.bf16.mxu0 0
    %9359 = vmatpush1.bf16.msra.mxu0 %v8610
    %9360 = vmatprep.subr.bf16.mxu0 0
    %9361 = vmatpush1.bf16.msra.mxu0 %v8609
    %9362 = vmatprep.subr.bf16.mxu0 0
    %9363 = vmatpush1.bf16.msra.mxu0 %v8608
    %9364 = vmatprep.subr.bf16.mxu0 0
    %9365 = vmatpush1.bf16.msra.mxu0 %v8607
    %9366 = vmatprep.subr.bf16.mxu0 0
    %9367 = vmatpush1.bf16.msra.mxu0 %v8606
    %9368 = vmatprep.subr.bf16.mxu0 0
    %9369 = vmatpush1.bf16.msra.mxu0 %v8605
    %9370 = vmatprep.subr.bf16.mxu0 0
    %9371 = vmatpush1.bf16.msra.mxu0 %v8604
    %9372 = vmatprep.subr.bf16.mxu0 0
    %9373 = vmatpush2.bf16.msra.mxu0 %v8619
    %9374 = vmatprep.subr.bf16.mxu0 0
    %9375 = vmatpush2.bf16.msra.mxu0 %v8618
    %9376 = vmatprep.subr.bf16.mxu0 0
    %9377 = vmatpush2.bf16.msra.mxu0 %v8617
    %9378 = vmatprep.subr.bf16.mxu0 0
    %9379 = vmatpush2.bf16.msra.mxu0 %v8616
    %9380 = vmatprep.subr.bf16.mxu0 0
    %9381 = vmatpush2.bf16.msra.mxu0 %v8615
    %9382 = vmatprep.subr.bf16.mxu0 0
    %9383 = vmatpush2.bf16.msra.mxu0 %v8614
    %9384 = vmatprep.subr.bf16.mxu0 0
    %9385 = vmatpush2.bf16.msra.mxu0 %v8613
    %9386 = vmatprep.subr.bf16.mxu0 0
    %9387 = vmatpush2.bf16.msra.mxu0 %v8612
    %9388 = vmatprep.mubr.bf16.mxu0 %v7016
    %9389 = vmatmul.mubr.bf16.gmra.mxu0 %v7015
    %v9390 = vpop.f32.mrf.mxu0
    %v9391 = vadd.f32 %v9351, %v9390
    %v9392 = vpop.f32.mrf.mxu0
    %v9393 = vpop.f32.mrf.mxu0
    %v9394 = vpop.f32.mrf.mxu0
    %9395 = vdwg.mxu0
    %9396 = vmatprep.subr.bf16.mxu0 0
    %9397 = vmatpush1.bf16.msra.mxu0 %v8627
    %9398 = vmatprep.subr.bf16.mxu0 0
    %9399 = vmatpush1.bf16.msra.mxu0 %v8626
    %9400 = vmatprep.subr.bf16.mxu0 0
    %9401 = vmatpush1.bf16.msra.mxu0 %v8625
    %9402 = vmatprep.subr.bf16.mxu0 0
    %9403 = vmatpush1.bf16.msra.mxu0 %v8624
    %9404 = vmatprep.subr.bf16.mxu0 0
    %9405 = vmatpush1.bf16.msra.mxu0 %v8623
    %9406 = vmatprep.subr.bf16.mxu0 0
    %9407 = vmatpush1.bf16.msra.mxu0 %v8622
    %9408 = vmatprep.subr.bf16.mxu0 0
    %9409 = vmatpush1.bf16.msra.mxu0 %v8621
    %9410 = vmatprep.subr.bf16.mxu0 0
    %9411 = vmatpush1.bf16.msra.mxu0 %v8620
    %9412 = vmatprep.subr.bf16.mxu0 0
    %9413 = vmatpush2.bf16.msra.mxu0 %v8635
    %9414 = vmatprep.subr.bf16.mxu0 0
    %9415 = vmatpush2.bf16.msra.mxu0 %v8634
    %9416 = vmatprep.subr.bf16.mxu0 0
    %9417 = vmatpush2.bf16.msra.mxu0 %v8633
    %9418 = vmatprep.subr.bf16.mxu0 0
    %9419 = vmatpush2.bf16.msra.mxu0 %v8632
    %9420 = vmatprep.subr.bf16.mxu0 0
    %9421 = vmatpush2.bf16.msra.mxu0 %v8631
    %9422 = vmatprep.subr.bf16.mxu0 0
    %9423 = vmatpush2.bf16.msra.mxu0 %v8630
    %9424 = vmatprep.subr.bf16.mxu0 0
    %9425 = vmatpush2.bf16.msra.mxu0 %v8629
    %9426 = vmatprep.subr.bf16.mxu0 0
    %9427 = vmatpush2.bf16.msra.mxu0 %v8628
    %9428 = vmatprep.mubr.bf16.mxu0 %v7018
    %9429 = vmatmul.mubr.bf16.gmra.mxu0 %v7017
    %v9430 = vpop.f32.mrf.mxu0
    %v9431 = vadd.f32 %v9391, %v9430
    %v9432 = vpop.f32.mrf.mxu0
    %v9433 = vpop.f32.mrf.mxu0
    %v9434 = vpop.f32.mrf.mxu0
    %9435 = vdwg.mxu0
    %9436 = vmatprep.subr.bf16.mxu0 0
    %9437 = vmatpush1.bf16.msra.mxu0 %v8643
    %9438 = vmatprep.subr.bf16.mxu0 0
    %9439 = vmatpush1.bf16.msra.mxu0 %v8642
    %9440 = vmatprep.subr.bf16.mxu0 0
    %9441 = vmatpush1.bf16.msra.mxu0 %v8641
    %9442 = vmatprep.subr.bf16.mxu0 0
    %9443 = vmatpush1.bf16.msra.mxu0 %v8640
    %9444 = vmatprep.subr.bf16.mxu0 0
    %9445 = vmatpush1.bf16.msra.mxu0 %v8639
    %9446 = vmatprep.subr.bf16.mxu0 0
    %9447 = vmatpush1.bf16.msra.mxu0 %v8638
    %9448 = vmatprep.subr.bf16.mxu0 0
    %9449 = vmatpush1.bf16.msra.mxu0 %v8637
    %9450 = vmatprep.subr.bf16.mxu0 0
    %9451 = vmatpush1.bf16.msra.mxu0 %v8636
    %9452 = vmatprep.subr.bf16.mxu0 0
    %9453 = vmatpush2.bf16.msra.mxu0 0
    %9454 = vmatprep.subr.bf16.mxu0 0
    %9455 = vmatpush2.bf16.msra.mxu0 0
    %9456 = vmatprep.subr.bf16.mxu0 0
    %9457 = vmatpush2.bf16.msra.mxu0 0
    %9458 = vmatprep.subr.bf16.mxu0 0
    %9459 = vmatpush2.bf16.msra.mxu0 0
    %9460 = vmatprep.subr.bf16.mxu0 0
    %9461 = vmatpush2.bf16.msra.mxu0 0
    %9462 = vmatprep.subr.bf16.mxu0 0
    %9463 = vmatpush2.bf16.msra.mxu0 0
    %9464 = vmatprep.subr.bf16.mxu0 0
    %9465 = vmatpush2.bf16.msra.mxu0 0
    %9466 = vmatprep.subr.bf16.mxu0 0
    %9467 = vmatpush2.bf16.msra.mxu0 0
    %9468 = vmatprep.mubr.bf16.mxu0 0
    %9469 = vmatmul.mubr.bf16.gmra.mxu0 %v7019
    %v9470 = vpop.f32.mrf.mxu0
    %v9471 = vadd.f32 %v9431, %v9470
    %v9472 = vpop.f32.mrf.mxu0
    %v9473 = vpop.f32.mrf.mxu0
    %v9474 = vpop.f32.mrf.mxu0
    %9475 = vdwg.mxu0
    %v9476 = vlog2.pop %v9471
    %v9477 = vmul.f32 %v9476, 0.6931472
    %v9478 = vld [vmem:[#allocation8] sm:$0xff]
    %v9479 = vld [vmem:[#allocation8 + $0x8] sm:$0xff]
    %v9480 = vld [vmem:[#allocation8 + $0x10] sm:$0xff]
    %v9481 = vld [vmem:[#allocation8 + $0x18] sm:$0xff]
    %v9482 = vld [vmem:[#allocation8 + $0x20] sm:$0xff]
    %v9483 = vld [vmem:[#allocation8 + $0x28] sm:$0xff]
    %v9484 = vld [vmem:[#allocation8 + $0x30] sm:$0xff]
    %v9485 = vld [vmem:[#allocation8 + $0x38] sm:$0xff]
    %v9486 = vld [vmem:[#allocation8 + $0x40] sm:$0xff]
    %v9487 = vld [vmem:[#allocation8 + $0x48] sm:$0xff]
    %v9488 = vld [vmem:[#allocation8 + $0x50] sm:$0xff]
    %v9489 = vld [vmem:[#allocation8 + $0x58] sm:$0xff]
    %v9490 = vld [vmem:[#allocation8 + $0x60] sm:$0xff]
    %v9491 = vld [vmem:[#allocation8 + $0x68] sm:$0xff]
    %v9492 = vld [vmem:[#allocation8 + $0x70] sm:$0xff]
    %v9493 = vld [vmem:[#allocation8 + $0x78] sm:$0xff]
    %v9494 = vld [vmem:[#allocation10] sm:$0x1]
    %v9496 = vlaneseq
    %v9497 = vshrl.u32 %v9496, 7
    %v9498 = vsub.s32 0, %v9497
    %v9499 = vrot.slane %v9494, %v9498
    %9501 = vmatprep.subr.mxu0 0.0
    %9502 = vmatpush1.msra.mxu0 %v9493
    %9503 = vmatprep.subr.mxu0 0.0
    %9504 = vmatpush1.msra.mxu0 %v9492
    %9505 = vmatprep.subr.mxu0 0.0
    %9506 = vmatpush1.msra.mxu0 %v9491
    %9507 = vmatprep.subr.mxu0 0.0
    %9508 = vmatpush1.msra.mxu0 %v9490
    %9509 = vmatprep.subr.mxu0 0.0
    %9510 = vmatpush1.msra.mxu0 %v9489
    %9511 = vmatprep.subr.mxu0 0.0
    %9512 = vmatpush1.msra.mxu0 %v9488
    %9513 = vmatprep.subr.mxu0 0.0
    %9514 = vmatpush1.msra.mxu0 %v9487
    %9515 = vmatprep.subr.mxu0 0.0
    %9516 = vmatpush1.msra.mxu0 %v9486
    %9517 = vmatprep.subr.mxu0 0.0
    %9518 = vmatpush1.msra.mxu0 %v9485
    %9519 = vmatprep.subr.mxu0 0.0
    %9520 = vmatpush1.msra.mxu0 %v9484
    %9521 = vmatprep.subr.mxu0 0.0
    %9522 = vmatpush1.msra.mxu0 %v9483
    %9523 = vmatprep.subr.mxu0 0.0
    %9524 = vmatpush1.msra.mxu0 %v9482
    %9525 = vmatprep.subr.mxu0 0.0
    %9526 = vmatpush1.msra.mxu0 %v9481
    %9527 = vmatprep.subr.mxu0 0.0
    %9528 = vmatpush1.msra.mxu0 %v9480
    %9529 = vmatprep.subr.mxu0 0.0
    %9530 = vmatpush1.msra.mxu0 %v9479
    %9531 = vmatprep.subr.mxu0 0.0
    %9532 = vmatpush1.msra.mxu0 %v9478
    %9533 = vmatprep.subr.mxu0 0.0
    %9534 = vmatpush2.msra.mxu0 0.0
    %9535 = vmatprep.subr.mxu0 0.0
    %9536 = vmatpush2.msra.mxu0 0.0
    %9537 = vmatprep.subr.mxu0 0.0
    %9538 = vmatpush2.msra.mxu0 0.0
    %9539 = vmatprep.subr.mxu0 0.0
    %9540 = vmatpush2.msra.mxu0 0.0
    %9541 = vmatprep.subr.mxu0 0.0
    %9542 = vmatpush2.msra.mxu0 0.0
    %9543 = vmatprep.subr.mxu0 0.0
    %9544 = vmatpush2.msra.mxu0 0.0
    %9545 = vmatprep.subr.mxu0 0.0
    %9546 = vmatpush2.msra.mxu0 0.0
    %9547 = vmatprep.subr.mxu0 0.0
    %9548 = vmatpush2.msra.mxu0 0.0
    %9549 = vmatprep.subr.mxu0 0.0
    %9550 = vmatpush2.msra.mxu0 0.0
    %9551 = vmatprep.subr.mxu0 0.0
    %9552 = vmatpush2.msra.mxu0 0.0
    %9553 = vmatprep.subr.mxu0 0.0
    %9554 = vmatpush2.msra.mxu0 0.0
    %9555 = vmatprep.subr.mxu0 0.0
    %9556 = vmatpush2.msra.mxu0 0.0
    %9557 = vmatprep.subr.mxu0 0.0
    %9558 = vmatpush2.msra.mxu0 0.0
    %9559 = vmatprep.subr.mxu0 0.0
    %9560 = vmatpush2.msra.mxu0 0.0
    %9561 = vmatprep.subr.mxu0 0.0
    %9562 = vmatpush2.msra.mxu0 0.0
    %9563 = vmatprep.subr.mxu0 0.0
    %9564 = vmatpush2.msra.mxu0 0.0
    %9565 = vmatprep.mubr.f32.mxu0 0.0
    %9566 = vmatmul.mubr.f32.gmra.mxu0 %v9477
    %v9567 = vpop.f32.mrf.mxu0
    %v9568 = vadd.f32 %v9499, %v9567
    %v9569 = vpop.f32.mrf.mxu0
    %9570 = vdwg.mxu0
    %9571 = vst [vmem:[#allocation11] sm:$0xff] %v9568
    // Predicated region
    $region42: #{tpu_custom_call.1} parent=1 // pred_check
      _
    $region43: #{tpu_custom_call.1} parent=1 // pred_check_branch
      %9573 = sbr.rel (0) target = $region45
    $region44: #{tpu_custom_call.1} parent=1 // pred_region
      %s9575 = ssub.s32 128, 128
      %9576 = vsyncadd [#allocation4], %s9575
      %s9578 = sshll.u32 [#allocation11], 4
      %s9579 = int_to_ptr.vmem [resolvable:$true] %s9578
      %9581 = dma.vmem_to_hbm [thread:$0]  %s9579, 128, %s5, [#allocation4]
    $region45: #{tpu_custom_call.1} parent=1 // pred_fallthru
      _
    // Predicated region
    $region46: #{tpu_custom_call.1} parent=1 // pred_check
      _
    $region47: #{tpu_custom_call.1} parent=1 // pred_check_branch
      %9583 = sbr.rel (0) target = $region49
    $region48: #{tpu_custom_call.1} parent=1 // pred_region
      %9584 = dma.done [#allocation4], 128
    $region49: #{tpu_custom_call.1} parent=1 // pred_fallthru
      _
    %9585 = vsyncpa [#allocation3], 1
    %9586 = vsyncpa [#allocation6], 1
    %9587 = vsyncpa [#allocation9], 1
    %9588 = vsyncpa [#allocation4], 1

</llo_original>
